<compile_context>
chip_gen: v6e
topology: v6e:2x2x1
jax: 0.10.0
libtpu: 0.0.40
codegen_flags: <defaults>
</compile_context>

<pallas_src>
import functools

import jax
import jax.numpy as jnp
from jax.experimental import pallas as pl
from jax.experimental.pallas import tpu as pltpu

N_DIM = 3
N_STEPS = 200
T_EMB = 256
EMB_PAD = 256      # embedding table rows padded 200 -> 256
HID = 512
X_PAD = 128        # lane-padded width for x and the output
N_VEC_ROWS = 16    # packed bias / LayerNorm slab rows (multiple of 8)

# Row indices inside the packed f32 vector slab [N_VEC_ROWS, HID].
V_TE1_B, V_TE2_B = 0, 1
V_L0_B, V_LN0_W, V_LN0_B = 2, 3, 4
V_R1A_B, V_R1LN_W, V_R1LN_B, V_R1B_B = 5, 6, 7, 8
V_R2A_B, V_R2LN_W, V_R2LN_B, V_R2B_B = 9, 10, 11, 12
V_OUT_B = 13
# NOTE: LayerNorm bias rows (V_LN0_B, V_R1LN_B, V_R2LN_B) stay zero because
# PyTorch LN biases initialize to zero; populate them when loading checkpoints.

_WEIGHT_NAMES = ("wte1", "wte2", "w0x", "w0t",
                 "r1wa", "r1wb", "r2wa", "r2wb", "wout")


# ----------------------------- Pallas kernel ---------------------------------
def ddpm_kernel(
    x_ref, t_ref, vec_ref, emb_ref,
    wte1_ref, wte2_ref, w0x_ref, w0t_ref,
    r1wa_ref, r1wb_ref, r2wa_ref, r2wb_ref,
    wout_ref,
    out_ref,
):
    f32 = jnp.float32
    bf16 = jnp.bfloat16
    TB = x_ref.shape[0]

    def dot(a, w_ref):
        # bf16 MXU inputs, f32 accumulation.
        return jnp.dot(a.astype(bf16), w_ref[...], preferred_element_type=f32)

    def vec(row, width=HID):
        # [1, width] row of the packed bias/LN slab (broadcasts over batch).
        return vec_ref[row:row + 1, :width]

    def layernorm(h, wrow, brow, eps=1e-5):
        # Fused one-pass stats: the E[x] and E[x^2] reductions are independent
        # (overlap on the XLU) instead of mean -> center -> second reduce.
        mu = jnp.mean(h, axis=-1, keepdims=True)
        mu2 = jnp.mean(h * h, axis=-1, keepdims=True)
        inv = jax.lax.rsqrt(mu2 - mu * mu + eps)
        return (h - mu) * inv * vec(wrow) + vec(brow)

    def silu(h):
        # sigmoid(x) = 0.5*(tanh(x/2)+1): tanh hits the EUP slot, avoiding the
        # VPU exp + full-precision divide of jax.nn.sigmoid.
        return h * (0.5 * jnp.tanh(0.5 * h) + 0.5)

    # ---- nn.Embedding(t) as a one-hot matmul on the MXU (no XLA gather) ----
    t_ids = t_ref[...]                                              # [TB, 1]
    iota = jax.lax.broadcasted_iota(jnp.int32, (TB, EMB_PAD), 1)
    one_hot = (t_ids == iota).astype(bf16)                          # [TB, 256]
    te = jnp.dot(one_hot, emb_ref[...], preferred_element_type=f32)

    # ---- time-embed MLP: Linear(256,256) -> ReLU -> Linear(256,256) ----
    h = jnp.maximum(dot(te, wte1_ref) + vec(V_TE1_B, T_EMB), 0.0)
    t_embed = dot(h, wte2_ref) + vec(V_TE2_B, T_EMB)

    # ---- first Linear over cat([x, t_embed]) as a split matmul ----
    h = dot(x_ref[...], w0x_ref) + dot(t_embed, w0t_ref) + vec(V_L0_B)
    h = layernorm(h, V_LN0_W, V_LN0_B)

    # ---- ResidualBlock 1 ----
    r = dot(h, r1wa_ref) + vec(V_R1A_B)
    r = silu(layernorm(r, V_R1LN_W, V_R1LN_B))
    h = h + dot(r, r1wb_ref) + vec(V_R1B_B)

    # ---- ResidualBlock 2 ----
    r = dot(h, r2wa_ref) + vec(V_R2A_B)
    r = silu(layernorm(r, V_R2LN_W, V_R2LN_B))
    h = h + dot(r, r2wb_ref) + vec(V_R2B_B)

    # ---- output projection, lane-dense [TB, 128] store (cols 3.. are zero) --
    out_ref[...] = dot(h, wout_ref) + vec(V_OUT_B, X_PAD)


# ------------------------------ parameters -----------------------------------
def init_params(key):
    """PyTorch-style inits, repacked ONCE into kernel-ready layout:
    pre-transposed [in,out] bf16 weights, zero-padded x/out projections and
    embedding table, and a single packed f32 bias/LayerNorm slab."""
    ks = list(jax.random.split(key, 16))

    def linear(k, fan_in, fan_out):
        k1, k2 = jax.random.split(k)
        bound = 1.0 / jnp.sqrt(fan_in)
        w = jax.random.uniform(k1, (fan_out, fan_in), jnp.float32, -bound, bound)
        b = jax.random.uniform(k2, (fan_out,), jnp.float32, -bound, bound)
        return w, b

    emb = jax.random.normal(ks[0], (N_STEPS, T_EMB), jnp.float32)
    te1_w, te1_b = linear(ks[1], T_EMB, T_EMB)
    te2_w, te2_b = linear(ks[2], T_EMB, T_EMB)
    l0_w, l0_b = linear(ks[3], N_DIM + T_EMB, HID)
    r1a_w, r1a_b = linear(ks[5], HID, HID)
    r1b_w, r1b_b = linear(ks[6], HID, HID)
    r2a_w, r2a_b = linear(ks[7], HID, HID)
    r2b_w, r2b_b = linear(ks[8], HID, HID)
    out_w, out_b = linear(ks[12], HID, N_DIM)

    bf16 = jnp.bfloat16

    def tT(w):  # torch Linear [out, in] -> [in, out], bf16
        return jnp.transpose(w).astype(bf16)

    # Embedding table zero-padded 200 -> 256 rows (one-hot matmul in kernel).
    emb_pad = (jnp.zeros((EMB_PAD, T_EMB), jnp.float32)
               .at[:N_STEPS].set(emb)).astype(bf16)

    # First Linear split into x-part / t_embed-part; x-part zero-padded 3->128.
    w0x = (jnp.zeros((X_PAD, HID), jnp.float32)
           .at[:N_DIM].set(jnp.transpose(l0_w[:, :N_DIM]))).astype(bf16)
    w0t = tT(l0_w[:, N_DIM:])

    # Output projection zero-padded on the output dim 3 -> 128 (lane-dense).
    wout = (jnp.zeros((HID, X_PAD), jnp.float32)
            .at[:, :N_DIM].set(jnp.transpose(out_w))).astype(bf16)

    # Packed f32 bias / LayerNorm slab [16, 512] (LN biases default to zero).
    vecs = jnp.zeros((N_VEC_ROWS, HID), jnp.float32)
    vecs = vecs.at[V_TE1_B, :T_EMB].set(te1_b)
    vecs = vecs.at[V_TE2_B, :T_EMB].set(te2_b)
    vecs = vecs.at[V_L0_B].set(l0_b)
    vecs = vecs.at[V_LN0_W].set(jnp.ones((HID,), jnp.float32))
    vecs = vecs.at[V_R1A_B].set(r1a_b)
    vecs = vecs.at[V_R1LN_W].set(jnp.ones((HID,), jnp.float32))
    vecs = vecs.at[V_R1B_B].set(r1b_b)
    vecs = vecs.at[V_R2A_B].set(r2a_b)
    vecs = vecs.at[V_R2LN_W].set(jnp.ones((HID,), jnp.float32))
    vecs = vecs.at[V_R2B_B].set(r2b_b)
    vecs = vecs.at[V_OUT_B, :N_DIM].set(out_b)

    return {
        "emb": emb_pad, "vecs": vecs,
        "wte1": tT(te1_w), "wte2": tT(te2_w),
        "w0x": w0x, "w0t": w0t,
        "r1wa": tT(r1a_w), "r1wb": tT(r1b_w),
        "r2wa": tT(r2a_w), "r2wb": tT(r2b_w),
        "wout": wout,
    }


# -------------------------------- wrapper -------------------------------------
def _round_up(n, m):
    return (n + m - 1) // m * m


@functools.partial(jax.jit, static_argnames=("block_b", "single_buffer_weights"))
def _ddpm_forward_impl(params, x, t, block_b, single_buffer_weights):
    B = x.shape[0]
    # TB: multiple of 16 (bf16 sublane packing), capped at block_b, and chosen
    # so the parallel batch grid has >= 2 steps when B allows (keeps both v7x
    # TensorCores busy); block_b=256 matches the 256-wide MXU on v6e/v7x.
    TB = max(16, min(block_b, _round_up((B + 1) // 2, 16)))
    B_pad = _round_up(B, TB)

    # Pad batch to a multiple of TB; pad x lanes 3 -> 128 (lane-dense).
    x_p = jnp.zeros((B_pad, X_PAD), jnp.float32).at[:B, :N_DIM].set(x)
    t_p = jnp.zeros((B_pad, 1), jnp.int32).at[:B, 0].set(t.astype(jnp.int32))

    grid = (B_pad // TB,)

    def batch_spec(width):
        return pl.BlockSpec((TB, width), lambda i: (i, 0))

    def const_spec(shape):
        # Constant index_map -> block DMA'd once, stays VMEM-resident across
        # grid steps. Single-buffer it (the second buffer is never used).
        if single_buffer_weights:
            return pl.BlockSpec(shape, lambda i: (0, 0),
                                pipeline_mode=pl.Buffered(1))
        return pl.BlockSpec(shape, lambda i: (0, 0))

    in_specs = (
        [batch_spec(X_PAD),
         pl.BlockSpec((TB, 1), lambda i: (i, 0)),
         const_spec((N_VEC_ROWS, HID)),
         const_spec((EMB_PAD, T_EMB))]
        + [const_spec(params[w].shape) for w in _WEIGHT_NAMES]
    )

    out = pl.pallas_call(
        ddpm_kernel,
        out_shape=jax.ShapeDtypeStruct((B_pad, X_PAD), jnp.float32),
        grid=grid,
        in_specs=in_specs,
        out_specs=batch_spec(X_PAD),
        compiler_params=pltpu.CompilerParams(
            dimension_semantics=("parallel",),
            vmem_limit_bytes=16 << 20,
        ),
    )(x_p, t_p, params["vecs"], params["emb"],
      *(params[w] for w in _WEIGHT_NAMES))

    return out[:B, :N_DIM]


def ddpm_forward(params, x, t, block_b=256):
    """block_b=256 suits v6e/v7x (256-wide MXU); pass block_b=128 on v5e."""
    try:
        return _ddpm_forward_impl(params, x, t, block_b=block_b,
                                  single_buffer_weights=True)
    except Exception:
        # pl.Buffered(1) unsupported on this jax version -> default buffering.
        return _ddpm_forward_impl(params, x, t, block_b=block_b,
                                  single_buffer_weights=False)


# ---------------------------- pure-JAX reference ------------------------------
def ddpm_reference(params, x, t):
    """Reference computed from the same kernel-ready (bf16) params in f32."""
    f32 = jnp.float32

    def w(name):
        return params[name].astype(f32)

    def vec(row, width=HID):
        return params["vecs"][row, :width]

    def ln(h, wrow, brow, eps=1e-5):
        mu = h.mean(-1, keepdims=True)
        var = ((h - mu) ** 2).mean(-1, keepdims=True)
        return (h - mu) / jnp.sqrt(var + eps) * vec(wrow) + vec(brow)

    te = w("emb")[t]
    h = jnp.maximum(te @ w("wte1") + vec(V_TE1_B, T_EMB), 0.0)
    t_embed = h @ w("wte2") + vec(V_TE2_B, T_EMB)

    x_pad = jnp.zeros((x.shape[0], X_PAD), f32).at[:, :N_DIM].set(x)
    h = x_pad @ w("w0x") + t_embed @ w("w0t") + vec(V_L0_B)
    h = ln(h, V_LN0_W, V_LN0_B)

    r = h @ w("r1wa") + vec(V_R1A_B)
    r = ln(r, V_R1LN_W, V_R1LN_B)
    r = r * jax.nn.sigmoid(r)
    h = h + r @ w("r1wb") + vec(V_R1B_B)

    r = h @ w("r2wa") + vec(V_R2A_B)
    r = ln(r, V_R2LN_W, V_R2LN_B)
    r = r * jax.nn.sigmoid(r)
    h = h + r @ w("r2wb") + vec(V_R2B_B)

    out = h @ w("wout") + vec(V_OUT_B, X_PAD)
    return out[:, :N_DIM]


if __name__ == "__main__":
    key = jax.random.PRNGKey(0)
    kp, kx, kt = jax.random.split(key, 3)
    params = init_params(kp)

    # Small batch: single-tile grid, exercises x/t/batch padding.
    B = 16
    x = jax.random.normal(kx, (B, N_DIM), jnp.float32)
    t = jax.random.randint(kt, (B,), 0, N_STEPS, jnp.int32)
    out = jax.block_until_ready(ddpm_forward(params, x, t))
    ref = ddpm_reference(params, x, t)
    assert out.shape == (B, N_DIM)
    err = jnp.max(jnp.abs(out - ref))
    assert jnp.allclose(out, ref, atol=5e-2, rtol=5e-2), f"max abs err {err}"

    # Larger batch: 2-step parallel grid (TB=112, grid=(2,)) + batch padding.
    B2 = 200
    x2 = jax.random.normal(kx, (B2, N_DIM), jnp.float32)
    t2 = jax.random.randint(kt, (B2,), 0, N_STEPS, jnp.int32)
    out2 = jax.block_until_ready(ddpm_forward(params, x2, t2))
    ref2 = ddpm_reference(params, x2, t2)
    err2 = jnp.max(jnp.abs(out2 - ref2))
    assert jnp.allclose(out2, ref2, atol=5e-2, rtol=5e-2), f"max abs err {err2}"

    print("KERNEL_OK")
</pallas_src>

<mosaic_0001>
module attributes {stable_mosaic.version = 11 : i64} {
  func.func @ddpm_kernel(%arg0: i32, %arg1: memref<16x128xf32, #tpu.memory_space<vmem>>, %arg2: memref<16x1xi32, #tpu.memory_space<vmem>>, %arg3: memref<16x512xf32, #tpu.memory_space<vmem>>, %arg4: memref<256x256xbf16, #tpu.memory_space<vmem>>, %arg5: memref<256x256xbf16, #tpu.memory_space<vmem>>, %arg6: memref<256x256xbf16, #tpu.memory_space<vmem>>, %arg7: memref<128x512xbf16, #tpu.memory_space<vmem>>, %arg8: memref<256x512xbf16, #tpu.memory_space<vmem>>, %arg9: memref<512x512xbf16, #tpu.memory_space<vmem>>, %arg10: memref<512x512xbf16, #tpu.memory_space<vmem>>, %arg11: memref<512x512xbf16, #tpu.memory_space<vmem>>, %arg12: memref<512x512xbf16, #tpu.memory_space<vmem>>, %arg13: memref<512x128xbf16, #tpu.memory_space<vmem>>, %arg14: memref<16x128xf32, #tpu.memory_space<vmem>>) attributes {dimension_semantics = [#tpu.dimension_semantics<parallel>], iteration_bounds = array<i64: 1>, scalar_prefetch = 0 : i64, scratch_operands = 0 : i64, tpu.core_type = #tpu.core_type<tc>, window_params = [{transform_indices = @transform_0, window_bounds = array<i64: 16, 128>}, {transform_indices = @transform_1, window_bounds = array<i64: 16, 1>}, {pipeline_mode = #tpu.pipeline_mode<synchronous>, transform_indices = @transform_2, window_bounds = array<i64: 16, 512>}, {pipeline_mode = #tpu.pipeline_mode<synchronous>, transform_indices = @transform_3, window_bounds = array<i64: 256, 256>}, {pipeline_mode = #tpu.pipeline_mode<synchronous>, transform_indices = @transform_4, window_bounds = array<i64: 256, 256>}, {pipeline_mode = #tpu.pipeline_mode<synchronous>, transform_indices = @transform_5, window_bounds = array<i64: 256, 256>}, {pipeline_mode = #tpu.pipeline_mode<synchronous>, transform_indices = @transform_6, window_bounds = array<i64: 128, 512>}, {pipeline_mode = #tpu.pipeline_mode<synchronous>, transform_indices = @transform_7, window_bounds = array<i64: 256, 512>}, {pipeline_mode = #tpu.pipeline_mode<synchronous>, transform_indices = @transform_8, window_bounds = array<i64: 512, 512>}, {pipeline_mode = #tpu.pipeline_mode<synchronous>, transform_indices = @transform_9, window_bounds = array<i64: 512, 512>}, {pipeline_mode = #tpu.pipeline_mode<synchronous>, transform_indices = @transform_10, window_bounds = array<i64: 512, 512>}, {pipeline_mode = #tpu.pipeline_mode<synchronous>, transform_indices = @transform_11, window_bounds = array<i64: 512, 512>}, {pipeline_mode = #tpu.pipeline_mode<synchronous>, transform_indices = @transform_12, window_bounds = array<i64: 512, 128>}, {transform_indices = @transform_13, window_bounds = array<i64: 16, 128>}]} {
    %c0 = arith.constant 0 : index
    %c0_0 = arith.constant 0 : index
    %0 = vector.load %arg2[%c0, %c0_0] : memref<16x1xi32, #tpu.memory_space<vmem>>, vector<16x1xi32>
    %1 = tpu.iota {dimensions = array<i32: 1>} : vector<16x256xi32>
    %2 = vector.broadcast %0 : vector<16x1xi32> to vector<16x256xi32>
    %3 = arith.cmpi eq, %2, %1 : vector<16x256xi32>
    %4 = arith.extui %3 : vector<16x256xi1> to vector<16x256xi32>
    %5 = arith.sitofp %4 : vector<16x256xi32> to vector<16x256xf32>
    %6 = arith.truncf %5 : vector<16x256xf32> to vector<16x256xbf16>
    %c0_1 = arith.constant 0 : index
    %c0_2 = arith.constant 0 : index
    %7 = vector.load %arg4[%c0_1, %c0_2] : memref<256x256xbf16, #tpu.memory_space<vmem>>, vector<256x256xbf16>
    %cst = arith.constant dense<0.000000e+00> : vector<16x256xf32>
    %8 = tpu.matmul %6, %7, %cst {dimension_numbers = #tpu.dot_dimension_numbers<[1], [0], [0], [1], [0, 0, 1, 1], [], []>} : vector<16x256xbf16>, vector<256x256xbf16>, vector<16x256xf32> -> vector<16x256xf32>
    %9 = arith.truncf %8 : vector<16x256xf32> to vector<16x256xbf16>
    %c0_3 = arith.constant 0 : index
    %c0_4 = arith.constant 0 : index
    %10 = vector.load %arg5[%c0_3, %c0_4] : memref<256x256xbf16, #tpu.memory_space<vmem>>, vector<256x256xbf16>
    %cst_5 = arith.constant dense<0.000000e+00> : vector<16x256xf32>
    %11 = tpu.matmul %9, %10, %cst_5 {dimension_numbers = #tpu.dot_dimension_numbers<[1], [0], [0], [1], [0, 0, 1, 1], [], []>} : vector<16x256xbf16>, vector<256x256xbf16>, vector<16x256xf32> -> vector<16x256xf32>
    %c0_6 = arith.constant 0 : index
    %c0_7 = arith.constant 0 : index
    %12 = vector.load %arg3[%c0_6, %c0_7] : memref<16x512xf32, #tpu.memory_space<vmem>>, vector<1x256xf32>
    %13 = vector.broadcast %12 : vector<1x256xf32> to vector<16x256xf32>
    %14 = arith.addf %11, %13 : vector<16x256xf32>
    %cst_8 = arith.constant 0.000000e+00 : f32
    %15 = vector.broadcast %cst_8 : f32 to vector<16x256xf32>
    %16 = arith.maximumf %14, %15 : vector<16x256xf32>
    %17 = arith.truncf %16 : vector<16x256xf32> to vector<16x256xbf16>
    %c0_9 = arith.constant 0 : index
    %c0_10 = arith.constant 0 : index
    %18 = vector.load %arg6[%c0_9, %c0_10] : memref<256x256xbf16, #tpu.memory_space<vmem>>, vector<256x256xbf16>
    %cst_11 = arith.constant dense<0.000000e+00> : vector<16x256xf32>
    %19 = tpu.matmul %17, %18, %cst_11 {dimension_numbers = #tpu.dot_dimension_numbers<[1], [0], [0], [1], [0, 0, 1, 1], [], []>} : vector<16x256xbf16>, vector<256x256xbf16>, vector<16x256xf32> -> vector<16x256xf32>
    %c1 = arith.constant 1 : index
    %c0_12 = arith.constant 0 : index
    %20 = vector.load %arg3[%c1, %c0_12] : memref<16x512xf32, #tpu.memory_space<vmem>>, vector<1x256xf32>
    %21 = vector.broadcast %20 : vector<1x256xf32> to vector<16x256xf32>
    %22 = arith.addf %19, %21 : vector<16x256xf32>
    %c0_13 = arith.constant 0 : index
    %c0_14 = arith.constant 0 : index
    %23 = vector.load %arg1[%c0_13, %c0_14] : memref<16x128xf32, #tpu.memory_space<vmem>>, vector<16x128xf32>
    %24 = arith.truncf %23 : vector<16x128xf32> to vector<16x128xbf16>
    %c0_15 = arith.constant 0 : index
    %c0_16 = arith.constant 0 : index
    %25 = vector.load %arg7[%c0_15, %c0_16] : memref<128x512xbf16, #tpu.memory_space<vmem>>, vector<128x512xbf16>
    %cst_17 = arith.constant dense<0.000000e+00> : vector<16x512xf32>
    %26 = tpu.matmul %24, %25, %cst_17 {dimension_numbers = #tpu.dot_dimension_numbers<[1], [0], [0], [1], [0, 0, 1, 1], [], []>} : vector<16x128xbf16>, vector<128x512xbf16>, vector<16x512xf32> -> vector<16x512xf32>
    %27 = arith.truncf %22 : vector<16x256xf32> to vector<16x256xbf16>
    %c0_18 = arith.constant 0 : index
    %c0_19 = arith.constant 0 : index
    %28 = vector.load %arg8[%c0_18, %c0_19] : memref<256x512xbf16, #tpu.memory_space<vmem>>, vector<256x512xbf16>
    %cst_20 = arith.constant dense<0.000000e+00> : vector<16x512xf32>
    %29 = tpu.matmul %27, %28, %cst_20 {dimension_numbers = #tpu.dot_dimension_numbers<[1], [0], [0], [1], [0, 0, 1, 1], [], []>} : vector<16x256xbf16>, vector<256x512xbf16>, vector<16x512xf32> -> vector<16x512xf32>
    %30 = arith.addf %26, %29 : vector<16x512xf32>
    %c2 = arith.constant 2 : index
    %c0_21 = arith.constant 0 : index
    %31 = vector.load %arg3[%c2, %c0_21] : memref<16x512xf32, #tpu.memory_space<vmem>>, vector<1x512xf32>
    %32 = vector.broadcast %31 : vector<1x512xf32> to vector<16x512xf32>
    %33 = arith.addf %30, %32 : vector<16x512xf32>
    %cst_22 = arith.constant dense<0.000000e+00> : vector<16xf32>
    %34 = vector.multi_reduction <add>, %33, %cst_22 [1] : vector<16x512xf32> to vector<16xf32>
    %35 = vector.shape_cast %34 : vector<16xf32> to vector<16x1xf32>
    %cst_23 = arith.constant 5.120000e+02 : f32
    %36 = vector.broadcast %cst_23 : f32 to vector<16x1xf32>
    %37 = arith.divf %35, %36 : vector<16x1xf32>
    %38 = arith.mulf %33, %33 : vector<16x512xf32>
    %cst_24 = arith.constant dense<0.000000e+00> : vector<16xf32>
    %39 = vector.multi_reduction <add>, %38, %cst_24 [1] : vector<16x512xf32> to vector<16xf32>
    %40 = vector.shape_cast %39 : vector<16xf32> to vector<16x1xf32>
    %cst_25 = arith.constant 5.120000e+02 : f32
    %41 = vector.broadcast %cst_25 : f32 to vector<16x1xf32>
    %42 = arith.divf %40, %41 : vector<16x1xf32>
    %43 = arith.mulf %37, %37 : vector<16x1xf32>
    %44 = arith.subf %42, %43 : vector<16x1xf32>
    %cst_26 = arith.constant 9.99999974E-6 : f32
    %45 = vector.broadcast %cst_26 : f32 to vector<16x1xf32>
    %46 = arith.addf %44, %45 : vector<16x1xf32>
    %47 = math.rsqrt %46 : vector<16x1xf32>
    %48 = vector.broadcast %37 : vector<16x1xf32> to vector<16x512xf32>
    %49 = arith.subf %33, %48 : vector<16x512xf32>
    %50 = vector.broadcast %47 : vector<16x1xf32> to vector<16x512xf32>
    %51 = arith.mulf %49, %50 : vector<16x512xf32>
    %c3 = arith.constant 3 : index
    %c0_27 = arith.constant 0 : index
    %52 = vector.load %arg3[%c3, %c0_27] : memref<16x512xf32, #tpu.memory_space<vmem>>, vector<1x512xf32>
    %53 = vector.broadcast %52 : vector<1x512xf32> to vector<16x512xf32>
    %54 = arith.mulf %51, %53 : vector<16x512xf32>
    %c4 = arith.constant 4 : index
    %c0_28 = arith.constant 0 : index
    %55 = vector.load %arg3[%c4, %c0_28] : memref<16x512xf32, #tpu.memory_space<vmem>>, vector<1x512xf32>
    %56 = vector.broadcast %55 : vector<1x512xf32> to vector<16x512xf32>
    %57 = arith.addf %54, %56 : vector<16x512xf32>
    %58 = arith.truncf %57 : vector<16x512xf32> to vector<16x512xbf16>
    %c0_29 = arith.constant 0 : index
    %c0_30 = arith.constant 0 : index
    %59 = vector.load %arg9[%c0_29, %c0_30] : memref<512x512xbf16, #tpu.memory_space<vmem>>, vector<512x512xbf16>
    %cst_31 = arith.constant dense<0.000000e+00> : vector<16x512xf32>
    %60 = tpu.matmul %58, %59, %cst_31 {dimension_numbers = #tpu.dot_dimension_numbers<[1], [0], [0], [1], [0, 0, 1, 1], [], []>} : vector<16x512xbf16>, vector<512x512xbf16>, vector<16x512xf32> -> vector<16x512xf32>
    %c5 = arith.constant 5 : index
    %c0_32 = arith.constant 0 : index
    %61 = vector.load %arg3[%c5, %c0_32] : memref<16x512xf32, #tpu.memory_space<vmem>>, vector<1x512xf32>
    %62 = vector.broadcast %61 : vector<1x512xf32> to vector<16x512xf32>
    %63 = arith.addf %60, %62 : vector<16x512xf32>
    %cst_33 = arith.constant dense<0.000000e+00> : vector<16xf32>
    %64 = vector.multi_reduction <add>, %63, %cst_33 [1] : vector<16x512xf32> to vector<16xf32>
    %65 = vector.shape_cast %64 : vector<16xf32> to vector<16x1xf32>
    %cst_34 = arith.constant 5.120000e+02 : f32
    %66 = vector.broadcast %cst_34 : f32 to vector<16x1xf32>
    %67 = arith.divf %65, %66 : vector<16x1xf32>
    %68 = arith.mulf %63, %63 : vector<16x512xf32>
    %cst_35 = arith.constant dense<0.000000e+00> : vector<16xf32>
    %69 = vector.multi_reduction <add>, %68, %cst_35 [1] : vector<16x512xf32> to vector<16xf32>
    %70 = vector.shape_cast %69 : vector<16xf32> to vector<16x1xf32>
    %cst_36 = arith.constant 5.120000e+02 : f32
    %71 = vector.broadcast %cst_36 : f32 to vector<16x1xf32>
    %72 = arith.divf %70, %71 : vector<16x1xf32>
    %73 = arith.mulf %67, %67 : vector<16x1xf32>
    %74 = arith.subf %72, %73 : vector<16x1xf32>
    %cst_37 = arith.constant 9.99999974E-6 : f32
    %75 = vector.broadcast %cst_37 : f32 to vector<16x1xf32>
    %76 = arith.addf %74, %75 : vector<16x1xf32>
    %77 = math.rsqrt %76 : vector<16x1xf32>
    %78 = vector.broadcast %67 : vector<16x1xf32> to vector<16x512xf32>
    %79 = arith.subf %63, %78 : vector<16x512xf32>
    %80 = vector.broadcast %77 : vector<16x1xf32> to vector<16x512xf32>
    %81 = arith.mulf %79, %80 : vector<16x512xf32>
    %c6 = arith.constant 6 : index
    %c0_38 = arith.constant 0 : index
    %82 = vector.load %arg3[%c6, %c0_38] : memref<16x512xf32, #tpu.memory_space<vmem>>, vector<1x512xf32>
    %83 = vector.broadcast %82 : vector<1x512xf32> to vector<16x512xf32>
    %84 = arith.mulf %81, %83 : vector<16x512xf32>
    %c7 = arith.constant 7 : index
    %c0_39 = arith.constant 0 : index
    %85 = vector.load %arg3[%c7, %c0_39] : memref<16x512xf32, #tpu.memory_space<vmem>>, vector<1x512xf32>
    %86 = vector.broadcast %85 : vector<1x512xf32> to vector<16x512xf32>
    %87 = arith.addf %84, %86 : vector<16x512xf32>
    %cst_40 = arith.constant 5.000000e-01 : f32
    %88 = vector.broadcast %cst_40 : f32 to vector<16x512xf32>
    %89 = arith.mulf %88, %87 : vector<16x512xf32>
    %90 = math.tanh %89 : vector<16x512xf32>
    %cst_41 = arith.constant 5.000000e-01 : f32
    %91 = vector.broadcast %cst_41 : f32 to vector<16x512xf32>
    %92 = arith.mulf %91, %90 : vector<16x512xf32>
    %cst_42 = arith.constant 5.000000e-01 : f32
    %93 = vector.broadcast %cst_42 : f32 to vector<16x512xf32>
    %94 = arith.addf %92, %93 : vector<16x512xf32>
    %95 = arith.mulf %87, %94 : vector<16x512xf32>
    %96 = arith.truncf %95 : vector<16x512xf32> to vector<16x512xbf16>
    %c0_43 = arith.constant 0 : index
    %c0_44 = arith.constant 0 : index
    %97 = vector.load %arg10[%c0_43, %c0_44] : memref<512x512xbf16, #tpu.memory_space<vmem>>, vector<512x512xbf16>
    %cst_45 = arith.constant dense<0.000000e+00> : vector<16x512xf32>
    %98 = tpu.matmul %96, %97, %cst_45 {dimension_numbers = #tpu.dot_dimension_numbers<[1], [0], [0], [1], [0, 0, 1, 1], [], []>} : vector<16x512xbf16>, vector<512x512xbf16>, vector<16x512xf32> -> vector<16x512xf32>
    %99 = arith.addf %57, %98 : vector<16x512xf32>
    %c8 = arith.constant 8 : index
    %c0_46 = arith.constant 0 : index
    %100 = vector.load %arg3[%c8, %c0_46] : memref<16x512xf32, #tpu.memory_space<vmem>>, vector<1x512xf32>
    %101 = vector.broadcast %100 : vector<1x512xf32> to vector<16x512xf32>
    %102 = arith.addf %99, %101 : vector<16x512xf32>
    %103 = arith.truncf %102 : vector<16x512xf32> to vector<16x512xbf16>
    %c0_47 = arith.constant 0 : index
    %c0_48 = arith.constant 0 : index
    %104 = vector.load %arg11[%c0_47, %c0_48] : memref<512x512xbf16, #tpu.memory_space<vmem>>, vector<512x512xbf16>
    %cst_49 = arith.constant dense<0.000000e+00> : vector<16x512xf32>
    %105 = tpu.matmul %103, %104, %cst_49 {dimension_numbers = #tpu.dot_dimension_numbers<[1], [0], [0], [1], [0, 0, 1, 1], [], []>} : vector<16x512xbf16>, vector<512x512xbf16>, vector<16x512xf32> -> vector<16x512xf32>
    %c9 = arith.constant 9 : index
    %c0_50 = arith.constant 0 : index
    %106 = vector.load %arg3[%c9, %c0_50] : memref<16x512xf32, #tpu.memory_space<vmem>>, vector<1x512xf32>
    %107 = vector.broadcast %106 : vector<1x512xf32> to vector<16x512xf32>
    %108 = arith.addf %105, %107 : vector<16x512xf32>
    %cst_51 = arith.constant dense<0.000000e+00> : vector<16xf32>
    %109 = vector.multi_reduction <add>, %108, %cst_51 [1] : vector<16x512xf32> to vector<16xf32>
    %110 = vector.shape_cast %109 : vector<16xf32> to vector<16x1xf32>
    %cst_52 = arith.constant 5.120000e+02 : f32
    %111 = vector.broadcast %cst_52 : f32 to vector<16x1xf32>
    %112 = arith.divf %110, %111 : vector<16x1xf32>
    %113 = arith.mulf %108, %108 : vector<16x512xf32>
    %cst_53 = arith.constant dense<0.000000e+00> : vector<16xf32>
    %114 = vector.multi_reduction <add>, %113, %cst_53 [1] : vector<16x512xf32> to vector<16xf32>
    %115 = vector.shape_cast %114 : vector<16xf32> to vector<16x1xf32>
    %cst_54 = arith.constant 5.120000e+02 : f32
    %116 = vector.broadcast %cst_54 : f32 to vector<16x1xf32>
    %117 = arith.divf %115, %116 : vector<16x1xf32>
    %118 = arith.mulf %112, %112 : vector<16x1xf32>
    %119 = arith.subf %117, %118 : vector<16x1xf32>
    %cst_55 = arith.constant 9.99999974E-6 : f32
    %120 = vector.broadcast %cst_55 : f32 to vector<16x1xf32>
    %121 = arith.addf %119, %120 : vector<16x1xf32>
    %122 = math.rsqrt %121 : vector<16x1xf32>
    %123 = vector.broadcast %112 : vector<16x1xf32> to vector<16x512xf32>
    %124 = arith.subf %108, %123 : vector<16x512xf32>
    %125 = vector.broadcast %122 : vector<16x1xf32> to vector<16x512xf32>
    %126 = arith.mulf %124, %125 : vector<16x512xf32>
    %c10 = arith.constant 10 : index
    %c0_56 = arith.constant 0 : index
    %127 = vector.load %arg3[%c10, %c0_56] : memref<16x512xf32, #tpu.memory_space<vmem>>, vector<1x512xf32>
    %128 = vector.broadcast %127 : vector<1x512xf32> to vector<16x512xf32>
    %129 = arith.mulf %126, %128 : vector<16x512xf32>
    %c11 = arith.constant 11 : index
    %c0_57 = arith.constant 0 : index
    %130 = vector.load %arg3[%c11, %c0_57] : memref<16x512xf32, #tpu.memory_space<vmem>>, vector<1x512xf32>
    %131 = vector.broadcast %130 : vector<1x512xf32> to vector<16x512xf32>
    %132 = arith.addf %129, %131 : vector<16x512xf32>
    %cst_58 = arith.constant 5.000000e-01 : f32
    %133 = vector.broadcast %cst_58 : f32 to vector<16x512xf32>
    %134 = arith.mulf %133, %132 : vector<16x512xf32>
    %135 = math.tanh %134 : vector<16x512xf32>
    %cst_59 = arith.constant 5.000000e-01 : f32
    %136 = vector.broadcast %cst_59 : f32 to vector<16x512xf32>
    %137 = arith.mulf %136, %135 : vector<16x512xf32>
    %cst_60 = arith.constant 5.000000e-01 : f32
    %138 = vector.broadcast %cst_60 : f32 to vector<16x512xf32>
    %139 = arith.addf %137, %138 : vector<16x512xf32>
    %140 = arith.mulf %132, %139 : vector<16x512xf32>
    %141 = arith.truncf %140 : vector<16x512xf32> to vector<16x512xbf16>
    %c0_61 = arith.constant 0 : index
    %c0_62 = arith.constant 0 : index
    %142 = vector.load %arg12[%c0_61, %c0_62] : memref<512x512xbf16, #tpu.memory_space<vmem>>, vector<512x512xbf16>
    %cst_63 = arith.constant dense<0.000000e+00> : vector<16x512xf32>
    %143 = tpu.matmul %141, %142, %cst_63 {dimension_numbers = #tpu.dot_dimension_numbers<[1], [0], [0], [1], [0, 0, 1, 1], [], []>} : vector<16x512xbf16>, vector<512x512xbf16>, vector<16x512xf32> -> vector<16x512xf32>
    %144 = arith.addf %102, %143 : vector<16x512xf32>
    %c12 = arith.constant 12 : index
    %c0_64 = arith.constant 0 : index
    %145 = vector.load %arg3[%c12, %c0_64] : memref<16x512xf32, #tpu.memory_space<vmem>>, vector<1x512xf32>
    %146 = vector.broadcast %145 : vector<1x512xf32> to vector<16x512xf32>
    %147 = arith.addf %144, %146 : vector<16x512xf32>
    %148 = arith.truncf %147 : vector<16x512xf32> to vector<16x512xbf16>
    %c0_65 = arith.constant 0 : index
    %c0_66 = arith.constant 0 : index
    %149 = vector.load %arg13[%c0_65, %c0_66] : memref<512x128xbf16, #tpu.memory_space<vmem>>, vector<512x128xbf16>
    %cst_67 = arith.constant dense<0.000000e+00> : vector<16x128xf32>
    %150 = tpu.matmul %148, %149, %cst_67 {dimension_numbers = #tpu.dot_dimension_numbers<[1], [0], [0], [1], [0, 0, 1, 1], [], []>} : vector<16x512xbf16>, vector<512x128xbf16>, vector<16x128xf32> -> vector<16x128xf32>
    %c13 = arith.constant 13 : index
    %c0_68 = arith.constant 0 : index
    %151 = vector.load %arg3[%c13, %c0_68] : memref<16x512xf32, #tpu.memory_space<vmem>>, vector<1x128xf32>
    %152 = vector.broadcast %151 : vector<1x128xf32> to vector<16x128xf32>
    %153 = arith.addf %150, %152 : vector<16x128xf32>
    %c0_69 = arith.constant 0 : index
    %c0_70 = arith.constant 0 : index
    %154 = vector.load %arg14[%c0_69, %c0_70] : memref<16x128xf32, #tpu.memory_space<vmem>>, vector<16x128xf32>
    tpu.vector_store %arg14[%c0_69, %c0_70], %153 {strides = array<i32>} : memref<16x128xf32, #tpu.memory_space<vmem>>, vector<16x128xf32>,
    return
  }
  func.func @transform_0(%arg0: i32) -> (i32, i32) {
    %c0_i32 = arith.constant 0 : i32
    %c0_i32_0 = arith.constant 0 : i32
    return %arg0, %c0_i32 : i32, i32
  }
  func.func @transform_1(%arg0: i32) -> (i32, i32) {
    %c0_i32 = arith.constant 0 : i32
    %c0_i32_0 = arith.constant 0 : i32
    return %arg0, %c0_i32 : i32, i32
  }
  func.func @transform_2(%arg0: i32) -> (i32, i32) {
    %c0_i32 = arith.constant 0 : i32
    %c0_i32_0 = arith.constant 0 : i32
    %c0_i32_1 = arith.constant 0 : i32
    return %c0_i32, %c0_i32_0 : i32, i32
  }
  func.func @transform_3(%arg0: i32) -> (i32, i32) {
    %c0_i32 = arith.constant 0 : i32
    %c0_i32_0 = arith.constant 0 : i32
    %c0_i32_1 = arith.constant 0 : i32
    return %c0_i32, %c0_i32_0 : i32, i32
  }
  func.func @transform_4(%arg0: i32) -> (i32, i32) {
    %c0_i32 = arith.constant 0 : i32
    %c0_i32_0 = arith.constant 0 : i32
    %c0_i32_1 = arith.constant 0 : i32
    return %c0_i32, %c0_i32_0 : i32, i32
  }
  func.func @transform_5(%arg0: i32) -> (i32, i32) {
    %c0_i32 = arith.constant 0 : i32
    %c0_i32_0 = arith.constant 0 : i32
    %c0_i32_1 = arith.constant 0 : i32
    return %c0_i32, %c0_i32_0 : i32, i32
  }
  func.func @transform_6(%arg0: i32) -> (i32, i32) {
    %c0_i32 = arith.constant 0 : i32
    %c0_i32_0 = arith.constant 0 : i32
    %c0_i32_1 = arith.constant 0 : i32
    return %c0_i32, %c0_i32_0 : i32, i32
  }
  func.func @transform_7(%arg0: i32) -> (i32, i32) {
    %c0_i32 = arith.constant 0 : i32
    %c0_i32_0 = arith.constant 0 : i32
    %c0_i32_1 = arith.constant 0 : i32
    return %c0_i32, %c0_i32_0 : i32, i32
  }
  func.func @transform_8(%arg0: i32) -> (i32, i32) {
    %c0_i32 = arith.constant 0 : i32
    %c0_i32_0 = arith.constant 0 : i32
    %c0_i32_1 = arith.constant 0 : i32
    return %c0_i32, %c0_i32_0 : i32, i32
  }
  func.func @transform_9(%arg0: i32) -> (i32, i32) {
    %c0_i32 = arith.constant 0 : i32
    %c0_i32_0 = arith.constant 0 : i32
    %c0_i32_1 = arith.constant 0 : i32
    return %c0_i32, %c0_i32_0 : i32, i32
  }
  func.func @transform_10(%arg0: i32) -> (i32, i32) {
    %c0_i32 = arith.constant 0 : i32
    %c0_i32_0 = arith.constant 0 : i32
    %c0_i32_1 = arith.constant 0 : i32
    return %c0_i32, %c0_i32_0 : i32, i32
  }
  func.func @transform_11(%arg0: i32) -> (i32, i32) {
    %c0_i32 = arith.constant 0 : i32
    %c0_i32_0 = arith.constant 0 : i32
    %c0_i32_1 = arith.constant 0 : i32
    return %c0_i32, %c0_i32_0 : i32, i32
  }
  func.func @transform_12(%arg0: i32) -> (i32, i32) {
    %c0_i32 = arith.constant 0 : i32
    %c0_i32_0 = arith.constant 0 : i32
    %c0_i32_1 = arith.constant 0 : i32
    return %c0_i32, %c0_i32_0 : i32, i32
  }
  func.func @transform_13(%arg0: i32) -> (i32, i32) {
    %c0_i32 = arith.constant 0 : i32
    %c0_i32_0 = arith.constant 0 : i32
    return %arg0, %c0_i32 : i32, i32
  }
}

module attributes {stable_mosaic.version = 11 : i64} {
  func.func @ddpm_kernel(%arg0: i32, %arg1: memref<16x128xf32, #tpu.memory_space<vmem>>, %arg2: memref<16x1xi32, #tpu.memory_space<vmem>>, %arg3: memref<16x512xf32, #tpu.memory_space<vmem>>, %arg4: memref<256x256xbf16, #tpu.memory_space<vmem>>, %arg5: memref<256x256xbf16, #tpu.memory_space<vmem>>, %arg6: memref<256x256xbf16, #tpu.memory_space<vmem>>, %arg7: memref<128x512xbf16, #tpu.memory_space<vmem>>, %arg8: memref<256x512xbf16, #tpu.memory_space<vmem>>, %arg9: memref<512x512xbf16, #tpu.memory_space<vmem>>, %arg10: memref<512x512xbf16, #tpu.memory_space<vmem>>, %arg11: memref<512x512xbf16, #tpu.memory_space<vmem>>, %arg12: memref<512x512xbf16, #tpu.memory_space<vmem>>, %arg13: memref<512x128xbf16, #tpu.memory_space<vmem>>, %arg14: memref<16x128xf32, #tpu.memory_space<vmem>>) attributes {dimension_semantics = [#tpu.dimension_semantics<parallel>], iteration_bounds = array<i64: 1>, scalar_prefetch = 0 : i64, scratch_operands = 0 : i64, tpu.core_type = #tpu.core_type<tc>, window_params = [{transform_indices = @transform_0, window_bounds = array<i64: 16, 128>}, {transform_indices = @transform_1, window_bounds = array<i64: 16, 1>}, {pipeline_mode = #tpu.pipeline_mode<synchronous>, transform_indices = @transform_2, window_bounds = array<i64: 16, 512>}, {pipeline_mode = #tpu.pipeline_mode<synchronous>, transform_indices = @transform_3, window_bounds = array<i64: 256, 256>}, {pipeline_mode = #tpu.pipeline_mode<synchronous>, transform_indices = @transform_4, window_bounds = array<i64: 256, 256>}, {pipeline_mode = #tpu.pipeline_mode<synchronous>, transform_indices = @transform_5, window_bounds = array<i64: 256, 256>}, {pipeline_mode = #tpu.pipeline_mode<synchronous>, transform_indices = @transform_6, window_bounds = array<i64: 128, 512>}, {pipeline_mode = #tpu.pipeline_mode<synchronous>, transform_indices = @transform_7, window_bounds = array<i64: 256, 512>}, {pipeline_mode = #tpu.pipeline_mode<synchronous>, transform_indices = @transform_8, window_bounds = array<i64: 512, 512>}, {pipeline_mode = #tpu.pipeline_mode<synchronous>, transform_indices = @transform_9, window_bounds = array<i64: 512, 512>}, {pipeline_mode = #tpu.pipeline_mode<synchronous>, transform_indices = @transform_10, window_bounds = array<i64: 512, 512>}, {pipeline_mode = #tpu.pipeline_mode<synchronous>, transform_indices = @transform_11, window_bounds = array<i64: 512, 512>}, {pipeline_mode = #tpu.pipeline_mode<synchronous>, transform_indices = @transform_12, window_bounds = array<i64: 512, 128>}, {transform_indices = @transform_13, window_bounds = array<i64: 16, 128>}]} {
    %c0 = arith.constant 0 : index
    %c0_0 = arith.constant 0 : index
    %0 = vector.load %arg2[%c0, %c0_0] : memref<16x1xi32, #tpu.memory_space<vmem>>, vector<16x1xi32>
    %1 = tpu.iota {dimensions = array<i32: 1>} : vector<16x256xi32>
    %2 = vector.broadcast %0 : vector<16x1xi32> to vector<16x256xi32>
    %3 = arith.cmpi eq, %2, %1 : vector<16x256xi32>
    %4 = arith.extui %3 : vector<16x256xi1> to vector<16x256xi32>
    %5 = arith.sitofp %4 : vector<16x256xi32> to vector<16x256xf32>
    %6 = arith.truncf %5 : vector<16x256xf32> to vector<16x256xbf16>
    %c0_1 = arith.constant 0 : index
    %c0_2 = arith.constant 0 : index
    %7 = vector.load %arg4[%c0_1, %c0_2] : memref<256x256xbf16, #tpu.memory_space<vmem>>, vector<256x256xbf16>
    %cst = arith.constant dense<0.000000e+00> : vector<16x256xf32>
    %8 = tpu.matmul %6, %7, %cst {dimension_numbers = #tpu.dot_dimension_numbers<[1], [0], [0], [1], [0, 0, 1, 1], [], []>} : vector<16x256xbf16>, vector<256x256xbf16>, vector<16x256xf32> -> vector<16x256xf32>
    %9 = arith.truncf %8 : vector<16x256xf32> to vector<16x256xbf16>
    %c0_3 = arith.constant 0 : index
    %c0_4 = arith.constant 0 : index
    %10 = vector.load %arg5[%c0_3, %c0_4] : memref<256x256xbf16, #tpu.memory_space<vmem>>, vector<256x256xbf16>
    %cst_5 = arith.constant dense<0.000000e+00> : vector<16x256xf32>
    %11 = tpu.matmul %9, %10, %cst_5 {dimension_numbers = #tpu.dot_dimension_numbers<[1], [0], [0], [1], [0, 0, 1, 1], [], []>} : vector<16x256xbf16>, vector<256x256xbf16>, vector<16x256xf32> -> vector<16x256xf32>
    %c0_6 = arith.constant 0 : index
    %c0_7 = arith.constant 0 : index
    %12 = vector.load %arg3[%c0_6, %c0_7] : memref<16x512xf32, #tpu.memory_space<vmem>>, vector<1x256xf32>
    %13 = vector.broadcast %12 : vector<1x256xf32> to vector<16x256xf32>
    %14 = arith.addf %11, %13 : vector<16x256xf32>
    %cst_8 = arith.constant 0.000000e+00 : f32
    %15 = vector.broadcast %cst_8 : f32 to vector<16x256xf32>
    %16 = arith.maximumf %14, %15 : vector<16x256xf32>
    %17 = arith.truncf %16 : vector<16x256xf32> to vector<16x256xbf16>
    %c0_9 = arith.constant 0 : index
    %c0_10 = arith.constant 0 : index
    %18 = vector.load %arg6[%c0_9, %c0_10] : memref<256x256xbf16, #tpu.memory_space<vmem>>, vector<256x256xbf16>
    %cst_11 = arith.constant dense<0.000000e+00> : vector<16x256xf32>
    %19 = tpu.matmul %17, %18, %cst_11 {dimension_numbers = #tpu.dot_dimension_numbers<[1], [0], [0], [1], [0, 0, 1, 1], [], []>} : vector<16x256xbf16>, vector<256x256xbf16>, vector<16x256xf32> -> vector<16x256xf32>
    %c1 = arith.constant 1 : index
    %c0_12 = arith.constant 0 : index
    %20 = vector.load %arg3[%c1, %c0_12] : memref<16x512xf32, #tpu.memory_space<vmem>>, vector<1x256xf32>
    %21 = vector.broadcast %20 : vector<1x256xf32> to vector<16x256xf32>
    %22 = arith.addf %19, %21 : vector<16x256xf32>
    %c0_13 = arith.constant 0 : index
    %c0_14 = arith.constant 0 : index
    %23 = vector.load %arg1[%c0_13, %c0_14] : memref<16x128xf32, #tpu.memory_space<vmem>>, vector<16x128xf32>
    %24 = arith.truncf %23 : vector<16x128xf32> to vector<16x128xbf16>
    %c0_15 = arith.constant 0 : index
    %c0_16 = arith.constant 0 : index
    %25 = vector.load %arg7[%c0_15, %c0_16] : memref<128x512xbf16, #tpu.memory_space<vmem>>, vector<128x512xbf16>
    %cst_17 = arith.constant dense<0.000000e+00> : vector<16x512xf32>
    %26 = tpu.matmul %24, %25, %cst_17 {dimension_numbers = #tpu.dot_dimension_numbers<[1], [0], [0], [1], [0, 0, 1, 1], [], []>} : vector<16x128xbf16>, vector<128x512xbf16>, vector<16x512xf32> -> vector<16x512xf32>
    %27 = arith.truncf %22 : vector<16x256xf32> to vector<16x256xbf16>
    %c0_18 = arith.constant 0 : index
    %c0_19 = arith.constant 0 : index
    %28 = vector.load %arg8[%c0_18, %c0_19] : memref<256x512xbf16, #tpu.memory_space<vmem>>, vector<256x512xbf16>
    %cst_20 = arith.constant dense<0.000000e+00> : vector<16x512xf32>
    %29 = tpu.matmul %27, %28, %cst_20 {dimension_numbers = #tpu.dot_dimension_numbers<[1], [0], [0], [1], [0, 0, 1, 1], [], []>} : vector<16x256xbf16>, vector<256x512xbf16>, vector<16x512xf32> -> vector<16x512xf32>
    %30 = arith.addf %26, %29 : vector<16x512xf32>
    %c2 = arith.constant 2 : index
    %c0_21 = arith.constant 0 : index
    %31 = vector.load %arg3[%c2, %c0_21] : memref<16x512xf32, #tpu.memory_space<vmem>>, vector<1x512xf32>
    %32 = vector.broadcast %31 : vector<1x512xf32> to vector<16x512xf32>
    %33 = arith.addf %30, %32 : vector<16x512xf32>
    %cst_22 = arith.constant dense<0.000000e+00> : vector<16xf32>
    %34 = vector.multi_reduction <add>, %33, %cst_22 [1] : vector<16x512xf32> to vector<16xf32>
    %35 = vector.shape_cast %34 : vector<16xf32> to vector<16x1xf32>
    %cst_23 = arith.constant 5.120000e+02 : f32
    %36 = vector.broadcast %cst_23 : f32 to vector<16x1xf32>
    %37 = arith.divf %35, %36 : vector<16x1xf32>
    %38 = arith.mulf %33, %33 : vector<16x512xf32>
    %cst_24 = arith.constant dense<0.000000e+00> : vector<16xf32>
    %39 = vector.multi_reduction <add>, %38, %cst_24 [1] : vector<16x512xf32> to vector<16xf32>
    %40 = vector.shape_cast %39 : vector<16xf32> to vector<16x1xf32>
    %cst_25 = arith.constant 5.120000e+02 : f32
    %41 = vector.broadcast %cst_25 : f32 to vector<16x1xf32>
    %42 = arith.divf %40, %41 : vector<16x1xf32>
    %43 = arith.mulf %37, %37 : vector<16x1xf32>
    %44 = arith.subf %42, %43 : vector<16x1xf32>
    %cst_26 = arith.constant 9.99999974E-6 : f32
    %45 = vector.broadcast %cst_26 : f32 to vector<16x1xf32>
    %46 = arith.addf %44, %45 : vector<16x1xf32>
    %47 = math.rsqrt %46 : vector<16x1xf32>
    %48 = vector.broadcast %37 : vector<16x1xf32> to vector<16x512xf32>
    %49 = arith.subf %33, %48 : vector<16x512xf32>
    %50 = vector.broadcast %47 : vector<16x1xf32> to vector<16x512xf32>
    %51 = arith.mulf %49, %50 : vector<16x512xf32>
    %c3 = arith.constant 3 : index
    %c0_27 = arith.constant 0 : index
    %52 = vector.load %arg3[%c3, %c0_27] : memref<16x512xf32, #tpu.memory_space<vmem>>, vector<1x512xf32>
    %53 = vector.broadcast %52 : vector<1x512xf32> to vector<16x512xf32>
    %54 = arith.mulf %51, %53 : vector<16x512xf32>
    %c4 = arith.constant 4 : index
    %c0_28 = arith.constant 0 : index
    %55 = vector.load %arg3[%c4, %c0_28] : memref<16x512xf32, #tpu.memory_space<vmem>>, vector<1x512xf32>
    %56 = vector.broadcast %55 : vector<1x512xf32> to vector<16x512xf32>
    %57 = arith.addf %54, %56 : vector<16x512xf32>
    %58 = arith.truncf %57 : vector<16x512xf32> to vector<16x512xbf16>
    %c0_29 = arith.constant 0 : index
    %c0_30 = arith.constant 0 : index
    %59 = vector.load %arg9[%c0_29, %c0_30] : memref<512x512xbf16, #tpu.memory_space<vmem>>, vector<512x512xbf16>
    %cst_31 = arith.constant dense<0.000000e+00> : vector<16x512xf32>
    %60 = tpu.matmul %58, %59, %cst_31 {dimension_numbers = #tpu.dot_dimension_numbers<[1], [0], [0], [1], [0, 0, 1, 1], [], []>} : vector<16x512xbf16>, vector<512x512xbf16>, vector<16x512xf32> -> vector<16x512xf32>
    %c5 = arith.constant 5 : index
    %c0_32 = arith.constant 0 : index
    %61 = vector.load %arg3[%c5, %c0_32] : memref<16x512xf32, #tpu.memory_space<vmem>>, vector<1x512xf32>
    %62 = vector.broadcast %61 : vector<1x512xf32> to vector<16x512xf32>
    %63 = arith.addf %60, %62 : vector<16x512xf32>
    %cst_33 = arith.constant dense<0.000000e+00> : vector<16xf32>
    %64 = vector.multi_reduction <add>, %63, %cst_33 [1] : vector<16x512xf32> to vector<16xf32>
    %65 = vector.shape_cast %64 : vector<16xf32> to vector<16x1xf32>
    %cst_34 = arith.constant 5.120000e+02 : f32
    %66 = vector.broadcast %cst_34 : f32 to vector<16x1xf32>
    %67 = arith.divf %65, %66 : vector<16x1xf32>
    %68 = arith.mulf %63, %63 : vector<16x512xf32>
    %cst_35 = arith.constant dense<0.000000e+00> : vector<16xf32>
    %69 = vector.multi_reduction <add>, %68, %cst_35 [1] : vector<16x512xf32> to vector<16xf32>
    %70 = vector.shape_cast %69 : vector<16xf32> to vector<16x1xf32>
    %cst_36 = arith.constant 5.120000e+02 : f32
    %71 = vector.broadcast %cst_36 : f32 to vector<16x1xf32>
    %72 = arith.divf %70, %71 : vector<16x1xf32>
    %73 = arith.mulf %67, %67 : vector<16x1xf32>
    %74 = arith.subf %72, %73 : vector<16x1xf32>
    %cst_37 = arith.constant 9.99999974E-6 : f32
    %75 = vector.broadcast %cst_37 : f32 to vector<16x1xf32>
    %76 = arith.addf %74, %75 : vector<16x1xf32>
    %77 = math.rsqrt %76 : vector<16x1xf32>
    %78 = vector.broadcast %67 : vector<16x1xf32> to vector<16x512xf32>
    %79 = arith.subf %63, %78 : vector<16x512xf32>
    %80 = vector.broadcast %77 : vector<16x1xf32> to vector<16x512xf32>
    %81 = arith.mulf %79, %80 : vector<16x512xf32>
    %c6 = arith.constant 6 : index
    %c0_38 = arith.constant 0 : index
    %82 = vector.load %arg3[%c6, %c0_38] : memref<16x512xf32, #tpu.memory_space<vmem>>, vector<1x512xf32>
    %83 = vector.broadcast %82 : vector<1x512xf32> to vector<16x512xf32>
    %84 = arith.mulf %81, %83 : vector<16x512xf32>
    %c7 = arith.constant 7 : index
    %c0_39 = arith.constant 0 : index
    %85 = vector.load %arg3[%c7, %c0_39] : memref<16x512xf32, #tpu.memory_space<vmem>>, vector<1x512xf32>
    %86 = vector.broadcast %85 : vector<1x512xf32> to vector<16x512xf32>
    %87 = arith.addf %84, %86 : vector<16x512xf32>
    %cst_40 = arith.constant 5.000000e-01 : f32
    %88 = vector.broadcast %cst_40 : f32 to vector<16x512xf32>
    %89 = arith.mulf %88, %87 : vector<16x512xf32>
    %90 = math.tanh %89 : vector<16x512xf32>
    %cst_41 = arith.constant 5.000000e-01 : f32
    %91 = vector.broadcast %cst_41 : f32 to vector<16x512xf32>
    %92 = arith.mulf %91, %90 : vector<16x512xf32>
    %cst_42 = arith.constant 5.000000e-01 : f32
    %93 = vector.broadcast %cst_42 : f32 to vector<16x512xf32>
    %94 = arith.addf %92, %93 : vector<16x512xf32>
    %95 = arith.mulf %87, %94 : vector<16x512xf32>
    %96 = arith.truncf %95 : vector<16x512xf32> to vector<16x512xbf16>
    %c0_43 = arith.constant 0 : index
    %c0_44 = arith.constant 0 : index
    %97 = vector.load %arg10[%c0_43, %c0_44] : memref<512x512xbf16, #tpu.memory_space<vmem>>, vector<512x512xbf16>
    %cst_45 = arith.constant dense<0.000000e+00> : vector<16x512xf32>
    %98 = tpu.matmul %96, %97, %cst_45 {dimension_numbers = #tpu.dot_dimension_numbers<[1], [0], [0], [1], [0, 0, 1, 1], [], []>} : vector<16x512xbf16>, vector<512x512xbf16>, vector<16x512xf32> -> vector<16x512xf32>
    %99 = arith.addf %57, %98 : vector<16x512xf32>
    %c8 = arith.constant 8 : index
    %c0_46 = arith.constant 0 : index
    %100 = vector.load %arg3[%c8, %c0_46] : memref<16x512xf32, #tpu.memory_space<vmem>>, vector<1x512xf32>
    %101 = vector.broadcast %100 : vector<1x512xf32> to vector<16x512xf32>
    %102 = arith.addf %99, %101 : vector<16x512xf32>
    %103 = arith.truncf %102 : vector<16x512xf32> to vector<16x512xbf16>
    %c0_47 = arith.constant 0 : index
    %c0_48 = arith.constant 0 : index
    %104 = vector.load %arg11[%c0_47, %c0_48] : memref<512x512xbf16, #tpu.memory_space<vmem>>, vector<512x512xbf16>
    %cst_49 = arith.constant dense<0.000000e+00> : vector<16x512xf32>
    %105 = tpu.matmul %103, %104, %cst_49 {dimension_numbers = #tpu.dot_dimension_numbers<[1], [0], [0], [1], [0, 0, 1, 1], [], []>} : vector<16x512xbf16>, vector<512x512xbf16>, vector<16x512xf32> -> vector<16x512xf32>
    %c9 = arith.constant 9 : index
    %c0_50 = arith.constant 0 : index
    %106 = vector.load %arg3[%c9, %c0_50] : memref<16x512xf32, #tpu.memory_space<vmem>>, vector<1x512xf32>
    %107 = vector.broadcast %106 : vector<1x512xf32> to vector<16x512xf32>
    %108 = arith.addf %105, %107 : vector<16x512xf32>
    %cst_51 = arith.constant dense<0.000000e+00> : vector<16xf32>
    %109 = vector.multi_reduction <add>, %108, %cst_51 [1] : vector<16x512xf32> to vector<16xf32>
    %110 = vector.shape_cast %109 : vector<16xf32> to vector<16x1xf32>
    %cst_52 = arith.constant 5.120000e+02 : f32
    %111 = vector.broadcast %cst_52 : f32 to vector<16x1xf32>
    %112 = arith.divf %110, %111 : vector<16x1xf32>
    %113 = arith.mulf %108, %108 : vector<16x512xf32>
    %cst_53 = arith.constant dense<0.000000e+00> : vector<16xf32>
    %114 = vector.multi_reduction <add>, %113, %cst_53 [1] : vector<16x512xf32> to vector<16xf32>
    %115 = vector.shape_cast %114 : vector<16xf32> to vector<16x1xf32>
    %cst_54 = arith.constant 5.120000e+02 : f32
    %116 = vector.broadcast %cst_54 : f32 to vector<16x1xf32>
    %117 = arith.divf %115, %116 : vector<16x1xf32>
    %118 = arith.mulf %112, %112 : vector<16x1xf32>
    %119 = arith.subf %117, %118 : vector<16x1xf32>
    %cst_55 = arith.constant 9.99999974E-6 : f32
    %120 = vector.broadcast %cst_55 : f32 to vector<16x1xf32>
    %121 = arith.addf %119, %120 : vector<16x1xf32>
    %122 = math.rsqrt %121 : vector<16x1xf32>
    %123 = vector.broadcast %112 : vector<16x1xf32> to vector<16x512xf32>
    %124 = arith.subf %108, %123 : vector<16x512xf32>
    %125 = vector.broadcast %122 : vector<16x1xf32> to vector<16x512xf32>
    %126 = arith.mulf %124, %125 : vector<16x512xf32>
    %c10 = arith.constant 10 : index
    %c0_56 = arith.constant 0 : index
    %127 = vector.load %arg3[%c10, %c0_56] : memref<16x512xf32, #tpu.memory_space<vmem>>, vector<1x512xf32>
    %128 = vector.broadcast %127 : vector<1x512xf32> to vector<16x512xf32>
    %129 = arith.mulf %126, %128 : vector<16x512xf32>
    %c11 = arith.constant 11 : index
    %c0_57 = arith.constant 0 : index
    %130 = vector.load %arg3[%c11, %c0_57] : memref<16x512xf32, #tpu.memory_space<vmem>>, vector<1x512xf32>
    %131 = vector.broadcast %130 : vector<1x512xf32> to vector<16x512xf32>
    %132 = arith.addf %129, %131 : vector<16x512xf32>
    %cst_58 = arith.constant 5.000000e-01 : f32
    %133 = vector.broadcast %cst_58 : f32 to vector<16x512xf32>
    %134 = arith.mulf %133, %132 : vector<16x512xf32>
    %135 = math.tanh %134 : vector<16x512xf32>
    %cst_59 = arith.constant 5.000000e-01 : f32
    %136 = vector.broadcast %cst_59 : f32 to vector<16x512xf32>
    %137 = arith.mulf %136, %135 : vector<16x512xf32>
    %cst_60 = arith.constant 5.000000e-01 : f32
    %138 = vector.broadcast %cst_60 : f32 to vector<16x512xf32>
    %139 = arith.addf %137, %138 : vector<16x512xf32>
    %140 = arith.mulf %132, %139 : vector<16x512xf32>
    %141 = arith.truncf %140 : vector<16x512xf32> to vector<16x512xbf16>
    %c0_61 = arith.constant 0 : index
    %c0_62 = arith.constant 0 : index
    %142 = vector.load %arg12[%c0_61, %c0_62] : memref<512x512xbf16, #tpu.memory_space<vmem>>, vector<512x512xbf16>
    %cst_63 = arith.constant dense<0.000000e+00> : vector<16x512xf32>
    %143 = tpu.matmul %141, %142, %cst_63 {dimension_numbers = #tpu.dot_dimension_numbers<[1], [0], [0], [1], [0, 0, 1, 1], [], []>} : vector<16x512xbf16>, vector<512x512xbf16>, vector<16x512xf32> -> vector<16x512xf32>
    %144 = arith.addf %102, %143 : vector<16x512xf32>
    %c12 = arith.constant 12 : index
    %c0_64 = arith.constant 0 : index
    %145 = vector.load %arg3[%c12, %c0_64] : memref<16x512xf32, #tpu.memory_space<vmem>>, vector<1x512xf32>
    %146 = vector.broadcast %145 : vector<1x512xf32> to vector<16x512xf32>
    %147 = arith.addf %144, %146 : vector<16x512xf32>
    %148 = arith.truncf %147 : vector<16x512xf32> to vector<16x512xbf16>
    %c0_65 = arith.constant 0 : index
    %c0_66 = arith.constant 0 : index
    %149 = vector.load %arg13[%c0_65, %c0_66] : memref<512x128xbf16, #tpu.memory_space<vmem>>, vector<512x128xbf16>
    %cst_67 = arith.constant dense<0.000000e+00> : vector<16x128xf32>
    %150 = tpu.matmul %148, %149, %cst_67 {dimension_numbers = #tpu.dot_dimension_numbers<[1], [0], [0], [1], [0, 0, 1, 1], [], []>} : vector<16x512xbf16>, vector<512x128xbf16>, vector<16x128xf32> -> vector<16x128xf32>
    %c13 = arith.constant 13 : index
    %c0_68 = arith.constant 0 : index
    %151 = vector.load %arg3[%c13, %c0_68] : memref<16x512xf32, #tpu.memory_space<vmem>>, vector<1x128xf32>
    %152 = vector.broadcast %151 : vector<1x128xf32> to vector<16x128xf32>
    %153 = arith.addf %150, %152 : vector<16x128xf32>
    %c0_69 = arith.constant 0 : index
    %c0_70 = arith.constant 0 : index
    %154 = vector.load %arg14[%c0_69, %c0_70] : memref<16x128xf32, #tpu.memory_space<vmem>>, vector<16x128xf32>
    tpu.vector_store %arg14[%c0_69, %c0_70], %153 {strides = array<i32>} : memref<16x128xf32, #tpu.memory_space<vmem>>, vector<16x128xf32>,
    return
  }
  func.func @transform_0(%arg0: i32) -> (i32, i32) {
    %c0_i32 = arith.constant 0 : i32
    %c0_i32_0 = arith.constant 0 : i32
    return %arg0, %c0_i32 : i32, i32
  }
  func.func @transform_1(%arg0: i32) -> (i32, i32) {
    %c0_i32 = arith.constant 0 : i32
    %c0_i32_0 = arith.constant 0 : i32
    return %arg0, %c0_i32 : i32, i32
  }
  func.func @transform_2(%arg0: i32) -> (i32, i32) {
    %c0_i32 = arith.constant 0 : i32
    %c0_i32_0 = arith.constant 0 : i32
    %c0_i32_1 = arith.constant 0 : i32
    return %c0_i32, %c0_i32_0 : i32, i32
  }
  func.func @transform_3(%arg0: i32) -> (i32, i32) {
    %c0_i32 = arith.constant 0 : i32
    %c0_i32_0 = arith.constant 0 : i32
    %c0_i32_1 = arith.constant 0 : i32
    return %c0_i32, %c0_i32_0 : i32, i32
  }
  func.func @transform_4(%arg0: i32) -> (i32, i32) {
    %c0_i32 = arith.constant 0 : i32
    %c0_i32_0 = arith.constant 0 : i32
    %c0_i32_1 = arith.constant 0 : i32
    return %c0_i32, %c0_i32_0 : i32, i32
  }
  func.func @transform_5(%arg0: i32) -> (i32, i32) {
    %c0_i32 = arith.constant 0 : i32
    %c0_i32_0 = arith.constant 0 : i32
    %c0_i32_1 = arith.constant 0 : i32
    return %c0_i32, %c0_i32_0 : i32, i32
  }
  func.func @transform_6(%arg0: i32) -> (i32, i32) {
    %c0_i32 = arith.constant 0 : i32
    %c0_i32_0 = arith.constant 0 : i32
    %c0_i32_1 = arith.constant 0 : i32
    return %c0_i32, %c0_i32_0 : i32, i32
  }
  func.func @transform_7(%arg0: i32) -> (i32, i32) {
    %c0_i32 = arith.constant 0 : i32
    %c0_i32_0 = arith.constant 0 : i32
    %c0_i32_1 = arith.constant 0 : i32
    return %c0_i32, %c0_i32_0 : i32, i32
  }
  func.func @transform_8(%arg0: i32) -> (i32, i32) {
    %c0_i32 = arith.constant 0 : i32
    %c0_i32_0 = arith.constant 0 : i32
    %c0_i32_1 = arith.constant 0 : i32
    return %c0_i32, %c0_i32_0 : i32, i32
  }
  func.func @transform_9(%arg0: i32) -> (i32, i32) {
    %c0_i32 = arith.constant 0 : i32
    %c0_i32_0 = arith.constant 0 : i32
    %c0_i32_1 = arith.constant 0 : i32
    return %c0_i32, %c0_i32_0 : i32, i32
  }
  func.func @transform_10(%arg0: i32) -> (i32, i32) {
    %c0_i32 = arith.constant 0 : i32
    %c0_i32_0 = arith.constant 0 : i32
    %c0_i32_1 = arith.constant 0 : i32
    return %c0_i32, %c0_i32_0 : i32, i32
  }
  func.func @transform_11(%arg0: i32) -> (i32, i32) {
    %c0_i32 = arith.constant 0 : i32
    %c0_i32_0 = arith.constant 0 : i32
    %c0_i32_1 = arith.constant 0 : i32
    return %c0_i32, %c0_i32_0 : i32, i32
  }
  func.func @transform_12(%arg0: i32) -> (i32, i32) {
    %c0_i32 = arith.constant 0 : i32
    %c0_i32_0 = arith.constant 0 : i32
    %c0_i32_1 = arith.constant 0 : i32
    return %c0_i32, %c0_i32_0 : i32, i32
  }
  func.func @transform_13(%arg0: i32) -> (i32, i32) {
    %c0_i32 = arith.constant 0 : i32
    %c0_i32_0 = arith.constant 0 : i32
    return %arg0, %c0_i32 : i32, i32
  }
}

</mosaic_0001>

<llo_original>
// kernel: _ddpm_forward_impl.1
$region0: #{_ddpm_forward_impl.1}
  #allocation0 [shape = 'u32[]', space=smem, size = 0x4, offset = 0x4, fixed_abs, tag = 'smem constant byte address 0x4 - core index']
  #allocation1 [shape = 'u32[144,128]{1,0:T(1,128)}', space=vmem, size = 0x12000, scoped, tag = 'internal scratch']
  %s0 = inlined_call_operand.vmem [shape: f32[16,128], index: 0, kind: input, shape index: {}]
  %s1 = inlined_call_operand.vmem [shape: s32[16,1], index: 1, kind: input, shape index: {}]
  %s2 = inlined_call_operand.vmem [shape: f32[16,512], index: 2, kind: input, shape index: {}]
  %s3 = inlined_call_operand.hbm [shape: bf16[256,256], index: 3, kind: input, shape index: {}]
  %s4 = inlined_call_operand.hbm [shape: bf16[256,256], index: 4, kind: input, shape index: {}]
  %s5 = inlined_call_operand.hbm [shape: bf16[256,256], index: 5, kind: input, shape index: {}]
  %s6 = inlined_call_operand.hbm [shape: bf16[128,512], index: 6, kind: input, shape index: {}]
  %s7 = inlined_call_operand.hbm [shape: bf16[256,512], index: 7, kind: input, shape index: {}]
  %s8 = inlined_call_operand.hbm [shape: bf16[512,512], index: 8, kind: input, shape index: {}]
  %s9 = inlined_call_operand.hbm [shape: bf16[512,512], index: 9, kind: input, shape index: {}]
  %s10 = inlined_call_operand.hbm [shape: bf16[512,512], index: 10, kind: input, shape index: {}]
  %s11 = inlined_call_operand.hbm [shape: bf16[512,512], index: 11, kind: input, shape index: {}]
  %s12 = inlined_call_operand.hbm [shape: bf16[512,128], index: 12, kind: input, shape index: {}]
  %s13 = inlined_call_operand.vmem [shape: f32[16,128], index: 13, kind: output, shape index: {}]
  %s14 = sld [smem:[#allocation0]]
  $region102: #{_ddpm_forward_impl.1} parent=0
    _
  %s16 = ssub.s32 1, %s14
  %s17 = scalar_select 0, %s16, %s14
  $region1: #{_ddpm_forward_impl.1} parent=0
    #allocation2 [shape = 'u8[131072]{0}', space=vmem, size = 0x20000, scoped, tag = 'input window, operand 3, single buffered']
    #allocation3 [shape = 's32[1]{0}', space=sflag, size = 0x4, scoped, tag = 'scoped memory for _ddpm_forward_impl.1']
    #allocation4 [shape = 'u8[131072]{0}', space=vmem, size = 0x20000, scoped, tag = 'input window, operand 4, single buffered']
    #allocation5 [shape = 's32[1]{0}', space=sflag, size = 0x4, scoped, tag = 'scoped memory for _ddpm_forward_impl.1']
    #allocation6 [shape = 'u8[131072]{0}', space=vmem, size = 0x20000, scoped, tag = 'input window, operand 5, single buffered']
    #allocation7 [shape = 'u8[131072]{0}', space=vmem, size = 0x20000, scoped, tag = 'input window, operand 6, single buffered']
    #allocation8 [shape = 's32[1]{0}', space=sflag, size = 0x4, scoped, tag = 'scoped memory for _ddpm_forward_impl.1']
    #allocation9 [shape = 'u8[262144]{0}', space=vmem, size = 0x40000, scoped, tag = 'input window, operand 7, single buffered']
    #allocation10 [shape = 'u8[524288]{0}', space=vmem, size = 0x80000, scoped, tag = 'input window, operand 8, single buffered']
    #allocation11 [shape = 's32[1]{0}', space=sflag, size = 0x4, scoped, tag = 'scoped memory for _ddpm_forward_impl.1']
    #allocation12 [shape = 'u8[524288]{0}', space=vmem, size = 0x80000, scoped, tag = 'input window, operand 9, single buffered']
    #allocation13 [shape = 'u8[524288]{0}', space=vmem, size = 0x80000, scoped, tag = 'input window, operand 10, single buffered']
    #allocation14 [shape = 's32[1]{0}', space=sflag, size = 0x4, scoped, tag = 'scoped memory for _ddpm_forward_impl.1']
    #allocation15 [shape = 'u8[524288]{0}', space=vmem, size = 0x80000, scoped, tag = 'input window, operand 11, single buffered']
    #allocation16 [shape = 'u8[131072]{0}', space=vmem, size = 0x20000, scoped, tag = 'input window, operand 12, single buffered']
    #allocation17 [shape = 's32[1]{0}', space=sflag, size = 0x4, scoped, tag = 'scoped memory for _ddpm_forward_impl.1']
    %18 = vsyncpa [#allocation3], 0
    %19 = vsyncpa [#allocation5], 0
    %20 = vsyncpa [#allocation8], 0
    %21 = vsyncpa [#allocation11], 0
    %22 = vsyncpa [#allocation14], 0
    %23 = vsyncpa [#allocation17], 0
    // Predicated region
    $region2: #{_ddpm_forward_impl.1} parent=1 // pred_check
      _
    $region3: #{_ddpm_forward_impl.1} parent=1 // pred_check_branch
      %25 = sbr.rel (0) target = $region5
    $region4: #{_ddpm_forward_impl.1} parent=1 // pred_region
      _
    $region5: #{_ddpm_forward_impl.1} parent=1 // pred_fallthru
      _
    // Predicated region
    $region6: #{_ddpm_forward_impl.1} parent=1 // pred_check
      _
    $region7: #{_ddpm_forward_impl.1} parent=1 // pred_check_branch
      %27 = sbr.rel (0) target = $region9
    $region8: #{_ddpm_forward_impl.1} parent=1 // pred_region
      _
    $region9: #{_ddpm_forward_impl.1} parent=1 // pred_fallthru
      _
    // Predicated region
    $region10: #{_ddpm_forward_impl.1} parent=1 // pred_check
      _
    $region11: #{_ddpm_forward_impl.1} parent=1 // pred_check_branch
      %29 = sbr.rel (0) target = $region13
    $region12: #{_ddpm_forward_impl.1} parent=1 // pred_region
      _
    $region13: #{_ddpm_forward_impl.1} parent=1 // pred_fallthru
      _
    // Predicated region
    $region14: #{_ddpm_forward_impl.1} parent=1 // pred_check
      _
    $region15: #{_ddpm_forward_impl.1} parent=1 // pred_check_branch
      %31 = sbr.rel (0) target = $region17
    $region16: #{_ddpm_forward_impl.1} parent=1 // pred_region
      %s33 = ssub.s32 4096, 4096
      %34 = vsyncadd [#allocation3], %s33
      %s35 = sshll.u32 [#allocation2], 4
      %s36 = int_to_ptr.vmem [resolvable:$true] %s35
      %41 = dma.hbm_to_vmem [thread:$0]  %s3, 4096, %s36, [#allocation3], 128, 128, 8
    $region17: #{_ddpm_forward_impl.1} parent=1 // pred_fallthru
      _
    // Predicated region
    $region18: #{_ddpm_forward_impl.1} parent=1 // pred_check
      _
    $region19: #{_ddpm_forward_impl.1} parent=1 // pred_check_branch
      %43 = sbr.rel (0) target = $region21
    $region20: #{_ddpm_forward_impl.1} parent=1 // pred_region
      %s45 = ssub.s32 4096, 4096
      %46 = vsyncadd [#allocation5], %s45
      %s47 = sshll.u32 [#allocation4], 4
      %s48 = int_to_ptr.vmem [resolvable:$true] %s47
      %53 = dma.hbm_to_vmem [thread:$0]  %s4, 4096, %s48, [#allocation5], 128, 128, 8
    $region21: #{_ddpm_forward_impl.1} parent=1 // pred_fallthru
      _
    // Predicated region
    $region22: #{_ddpm_forward_impl.1} parent=1 // pred_check
      _
    $region23: #{_ddpm_forward_impl.1} parent=1 // pred_check_branch
      %55 = sbr.rel (0) target = $region25
    $region24: #{_ddpm_forward_impl.1} parent=1 // pred_region
      %s57 = ssub.s32 4096, 4096
      %58 = vsyncadd [#allocation5], %s57
      %s59 = sshll.u32 [#allocation6], 4
      %s60 = int_to_ptr.vmem [resolvable:$true] %s59
      %65 = dma.hbm_to_vmem [thread:$0]  %s5, 4096, %s60, [#allocation5], 128, 128, 8
    $region25: #{_ddpm_forward_impl.1} parent=1 // pred_fallthru
      _
    // Predicated region
    $region26: #{_ddpm_forward_impl.1} parent=1 // pred_check
      _
    $region27: #{_ddpm_forward_impl.1} parent=1 // pred_check_branch
      %67 = sbr.rel (0) target = $region29
    $region28: #{_ddpm_forward_impl.1} parent=1 // pred_region
      %s69 = ssub.s32 4096, 4096
      %70 = vsyncadd [#allocation8], %s69
      %s71 = sshll.u32 [#allocation7], 4
      %s72 = int_to_ptr.vmem [resolvable:$true] %s71
      %77 = dma.hbm_to_vmem [thread:$0]  %s6, 4096, %s72, [#allocation8], 256, 256, 16
    $region29: #{_ddpm_forward_impl.1} parent=1 // pred_fallthru
      _
    // Predicated region
    $region30: #{_ddpm_forward_impl.1} parent=1 // pred_check
      _
    $region31: #{_ddpm_forward_impl.1} parent=1 // pred_check_branch
      %79 = sbr.rel (0) target = $region33
    $region32: #{_ddpm_forward_impl.1} parent=1 // pred_region
      %s81 = ssub.s32 8192, 8192
      %82 = vsyncadd [#allocation8], %s81
      %s83 = sshll.u32 [#allocation9], 4
      %s84 = int_to_ptr.vmem [resolvable:$true] %s83
      %89 = dma.hbm_to_vmem [thread:$0]  %s7, 8192, %s84, [#allocation8], 256, 256, 16
    $region33: #{_ddpm_forward_impl.1} parent=1 // pred_fallthru
      _
    // Predicated region
    $region34: #{_ddpm_forward_impl.1} parent=1 // pred_check
      _
    $region35: #{_ddpm_forward_impl.1} parent=1 // pred_check_branch
      %91 = sbr.rel (0) target = $region37
    $region36: #{_ddpm_forward_impl.1} parent=1 // pred_region
      %s93 = ssub.s32 16384, 16384
      %94 = vsyncadd [#allocation11], %s93
      %s95 = sshll.u32 [#allocation10], 4
      %s96 = int_to_ptr.vmem [resolvable:$true] %s95
      %101 = dma.hbm_to_vmem [thread:$0]  %s8, 16384, %s96, [#allocation11], 256, 256, 16
    $region37: #{_ddpm_forward_impl.1} parent=1 // pred_fallthru
      _
    // Predicated region
    $region38: #{_ddpm_forward_impl.1} parent=1 // pred_check
      _
    $region39: #{_ddpm_forward_impl.1} parent=1 // pred_check_branch
      %103 = sbr.rel (0) target = $region41
    $region40: #{_ddpm_forward_impl.1} parent=1 // pred_region
      %s105 = ssub.s32 16384, 16384
      %106 = vsyncadd [#allocation11], %s105
      %s107 = sshll.u32 [#allocation12], 4
      %s108 = int_to_ptr.vmem [resolvable:$true] %s107
      %113 = dma.hbm_to_vmem [thread:$0]  %s9, 16384, %s108, [#allocation11], 256, 256, 16
    $region41: #{_ddpm_forward_impl.1} parent=1 // pred_fallthru
      _
    // Predicated region
    $region42: #{_ddpm_forward_impl.1} parent=1 // pred_check
      _
    $region43: #{_ddpm_forward_impl.1} parent=1 // pred_check_branch
      %115 = sbr.rel (0) target = $region45
    $region44: #{_ddpm_forward_impl.1} parent=1 // pred_region
      %s117 = ssub.s32 16384, 16384
      %118 = vsyncadd [#allocation14], %s117
      %s119 = sshll.u32 [#allocation13], 4
      %s120 = int_to_ptr.vmem [resolvable:$true] %s119
      %125 = dma.hbm_to_vmem [thread:$0]  %s10, 16384, %s120, [#allocation14], 256, 256, 16
    $region45: #{_ddpm_forward_impl.1} parent=1 // pred_fallthru
      _
    // Predicated region
    $region46: #{_ddpm_forward_impl.1} parent=1 // pred_check
      _
    $region47: #{_ddpm_forward_impl.1} parent=1 // pred_check_branch
      %127 = sbr.rel (0) target = $region49
    $region48: #{_ddpm_forward_impl.1} parent=1 // pred_region
      %s129 = ssub.s32 16384, 16384
      %130 = vsyncadd [#allocation14], %s129
      %s131 = sshll.u32 [#allocation15], 4
      %s132 = int_to_ptr.vmem [resolvable:$true] %s131
      %137 = dma.hbm_to_vmem [thread:$0]  %s11, 16384, %s132, [#allocation14], 256, 256, 16
    $region49: #{_ddpm_forward_impl.1} parent=1 // pred_fallthru
      _
    // Predicated region
    $region50: #{_ddpm_forward_impl.1} parent=1 // pred_check
      _
    $region51: #{_ddpm_forward_impl.1} parent=1 // pred_check_branch
      %139 = sbr.rel (0) target = $region53
    $region52: #{_ddpm_forward_impl.1} parent=1 // pred_region
      %s141 = ssub.s32 4096, 4096
      %142 = vsyncadd [#allocation17], %s141
      %s143 = sshll.u32 [#allocation16], 4
      %s144 = int_to_ptr.vmem [resolvable:$true] %s143
      %149 = dma.hbm_to_vmem [thread:$0]  %s12, 4096, %s144, [#allocation17], 64, 64, 4
    $region53: #{_ddpm_forward_impl.1} parent=1 // pred_fallthru
      _
    // Predicated region
    $region54: #{_ddpm_forward_impl.1} parent=1 // pred_check
      _
    $region55: #{_ddpm_forward_impl.1} parent=1 // pred_check_branch
      %151 = sbr.rel (0) target = $region57
    $region56: #{_ddpm_forward_impl.1} parent=1 // pred_region
      %152 = dma.done [#allocation3], 4096
    $region57: #{_ddpm_forward_impl.1} parent=1 // pred_fallthru
      _
    // Predicated region
    $region58: #{_ddpm_forward_impl.1} parent=1 // pred_check
      _
    $region59: #{_ddpm_forward_impl.1} parent=1 // pred_check_branch
      %154 = sbr.rel (0) target = $region61
    $region60: #{_ddpm_forward_impl.1} parent=1 // pred_region
      %155 = dma.done [#allocation5], 4096
    $region61: #{_ddpm_forward_impl.1} parent=1 // pred_fallthru
      _
    // Predicated region
    $region62: #{_ddpm_forward_impl.1} parent=1 // pred_check
      _
    $region63: #{_ddpm_forward_impl.1} parent=1 // pred_check_branch
      %157 = sbr.rel (0) target = $region65
    $region64: #{_ddpm_forward_impl.1} parent=1 // pred_region
      %158 = dma.done [#allocation5], 4096
    $region65: #{_ddpm_forward_impl.1} parent=1 // pred_fallthru
      _
    // Predicated region
    $region66: #{_ddpm_forward_impl.1} parent=1 // pred_check
      _
    $region67: #{_ddpm_forward_impl.1} parent=1 // pred_check_branch
      %160 = sbr.rel (0) target = $region69
    $region68: #{_ddpm_forward_impl.1} parent=1 // pred_region
      %161 = dma.done [#allocation8], 4096
    $region69: #{_ddpm_forward_impl.1} parent=1 // pred_fallthru
      _
    // Predicated region
    $region70: #{_ddpm_forward_impl.1} parent=1 // pred_check
      _
    $region71: #{_ddpm_forward_impl.1} parent=1 // pred_check_branch
      %163 = sbr.rel (0) target = $region73
    $region72: #{_ddpm_forward_impl.1} parent=1 // pred_region
      %164 = dma.done [#allocation8], 8192
    $region73: #{_ddpm_forward_impl.1} parent=1 // pred_fallthru
      _
    // Predicated region
    $region74: #{_ddpm_forward_impl.1} parent=1 // pred_check
      _
    $region75: #{_ddpm_forward_impl.1} parent=1 // pred_check_branch
      %166 = sbr.rel (0) target = $region77
    $region76: #{_ddpm_forward_impl.1} parent=1 // pred_region
      %167 = dma.done [#allocation11], 16384
    $region77: #{_ddpm_forward_impl.1} parent=1 // pred_fallthru
      _
    // Predicated region
    $region78: #{_ddpm_forward_impl.1} parent=1 // pred_check
      _
    $region79: #{_ddpm_forward_impl.1} parent=1 // pred_check_branch
      %169 = sbr.rel (0) target = $region81
    $region80: #{_ddpm_forward_impl.1} parent=1 // pred_region
      %170 = dma.done [#allocation11], 16384
    $region81: #{_ddpm_forward_impl.1} parent=1 // pred_fallthru
      _
    // Predicated region
    $region82: #{_ddpm_forward_impl.1} parent=1 // pred_check
      _
    $region83: #{_ddpm_forward_impl.1} parent=1 // pred_check_branch
      %172 = sbr.rel (0) target = $region85
    $region84: #{_ddpm_forward_impl.1} parent=1 // pred_region
      %173 = dma.done [#allocation14], 16384
    $region85: #{_ddpm_forward_impl.1} parent=1 // pred_fallthru
      _
    // Predicated region
    $region86: #{_ddpm_forward_impl.1} parent=1 // pred_check
      _
    $region87: #{_ddpm_forward_impl.1} parent=1 // pred_check_branch
      %175 = sbr.rel (0) target = $region89
    $region88: #{_ddpm_forward_impl.1} parent=1 // pred_region
      %176 = dma.done [#allocation14], 16384
    $region89: #{_ddpm_forward_impl.1} parent=1 // pred_fallthru
      _
    // Predicated region
    $region90: #{_ddpm_forward_impl.1} parent=1 // pred_check
      _
    $region91: #{_ddpm_forward_impl.1} parent=1 // pred_check_branch
      %178 = sbr.rel (0) target = $region93
    $region92: #{_ddpm_forward_impl.1} parent=1 // pred_region
      %179 = dma.done [#allocation17], 4096
    $region93: #{_ddpm_forward_impl.1} parent=1 // pred_fallthru
      _
    %v181 = vld [vmem:[%s1] sm:$0xff]
    %v182 = vld [vmem:[%s1 + $0x8] sm:$0xff]
    %v183 = vlaneseq
    %v184 = vand.u32 %v183, 127
    %v185 = vadd.s32 %v184, 128
    %186 = vset.pattern.permute.xlu0 0
    %187 = vperm.xlu0 %186, %v181
    %v188 = vpop.permute.xlu0 %187
    %189 = vset.pattern.permute.xlu0 0
    %190 = vperm.xlu0 %189, %v182
    %v191 = vpop.permute.xlu0 %190
    %vm192 = vcmp.eq.s32.totalorder %v188, %v184
    %vm193 = vcmp.eq.s32.totalorder %v188, %v185
    %vm194 = vcmp.eq.s32.totalorder %v191, %v184
    %vm195 = vcmp.eq.s32.totalorder %v191, %v185
    %v196 = vsel %vm192, 1, 0
    %v197 = vsel %vm193, 1, 0
    %v198 = vsel %vm194, 1, 0
    %v199 = vsel %vm195, 1, 0
    %v200 = vcvt.s32.f32 %v196
    %v201 = vcvt.s32.f32 %v197
    %v202 = vcvt.s32.f32 %v198
    %v203 = vcvt.s32.f32 %v199
    %v204 = vpack.c.bf16 %v202, %v200
    %v205 = vpack.c.bf16 %v203, %v201
    %v206 = vld [vmem:[#allocation2] sm:$0xff]
    %v207 = vld [vmem:[#allocation2 + $0x8] sm:$0xff]
    %v208 = vld [vmem:[#allocation2 + $0x10] sm:$0xff]
    %v209 = vld [vmem:[#allocation2 + $0x18] sm:$0xff]
    %v210 = vld [vmem:[#allocation2 + $0x20] sm:$0xff]
    %v211 = vld [vmem:[#allocation2 + $0x28] sm:$0xff]
    %v212 = vld [vmem:[#allocation2 + $0x30] sm:$0xff]
    %v213 = vld [vmem:[#allocation2 + $0x38] sm:$0xff]
    %v214 = vld [vmem:[#allocation2 + $0x40] sm:$0xff]
    %v215 = vld [vmem:[#allocation2 + $0x48] sm:$0xff]
    %v216 = vld [vmem:[#allocation2 + $0x50] sm:$0xff]
    %v217 = vld [vmem:[#allocation2 + $0x58] sm:$0xff]
    %v218 = vld [vmem:[#allocation2 + $0x60] sm:$0xff]
    %v219 = vld [vmem:[#allocation2 + $0x68] sm:$0xff]
    %v220 = vld [vmem:[#allocation2 + $0x70] sm:$0xff]
    %v221 = vld [vmem:[#allocation2 + $0x78] sm:$0xff]
    %v222 = vld [vmem:[#allocation2 + $0x80] sm:$0xff]
    %v223 = vld [vmem:[#allocation2 + $0x88] sm:$0xff]
    %v224 = vld [vmem:[#allocation2 + $0x90] sm:$0xff]
    %v225 = vld [vmem:[#allocation2 + $0x98] sm:$0xff]
    %v226 = vld [vmem:[#allocation2 + $0xa0] sm:$0xff]
    %v227 = vld [vmem:[#allocation2 + $0xa8] sm:$0xff]
    %v228 = vld [vmem:[#allocation2 + $0xb0] sm:$0xff]
    %v229 = vld [vmem:[#allocation2 + $0xb8] sm:$0xff]
    %v230 = vld [vmem:[#allocation2 + $0xc0] sm:$0xff]
    %v231 = vld [vmem:[#allocation2 + $0xc8] sm:$0xff]
    %v232 = vld [vmem:[#allocation2 + $0xd0] sm:$0xff]
    %v233 = vld [vmem:[#allocation2 + $0xd8] sm:$0xff]
    %v234 = vld [vmem:[#allocation2 + $0xe0] sm:$0xff]
    %v235 = vld [vmem:[#allocation2 + $0xe8] sm:$0xff]
    %v236 = vld [vmem:[#allocation2 + $0xf0] sm:$0xff]
    %v237 = vld [vmem:[#allocation2 + $0xf8] sm:$0xff]
    %v270 = vunpack.c.l.b16 %v206
    %v271 = vunpack.c.h.b16 %v206
    %v272 = vunpack.c.l.b16 %v207
    %v273 = vunpack.c.h.b16 %v207
    %v274 = vunpack.c.l.b16 %v208
    %v275 = vunpack.c.h.b16 %v208
    %v276 = vunpack.c.l.b16 %v209
    %v277 = vunpack.c.h.b16 %v209
    %v278 = vunpack.c.l.b16 %v210
    %v279 = vunpack.c.h.b16 %v210
    %v280 = vunpack.c.l.b16 %v211
    %v281 = vunpack.c.h.b16 %v211
    %v282 = vunpack.c.l.b16 %v212
    %v283 = vunpack.c.h.b16 %v212
    %v284 = vunpack.c.l.b16 %v213
    %v285 = vunpack.c.h.b16 %v213
    %v286 = vunpack.c.l.b16 %v214
    %v287 = vunpack.c.h.b16 %v214
    %v288 = vunpack.c.l.b16 %v215
    %v289 = vunpack.c.h.b16 %v215
    %v290 = vunpack.c.l.b16 %v216
    %v291 = vunpack.c.h.b16 %v216
    %v292 = vunpack.c.l.b16 %v217
    %v293 = vunpack.c.h.b16 %v217
    %v294 = vunpack.c.l.b16 %v218
    %v295 = vunpack.c.h.b16 %v218
    %v296 = vunpack.c.l.b16 %v219
    %v297 = vunpack.c.h.b16 %v219
    %v298 = vunpack.c.l.b16 %v220
    %v299 = vunpack.c.h.b16 %v220
    %v300 = vunpack.c.l.b16 %v221
    %v301 = vunpack.c.h.b16 %v221
    %v302 = vunpack.c.l.b16 %v222
    %v303 = vunpack.c.h.b16 %v222
    %v304 = vunpack.c.l.b16 %v223
    %v305 = vunpack.c.h.b16 %v223
    %v306 = vunpack.c.l.b16 %v224
    %v307 = vunpack.c.h.b16 %v224
    %v308 = vunpack.c.l.b16 %v225
    %v309 = vunpack.c.h.b16 %v225
    %v310 = vunpack.c.l.b16 %v226
    %v311 = vunpack.c.h.b16 %v226
    %v312 = vunpack.c.l.b16 %v227
    %v313 = vunpack.c.h.b16 %v227
    %v314 = vunpack.c.l.b16 %v228
    %v315 = vunpack.c.h.b16 %v228
    %v316 = vunpack.c.l.b16 %v229
    %v317 = vunpack.c.h.b16 %v229
    %v318 = vunpack.c.l.b16 %v230
    %v319 = vunpack.c.h.b16 %v230
    %v320 = vunpack.c.l.b16 %v231
    %v321 = vunpack.c.h.b16 %v231
    %v322 = vunpack.c.l.b16 %v232
    %v323 = vunpack.c.h.b16 %v232
    %v324 = vunpack.c.l.b16 %v233
    %v325 = vunpack.c.h.b16 %v233
    %v326 = vunpack.c.l.b16 %v234
    %v327 = vunpack.c.h.b16 %v234
    %v328 = vunpack.c.l.b16 %v235
    %v329 = vunpack.c.h.b16 %v235
    %v330 = vunpack.c.l.b16 %v236
    %v331 = vunpack.c.h.b16 %v236
    %v332 = vunpack.c.l.b16 %v237
    %v333 = vunpack.c.h.b16 %v237
    %v334 = vpack.c.b16 %v272, %v270
    %v335 = vpack.c.b16 %v273, %v271
    %v336 = vpack.c.b16 %v276, %v274
    %v337 = vpack.c.b16 %v277, %v275
    %v338 = vpack.c.b16 %v280, %v278
    %v339 = vpack.c.b16 %v281, %v279
    %v340 = vpack.c.b16 %v284, %v282
    %v341 = vpack.c.b16 %v285, %v283
    %v342 = vpack.c.b16 %v288, %v286
    %v343 = vpack.c.b16 %v289, %v287
    %v344 = vpack.c.b16 %v292, %v290
    %v345 = vpack.c.b16 %v293, %v291
    %v346 = vpack.c.b16 %v296, %v294
    %v347 = vpack.c.b16 %v297, %v295
    %v348 = vpack.c.b16 %v300, %v298
    %v349 = vpack.c.b16 %v301, %v299
    %v350 = vpack.c.b16 %v304, %v302
    %v351 = vpack.c.b16 %v305, %v303
    %v352 = vpack.c.b16 %v308, %v306
    %v353 = vpack.c.b16 %v309, %v307
    %v354 = vpack.c.b16 %v312, %v310
    %v355 = vpack.c.b16 %v313, %v311
    %v356 = vpack.c.b16 %v316, %v314
    %v357 = vpack.c.b16 %v317, %v315
    %v358 = vpack.c.b16 %v320, %v318
    %v359 = vpack.c.b16 %v321, %v319
    %v360 = vpack.c.b16 %v324, %v322
    %v361 = vpack.c.b16 %v325, %v323
    %v362 = vpack.c.b16 %v328, %v326
    %v363 = vpack.c.b16 %v329, %v327
    %v364 = vpack.c.b16 %v332, %v330
    %v365 = vpack.c.b16 %v333, %v331
    %398 = vmatprep.subr.bf16.mxu0 %v349
    %399 = vmatpush1.bf16.msra.mxu0 %v348
    %400 = vmatprep.subr.bf16.mxu0 %v347
    %401 = vmatpush1.bf16.msra.mxu0 %v346
    %402 = vmatprep.subr.bf16.mxu0 %v345
    %403 = vmatpush1.bf16.msra.mxu0 %v344
    %404 = vmatprep.subr.bf16.mxu0 %v343
    %405 = vmatpush1.bf16.msra.mxu0 %v342
    %406 = vmatprep.subr.bf16.mxu0 %v341
    %407 = vmatpush1.bf16.msra.mxu0 %v340
    %408 = vmatprep.subr.bf16.mxu0 %v339
    %409 = vmatpush1.bf16.msra.mxu0 %v338
    %410 = vmatprep.subr.bf16.mxu0 %v337
    %411 = vmatpush1.bf16.msra.mxu0 %v336
    %412 = vmatprep.subr.bf16.mxu0 %v335
    %413 = vmatpush1.bf16.msra.mxu0 %v334
    %414 = vmatprep.subr.bf16.mxu0 %v365
    %415 = vmatpush2.bf16.msra.mxu0 %v364
    %416 = vmatprep.subr.bf16.mxu0 %v363
    %417 = vmatpush2.bf16.msra.mxu0 %v362
    %418 = vmatprep.subr.bf16.mxu0 %v361
    %419 = vmatpush2.bf16.msra.mxu0 %v360
    %420 = vmatprep.subr.bf16.mxu0 %v359
    %421 = vmatpush2.bf16.msra.mxu0 %v358
    %422 = vmatprep.subr.bf16.mxu0 %v357
    %423 = vmatpush2.bf16.msra.mxu0 %v356
    %424 = vmatprep.subr.bf16.mxu0 %v355
    %425 = vmatpush2.bf16.msra.mxu0 %v354
    %426 = vmatprep.subr.bf16.mxu0 %v353
    %427 = vmatpush2.bf16.msra.mxu0 %v352
    %428 = vmatprep.subr.bf16.mxu0 %v351
    %429 = vmatpush2.bf16.msra.mxu0 %v350
    %430 = vmatprep.mubr.bf16.mxu0 %v205
    %431 = vmatmul.mubr.bf16.gmra.mxu0 %v204
    %v432 = vpop.f32.mrf.mxu0
    %v433 = vadd.f32 0.0, %v432
    %v434 = vpop.f32.mrf.mxu0
    %v435 = vadd.f32 0.0, %v434
    %v436 = vpop.f32.mrf.mxu0
    %v437 = vadd.f32 0.0, %v436
    %v438 = vpop.f32.mrf.mxu0
    %v439 = vadd.f32 0.0, %v438
    %440 = vdwg.mxu0
    %v441 = vpack.c.bf16 %v437, %v433
    %v442 = vpack.c.bf16 %v439, %v435
    %v443 = vld [vmem:[#allocation4] sm:$0xff]
    %v444 = vld [vmem:[#allocation4 + $0x8] sm:$0xff]
    %v445 = vld [vmem:[#allocation4 + $0x10] sm:$0xff]
    %v446 = vld [vmem:[#allocation4 + $0x18] sm:$0xff]
    %v447 = vld [vmem:[#allocation4 + $0x20] sm:$0xff]
    %v448 = vld [vmem:[#allocation4 + $0x28] sm:$0xff]
    %v449 = vld [vmem:[#allocation4 + $0x30] sm:$0xff]
    %v450 = vld [vmem:[#allocation4 + $0x38] sm:$0xff]
    %v451 = vld [vmem:[#allocation4 + $0x40] sm:$0xff]
    %v452 = vld [vmem:[#allocation4 + $0x48] sm:$0xff]
    %v453 = vld [vmem:[#allocation4 + $0x50] sm:$0xff]
    %v454 = vld [vmem:[#allocation4 + $0x58] sm:$0xff]
    %v455 = vld [vmem:[#allocation4 + $0x60] sm:$0xff]
    %v456 = vld [vmem:[#allocation4 + $0x68] sm:$0xff]
    %v457 = vld [vmem:[#allocation4 + $0x70] sm:$0xff]
    %v458 = vld [vmem:[#allocation4 + $0x78] sm:$0xff]
    %v459 = vld [vmem:[#allocation4 + $0x80] sm:$0xff]
    %v460 = vld [vmem:[#allocation4 + $0x88] sm:$0xff]
    %v461 = vld [vmem:[#allocation4 + $0x90] sm:$0xff]
    %v462 = vld [vmem:[#allocation4 + $0x98] sm:$0xff]
    %v463 = vld [vmem:[#allocation4 + $0xa0] sm:$0xff]
    %v464 = vld [vmem:[#allocation4 + $0xa8] sm:$0xff]
    %v465 = vld [vmem:[#allocation4 + $0xb0] sm:$0xff]
    %v466 = vld [vmem:[#allocation4 + $0xb8] sm:$0xff]
    %v467 = vld [vmem:[#allocation4 + $0xc0] sm:$0xff]
    %v468 = vld [vmem:[#allocation4 + $0xc8] sm:$0xff]
    %v469 = vld [vmem:[#allocation4 + $0xd0] sm:$0xff]
    %v470 = vld [vmem:[#allocation4 + $0xd8] sm:$0xff]
    %v471 = vld [vmem:[#allocation4 + $0xe0] sm:$0xff]
    %v472 = vld [vmem:[#allocation4 + $0xe8] sm:$0xff]
    %v473 = vld [vmem:[#allocation4 + $0xf0] sm:$0xff]
    %v474 = vld [vmem:[#allocation4 + $0xf8] sm:$0xff]
    %v475 = vld [vmem:[%s2] ss:$8 sm:$0x3]
    %v477 = vlaneseq
    %v478 = vshrl.u32 %v477, 7
    %v479 = vsub.s32 0, %v478
    %v480 = vrot.slane %v475, %v479
    %v481 = vlaneseq
    %v482 = vshrl.u32 %v481, 7
    %v483 = vsub.s32 1, %v482
    %v484 = vrot.slane %v475, %v483
    %v519 = vunpack.c.l.b16 %v443
    %v520 = vunpack.c.h.b16 %v443
    %v521 = vunpack.c.l.b16 %v444
    %v522 = vunpack.c.h.b16 %v444
    %v523 = vunpack.c.l.b16 %v445
    %v524 = vunpack.c.h.b16 %v445
    %v525 = vunpack.c.l.b16 %v446
    %v526 = vunpack.c.h.b16 %v446
    %v527 = vunpack.c.l.b16 %v447
    %v528 = vunpack.c.h.b16 %v447
    %v529 = vunpack.c.l.b16 %v448
    %v530 = vunpack.c.h.b16 %v448
    %v531 = vunpack.c.l.b16 %v449
    %v532 = vunpack.c.h.b16 %v449
    %v533 = vunpack.c.l.b16 %v450
    %v534 = vunpack.c.h.b16 %v450
    %v535 = vunpack.c.l.b16 %v451
    %v536 = vunpack.c.h.b16 %v451
    %v537 = vunpack.c.l.b16 %v452
    %v538 = vunpack.c.h.b16 %v452
    %v539 = vunpack.c.l.b16 %v453
    %v540 = vunpack.c.h.b16 %v453
    %v541 = vunpack.c.l.b16 %v454
    %v542 = vunpack.c.h.b16 %v454
    %v543 = vunpack.c.l.b16 %v455
    %v544 = vunpack.c.h.b16 %v455
    %v545 = vunpack.c.l.b16 %v456
    %v546 = vunpack.c.h.b16 %v456
    %v547 = vunpack.c.l.b16 %v457
    %v548 = vunpack.c.h.b16 %v457
    %v549 = vunpack.c.l.b16 %v458
    %v550 = vunpack.c.h.b16 %v458
    %v551 = vunpack.c.l.b16 %v459
    %v552 = vunpack.c.h.b16 %v459
    %v553 = vunpack.c.l.b16 %v460
    %v554 = vunpack.c.h.b16 %v460
    %v555 = vunpack.c.l.b16 %v461
    %v556 = vunpack.c.h.b16 %v461
    %v557 = vunpack.c.l.b16 %v462
    %v558 = vunpack.c.h.b16 %v462
    %v559 = vunpack.c.l.b16 %v463
    %v560 = vunpack.c.h.b16 %v463
    %v561 = vunpack.c.l.b16 %v464
    %v562 = vunpack.c.h.b16 %v464
    %v563 = vunpack.c.l.b16 %v465
    %v564 = vunpack.c.h.b16 %v465
    %v565 = vunpack.c.l.b16 %v466
    %v566 = vunpack.c.h.b16 %v466
    %v567 = vunpack.c.l.b16 %v467
    %v568 = vunpack.c.h.b16 %v467
    %v569 = vunpack.c.l.b16 %v468
    %v570 = vunpack.c.h.b16 %v468
    %v571 = vunpack.c.l.b16 %v469
    %v572 = vunpack.c.h.b16 %v469
    %v573 = vunpack.c.l.b16 %v470
    %v574 = vunpack.c.h.b16 %v470
    %v575 = vunpack.c.l.b16 %v471
    %v576 = vunpack.c.h.b16 %v471
    %v577 = vunpack.c.l.b16 %v472
    %v578 = vunpack.c.h.b16 %v472
    %v579 = vunpack.c.l.b16 %v473
    %v580 = vunpack.c.h.b16 %v473
    %v581 = vunpack.c.l.b16 %v474
    %v582 = vunpack.c.h.b16 %v474
    %v583 = vpack.c.b16 %v521, %v519
    %v584 = vpack.c.b16 %v522, %v520
    %v585 = vpack.c.b16 %v525, %v523
    %v586 = vpack.c.b16 %v526, %v524
    %v587 = vpack.c.b16 %v529, %v527
    %v588 = vpack.c.b16 %v530, %v528
    %v589 = vpack.c.b16 %v533, %v531
    %v590 = vpack.c.b16 %v534, %v532
    %v591 = vpack.c.b16 %v537, %v535
    %v592 = vpack.c.b16 %v538, %v536
    %v593 = vpack.c.b16 %v541, %v539
    %v594 = vpack.c.b16 %v542, %v540
    %v595 = vpack.c.b16 %v545, %v543
    %v596 = vpack.c.b16 %v546, %v544
    %v597 = vpack.c.b16 %v549, %v547
    %v598 = vpack.c.b16 %v550, %v548
    %v599 = vpack.c.b16 %v553, %v551
    %v600 = vpack.c.b16 %v554, %v552
    %v601 = vpack.c.b16 %v557, %v555
    %v602 = vpack.c.b16 %v558, %v556
    %v603 = vpack.c.b16 %v561, %v559
    %v604 = vpack.c.b16 %v562, %v560
    %v605 = vpack.c.b16 %v565, %v563
    %v606 = vpack.c.b16 %v566, %v564
    %v607 = vpack.c.b16 %v569, %v567
    %v608 = vpack.c.b16 %v570, %v568
    %v609 = vpack.c.b16 %v573, %v571
    %v610 = vpack.c.b16 %v574, %v572
    %v611 = vpack.c.b16 %v577, %v575
    %v612 = vpack.c.b16 %v578, %v576
    %v613 = vpack.c.b16 %v581, %v579
    %v614 = vpack.c.b16 %v582, %v580
    %647 = vmatprep.subr.bf16.mxu0 %v598
    %648 = vmatpush1.bf16.msra.mxu0 %v597
    %649 = vmatprep.subr.bf16.mxu0 %v596
    %650 = vmatpush1.bf16.msra.mxu0 %v595
    %651 = vmatprep.subr.bf16.mxu0 %v594
    %652 = vmatpush1.bf16.msra.mxu0 %v593
    %653 = vmatprep.subr.bf16.mxu0 %v592
    %654 = vmatpush1.bf16.msra.mxu0 %v591
    %655 = vmatprep.subr.bf16.mxu0 %v590
    %656 = vmatpush1.bf16.msra.mxu0 %v589
    %657 = vmatprep.subr.bf16.mxu0 %v588
    %658 = vmatpush1.bf16.msra.mxu0 %v587
    %659 = vmatprep.subr.bf16.mxu0 %v586
    %660 = vmatpush1.bf16.msra.mxu0 %v585
    %661 = vmatprep.subr.bf16.mxu0 %v584
    %662 = vmatpush1.bf16.msra.mxu0 %v583
    %663 = vmatprep.subr.bf16.mxu0 %v614
    %664 = vmatpush2.bf16.msra.mxu0 %v613
    %665 = vmatprep.subr.bf16.mxu0 %v612
    %666 = vmatpush2.bf16.msra.mxu0 %v611
    %667 = vmatprep.subr.bf16.mxu0 %v610
    %668 = vmatpush2.bf16.msra.mxu0 %v609
    %669 = vmatprep.subr.bf16.mxu0 %v608
    %670 = vmatpush2.bf16.msra.mxu0 %v607
    %671 = vmatprep.subr.bf16.mxu0 %v606
    %672 = vmatpush2.bf16.msra.mxu0 %v605
    %673 = vmatprep.subr.bf16.mxu0 %v604
    %674 = vmatpush2.bf16.msra.mxu0 %v603
    %675 = vmatprep.subr.bf16.mxu0 %v602
    %676 = vmatpush2.bf16.msra.mxu0 %v601
    %677 = vmatprep.subr.bf16.mxu0 %v600
    %678 = vmatpush2.bf16.msra.mxu0 %v599
    %679 = vmatprep.mubr.bf16.mxu0 %v442
    %680 = vmatmul.mubr.bf16.gmra.mxu0 %v441
    %v681 = vpop.f32.mrf.mxu0
    %v682 = vadd.f32 %v480, %v681
    %v683 = vpop.f32.mrf.mxu0
    %v684 = vadd.f32 %v484, %v683
    %v685 = vpop.f32.mrf.mxu0
    %v686 = vadd.f32 %v480, %v685
    %v687 = vpop.f32.mrf.mxu0
    %v688 = vadd.f32 %v484, %v687
    %689 = vdwg.mxu0
    %v690 = vmax.f32 %v682, 0.0
    %v691 = vmax.f32 %v684, 0.0
    %v692 = vmax.f32 %v686, 0.0
    %v693 = vmax.f32 %v688, 0.0
    %v694 = vpack.c.bf16 %v692, %v690
    %v695 = vpack.c.bf16 %v693, %v691
    %v696 = vld [vmem:[#allocation6] sm:$0xff]
    %v697 = vld [vmem:[#allocation6 + $0x8] sm:$0xff]
    %v698 = vld [vmem:[#allocation6 + $0x10] sm:$0xff]
    %v699 = vld [vmem:[#allocation6 + $0x18] sm:$0xff]
    %v700 = vld [vmem:[#allocation6 + $0x20] sm:$0xff]
    %v701 = vld [vmem:[#allocation6 + $0x28] sm:$0xff]
    %v702 = vld [vmem:[#allocation6 + $0x30] sm:$0xff]
    %v703 = vld [vmem:[#allocation6 + $0x38] sm:$0xff]
    %v704 = vld [vmem:[#allocation6 + $0x40] sm:$0xff]
    %v705 = vld [vmem:[#allocation6 + $0x48] sm:$0xff]
    %v706 = vld [vmem:[#allocation6 + $0x50] sm:$0xff]
    %v707 = vld [vmem:[#allocation6 + $0x58] sm:$0xff]
    %v708 = vld [vmem:[#allocation6 + $0x60] sm:$0xff]
    %v709 = vld [vmem:[#allocation6 + $0x68] sm:$0xff]
    %v710 = vld [vmem:[#allocation6 + $0x70] sm:$0xff]
    %v711 = vld [vmem:[#allocation6 + $0x78] sm:$0xff]
    %v712 = vld [vmem:[#allocation6 + $0x80] sm:$0xff]
    %v713 = vld [vmem:[#allocation6 + $0x88] sm:$0xff]
    %v714 = vld [vmem:[#allocation6 + $0x90] sm:$0xff]
    %v715 = vld [vmem:[#allocation6 + $0x98] sm:$0xff]
    %v716 = vld [vmem:[#allocation6 + $0xa0] sm:$0xff]
    %v717 = vld [vmem:[#allocation6 + $0xa8] sm:$0xff]
    %v718 = vld [vmem:[#allocation6 + $0xb0] sm:$0xff]
    %v719 = vld [vmem:[#allocation6 + $0xb8] sm:$0xff]
    %v720 = vld [vmem:[#allocation6 + $0xc0] sm:$0xff]
    %v721 = vld [vmem:[#allocation6 + $0xc8] sm:$0xff]
    %v722 = vld [vmem:[#allocation6 + $0xd0] sm:$0xff]
    %v723 = vld [vmem:[#allocation6 + $0xd8] sm:$0xff]
    %v724 = vld [vmem:[#allocation6 + $0xe0] sm:$0xff]
    %v725 = vld [vmem:[#allocation6 + $0xe8] sm:$0xff]
    %v726 = vld [vmem:[#allocation6 + $0xf0] sm:$0xff]
    %v727 = vld [vmem:[#allocation6 + $0xf8] sm:$0xff]
    %s728 = scalar_lea.vmem %s2, 1
    %v729 = vld [vmem:[%s728] ss:$8 sm:$0x3]
    %v731 = vlaneseq
    %v732 = vshrl.u32 %v731, 7
    %v733 = vsub.s32 0, %v732
    %v734 = vrot.slane %v729, %v733
    %v735 = vlaneseq
    %v736 = vshrl.u32 %v735, 7
    %v737 = vsub.s32 1, %v736
    %v738 = vrot.slane %v729, %v737
    %v773 = vunpack.c.l.b16 %v696
    %v774 = vunpack.c.h.b16 %v696
    %v775 = vunpack.c.l.b16 %v697
    %v776 = vunpack.c.h.b16 %v697
    %v777 = vunpack.c.l.b16 %v698
    %v778 = vunpack.c.h.b16 %v698
    %v779 = vunpack.c.l.b16 %v699
    %v780 = vunpack.c.h.b16 %v699
    %v781 = vunpack.c.l.b16 %v700
    %v782 = vunpack.c.h.b16 %v700
    %v783 = vunpack.c.l.b16 %v701
    %v784 = vunpack.c.h.b16 %v701
    %v785 = vunpack.c.l.b16 %v702
    %v786 = vunpack.c.h.b16 %v702
    %v787 = vunpack.c.l.b16 %v703
    %v788 = vunpack.c.h.b16 %v703
    %v789 = vunpack.c.l.b16 %v704
    %v790 = vunpack.c.h.b16 %v704
    %v791 = vunpack.c.l.b16 %v705
    %v792 = vunpack.c.h.b16 %v705
    %v793 = vunpack.c.l.b16 %v706
    %v794 = vunpack.c.h.b16 %v706
    %v795 = vunpack.c.l.b16 %v707
    %v796 = vunpack.c.h.b16 %v707
    %v797 = vunpack.c.l.b16 %v708
    %v798 = vunpack.c.h.b16 %v708
    %v799 = vunpack.c.l.b16 %v709
    %v800 = vunpack.c.h.b16 %v709
    %v801 = vunpack.c.l.b16 %v710
    %v802 = vunpack.c.h.b16 %v710
    %v803 = vunpack.c.l.b16 %v711
    %v804 = vunpack.c.h.b16 %v711
    %v805 = vunpack.c.l.b16 %v712
    %v806 = vunpack.c.h.b16 %v712
    %v807 = vunpack.c.l.b16 %v713
    %v808 = vunpack.c.h.b16 %v713
    %v809 = vunpack.c.l.b16 %v714
    %v810 = vunpack.c.h.b16 %v714
    %v811 = vunpack.c.l.b16 %v715
    %v812 = vunpack.c.h.b16 %v715
    %v813 = vunpack.c.l.b16 %v716
    %v814 = vunpack.c.h.b16 %v716
    %v815 = vunpack.c.l.b16 %v717
    %v816 = vunpack.c.h.b16 %v717
    %v817 = vunpack.c.l.b16 %v718
    %v818 = vunpack.c.h.b16 %v718
    %v819 = vunpack.c.l.b16 %v719
    %v820 = vunpack.c.h.b16 %v719
    %v821 = vunpack.c.l.b16 %v720
    %v822 = vunpack.c.h.b16 %v720
    %v823 = vunpack.c.l.b16 %v721
    %v824 = vunpack.c.h.b16 %v721
    %v825 = vunpack.c.l.b16 %v722
    %v826 = vunpack.c.h.b16 %v722
    %v827 = vunpack.c.l.b16 %v723
    %v828 = vunpack.c.h.b16 %v723
    %v829 = vunpack.c.l.b16 %v724
    %v830 = vunpack.c.h.b16 %v724
    %v831 = vunpack.c.l.b16 %v725
    %v832 = vunpack.c.h.b16 %v725
    %v833 = vunpack.c.l.b16 %v726
    %v834 = vunpack.c.h.b16 %v726
    %v835 = vunpack.c.l.b16 %v727
    %v836 = vunpack.c.h.b16 %v727
    %v837 = vpack.c.b16 %v775, %v773
    %v838 = vpack.c.b16 %v776, %v774
    %v839 = vpack.c.b16 %v779, %v777
    %v840 = vpack.c.b16 %v780, %v778
    %v841 = vpack.c.b16 %v783, %v781
    %v842 = vpack.c.b16 %v784, %v782
    %v843 = vpack.c.b16 %v787, %v785
    %v844 = vpack.c.b16 %v788, %v786
    %v845 = vpack.c.b16 %v791, %v789
    %v846 = vpack.c.b16 %v792, %v790
    %v847 = vpack.c.b16 %v795, %v793
    %v848 = vpack.c.b16 %v796, %v794
    %v849 = vpack.c.b16 %v799, %v797
    %v850 = vpack.c.b16 %v800, %v798
    %v851 = vpack.c.b16 %v803, %v801
    %v852 = vpack.c.b16 %v804, %v802
    %v853 = vpack.c.b16 %v807, %v805
    %v854 = vpack.c.b16 %v808, %v806
    %v855 = vpack.c.b16 %v811, %v809
    %v856 = vpack.c.b16 %v812, %v810
    %v857 = vpack.c.b16 %v815, %v813
    %v858 = vpack.c.b16 %v816, %v814
    %v859 = vpack.c.b16 %v819, %v817
    %v860 = vpack.c.b16 %v820, %v818
    %v861 = vpack.c.b16 %v823, %v821
    %v862 = vpack.c.b16 %v824, %v822
    %v863 = vpack.c.b16 %v827, %v825
    %v864 = vpack.c.b16 %v828, %v826
    %v865 = vpack.c.b16 %v831, %v829
    %v866 = vpack.c.b16 %v832, %v830
    %v867 = vpack.c.b16 %v835, %v833
    %v868 = vpack.c.b16 %v836, %v834
    %901 = vmatprep.subr.bf16.mxu0 %v852
    %902 = vmatpush1.bf16.msra.mxu0 %v851
    %903 = vmatprep.subr.bf16.mxu0 %v850
    %904 = vmatpush1.bf16.msra.mxu0 %v849
    %905 = vmatprep.subr.bf16.mxu0 %v848
    %906 = vmatpush1.bf16.msra.mxu0 %v847
    %907 = vmatprep.subr.bf16.mxu0 %v846
    %908 = vmatpush1.bf16.msra.mxu0 %v845
    %909 = vmatprep.subr.bf16.mxu0 %v844
    %910 = vmatpush1.bf16.msra.mxu0 %v843
    %911 = vmatprep.subr.bf16.mxu0 %v842
    %912 = vmatpush1.bf16.msra.mxu0 %v841
    %913 = vmatprep.subr.bf16.mxu0 %v840
    %914 = vmatpush1.bf16.msra.mxu0 %v839
    %915 = vmatprep.subr.bf16.mxu0 %v838
    %916 = vmatpush1.bf16.msra.mxu0 %v837
    %917 = vmatprep.subr.bf16.mxu0 %v868
    %918 = vmatpush2.bf16.msra.mxu0 %v867
    %919 = vmatprep.subr.bf16.mxu0 %v866
    %920 = vmatpush2.bf16.msra.mxu0 %v865
    %921 = vmatprep.subr.bf16.mxu0 %v864
    %922 = vmatpush2.bf16.msra.mxu0 %v863
    %923 = vmatprep.subr.bf16.mxu0 %v862
    %924 = vmatpush2.bf16.msra.mxu0 %v861
    %925 = vmatprep.subr.bf16.mxu0 %v860
    %926 = vmatpush2.bf16.msra.mxu0 %v859
    %927 = vmatprep.subr.bf16.mxu0 %v858
    %928 = vmatpush2.bf16.msra.mxu0 %v857
    %929 = vmatprep.subr.bf16.mxu0 %v856
    %930 = vmatpush2.bf16.msra.mxu0 %v855
    %931 = vmatprep.subr.bf16.mxu0 %v854
    %932 = vmatpush2.bf16.msra.mxu0 %v853
    %933 = vmatprep.mubr.bf16.mxu0 %v695
    %934 = vmatmul.mubr.bf16.gmra.mxu0 %v694
    %v935 = vpop.f32.mrf.mxu0
    %v936 = vadd.f32 %v734, %v935
    %v937 = vpop.f32.mrf.mxu0
    %v938 = vadd.f32 %v738, %v937
    %v939 = vpop.f32.mrf.mxu0
    %v940 = vadd.f32 %v734, %v939
    %v941 = vpop.f32.mrf.mxu0
    %v942 = vadd.f32 %v738, %v941
    %943 = vdwg.mxu0
    %v944 = vld [vmem:[%s0] sm:$0xff]
    %v945 = vld [vmem:[%s0 + $0x8] sm:$0xff]
    %v946 = vpack.c.bf16 %v945, %v944
    %v947 = vld [vmem:[#allocation7] sm:$0xff]
    %v948 = vld [vmem:[#allocation7 + $0x8] sm:$0xff]
    %v949 = vld [vmem:[#allocation7 + $0x10] sm:$0xff]
    %v950 = vld [vmem:[#allocation7 + $0x18] sm:$0xff]
    %v951 = vld [vmem:[#allocation7 + $0x20] sm:$0xff]
    %v952 = vld [vmem:[#allocation7 + $0x28] sm:$0xff]
    %v953 = vld [vmem:[#allocation7 + $0x30] sm:$0xff]
    %v954 = vld [vmem:[#allocation7 + $0x38] sm:$0xff]
    %v955 = vld [vmem:[#allocation7 + $0x40] sm:$0xff]
    %v956 = vld [vmem:[#allocation7 + $0x48] sm:$0xff]
    %v957 = vld [vmem:[#allocation7 + $0x50] sm:$0xff]
    %v958 = vld [vmem:[#allocation7 + $0x58] sm:$0xff]
    %v959 = vld [vmem:[#allocation7 + $0x60] sm:$0xff]
    %v960 = vld [vmem:[#allocation7 + $0x68] sm:$0xff]
    %v961 = vld [vmem:[#allocation7 + $0x70] sm:$0xff]
    %v962 = vld [vmem:[#allocation7 + $0x78] sm:$0xff]
    %v963 = vld [vmem:[#allocation7 + $0x80] sm:$0xff]
    %v964 = vld [vmem:[#allocation7 + $0x88] sm:$0xff]
    %v965 = vld [vmem:[#allocation7 + $0x90] sm:$0xff]
    %v966 = vld [vmem:[#allocation7 + $0x98] sm:$0xff]
    %v967 = vld [vmem:[#allocation7 + $0xa0] sm:$0xff]
    %v968 = vld [vmem:[#allocation7 + $0xa8] sm:$0xff]
    %v969 = vld [vmem:[#allocation7 + $0xb0] sm:$0xff]
    %v970 = vld [vmem:[#allocation7 + $0xb8] sm:$0xff]
    %v971 = vld [vmem:[#allocation7 + $0xc0] sm:$0xff]
    %v972 = vld [vmem:[#allocation7 + $0xc8] sm:$0xff]
    %v973 = vld [vmem:[#allocation7 + $0xd0] sm:$0xff]
    %v974 = vld [vmem:[#allocation7 + $0xd8] sm:$0xff]
    %v975 = vld [vmem:[#allocation7 + $0xe0] sm:$0xff]
    %v976 = vld [vmem:[#allocation7 + $0xe8] sm:$0xff]
    %v977 = vld [vmem:[#allocation7 + $0xf0] sm:$0xff]
    %v978 = vld [vmem:[#allocation7 + $0xf8] sm:$0xff]
    %v979 = vpack.c.bf16 %v940, %v936
    %v980 = vpack.c.bf16 %v942, %v938
    %v981 = vld [vmem:[#allocation9] sm:$0xff]
    %v982 = vld [vmem:[#allocation9 + $0x8] sm:$0xff]
    %v983 = vld [vmem:[#allocation9 + $0x10] sm:$0xff]
    %v984 = vld [vmem:[#allocation9 + $0x18] sm:$0xff]
    %v985 = vld [vmem:[#allocation9 + $0x20] sm:$0xff]
    %v986 = vld [vmem:[#allocation9 + $0x28] sm:$0xff]
    %v987 = vld [vmem:[#allocation9 + $0x30] sm:$0xff]
    %v988 = vld [vmem:[#allocation9 + $0x38] sm:$0xff]
    %v989 = vld [vmem:[#allocation9 + $0x40] sm:$0xff]
    %v990 = vld [vmem:[#allocation9 + $0x48] sm:$0xff]
    %v991 = vld [vmem:[#allocation9 + $0x50] sm:$0xff]
    %v992 = vld [vmem:[#allocation9 + $0x58] sm:$0xff]
    %v993 = vld [vmem:[#allocation9 + $0x60] sm:$0xff]
    %v994 = vld [vmem:[#allocation9 + $0x68] sm:$0xff]
    %v995 = vld [vmem:[#allocation9 + $0x70] sm:$0xff]
    %v996 = vld [vmem:[#allocation9 + $0x78] sm:$0xff]
    %v997 = vld [vmem:[#allocation9 + $0x80] sm:$0xff]
    %v998 = vld [vmem:[#allocation9 + $0x88] sm:$0xff]
    %v999 = vld [vmem:[#allocation9 + $0x90] sm:$0xff]
    %v1000 = vld [vmem:[#allocation9 + $0x98] sm:$0xff]
    %v1001 = vld [vmem:[#allocation9 + $0xa0] sm:$0xff]
    %v1002 = vld [vmem:[#allocation9 + $0xa8] sm:$0xff]
    %v1003 = vld [vmem:[#allocation9 + $0xb0] sm:$0xff]
    %v1004 = vld [vmem:[#allocation9 + $0xb8] sm:$0xff]
    %v1005 = vld [vmem:[#allocation9 + $0xc0] sm:$0xff]
    %v1006 = vld [vmem:[#allocation9 + $0xc8] sm:$0xff]
    %v1007 = vld [vmem:[#allocation9 + $0xd0] sm:$0xff]
    %v1008 = vld [vmem:[#allocation9 + $0xd8] sm:$0xff]
    %v1009 = vld [vmem:[#allocation9 + $0xe0] sm:$0xff]
    %v1010 = vld [vmem:[#allocation9 + $0xe8] sm:$0xff]
    %v1011 = vld [vmem:[#allocation9 + $0xf0] sm:$0xff]
    %v1012 = vld [vmem:[#allocation9 + $0xf8] sm:$0xff]
    %v1013 = vld [vmem:[#allocation9 + $0x100] sm:$0xff]
    %v1014 = vld [vmem:[#allocation9 + $0x108] sm:$0xff]
    %v1015 = vld [vmem:[#allocation9 + $0x110] sm:$0xff]
    %v1016 = vld [vmem:[#allocation9 + $0x118] sm:$0xff]
    %v1017 = vld [vmem:[#allocation9 + $0x120] sm:$0xff]
    %v1018 = vld [vmem:[#allocation9 + $0x128] sm:$0xff]
    %v1019 = vld [vmem:[#allocation9 + $0x130] sm:$0xff]
    %v1020 = vld [vmem:[#allocation9 + $0x138] sm:$0xff]
    %v1021 = vld [vmem:[#allocation9 + $0x140] sm:$0xff]
    %v1022 = vld [vmem:[#allocation9 + $0x148] sm:$0xff]
    %v1023 = vld [vmem:[#allocation9 + $0x150] sm:$0xff]
    %v1024 = vld [vmem:[#allocation9 + $0x158] sm:$0xff]
    %v1025 = vld [vmem:[#allocation9 + $0x160] sm:$0xff]
    %v1026 = vld [vmem:[#allocation9 + $0x168] sm:$0xff]
    %v1027 = vld [vmem:[#allocation9 + $0x170] sm:$0xff]
    %v1028 = vld [vmem:[#allocation9 + $0x178] sm:$0xff]
    %v1029 = vld [vmem:[#allocation9 + $0x180] sm:$0xff]
    %v1030 = vld [vmem:[#allocation9 + $0x188] sm:$0xff]
    %v1031 = vld [vmem:[#allocation9 + $0x190] sm:$0xff]
    %v1032 = vld [vmem:[#allocation9 + $0x198] sm:$0xff]
    %v1033 = vld [vmem:[#allocation9 + $0x1a0] sm:$0xff]
    %v1034 = vld [vmem:[#allocation9 + $0x1a8] sm:$0xff]
    %v1035 = vld [vmem:[#allocation9 + $0x1b0] sm:$0xff]
    %v1036 = vld [vmem:[#allocation9 + $0x1b8] sm:$0xff]
    %v1037 = vld [vmem:[#allocation9 + $0x1c0] sm:$0xff]
    %v1038 = vld [vmem:[#allocation9 + $0x1c8] sm:$0xff]
    %v1039 = vld [vmem:[#allocation9 + $0x1d0] sm:$0xff]
    %v1040 = vld [vmem:[#allocation9 + $0x1d8] sm:$0xff]
    %v1041 = vld [vmem:[#allocation9 + $0x1e0] sm:$0xff]
    %v1042 = vld [vmem:[#allocation9 + $0x1e8] sm:$0xff]
    %v1043 = vld [vmem:[#allocation9 + $0x1f0] sm:$0xff]
    %v1044 = vld [vmem:[#allocation9 + $0x1f8] sm:$0xff]
    %v1109 = vunpack.c.l.b16 %v981
    %v1110 = vunpack.c.h.b16 %v981
    %v1111 = vunpack.c.l.b16 %v982
    %v1112 = vunpack.c.h.b16 %v982
    %v1113 = vunpack.c.l.b16 %v983
    %v1114 = vunpack.c.h.b16 %v983
    %v1115 = vunpack.c.l.b16 %v984
    %v1116 = vunpack.c.h.b16 %v984
    %v1117 = vunpack.c.l.b16 %v985
    %v1118 = vunpack.c.h.b16 %v985
    %v1119 = vunpack.c.l.b16 %v986
    %v1120 = vunpack.c.h.b16 %v986
    %v1121 = vunpack.c.l.b16 %v987
    %v1122 = vunpack.c.h.b16 %v987
    %v1123 = vunpack.c.l.b16 %v988
    %v1124 = vunpack.c.h.b16 %v988
    %v1125 = vunpack.c.l.b16 %v989
    %v1126 = vunpack.c.h.b16 %v989
    %v1127 = vunpack.c.l.b16 %v990
    %v1128 = vunpack.c.h.b16 %v990
    %v1129 = vunpack.c.l.b16 %v991
    %v1130 = vunpack.c.h.b16 %v991
    %v1131 = vunpack.c.l.b16 %v992
    %v1132 = vunpack.c.h.b16 %v992
    %v1133 = vunpack.c.l.b16 %v993
    %v1134 = vunpack.c.h.b16 %v993
    %v1135 = vunpack.c.l.b16 %v994
    %v1136 = vunpack.c.h.b16 %v994
    %v1137 = vunpack.c.l.b16 %v995
    %v1138 = vunpack.c.h.b16 %v995
    %v1139 = vunpack.c.l.b16 %v996
    %v1140 = vunpack.c.h.b16 %v996
    %v1141 = vunpack.c.l.b16 %v997
    %v1142 = vunpack.c.h.b16 %v997
    %v1143 = vunpack.c.l.b16 %v998
    %v1144 = vunpack.c.h.b16 %v998
    %v1145 = vunpack.c.l.b16 %v999
    %v1146 = vunpack.c.h.b16 %v999
    %v1147 = vunpack.c.l.b16 %v1000
    %v1148 = vunpack.c.h.b16 %v1000
    %v1149 = vunpack.c.l.b16 %v1001
    %v1150 = vunpack.c.h.b16 %v1001
    %v1151 = vunpack.c.l.b16 %v1002
    %v1152 = vunpack.c.h.b16 %v1002
    %v1153 = vunpack.c.l.b16 %v1003
    %v1154 = vunpack.c.h.b16 %v1003
    %v1155 = vunpack.c.l.b16 %v1004
    %v1156 = vunpack.c.h.b16 %v1004
    %v1157 = vunpack.c.l.b16 %v1005
    %v1158 = vunpack.c.h.b16 %v1005
    %v1159 = vunpack.c.l.b16 %v1006
    %v1160 = vunpack.c.h.b16 %v1006
    %v1161 = vunpack.c.l.b16 %v1007
    %v1162 = vunpack.c.h.b16 %v1007
    %v1163 = vunpack.c.l.b16 %v1008
    %v1164 = vunpack.c.h.b16 %v1008
    %v1165 = vunpack.c.l.b16 %v1009
    %v1166 = vunpack.c.h.b16 %v1009
    %v1167 = vunpack.c.l.b16 %v1010
    %v1168 = vunpack.c.h.b16 %v1010
    %v1169 = vunpack.c.l.b16 %v1011
    %v1170 = vunpack.c.h.b16 %v1011
    %v1171 = vunpack.c.l.b16 %v1012
    %v1172 = vunpack.c.h.b16 %v1012
    %v1173 = vunpack.c.l.b16 %v1013
    %v1174 = vunpack.c.h.b16 %v1013
    %v1175 = vunpack.c.l.b16 %v1014
    %v1176 = vunpack.c.h.b16 %v1014
    %v1177 = vunpack.c.l.b16 %v1015
    %v1178 = vunpack.c.h.b16 %v1015
    %v1179 = vunpack.c.l.b16 %v1016
    %v1180 = vunpack.c.h.b16 %v1016
    %v1181 = vunpack.c.l.b16 %v1017
    %v1182 = vunpack.c.h.b16 %v1017
    %v1183 = vunpack.c.l.b16 %v1018
    %v1184 = vunpack.c.h.b16 %v1018
    %v1185 = vunpack.c.l.b16 %v1019
    %v1186 = vunpack.c.h.b16 %v1019
    %v1187 = vunpack.c.l.b16 %v1020
    %v1188 = vunpack.c.h.b16 %v1020
    %v1189 = vunpack.c.l.b16 %v1021
    %v1190 = vunpack.c.h.b16 %v1021
    %v1191 = vunpack.c.l.b16 %v1022
    %v1192 = vunpack.c.h.b16 %v1022
    %v1193 = vunpack.c.l.b16 %v1023
    %v1194 = vunpack.c.h.b16 %v1023
    %v1195 = vunpack.c.l.b16 %v1024
    %v1196 = vunpack.c.h.b16 %v1024
    %v1197 = vunpack.c.l.b16 %v1025
    %v1198 = vunpack.c.h.b16 %v1025
    %v1199 = vunpack.c.l.b16 %v1026
    %v1200 = vunpack.c.h.b16 %v1026
    %v1201 = vunpack.c.l.b16 %v1027
    %v1202 = vunpack.c.h.b16 %v1027
    %v1203 = vunpack.c.l.b16 %v1028
    %v1204 = vunpack.c.h.b16 %v1028
    %v1205 = vunpack.c.l.b16 %v1029
    %v1206 = vunpack.c.h.b16 %v1029
    %v1207 = vunpack.c.l.b16 %v1030
    %v1208 = vunpack.c.h.b16 %v1030
    %v1209 = vunpack.c.l.b16 %v1031
    %v1210 = vunpack.c.h.b16 %v1031
    %v1211 = vunpack.c.l.b16 %v1032
    %v1212 = vunpack.c.h.b16 %v1032
    %v1213 = vunpack.c.l.b16 %v1033
    %v1214 = vunpack.c.h.b16 %v1033
    %v1215 = vunpack.c.l.b16 %v1034
    %v1216 = vunpack.c.h.b16 %v1034
    %v1217 = vunpack.c.l.b16 %v1035
    %v1218 = vunpack.c.h.b16 %v1035
    %v1219 = vunpack.c.l.b16 %v1036
    %v1220 = vunpack.c.h.b16 %v1036
    %v1221 = vunpack.c.l.b16 %v1037
    %v1222 = vunpack.c.h.b16 %v1037
    %v1223 = vunpack.c.l.b16 %v1038
    %v1224 = vunpack.c.h.b16 %v1038
    %v1225 = vunpack.c.l.b16 %v1039
    %v1226 = vunpack.c.h.b16 %v1039
    %v1227 = vunpack.c.l.b16 %v1040
    %v1228 = vunpack.c.h.b16 %v1040
    %v1229 = vunpack.c.l.b16 %v1041
    %v1230 = vunpack.c.h.b16 %v1041
    %v1231 = vunpack.c.l.b16 %v1042
    %v1232 = vunpack.c.h.b16 %v1042
    %v1233 = vunpack.c.l.b16 %v1043
    %v1234 = vunpack.c.h.b16 %v1043
    %v1235 = vunpack.c.l.b16 %v1044
    %v1236 = vunpack.c.h.b16 %v1044
    %v1237 = vpack.c.b16 %v1113, %v1109
    %v1238 = vpack.c.b16 %v1114, %v1110
    %v1239 = vpack.c.b16 %v1115, %v1111
    %v1240 = vpack.c.b16 %v1116, %v1112
    %v1241 = vpack.c.b16 %v1121, %v1117
    %v1242 = vpack.c.b16 %v1122, %v1118
    %v1243 = vpack.c.b16 %v1123, %v1119
    %v1244 = vpack.c.b16 %v1124, %v1120
    %v1245 = vpack.c.b16 %v1129, %v1125
    %v1246 = vpack.c.b16 %v1130, %v1126
    %v1247 = vpack.c.b16 %v1131, %v1127
    %v1248 = vpack.c.b16 %v1132, %v1128
    %v1249 = vpack.c.b16 %v1137, %v1133
    %v1250 = vpack.c.b16 %v1138, %v1134
    %v1251 = vpack.c.b16 %v1139, %v1135
    %v1252 = vpack.c.b16 %v1140, %v1136
    %v1253 = vpack.c.b16 %v1145, %v1141
    %v1254 = vpack.c.b16 %v1146, %v1142
    %v1255 = vpack.c.b16 %v1147, %v1143
    %v1256 = vpack.c.b16 %v1148, %v1144
    %v1257 = vpack.c.b16 %v1153, %v1149
    %v1258 = vpack.c.b16 %v1154, %v1150
    %v1259 = vpack.c.b16 %v1155, %v1151
    %v1260 = vpack.c.b16 %v1156, %v1152
    %v1261 = vpack.c.b16 %v1161, %v1157
    %v1262 = vpack.c.b16 %v1162, %v1158
    %v1263 = vpack.c.b16 %v1163, %v1159
    %v1264 = vpack.c.b16 %v1164, %v1160
    %v1265 = vpack.c.b16 %v1169, %v1165
    %v1266 = vpack.c.b16 %v1170, %v1166
    %v1267 = vpack.c.b16 %v1171, %v1167
    %v1268 = vpack.c.b16 %v1172, %v1168
    %v1269 = vpack.c.b16 %v1177, %v1173
    %v1270 = vpack.c.b16 %v1178, %v1174
    %v1271 = vpack.c.b16 %v1179, %v1175
    %v1272 = vpack.c.b16 %v1180, %v1176
    %v1273 = vpack.c.b16 %v1185, %v1181
    %v1274 = vpack.c.b16 %v1186, %v1182
    %v1275 = vpack.c.b16 %v1187, %v1183
    %v1276 = vpack.c.b16 %v1188, %v1184
    %v1277 = vpack.c.b16 %v1193, %v1189
    %v1278 = vpack.c.b16 %v1194, %v1190
    %v1279 = vpack.c.b16 %v1195, %v1191
    %v1280 = vpack.c.b16 %v1196, %v1192
    %v1281 = vpack.c.b16 %v1201, %v1197
    %v1282 = vpack.c.b16 %v1202, %v1198
    %v1283 = vpack.c.b16 %v1203, %v1199
    %v1284 = vpack.c.b16 %v1204, %v1200
    %v1285 = vpack.c.b16 %v1209, %v1205
    %v1286 = vpack.c.b16 %v1210, %v1206
    %v1287 = vpack.c.b16 %v1211, %v1207
    %v1288 = vpack.c.b16 %v1212, %v1208
    %v1289 = vpack.c.b16 %v1217, %v1213
    %v1290 = vpack.c.b16 %v1218, %v1214
    %v1291 = vpack.c.b16 %v1219, %v1215
    %v1292 = vpack.c.b16 %v1220, %v1216
    %v1293 = vpack.c.b16 %v1225, %v1221
    %v1294 = vpack.c.b16 %v1226, %v1222
    %v1295 = vpack.c.b16 %v1227, %v1223
    %v1296 = vpack.c.b16 %v1228, %v1224
    %v1297 = vpack.c.b16 %v1233, %v1229
    %v1298 = vpack.c.b16 %v1234, %v1230
    %v1299 = vpack.c.b16 %v1235, %v1231
    %v1300 = vpack.c.b16 %v1236, %v1232
    %1365 = vmatprep.subr.bf16.mxu0 %v1266
    %1366 = vmatpush1.bf16.msra.mxu0 %v1265
    %1367 = vmatprep.subr.bf16.mxu0 %v1262
    %1368 = vmatpush1.bf16.msra.mxu0 %v1261
    %1369 = vmatprep.subr.bf16.mxu0 %v1258
    %1370 = vmatpush1.bf16.msra.mxu0 %v1257
    %1371 = vmatprep.subr.bf16.mxu0 %v1254
    %1372 = vmatpush1.bf16.msra.mxu0 %v1253
    %1373 = vmatprep.subr.bf16.mxu0 %v1250
    %1374 = vmatpush1.bf16.msra.mxu0 %v1249
    %1375 = vmatprep.subr.bf16.mxu0 %v1246
    %1376 = vmatpush1.bf16.msra.mxu0 %v1245
    %1377 = vmatprep.subr.bf16.mxu0 %v1242
    %1378 = vmatpush1.bf16.msra.mxu0 %v1241
    %1379 = vmatprep.subr.bf16.mxu0 %v1238
    %1380 = vmatpush1.bf16.msra.mxu0 %v1237
    %1381 = vmatprep.subr.bf16.mxu0 %v1298
    %1382 = vmatpush2.bf16.msra.mxu0 %v1297
    %1383 = vmatprep.subr.bf16.mxu0 %v1294
    %1384 = vmatpush2.bf16.msra.mxu0 %v1293
    %1385 = vmatprep.subr.bf16.mxu0 %v1290
    %1386 = vmatpush2.bf16.msra.mxu0 %v1289
    %1387 = vmatprep.subr.bf16.mxu0 %v1286
    %1388 = vmatpush2.bf16.msra.mxu0 %v1285
    %1389 = vmatprep.subr.bf16.mxu0 %v1282
    %1390 = vmatpush2.bf16.msra.mxu0 %v1281
    %1391 = vmatprep.subr.bf16.mxu0 %v1278
    %1392 = vmatpush2.bf16.msra.mxu0 %v1277
    %1393 = vmatprep.subr.bf16.mxu0 %v1274
    %1394 = vmatpush2.bf16.msra.mxu0 %v1273
    %1395 = vmatprep.subr.bf16.mxu0 %v1270
    %1396 = vmatpush2.bf16.msra.mxu0 %v1269
    %1397 = vmatprep.mubr.bf16.mxu0 %v980
    %1398 = vmatmul.mubr.bf16.gmra.mxu0 %v979
    %v1399 = vpop.f32.mrf.mxu0
    %v1400 = vadd.f32 0.0, %v1399
    %v1401 = vpop.f32.mrf.mxu0
    %v1402 = vadd.f32 0.0, %v1401
    %v1403 = vpop.f32.mrf.mxu0
    %v1404 = vadd.f32 0.0, %v1403
    %v1405 = vpop.f32.mrf.mxu0
    %v1406 = vadd.f32 0.0, %v1405
    %1407 = vdwg.mxu0
    %1408 = vmatprep.subr.bf16.mxu0 %v1268
    %1409 = vmatpush1.bf16.msra.mxu0 %v1267
    %1410 = vmatprep.subr.bf16.mxu0 %v1264
    %1411 = vmatpush1.bf16.msra.mxu0 %v1263
    %1412 = vmatprep.subr.bf16.mxu0 %v1260
    %1413 = vmatpush1.bf16.msra.mxu0 %v1259
    %1414 = vmatprep.subr.bf16.mxu0 %v1256
    %1415 = vmatpush1.bf16.msra.mxu0 %v1255
    %1416 = vmatprep.subr.bf16.mxu0 %v1252
    %1417 = vmatpush1.bf16.msra.mxu0 %v1251
    %1418 = vmatprep.subr.bf16.mxu0 %v1248
    %1419 = vmatpush1.bf16.msra.mxu0 %v1247
    %1420 = vmatprep.subr.bf16.mxu0 %v1244
    %1421 = vmatpush1.bf16.msra.mxu0 %v1243
    %1422 = vmatprep.subr.bf16.mxu0 %v1240
    %1423 = vmatpush1.bf16.msra.mxu0 %v1239
    %1424 = vmatprep.subr.bf16.mxu0 %v1300
    %1425 = vmatpush2.bf16.msra.mxu0 %v1299
    %1426 = vmatprep.subr.bf16.mxu0 %v1296
    %1427 = vmatpush2.bf16.msra.mxu0 %v1295
    %1428 = vmatprep.subr.bf16.mxu0 %v1292
    %1429 = vmatpush2.bf16.msra.mxu0 %v1291
    %1430 = vmatprep.subr.bf16.mxu0 %v1288
    %1431 = vmatpush2.bf16.msra.mxu0 %v1287
    %1432 = vmatprep.subr.bf16.mxu0 %v1284
    %1433 = vmatpush2.bf16.msra.mxu0 %v1283
    %1434 = vmatprep.subr.bf16.mxu0 %v1280
    %1435 = vmatpush2.bf16.msra.mxu0 %v1279
    %1436 = vmatprep.subr.bf16.mxu0 %v1276
    %1437 = vmatpush2.bf16.msra.mxu0 %v1275
    %1438 = vmatprep.subr.bf16.mxu0 %v1272
    %1439 = vmatpush2.bf16.msra.mxu0 %v1271
    %1440 = vmatprep.mubr.bf16.mxu0 %v980
    %1441 = vmatmul.mubr.bf16.gmra.mxu0 %v979
    %v1442 = vpop.f32.mrf.mxu0
    %v1443 = vadd.f32 0.0, %v1442
    %v1444 = vpop.f32.mrf.mxu0
    %v1445 = vadd.f32 0.0, %v1444
    %v1446 = vpop.f32.mrf.mxu0
    %v1447 = vadd.f32 0.0, %v1446
    %v1448 = vpop.f32.mrf.mxu0
    %v1449 = vadd.f32 0.0, %v1448
    %1450 = vdwg.mxu0
    %v1483 = vunpack.c.l.b16 %v947
    %v1484 = vunpack.c.h.b16 %v947
    %v1485 = vunpack.c.l.b16 %v948
    %v1486 = vunpack.c.h.b16 %v948
    %v1487 = vunpack.c.l.b16 %v949
    %v1488 = vunpack.c.h.b16 %v949
    %v1489 = vunpack.c.l.b16 %v950
    %v1490 = vunpack.c.h.b16 %v950
    %v1491 = vunpack.c.l.b16 %v951
    %v1492 = vunpack.c.h.b16 %v951
    %v1493 = vunpack.c.l.b16 %v952
    %v1494 = vunpack.c.h.b16 %v952
    %v1495 = vunpack.c.l.b16 %v953
    %v1496 = vunpack.c.h.b16 %v953
    %v1497 = vunpack.c.l.b16 %v954
    %v1498 = vunpack.c.h.b16 %v954
    %v1499 = vunpack.c.l.b16 %v955
    %v1500 = vunpack.c.h.b16 %v955
    %v1501 = vunpack.c.l.b16 %v956
    %v1502 = vunpack.c.h.b16 %v956
    %v1503 = vunpack.c.l.b16 %v957
    %v1504 = vunpack.c.h.b16 %v957
    %v1505 = vunpack.c.l.b16 %v958
    %v1506 = vunpack.c.h.b16 %v958
    %v1507 = vunpack.c.l.b16 %v959
    %v1508 = vunpack.c.h.b16 %v959
    %v1509 = vunpack.c.l.b16 %v960
    %v1510 = vunpack.c.h.b16 %v960
    %v1511 = vunpack.c.l.b16 %v961
    %v1512 = vunpack.c.h.b16 %v961
    %v1513 = vunpack.c.l.b16 %v962
    %v1514 = vunpack.c.h.b16 %v962
    %v1515 = vunpack.c.l.b16 %v963
    %v1516 = vunpack.c.h.b16 %v963
    %v1517 = vunpack.c.l.b16 %v964
    %v1518 = vunpack.c.h.b16 %v964
    %v1519 = vunpack.c.l.b16 %v965
    %v1520 = vunpack.c.h.b16 %v965
    %v1521 = vunpack.c.l.b16 %v966
    %v1522 = vunpack.c.h.b16 %v966
    %v1523 = vunpack.c.l.b16 %v967
    %v1524 = vunpack.c.h.b16 %v967
    %v1525 = vunpack.c.l.b16 %v968
    %v1526 = vunpack.c.h.b16 %v968
    %v1527 = vunpack.c.l.b16 %v969
    %v1528 = vunpack.c.h.b16 %v969
    %v1529 = vunpack.c.l.b16 %v970
    %v1530 = vunpack.c.h.b16 %v970
    %v1531 = vunpack.c.l.b16 %v971
    %v1532 = vunpack.c.h.b16 %v971
    %v1533 = vunpack.c.l.b16 %v972
    %v1534 = vunpack.c.h.b16 %v972
    %v1535 = vunpack.c.l.b16 %v973
    %v1536 = vunpack.c.h.b16 %v973
    %v1537 = vunpack.c.l.b16 %v974
    %v1538 = vunpack.c.h.b16 %v974
    %v1539 = vunpack.c.l.b16 %v975
    %v1540 = vunpack.c.h.b16 %v975
    %v1541 = vunpack.c.l.b16 %v976
    %v1542 = vunpack.c.h.b16 %v976
    %v1543 = vunpack.c.l.b16 %v977
    %v1544 = vunpack.c.h.b16 %v977
    %v1545 = vunpack.c.l.b16 %v978
    %v1546 = vunpack.c.h.b16 %v978
    %v1547 = vpack.c.b16 %v1487, %v1483
    %v1548 = vpack.c.b16 %v1488, %v1484
    %v1549 = vpack.c.b16 %v1489, %v1485
    %v1550 = vpack.c.b16 %v1490, %v1486
    %v1551 = vpack.c.b16 %v1495, %v1491
    %v1552 = vpack.c.b16 %v1496, %v1492
    %v1553 = vpack.c.b16 %v1497, %v1493
    %v1554 = vpack.c.b16 %v1498, %v1494
    %v1555 = vpack.c.b16 %v1503, %v1499
    %v1556 = vpack.c.b16 %v1504, %v1500
    %v1557 = vpack.c.b16 %v1505, %v1501
    %v1558 = vpack.c.b16 %v1506, %v1502
    %v1559 = vpack.c.b16 %v1511, %v1507
    %v1560 = vpack.c.b16 %v1512, %v1508
    %v1561 = vpack.c.b16 %v1513, %v1509
    %v1562 = vpack.c.b16 %v1514, %v1510
    %v1563 = vpack.c.b16 %v1519, %v1515
    %v1564 = vpack.c.b16 %v1520, %v1516
    %v1565 = vpack.c.b16 %v1521, %v1517
    %v1566 = vpack.c.b16 %v1522, %v1518
    %v1567 = vpack.c.b16 %v1527, %v1523
    %v1568 = vpack.c.b16 %v1528, %v1524
    %v1569 = vpack.c.b16 %v1529, %v1525
    %v1570 = vpack.c.b16 %v1530, %v1526
    %v1571 = vpack.c.b16 %v1535, %v1531
    %v1572 = vpack.c.b16 %v1536, %v1532
    %v1573 = vpack.c.b16 %v1537, %v1533
    %v1574 = vpack.c.b16 %v1538, %v1534
    %v1575 = vpack.c.b16 %v1543, %v1539
    %v1576 = vpack.c.b16 %v1544, %v1540
    %v1577 = vpack.c.b16 %v1545, %v1541
    %v1578 = vpack.c.b16 %v1546, %v1542
    %1611 = vmatprep.subr.bf16.mxu0 %v1576
    %1612 = vmatpush1.bf16.msra.mxu0 %v1575
    %1613 = vmatprep.subr.bf16.mxu0 %v1572
    %1614 = vmatpush1.bf16.msra.mxu0 %v1571
    %1615 = vmatprep.subr.bf16.mxu0 %v1568
    %1616 = vmatpush1.bf16.msra.mxu0 %v1567
    %1617 = vmatprep.subr.bf16.mxu0 %v1564
    %1618 = vmatpush1.bf16.msra.mxu0 %v1563
    %1619 = vmatprep.subr.bf16.mxu0 %v1560
    %1620 = vmatpush1.bf16.msra.mxu0 %v1559
    %1621 = vmatprep.subr.bf16.mxu0 %v1556
    %1622 = vmatpush1.bf16.msra.mxu0 %v1555
    %1623 = vmatprep.subr.bf16.mxu0 %v1552
    %1624 = vmatpush1.bf16.msra.mxu0 %v1551
    %1625 = vmatprep.subr.bf16.mxu0 %v1548
    %1626 = vmatpush1.bf16.msra.mxu0 %v1547
    %1627 = vmatprep.subr.bf16.mxu0 0
    %1628 = vmatpush2.bf16.msra.mxu0 0
    %1629 = vmatprep.subr.bf16.mxu0 0
    %1630 = vmatpush2.bf16.msra.mxu0 0
    %1631 = vmatprep.subr.bf16.mxu0 0
    %1632 = vmatpush2.bf16.msra.mxu0 0
    %1633 = vmatprep.subr.bf16.mxu0 0
    %1634 = vmatpush2.bf16.msra.mxu0 0
    %1635 = vmatprep.subr.bf16.mxu0 0
    %1636 = vmatpush2.bf16.msra.mxu0 0
    %1637 = vmatprep.subr.bf16.mxu0 0
    %1638 = vmatpush2.bf16.msra.mxu0 0
    %1639 = vmatprep.subr.bf16.mxu0 0
    %1640 = vmatpush2.bf16.msra.mxu0 0
    %1641 = vmatprep.subr.bf16.mxu0 0
    %1642 = vmatpush2.bf16.msra.mxu0 0
    %1643 = vmatprep.mubr.bf16.mxu0 0
    %1644 = vmatmul.mubr.bf16.gmra.mxu0 %v946
    %v1645 = vpop.f32.mrf.mxu0
    %v1646 = vadd.f32 %v1400, %v1645
    %v1647 = vpop.f32.mrf.mxu0
    %v1648 = vadd.f32 %v1402, %v1647
    %v1649 = vpop.f32.mrf.mxu0
    %v1650 = vadd.f32 %v1404, %v1649
    %v1651 = vpop.f32.mrf.mxu0
    %v1652 = vadd.f32 %v1406, %v1651
    %1653 = vdwg.mxu0
    %1654 = vmatprep.subr.bf16.mxu0 %v1578
    %1655 = vmatpush1.bf16.msra.mxu0 %v1577
    %1656 = vmatprep.subr.bf16.mxu0 %v1574
    %1657 = vmatpush1.bf16.msra.mxu0 %v1573
    %1658 = vmatprep.subr.bf16.mxu0 %v1570
    %1659 = vmatpush1.bf16.msra.mxu0 %v1569
    %1660 = vmatprep.subr.bf16.mxu0 %v1566
    %1661 = vmatpush1.bf16.msra.mxu0 %v1565
    %1662 = vmatprep.subr.bf16.mxu0 %v1562
    %1663 = vmatpush1.bf16.msra.mxu0 %v1561
    %1664 = vmatprep.subr.bf16.mxu0 %v1558
    %1665 = vmatpush1.bf16.msra.mxu0 %v1557
    %1666 = vmatprep.subr.bf16.mxu0 %v1554
    %1667 = vmatpush1.bf16.msra.mxu0 %v1553
    %1668 = vmatprep.subr.bf16.mxu0 %v1550
    %1669 = vmatpush1.bf16.msra.mxu0 %v1549
    %1670 = vmatprep.subr.bf16.mxu0 0
    %1671 = vmatpush2.bf16.msra.mxu0 0
    %1672 = vmatprep.subr.bf16.mxu0 0
    %1673 = vmatpush2.bf16.msra.mxu0 0
    %1674 = vmatprep.subr.bf16.mxu0 0
    %1675 = vmatpush2.bf16.msra.mxu0 0
    %1676 = vmatprep.subr.bf16.mxu0 0
    %1677 = vmatpush2.bf16.msra.mxu0 0
    %1678 = vmatprep.subr.bf16.mxu0 0
    %1679 = vmatpush2.bf16.msra.mxu0 0
    %1680 = vmatprep.subr.bf16.mxu0 0
    %1681 = vmatpush2.bf16.msra.mxu0 0
    %1682 = vmatprep.subr.bf16.mxu0 0
    %1683 = vmatpush2.bf16.msra.mxu0 0
    %1684 = vmatprep.subr.bf16.mxu0 0
    %1685 = vmatpush2.bf16.msra.mxu0 0
    %1686 = vmatprep.mubr.bf16.mxu0 0
    %1687 = vmatmul.mubr.bf16.gmra.mxu0 %v946
    %v1688 = vpop.f32.mrf.mxu0
    %v1689 = vadd.f32 %v1443, %v1688
    %v1690 = vpop.f32.mrf.mxu0
    %v1691 = vadd.f32 %v1445, %v1690
    %v1692 = vpop.f32.mrf.mxu0
    %v1693 = vadd.f32 %v1447, %v1692
    %v1694 = vpop.f32.mrf.mxu0
    %v1695 = vadd.f32 %v1449, %v1694
    %1696 = vdwg.mxu0
    %s1697 = scalar_lea.vmem %s2, 2
    %v1698 = vld [vmem:[%s1697] ss:$8 sm:$0xf]
    %v1700 = vlaneseq
    %v1701 = vshrl.u32 %v1700, 7
    %v1702 = vsub.s32 0, %v1701
    %v1703 = vrot.slane %v1698, %v1702
    %v1704 = vlaneseq
    %v1705 = vshrl.u32 %v1704, 7
    %v1706 = vsub.s32 1, %v1705
    %v1707 = vrot.slane %v1698, %v1706
    %v1708 = vlaneseq
    %v1709 = vshrl.u32 %v1708, 7
    %v1710 = vsub.s32 2, %v1709
    %v1711 = vrot.slane %v1698, %v1710
    %v1712 = vlaneseq
    %v1713 = vshrl.u32 %v1712, 7
    %v1714 = vsub.s32 3, %v1713
    %v1715 = vrot.slane %v1698, %v1714
    %v1720 = vadd.f32 %v1646, %v1703
    %v1721 = vadd.f32 %v1648, %v1707
    %v1722 = vadd.f32 %v1689, %v1711
    %v1723 = vadd.f32 %v1691, %v1715
    %v1724 = vadd.f32 %v1650, %v1703
    %v1725 = vadd.f32 %v1652, %v1707
    %v1726 = vadd.f32 %v1693, %v1711
    %v1727 = vadd.f32 %v1695, %v1715
    %v1728 = vadd.f32 %v1720, %v1721
    %v1729 = vadd.f32 %v1728, %v1722
    %v1730 = vadd.f32 %v1729, %v1723
    %1731 = vadd.xlane.f32.xlu0 %v1730
    %v1732 = vpop.xlane.xlu0 %1731
    %v1733 = vadd.f32 %v1724, %v1725
    %v1734 = vadd.f32 %v1733, %v1726
    %v1735 = vadd.f32 %v1734, %v1727
    %1736 = vadd.xlane.f32.xlu0 %v1735
    %v1737 = vpop.xlane.xlu0 %1736
    %v1738 = vrcp.pop 512.0
    %v1739 = vmul.f32 %v1732, %v1738
    %v1740 = vmul.f32 %v1737, %v1738
    %v1741 = vmul.f32 %v1720, %v1720
    %v1742 = vmul.f32 %v1721, %v1721
    %v1743 = vmul.f32 %v1722, %v1722
    %v1744 = vmul.f32 %v1723, %v1723
    %v1745 = vmul.f32 %v1724, %v1724
    %v1746 = vmul.f32 %v1725, %v1725
    %v1747 = vmul.f32 %v1726, %v1726
    %v1748 = vmul.f32 %v1727, %v1727
    %v1749 = vadd.f32 %v1741, %v1742
    %v1750 = vadd.f32 %v1749, %v1743
    %v1751 = vadd.f32 %v1750, %v1744
    %1752 = vadd.xlane.f32.xlu0 %v1751
    %v1753 = vpop.xlane.xlu0 %1752
    %v1754 = vadd.f32 %v1745, %v1746
    %v1755 = vadd.f32 %v1754, %v1747
    %v1756 = vadd.f32 %v1755, %v1748
    %1757 = vadd.xlane.f32.xlu0 %v1756
    %v1758 = vpop.xlane.xlu0 %1757
    %v1759 = vmul.f32 %v1753, %v1738
    %v1760 = vmul.f32 %v1758, %v1738
    %v1761 = vmul.f32 %v1739, %v1739
    %v1762 = vmul.f32 %v1740, %v1740
    %v1763 = vsub.f32 %v1759, %v1761
    %v1764 = vsub.f32 %v1760, %v1762
    %v1765 = vadd.f32 %v1763, 1e-05
    %v1766 = vadd.f32 %v1764, 1e-05
    %v1767 = vrsqrt.pop %v1765
    %v1768 = vrsqrt.pop %v1766
    %v1769 = vsub.f32 %v1720, %v1739
    %v1770 = vsub.f32 %v1721, %v1739
    %v1771 = vsub.f32 %v1722, %v1739
    %v1772 = vsub.f32 %v1723, %v1739
    %v1773 = vsub.f32 %v1724, %v1740
    %v1774 = vsub.f32 %v1725, %v1740
    %v1775 = vsub.f32 %v1726, %v1740
    %v1776 = vsub.f32 %v1727, %v1740
    %v1777 = vmul.f32 %v1769, %v1767
    %v1778 = vmul.f32 %v1770, %v1767
    %v1779 = vmul.f32 %v1771, %v1767
    %v1780 = vmul.f32 %v1772, %v1767
    %v1781 = vmul.f32 %v1773, %v1768
    %v1782 = vmul.f32 %v1774, %v1768
    %v1783 = vmul.f32 %v1775, %v1768
    %v1784 = vmul.f32 %v1776, %v1768
    %s1785 = scalar_lea.vmem %s2, 3
    %v1786 = vld [vmem:[%s1785] ss:$8 sm:$0xf]
    %v1788 = vlaneseq
    %v1789 = vshrl.u32 %v1788, 7
    %v1790 = vsub.s32 0, %v1789
    %v1791 = vrot.slane %v1786, %v1790
    %v1792 = vlaneseq
    %v1793 = vshrl.u32 %v1792, 7
    %v1794 = vsub.s32 1, %v1793
    %v1795 = vrot.slane %v1786, %v1794
    %v1796 = vlaneseq
    %v1797 = vshrl.u32 %v1796, 7
    %v1798 = vsub.s32 2, %v1797
    %v1799 = vrot.slane %v1786, %v1798
    %v1800 = vlaneseq
    %v1801 = vshrl.u32 %v1800, 7
    %v1802 = vsub.s32 3, %v1801
    %v1803 = vrot.slane %v1786, %v1802
    %v1808 = vmul.f32 %v1777, %v1791
    %v1809 = vmul.f32 %v1778, %v1795
    %v1810 = vmul.f32 %v1779, %v1799
    %v1811 = vmul.f32 %v1780, %v1803
    %v1812 = vmul.f32 %v1781, %v1791
    %v1813 = vmul.f32 %v1782, %v1795
    %v1814 = vmul.f32 %v1783, %v1799
    %v1815 = vmul.f32 %v1784, %v1803
    %s1816 = scalar_lea.vmem %s2, 4
    %v1817 = vld [vmem:[%s1816] ss:$8 sm:$0xf]
    %v1819 = vlaneseq
    %v1820 = vshrl.u32 %v1819, 7
    %v1821 = vsub.s32 0, %v1820
    %v1822 = vrot.slane %v1817, %v1821
    %v1823 = vlaneseq
    %v1824 = vshrl.u32 %v1823, 7
    %v1825 = vsub.s32 1, %v1824
    %v1826 = vrot.slane %v1817, %v1825
    %v1827 = vlaneseq
    %v1828 = vshrl.u32 %v1827, 7
    %v1829 = vsub.s32 2, %v1828
    %v1830 = vrot.slane %v1817, %v1829
    %v1831 = vlaneseq
    %v1832 = vshrl.u32 %v1831, 7
    %v1833 = vsub.s32 3, %v1832
    %v1834 = vrot.slane %v1817, %v1833
    %v1839 = vadd.f32 %v1808, %v1822
    %v1840 = vadd.f32 %v1809, %v1826
    %v1841 = vadd.f32 %v1810, %v1830
    %v1842 = vadd.f32 %v1811, %v1834
    %v1843 = vadd.f32 %v1812, %v1822
    %v1844 = vadd.f32 %v1813, %v1826
    %v1845 = vadd.f32 %v1814, %v1830
    %v1846 = vadd.f32 %v1815, %v1834
    %v1847 = vpack.c.bf16 %v1843, %v1839
    %v1848 = vpack.c.bf16 %v1844, %v1840
    %v1849 = vpack.c.bf16 %v1845, %v1841
    %v1850 = vpack.c.bf16 %v1846, %v1842
    %v1851 = vld [vmem:[#allocation10] sm:$0xff]
    %v1852 = vld [vmem:[#allocation10 + $0x8] sm:$0xff]
    %v1853 = vld [vmem:[#allocation10 + $0x10] sm:$0xff]
    %v1854 = vld [vmem:[#allocation10 + $0x18] sm:$0xff]
    %v1855 = vld [vmem:[#allocation10 + $0x20] sm:$0xff]
    %v1856 = vld [vmem:[#allocation10 + $0x28] sm:$0xff]
    %v1857 = vld [vmem:[#allocation10 + $0x30] sm:$0xff]
    %v1858 = vld [vmem:[#allocation10 + $0x38] sm:$0xff]
    %v1859 = vld [vmem:[#allocation10 + $0x40] sm:$0xff]
    %v1860 = vld [vmem:[#allocation10 + $0x48] sm:$0xff]
    %v1861 = vld [vmem:[#allocation10 + $0x50] sm:$0xff]
    %v1862 = vld [vmem:[#allocation10 + $0x58] sm:$0xff]
    %v1863 = vld [vmem:[#allocation10 + $0x60] sm:$0xff]
    %v1864 = vld [vmem:[#allocation10 + $0x68] sm:$0xff]
    %v1865 = vld [vmem:[#allocation10 + $0x70] sm:$0xff]
    %v1866 = vld [vmem:[#allocation10 + $0x78] sm:$0xff]
    %v1867 = vld [vmem:[#allocation10 + $0x80] sm:$0xff]
    %v1868 = vld [vmem:[#allocation10 + $0x88] sm:$0xff]
    %v1869 = vld [vmem:[#allocation10 + $0x90] sm:$0xff]
    %v1870 = vld [vmem:[#allocation10 + $0x98] sm:$0xff]
    %v1871 = vld [vmem:[#allocation10 + $0xa0] sm:$0xff]
    %v1872 = vld [vmem:[#allocation10 + $0xa8] sm:$0xff]
    %v1873 = vld [vmem:[#allocation10 + $0xb0] sm:$0xff]
    %v1874 = vld [vmem:[#allocation10 + $0xb8] sm:$0xff]
    %v1875 = vld [vmem:[#allocation10 + $0xc0] sm:$0xff]
    %v1876 = vld [vmem:[#allocation10 + $0xc8] sm:$0xff]
    %v1877 = vld [vmem:[#allocation10 + $0xd0] sm:$0xff]
    %v1878 = vld [vmem:[#allocation10 + $0xd8] sm:$0xff]
    %v1879 = vld [vmem:[#allocation10 + $0xe0] sm:$0xff]
    %v1880 = vld [vmem:[#allocation10 + $0xe8] sm:$0xff]
    %v1881 = vld [vmem:[#allocation10 + $0xf0] sm:$0xff]
    %v1882 = vld [vmem:[#allocation10 + $0xf8] sm:$0xff]
    %v1883 = vld [vmem:[#allocation10 + $0x100] sm:$0xff]
    %v1884 = vld [vmem:[#allocation10 + $0x108] sm:$0xff]
    %v1885 = vld [vmem:[#allocation10 + $0x110] sm:$0xff]
    %v1886 = vld [vmem:[#allocation10 + $0x118] sm:$0xff]
    %v1887 = vld [vmem:[#allocation10 + $0x120] sm:$0xff]
    %v1888 = vld [vmem:[#allocation10 + $0x128] sm:$0xff]
    %v1889 = vld [vmem:[#allocation10 + $0x130] sm:$0xff]
    %v1890 = vld [vmem:[#allocation10 + $0x138] sm:$0xff]
    %v1891 = vld [vmem:[#allocation10 + $0x140] sm:$0xff]
    %v1892 = vld [vmem:[#allocation10 + $0x148] sm:$0xff]
    %v1893 = vld [vmem:[#allocation10 + $0x150] sm:$0xff]
    %v1894 = vld [vmem:[#allocation10 + $0x158] sm:$0xff]
    %v1895 = vld [vmem:[#allocation10 + $0x160] sm:$0xff]
    %v1896 = vld [vmem:[#allocation10 + $0x168] sm:$0xff]
    %v1897 = vld [vmem:[#allocation10 + $0x170] sm:$0xff]
    %v1898 = vld [vmem:[#allocation10 + $0x178] sm:$0xff]
    %v1899 = vld [vmem:[#allocation10 + $0x180] sm:$0xff]
    %v1900 = vld [vmem:[#allocation10 + $0x188] sm:$0xff]
    %v1901 = vld [vmem:[#allocation10 + $0x190] sm:$0xff]
    %v1902 = vld [vmem:[#allocation10 + $0x198] sm:$0xff]
    %v1903 = vld [vmem:[#allocation10 + $0x1a0] sm:$0xff]
    %v1904 = vld [vmem:[#allocation10 + $0x1a8] sm:$0xff]
    %v1905 = vld [vmem:[#allocation10 + $0x1b0] sm:$0xff]
    %v1906 = vld [vmem:[#allocation10 + $0x1b8] sm:$0xff]
    %v1907 = vld [vmem:[#allocation10 + $0x1c0] sm:$0xff]
    %v1908 = vld [vmem:[#allocation10 + $0x1c8] sm:$0xff]
    %v1909 = vld [vmem:[#allocation10 + $0x1d0] sm:$0xff]
    %v1910 = vld [vmem:[#allocation10 + $0x1d8] sm:$0xff]
    %v1911 = vld [vmem:[#allocation10 + $0x1e0] sm:$0xff]
    %v1912 = vld [vmem:[#allocation10 + $0x1e8] sm:$0xff]
    %v1913 = vld [vmem:[#allocation10 + $0x1f0] sm:$0xff]
    %v1914 = vld [vmem:[#allocation10 + $0x1f8] sm:$0xff]
    %v1915 = vld [vmem:[#allocation10 + $0x200] sm:$0xff]
    %v1916 = vld [vmem:[#allocation10 + $0x208] sm:$0xff]
    %v1917 = vld [vmem:[#allocation10 + $0x210] sm:$0xff]
    %v1918 = vld [vmem:[#allocation10 + $0x218] sm:$0xff]
    %v1919 = vld [vmem:[#allocation10 + $0x220] sm:$0xff]
    %v1920 = vld [vmem:[#allocation10 + $0x228] sm:$0xff]
    %v1921 = vld [vmem:[#allocation10 + $0x230] sm:$0xff]
    %v1922 = vld [vmem:[#allocation10 + $0x238] sm:$0xff]
    %v1923 = vld [vmem:[#allocation10 + $0x240] sm:$0xff]
    %v1924 = vld [vmem:[#allocation10 + $0x248] sm:$0xff]
    %v1925 = vld [vmem:[#allocation10 + $0x250] sm:$0xff]
    %v1926 = vld [vmem:[#allocation10 + $0x258] sm:$0xff]
    %v1927 = vld [vmem:[#allocation10 + $0x260] sm:$0xff]
    %v1928 = vld [vmem:[#allocation10 + $0x268] sm:$0xff]
    %v1929 = vld [vmem:[#allocation10 + $0x270] sm:$0xff]
    %v1930 = vld [vmem:[#allocation10 + $0x278] sm:$0xff]
    %v1931 = vld [vmem:[#allocation10 + $0x280] sm:$0xff]
    %v1932 = vld [vmem:[#allocation10 + $0x288] sm:$0xff]
    %v1933 = vld [vmem:[#allocation10 + $0x290] sm:$0xff]
    %v1934 = vld [vmem:[#allocation10 + $0x298] sm:$0xff]
    %v1935 = vld [vmem:[#allocation10 + $0x2a0] sm:$0xff]
    %v1936 = vld [vmem:[#allocation10 + $0x2a8] sm:$0xff]
    %v1937 = vld [vmem:[#allocation10 + $0x2b0] sm:$0xff]
    %v1938 = vld [vmem:[#allocation10 + $0x2b8] sm:$0xff]
    %v1939 = vld [vmem:[#allocation10 + $0x2c0] sm:$0xff]
    %v1940 = vld [vmem:[#allocation10 + $0x2c8] sm:$0xff]
    %v1941 = vld [vmem:[#allocation10 + $0x2d0] sm:$0xff]
    %v1942 = vld [vmem:[#allocation10 + $0x2d8] sm:$0xff]
    %v1943 = vld [vmem:[#allocation10 + $0x2e0] sm:$0xff]
    %v1944 = vld [vmem:[#allocation10 + $0x2e8] sm:$0xff]
    %v1945 = vld [vmem:[#allocation10 + $0x2f0] sm:$0xff]
    %v1946 = vld [vmem:[#allocation10 + $0x2f8] sm:$0xff]
    %v1947 = vld [vmem:[#allocation10 + $0x300] sm:$0xff]
    %v1948 = vld [vmem:[#allocation10 + $0x308] sm:$0xff]
    %v1949 = vld [vmem:[#allocation10 + $0x310] sm:$0xff]
    %v1950 = vld [vmem:[#allocation10 + $0x318] sm:$0xff]
    %v1951 = vld [vmem:[#allocation10 + $0x320] sm:$0xff]
    %v1952 = vld [vmem:[#allocation10 + $0x328] sm:$0xff]
    %v1953 = vld [vmem:[#allocation10 + $0x330] sm:$0xff]
    %v1954 = vld [vmem:[#allocation10 + $0x338] sm:$0xff]
    %v1955 = vld [vmem:[#allocation10 + $0x340] sm:$0xff]
    %v1956 = vld [vmem:[#allocation10 + $0x348] sm:$0xff]
    %v1957 = vld [vmem:[#allocation10 + $0x350] sm:$0xff]
    %v1958 = vld [vmem:[#allocation10 + $0x358] sm:$0xff]
    %v1959 = vld [vmem:[#allocation10 + $0x360] sm:$0xff]
    %v1960 = vld [vmem:[#allocation10 + $0x368] sm:$0xff]
    %v1961 = vld [vmem:[#allocation10 + $0x370] sm:$0xff]
    %v1962 = vld [vmem:[#allocation10 + $0x378] sm:$0xff]
    %v1963 = vld [vmem:[#allocation10 + $0x380] sm:$0xff]
    %v1964 = vld [vmem:[#allocation10 + $0x388] sm:$0xff]
    %v1965 = vld [vmem:[#allocation10 + $0x390] sm:$0xff]
    %v1966 = vld [vmem:[#allocation10 + $0x398] sm:$0xff]
    %v1967 = vld [vmem:[#allocation10 + $0x3a0] sm:$0xff]
    %v1968 = vld [vmem:[#allocation10 + $0x3a8] sm:$0xff]
    %v1969 = vld [vmem:[#allocation10 + $0x3b0] sm:$0xff]
    %v1970 = vld [vmem:[#allocation10 + $0x3b8] sm:$0xff]
    %v1971 = vld [vmem:[#allocation10 + $0x3c0] sm:$0xff]
    %v1972 = vld [vmem:[#allocation10 + $0x3c8] sm:$0xff]
    %v1973 = vld [vmem:[#allocation10 + $0x3d0] sm:$0xff]
    %v1974 = vld [vmem:[#allocation10 + $0x3d8] sm:$0xff]
    %v1975 = vld [vmem:[#allocation10 + $0x3e0] sm:$0xff]
    %v1976 = vld [vmem:[#allocation10 + $0x3e8] sm:$0xff]
    %v1977 = vld [vmem:[#allocation10 + $0x3f0] sm:$0xff]
    %v1978 = vld [vmem:[#allocation10 + $0x3f8] sm:$0xff]
    %s1979 = scalar_lea.vmem %s2, 5
    %v1980 = vld [vmem:[%s1979] ss:$8 sm:$0xf]
    %v1982 = vlaneseq
    %v1983 = vshrl.u32 %v1982, 7
    %v1984 = vsub.s32 0, %v1983
    %v1985 = vrot.slane %v1980, %v1984
    %v1986 = vlaneseq
    %v1987 = vshrl.u32 %v1986, 7
    %v1988 = vsub.s32 1, %v1987
    %v1989 = vrot.slane %v1980, %v1988
    %v1990 = vlaneseq
    %v1991 = vshrl.u32 %v1990, 7
    %v1992 = vsub.s32 2, %v1991
    %v1993 = vrot.slane %v1980, %v1992
    %v1994 = vlaneseq
    %v1995 = vshrl.u32 %v1994, 7
    %v1996 = vsub.s32 3, %v1995
    %v1997 = vrot.slane %v1980, %v1996
    %v2130 = vunpack.c.l.b16 %v1851
    %v2131 = vunpack.c.h.b16 %v1851
    %v2132 = vunpack.c.l.b16 %v1852
    %v2133 = vunpack.c.h.b16 %v1852
    %v2134 = vunpack.c.l.b16 %v1853
    %v2135 = vunpack.c.h.b16 %v1853
    %v2136 = vunpack.c.l.b16 %v1854
    %v2137 = vunpack.c.h.b16 %v1854
    %v2138 = vunpack.c.l.b16 %v1855
    %v2139 = vunpack.c.h.b16 %v1855
    %v2140 = vunpack.c.l.b16 %v1856
    %v2141 = vunpack.c.h.b16 %v1856
    %v2142 = vunpack.c.l.b16 %v1857
    %v2143 = vunpack.c.h.b16 %v1857
    %v2144 = vunpack.c.l.b16 %v1858
    %v2145 = vunpack.c.h.b16 %v1858
    %v2146 = vunpack.c.l.b16 %v1859
    %v2147 = vunpack.c.h.b16 %v1859
    %v2148 = vunpack.c.l.b16 %v1860
    %v2149 = vunpack.c.h.b16 %v1860
    %v2150 = vunpack.c.l.b16 %v1861
    %v2151 = vunpack.c.h.b16 %v1861
    %v2152 = vunpack.c.l.b16 %v1862
    %v2153 = vunpack.c.h.b16 %v1862
    %v2154 = vunpack.c.l.b16 %v1863
    %v2155 = vunpack.c.h.b16 %v1863
    %v2156 = vunpack.c.l.b16 %v1864
    %v2157 = vunpack.c.h.b16 %v1864
    %v2158 = vunpack.c.l.b16 %v1865
    %v2159 = vunpack.c.h.b16 %v1865
    %v2160 = vunpack.c.l.b16 %v1866
    %v2161 = vunpack.c.h.b16 %v1866
    %v2162 = vunpack.c.l.b16 %v1867
    %v2163 = vunpack.c.h.b16 %v1867
    %v2164 = vunpack.c.l.b16 %v1868
    %v2165 = vunpack.c.h.b16 %v1868
    %v2166 = vunpack.c.l.b16 %v1869
    %v2167 = vunpack.c.h.b16 %v1869
    %v2168 = vunpack.c.l.b16 %v1870
    %v2169 = vunpack.c.h.b16 %v1870
    %v2170 = vunpack.c.l.b16 %v1871
    %v2171 = vunpack.c.h.b16 %v1871
    %v2172 = vunpack.c.l.b16 %v1872
    %v2173 = vunpack.c.h.b16 %v1872
    %v2174 = vunpack.c.l.b16 %v1873
    %v2175 = vunpack.c.h.b16 %v1873
    %v2176 = vunpack.c.l.b16 %v1874
    %v2177 = vunpack.c.h.b16 %v1874
    %v2178 = vunpack.c.l.b16 %v1875
    %v2179 = vunpack.c.h.b16 %v1875
    %v2180 = vunpack.c.l.b16 %v1876
    %v2181 = vunpack.c.h.b16 %v1876
    %v2182 = vunpack.c.l.b16 %v1877
    %v2183 = vunpack.c.h.b16 %v1877
    %v2184 = vunpack.c.l.b16 %v1878
    %v2185 = vunpack.c.h.b16 %v1878
    %v2186 = vunpack.c.l.b16 %v1879
    %v2187 = vunpack.c.h.b16 %v1879
    %v2188 = vunpack.c.l.b16 %v1880
    %v2189 = vunpack.c.h.b16 %v1880
    %v2190 = vunpack.c.l.b16 %v1881
    %v2191 = vunpack.c.h.b16 %v1881
    %v2192 = vunpack.c.l.b16 %v1882
    %v2193 = vunpack.c.h.b16 %v1882
    %v2194 = vunpack.c.l.b16 %v1883
    %v2195 = vunpack.c.h.b16 %v1883
    %v2196 = vunpack.c.l.b16 %v1884
    %v2197 = vunpack.c.h.b16 %v1884
    %v2198 = vunpack.c.l.b16 %v1885
    %v2199 = vunpack.c.h.b16 %v1885
    %v2200 = vunpack.c.l.b16 %v1886
    %v2201 = vunpack.c.h.b16 %v1886
    %v2202 = vunpack.c.l.b16 %v1887
    %v2203 = vunpack.c.h.b16 %v1887
    %v2204 = vunpack.c.l.b16 %v1888
    %v2205 = vunpack.c.h.b16 %v1888
    %v2206 = vunpack.c.l.b16 %v1889
    %v2207 = vunpack.c.h.b16 %v1889
    %v2208 = vunpack.c.l.b16 %v1890
    %v2209 = vunpack.c.h.b16 %v1890
    %v2210 = vunpack.c.l.b16 %v1891
    %v2211 = vunpack.c.h.b16 %v1891
    %v2212 = vunpack.c.l.b16 %v1892
    %v2213 = vunpack.c.h.b16 %v1892
    %v2214 = vunpack.c.l.b16 %v1893
    %v2215 = vunpack.c.h.b16 %v1893
    %v2216 = vunpack.c.l.b16 %v1894
    %v2217 = vunpack.c.h.b16 %v1894
    %v2218 = vunpack.c.l.b16 %v1895
    %v2219 = vunpack.c.h.b16 %v1895
    %v2220 = vunpack.c.l.b16 %v1896
    %v2221 = vunpack.c.h.b16 %v1896
    %v2222 = vunpack.c.l.b16 %v1897
    %v2223 = vunpack.c.h.b16 %v1897
    %v2224 = vunpack.c.l.b16 %v1898
    %v2225 = vunpack.c.h.b16 %v1898
    %v2226 = vunpack.c.l.b16 %v1899
    %v2227 = vunpack.c.h.b16 %v1899
    %v2228 = vunpack.c.l.b16 %v1900
    %v2229 = vunpack.c.h.b16 %v1900
    %v2230 = vunpack.c.l.b16 %v1901
    %v2231 = vunpack.c.h.b16 %v1901
    %v2232 = vunpack.c.l.b16 %v1902
    %v2233 = vunpack.c.h.b16 %v1902
    %v2234 = vunpack.c.l.b16 %v1903
    %v2235 = vunpack.c.h.b16 %v1903
    %v2236 = vunpack.c.l.b16 %v1904
    %v2237 = vunpack.c.h.b16 %v1904
    %v2238 = vunpack.c.l.b16 %v1905
    %v2239 = vunpack.c.h.b16 %v1905
    %v2240 = vunpack.c.l.b16 %v1906
    %v2241 = vunpack.c.h.b16 %v1906
    %v2242 = vunpack.c.l.b16 %v1907
    %v2243 = vunpack.c.h.b16 %v1907
    %v2244 = vunpack.c.l.b16 %v1908
    %v2245 = vunpack.c.h.b16 %v1908
    %v2246 = vunpack.c.l.b16 %v1909
    %v2247 = vunpack.c.h.b16 %v1909
    %v2248 = vunpack.c.l.b16 %v1910
    %v2249 = vunpack.c.h.b16 %v1910
    %v2250 = vunpack.c.l.b16 %v1911
    %v2251 = vunpack.c.h.b16 %v1911
    %v2252 = vunpack.c.l.b16 %v1912
    %v2253 = vunpack.c.h.b16 %v1912
    %v2254 = vunpack.c.l.b16 %v1913
    %v2255 = vunpack.c.h.b16 %v1913
    %v2256 = vunpack.c.l.b16 %v1914
    %v2257 = vunpack.c.h.b16 %v1914
    %v2258 = vunpack.c.l.b16 %v1915
    %v2259 = vunpack.c.h.b16 %v1915
    %v2260 = vunpack.c.l.b16 %v1916
    %v2261 = vunpack.c.h.b16 %v1916
    %v2262 = vunpack.c.l.b16 %v1917
    %v2263 = vunpack.c.h.b16 %v1917
    %v2264 = vunpack.c.l.b16 %v1918
    %v2265 = vunpack.c.h.b16 %v1918
    %v2266 = vunpack.c.l.b16 %v1919
    %v2267 = vunpack.c.h.b16 %v1919
    %v2268 = vunpack.c.l.b16 %v1920
    %v2269 = vunpack.c.h.b16 %v1920
    %v2270 = vunpack.c.l.b16 %v1921
    %v2271 = vunpack.c.h.b16 %v1921
    %v2272 = vunpack.c.l.b16 %v1922
    %v2273 = vunpack.c.h.b16 %v1922
    %v2274 = vunpack.c.l.b16 %v1923
    %v2275 = vunpack.c.h.b16 %v1923
    %v2276 = vunpack.c.l.b16 %v1924
    %v2277 = vunpack.c.h.b16 %v1924
    %v2278 = vunpack.c.l.b16 %v1925
    %v2279 = vunpack.c.h.b16 %v1925
    %v2280 = vunpack.c.l.b16 %v1926
    %v2281 = vunpack.c.h.b16 %v1926
    %v2282 = vunpack.c.l.b16 %v1927
    %v2283 = vunpack.c.h.b16 %v1927
    %v2284 = vunpack.c.l.b16 %v1928
    %v2285 = vunpack.c.h.b16 %v1928
    %v2286 = vunpack.c.l.b16 %v1929
    %v2287 = vunpack.c.h.b16 %v1929
    %v2288 = vunpack.c.l.b16 %v1930
    %v2289 = vunpack.c.h.b16 %v1930
    %v2290 = vunpack.c.l.b16 %v1931
    %v2291 = vunpack.c.h.b16 %v1931
    %v2292 = vunpack.c.l.b16 %v1932
    %v2293 = vunpack.c.h.b16 %v1932
    %v2294 = vunpack.c.l.b16 %v1933
    %v2295 = vunpack.c.h.b16 %v1933
    %v2296 = vunpack.c.l.b16 %v1934
    %v2297 = vunpack.c.h.b16 %v1934
    %v2298 = vunpack.c.l.b16 %v1935
    %v2299 = vunpack.c.h.b16 %v1935
    %v2300 = vunpack.c.l.b16 %v1936
    %v2301 = vunpack.c.h.b16 %v1936
    %v2302 = vunpack.c.l.b16 %v1937
    %v2303 = vunpack.c.h.b16 %v1937
    %v2304 = vunpack.c.l.b16 %v1938
    %v2305 = vunpack.c.h.b16 %v1938
    %v2306 = vunpack.c.l.b16 %v1939
    %v2307 = vunpack.c.h.b16 %v1939
    %v2308 = vunpack.c.l.b16 %v1940
    %v2309 = vunpack.c.h.b16 %v1940
    %v2310 = vunpack.c.l.b16 %v1941
    %v2311 = vunpack.c.h.b16 %v1941
    %v2312 = vunpack.c.l.b16 %v1942
    %v2313 = vunpack.c.h.b16 %v1942
    %v2314 = vunpack.c.l.b16 %v1943
    %v2315 = vunpack.c.h.b16 %v1943
    %v2316 = vunpack.c.l.b16 %v1944
    %v2317 = vunpack.c.h.b16 %v1944
    %v2318 = vunpack.c.l.b16 %v1945
    %v2319 = vunpack.c.h.b16 %v1945
    %v2320 = vunpack.c.l.b16 %v1946
    %v2321 = vunpack.c.h.b16 %v1946
    %v2322 = vunpack.c.l.b16 %v1947
    %v2323 = vunpack.c.h.b16 %v1947
    %v2324 = vunpack.c.l.b16 %v1948
    %v2325 = vunpack.c.h.b16 %v1948
    %v2326 = vunpack.c.l.b16 %v1949
    %v2327 = vunpack.c.h.b16 %v1949
    %v2328 = vunpack.c.l.b16 %v1950
    %v2329 = vunpack.c.h.b16 %v1950
    %v2330 = vunpack.c.l.b16 %v1951
    %v2331 = vunpack.c.h.b16 %v1951
    %v2332 = vunpack.c.l.b16 %v1952
    %v2333 = vunpack.c.h.b16 %v1952
    %v2334 = vunpack.c.l.b16 %v1953
    %v2335 = vunpack.c.h.b16 %v1953
    %v2336 = vunpack.c.l.b16 %v1954
    %v2337 = vunpack.c.h.b16 %v1954
    %v2338 = vunpack.c.l.b16 %v1955
    %v2339 = vunpack.c.h.b16 %v1955
    %v2340 = vunpack.c.l.b16 %v1956
    %v2341 = vunpack.c.h.b16 %v1956
    %v2342 = vunpack.c.l.b16 %v1957
    %v2343 = vunpack.c.h.b16 %v1957
    %v2344 = vunpack.c.l.b16 %v1958
    %v2345 = vunpack.c.h.b16 %v1958
    %v2346 = vunpack.c.l.b16 %v1959
    %v2347 = vunpack.c.h.b16 %v1959
    %v2348 = vunpack.c.l.b16 %v1960
    %v2349 = vunpack.c.h.b16 %v1960
    %v2350 = vunpack.c.l.b16 %v1961
    %v2351 = vunpack.c.h.b16 %v1961
    %v2352 = vunpack.c.l.b16 %v1962
    %v2353 = vunpack.c.h.b16 %v1962
    %v2354 = vunpack.c.l.b16 %v1963
    %v2355 = vunpack.c.h.b16 %v1963
    %v2356 = vunpack.c.l.b16 %v1964
    %v2357 = vunpack.c.h.b16 %v1964
    %v2358 = vunpack.c.l.b16 %v1965
    %v2359 = vunpack.c.h.b16 %v1965
    %v2360 = vunpack.c.l.b16 %v1966
    %v2361 = vunpack.c.h.b16 %v1966
    %v2362 = vunpack.c.l.b16 %v1967
    %v2363 = vunpack.c.h.b16 %v1967
    %v2364 = vunpack.c.l.b16 %v1968
    %v2365 = vunpack.c.h.b16 %v1968
    %v2366 = vunpack.c.l.b16 %v1969
    %v2367 = vunpack.c.h.b16 %v1969
    %v2368 = vunpack.c.l.b16 %v1970
    %v2369 = vunpack.c.h.b16 %v1970
    %v2370 = vunpack.c.l.b16 %v1971
    %v2371 = vunpack.c.h.b16 %v1971
    %v2372 = vunpack.c.l.b16 %v1972
    %v2373 = vunpack.c.h.b16 %v1972
    %v2374 = vunpack.c.l.b16 %v1973
    %v2375 = vunpack.c.h.b16 %v1973
    %v2376 = vunpack.c.l.b16 %v1974
    %v2377 = vunpack.c.h.b16 %v1974
    %v2378 = vunpack.c.l.b16 %v1975
    %v2379 = vunpack.c.h.b16 %v1975
    %v2380 = vunpack.c.l.b16 %v1976
    %v2381 = vunpack.c.h.b16 %v1976
    %v2382 = vunpack.c.l.b16 %v1977
    %v2383 = vunpack.c.h.b16 %v1977
    %v2384 = vunpack.c.l.b16 %v1978
    %v2385 = vunpack.c.h.b16 %v1978
    %v2386 = vpack.c.b16 %v2134, %v2130
    %v2387 = vpack.c.b16 %v2135, %v2131
    %v2388 = vpack.c.b16 %v2136, %v2132
    %v2389 = vpack.c.b16 %v2137, %v2133
    %v2390 = vpack.c.b16 %v2142, %v2138
    %v2391 = vpack.c.b16 %v2143, %v2139
    %v2392 = vpack.c.b16 %v2144, %v2140
    %v2393 = vpack.c.b16 %v2145, %v2141
    %v2394 = vpack.c.b16 %v2150, %v2146
    %v2395 = vpack.c.b16 %v2151, %v2147
    %v2396 = vpack.c.b16 %v2152, %v2148
    %v2397 = vpack.c.b16 %v2153, %v2149
    %v2398 = vpack.c.b16 %v2158, %v2154
    %v2399 = vpack.c.b16 %v2159, %v2155
    %v2400 = vpack.c.b16 %v2160, %v2156
    %v2401 = vpack.c.b16 %v2161, %v2157
    %v2402 = vpack.c.b16 %v2166, %v2162
    %v2403 = vpack.c.b16 %v2167, %v2163
    %v2404 = vpack.c.b16 %v2168, %v2164
    %v2405 = vpack.c.b16 %v2169, %v2165
    %v2406 = vpack.c.b16 %v2174, %v2170
    %v2407 = vpack.c.b16 %v2175, %v2171
    %v2408 = vpack.c.b16 %v2176, %v2172
    %v2409 = vpack.c.b16 %v2177, %v2173
    %v2410 = vpack.c.b16 %v2182, %v2178
    %v2411 = vpack.c.b16 %v2183, %v2179
    %v2412 = vpack.c.b16 %v2184, %v2180
    %v2413 = vpack.c.b16 %v2185, %v2181
    %v2414 = vpack.c.b16 %v2190, %v2186
    %v2415 = vpack.c.b16 %v2191, %v2187
    %v2416 = vpack.c.b16 %v2192, %v2188
    %v2417 = vpack.c.b16 %v2193, %v2189
    %v2418 = vpack.c.b16 %v2198, %v2194
    %v2419 = vpack.c.b16 %v2199, %v2195
    %v2420 = vpack.c.b16 %v2200, %v2196
    %v2421 = vpack.c.b16 %v2201, %v2197
    %v2422 = vpack.c.b16 %v2206, %v2202
    %v2423 = vpack.c.b16 %v2207, %v2203
    %v2424 = vpack.c.b16 %v2208, %v2204
    %v2425 = vpack.c.b16 %v2209, %v2205
    %v2426 = vpack.c.b16 %v2214, %v2210
    %v2427 = vpack.c.b16 %v2215, %v2211
    %v2428 = vpack.c.b16 %v2216, %v2212
    %v2429 = vpack.c.b16 %v2217, %v2213
    %v2430 = vpack.c.b16 %v2222, %v2218
    %v2431 = vpack.c.b16 %v2223, %v2219
    %v2432 = vpack.c.b16 %v2224, %v2220
    %v2433 = vpack.c.b16 %v2225, %v2221
    %v2434 = vpack.c.b16 %v2230, %v2226
    %v2435 = vpack.c.b16 %v2231, %v2227
    %v2436 = vpack.c.b16 %v2232, %v2228
    %v2437 = vpack.c.b16 %v2233, %v2229
    %v2438 = vpack.c.b16 %v2238, %v2234
    %v2439 = vpack.c.b16 %v2239, %v2235
    %v2440 = vpack.c.b16 %v2240, %v2236
    %v2441 = vpack.c.b16 %v2241, %v2237
    %v2442 = vpack.c.b16 %v2246, %v2242
    %v2443 = vpack.c.b16 %v2247, %v2243
    %v2444 = vpack.c.b16 %v2248, %v2244
    %v2445 = vpack.c.b16 %v2249, %v2245
    %v2446 = vpack.c.b16 %v2254, %v2250
    %v2447 = vpack.c.b16 %v2255, %v2251
    %v2448 = vpack.c.b16 %v2256, %v2252
    %v2449 = vpack.c.b16 %v2257, %v2253
    %v2450 = vpack.c.b16 %v2262, %v2258
    %v2451 = vpack.c.b16 %v2263, %v2259
    %v2452 = vpack.c.b16 %v2264, %v2260
    %v2453 = vpack.c.b16 %v2265, %v2261
    %v2454 = vpack.c.b16 %v2270, %v2266
    %v2455 = vpack.c.b16 %v2271, %v2267
    %v2456 = vpack.c.b16 %v2272, %v2268
    %v2457 = vpack.c.b16 %v2273, %v2269
    %v2458 = vpack.c.b16 %v2278, %v2274
    %v2459 = vpack.c.b16 %v2279, %v2275
    %v2460 = vpack.c.b16 %v2280, %v2276
    %v2461 = vpack.c.b16 %v2281, %v2277
    %v2462 = vpack.c.b16 %v2286, %v2282
    %v2463 = vpack.c.b16 %v2287, %v2283
    %v2464 = vpack.c.b16 %v2288, %v2284
    %v2465 = vpack.c.b16 %v2289, %v2285
    %v2466 = vpack.c.b16 %v2294, %v2290
    %v2467 = vpack.c.b16 %v2295, %v2291
    %v2468 = vpack.c.b16 %v2296, %v2292
    %v2469 = vpack.c.b16 %v2297, %v2293
    %v2470 = vpack.c.b16 %v2302, %v2298
    %v2471 = vpack.c.b16 %v2303, %v2299
    %v2472 = vpack.c.b16 %v2304, %v2300
    %v2473 = vpack.c.b16 %v2305, %v2301
    %v2474 = vpack.c.b16 %v2310, %v2306
    %v2475 = vpack.c.b16 %v2311, %v2307
    %v2476 = vpack.c.b16 %v2312, %v2308
    %v2477 = vpack.c.b16 %v2313, %v2309
    %v2478 = vpack.c.b16 %v2318, %v2314
    %v2479 = vpack.c.b16 %v2319, %v2315
    %v2480 = vpack.c.b16 %v2320, %v2316
    %v2481 = vpack.c.b16 %v2321, %v2317
    %v2482 = vpack.c.b16 %v2326, %v2322
    %v2483 = vpack.c.b16 %v2327, %v2323
    %v2484 = vpack.c.b16 %v2328, %v2324
    %v2485 = vpack.c.b16 %v2329, %v2325
    %v2486 = vpack.c.b16 %v2334, %v2330
    %v2487 = vpack.c.b16 %v2335, %v2331
    %v2488 = vpack.c.b16 %v2336, %v2332
    %v2489 = vpack.c.b16 %v2337, %v2333
    %v2490 = vpack.c.b16 %v2342, %v2338
    %v2491 = vpack.c.b16 %v2343, %v2339
    %v2492 = vpack.c.b16 %v2344, %v2340
    %v2493 = vpack.c.b16 %v2345, %v2341
    %v2494 = vpack.c.b16 %v2350, %v2346
    %v2495 = vpack.c.b16 %v2351, %v2347
    %v2496 = vpack.c.b16 %v2352, %v2348
    %v2497 = vpack.c.b16 %v2353, %v2349
    %v2498 = vpack.c.b16 %v2358, %v2354
    %v2499 = vpack.c.b16 %v2359, %v2355
    %v2500 = vpack.c.b16 %v2360, %v2356
    %v2501 = vpack.c.b16 %v2361, %v2357
    %v2502 = vpack.c.b16 %v2366, %v2362
    %v2503 = vpack.c.b16 %v2367, %v2363
    %v2504 = vpack.c.b16 %v2368, %v2364
    %v2505 = vpack.c.b16 %v2369, %v2365
    %v2506 = vpack.c.b16 %v2374, %v2370
    %v2507 = vpack.c.b16 %v2375, %v2371
    %v2508 = vpack.c.b16 %v2376, %v2372
    %v2509 = vpack.c.b16 %v2377, %v2373
    %v2510 = vpack.c.b16 %v2382, %v2378
    %v2511 = vpack.c.b16 %v2383, %v2379
    %v2512 = vpack.c.b16 %v2384, %v2380
    %v2513 = vpack.c.b16 %v2385, %v2381
    %2642 = vmatprep.subr.bf16.mxu0 %v2415
    %2643 = vmatpush1.bf16.msra.mxu0 %v2414
    %2644 = vmatprep.subr.bf16.mxu0 %v2411
    %2645 = vmatpush1.bf16.msra.mxu0 %v2410
    %2646 = vmatprep.subr.bf16.mxu0 %v2407
    %2647 = vmatpush1.bf16.msra.mxu0 %v2406
    %2648 = vmatprep.subr.bf16.mxu0 %v2403
    %2649 = vmatpush1.bf16.msra.mxu0 %v2402
    %2650 = vmatprep.subr.bf16.mxu0 %v2399
    %2651 = vmatpush1.bf16.msra.mxu0 %v2398
    %2652 = vmatprep.subr.bf16.mxu0 %v2395
    %2653 = vmatpush1.bf16.msra.mxu0 %v2394
    %2654 = vmatprep.subr.bf16.mxu0 %v2391
    %2655 = vmatpush1.bf16.msra.mxu0 %v2390
    %2656 = vmatprep.subr.bf16.mxu0 %v2387
    %2657 = vmatpush1.bf16.msra.mxu0 %v2386
    %2658 = vmatprep.subr.bf16.mxu0 %v2447
    %2659 = vmatpush2.bf16.msra.mxu0 %v2446
    %2660 = vmatprep.subr.bf16.mxu0 %v2443
    %2661 = vmatpush2.bf16.msra.mxu0 %v2442
    %2662 = vmatprep.subr.bf16.mxu0 %v2439
    %2663 = vmatpush2.bf16.msra.mxu0 %v2438
    %2664 = vmatprep.subr.bf16.mxu0 %v2435
    %2665 = vmatpush2.bf16.msra.mxu0 %v2434
    %2666 = vmatprep.subr.bf16.mxu0 %v2431
    %2667 = vmatpush2.bf16.msra.mxu0 %v2430
    %2668 = vmatprep.subr.bf16.mxu0 %v2427
    %2669 = vmatpush2.bf16.msra.mxu0 %v2426
    %2670 = vmatprep.subr.bf16.mxu0 %v2423
    %2671 = vmatpush2.bf16.msra.mxu0 %v2422
    %2672 = vmatprep.subr.bf16.mxu0 %v2419
    %2673 = vmatpush2.bf16.msra.mxu0 %v2418
    %2674 = vmatprep.mubr.bf16.mxu0 %v1848
    %2675 = vmatmul.mubr.bf16.gmra.mxu0 %v1847
    %v2676 = vpop.f32.mrf.mxu0
    %v2677 = vadd.f32 %v1985, %v2676
    %v2678 = vpop.f32.mrf.mxu0
    %v2679 = vadd.f32 %v1989, %v2678
    %v2680 = vpop.f32.mrf.mxu0
    %v2681 = vadd.f32 %v1985, %v2680
    %v2682 = vpop.f32.mrf.mxu0
    %v2683 = vadd.f32 %v1989, %v2682
    %2684 = vdwg.mxu0
    %2685 = vmatprep.subr.bf16.mxu0 %v2479
    %2686 = vmatpush1.bf16.msra.mxu0 %v2478
    %2687 = vmatprep.subr.bf16.mxu0 %v2475
    %2688 = vmatpush1.bf16.msra.mxu0 %v2474
    %2689 = vmatprep.subr.bf16.mxu0 %v2471
    %2690 = vmatpush1.bf16.msra.mxu0 %v2470
    %2691 = vmatprep.subr.bf16.mxu0 %v2467
    %2692 = vmatpush1.bf16.msra.mxu0 %v2466
    %2693 = vmatprep.subr.bf16.mxu0 %v2463
    %2694 = vmatpush1.bf16.msra.mxu0 %v2462
    %2695 = vmatprep.subr.bf16.mxu0 %v2459
    %2696 = vmatpush1.bf16.msra.mxu0 %v2458
    %2697 = vmatprep.subr.bf16.mxu0 %v2455
    %2698 = vmatpush1.bf16.msra.mxu0 %v2454
    %2699 = vmatprep.subr.bf16.mxu0 %v2451
    %2700 = vmatpush1.bf16.msra.mxu0 %v2450
    %2701 = vmatprep.subr.bf16.mxu0 %v2511
    %2702 = vmatpush2.bf16.msra.mxu0 %v2510
    %2703 = vmatprep.subr.bf16.mxu0 %v2507
    %2704 = vmatpush2.bf16.msra.mxu0 %v2506
    %2705 = vmatprep.subr.bf16.mxu0 %v2503
    %2706 = vmatpush2.bf16.msra.mxu0 %v2502
    %2707 = vmatprep.subr.bf16.mxu0 %v2499
    %2708 = vmatpush2.bf16.msra.mxu0 %v2498
    %2709 = vmatprep.subr.bf16.mxu0 %v2495
    %2710 = vmatpush2.bf16.msra.mxu0 %v2494
    %2711 = vmatprep.subr.bf16.mxu0 %v2491
    %2712 = vmatpush2.bf16.msra.mxu0 %v2490
    %2713 = vmatprep.subr.bf16.mxu0 %v2487
    %2714 = vmatpush2.bf16.msra.mxu0 %v2486
    %2715 = vmatprep.subr.bf16.mxu0 %v2483
    %2716 = vmatpush2.bf16.msra.mxu0 %v2482
    %2717 = vmatprep.mubr.bf16.mxu0 %v1850
    %2718 = vmatmul.mubr.bf16.gmra.mxu0 %v1849
    %v2719 = vpop.f32.mrf.mxu0
    %v2720 = vadd.f32 %v2677, %v2719
    %v2721 = vpop.f32.mrf.mxu0
    %v2722 = vadd.f32 %v2679, %v2721
    %v2723 = vpop.f32.mrf.mxu0
    %v2724 = vadd.f32 %v2681, %v2723
    %v2725 = vpop.f32.mrf.mxu0
    %v2726 = vadd.f32 %v2683, %v2725
    %2727 = vdwg.mxu0
    %2728 = vmatprep.subr.bf16.mxu0 %v2417
    %2729 = vmatpush1.bf16.msra.mxu0 %v2416
    %2730 = vmatprep.subr.bf16.mxu0 %v2413
    %2731 = vmatpush1.bf16.msra.mxu0 %v2412
    %2732 = vmatprep.subr.bf16.mxu0 %v2409
    %2733 = vmatpush1.bf16.msra.mxu0 %v2408
    %2734 = vmatprep.subr.bf16.mxu0 %v2405
    %2735 = vmatpush1.bf16.msra.mxu0 %v2404
    %2736 = vmatprep.subr.bf16.mxu0 %v2401
    %2737 = vmatpush1.bf16.msra.mxu0 %v2400
    %2738 = vmatprep.subr.bf16.mxu0 %v2397
    %2739 = vmatpush1.bf16.msra.mxu0 %v2396
    %2740 = vmatprep.subr.bf16.mxu0 %v2393
    %2741 = vmatpush1.bf16.msra.mxu0 %v2392
    %2742 = vmatprep.subr.bf16.mxu0 %v2389
    %2743 = vmatpush1.bf16.msra.mxu0 %v2388
    %2744 = vmatprep.subr.bf16.mxu0 %v2449
    %2745 = vmatpush2.bf16.msra.mxu0 %v2448
    %2746 = vmatprep.subr.bf16.mxu0 %v2445
    %2747 = vmatpush2.bf16.msra.mxu0 %v2444
    %2748 = vmatprep.subr.bf16.mxu0 %v2441
    %2749 = vmatpush2.bf16.msra.mxu0 %v2440
    %2750 = vmatprep.subr.bf16.mxu0 %v2437
    %2751 = vmatpush2.bf16.msra.mxu0 %v2436
    %2752 = vmatprep.subr.bf16.mxu0 %v2433
    %2753 = vmatpush2.bf16.msra.mxu0 %v2432
    %2754 = vmatprep.subr.bf16.mxu0 %v2429
    %2755 = vmatpush2.bf16.msra.mxu0 %v2428
    %2756 = vmatprep.subr.bf16.mxu0 %v2425
    %2757 = vmatpush2.bf16.msra.mxu0 %v2424
    %2758 = vmatprep.subr.bf16.mxu0 %v2421
    %2759 = vmatpush2.bf16.msra.mxu0 %v2420
    %2760 = vmatprep.mubr.bf16.mxu0 %v1848
    %2761 = vmatmul.mubr.bf16.gmra.mxu0 %v1847
    %v2762 = vpop.f32.mrf.mxu0
    %v2763 = vadd.f32 %v1993, %v2762
    %v2764 = vpop.f32.mrf.mxu0
    %v2765 = vadd.f32 %v1997, %v2764
    %v2766 = vpop.f32.mrf.mxu0
    %v2767 = vadd.f32 %v1993, %v2766
    %v2768 = vpop.f32.mrf.mxu0
    %v2769 = vadd.f32 %v1997, %v2768
    %2770 = vdwg.mxu0
    %2771 = vmatprep.subr.bf16.mxu0 %v2481
    %2772 = vmatpush1.bf16.msra.mxu0 %v2480
    %2773 = vmatprep.subr.bf16.mxu0 %v2477
    %2774 = vmatpush1.bf16.msra.mxu0 %v2476
    %2775 = vmatprep.subr.bf16.mxu0 %v2473
    %2776 = vmatpush1.bf16.msra.mxu0 %v2472
    %2777 = vmatprep.subr.bf16.mxu0 %v2469
    %2778 = vmatpush1.bf16.msra.mxu0 %v2468
    %2779 = vmatprep.subr.bf16.mxu0 %v2465
    %2780 = vmatpush1.bf16.msra.mxu0 %v2464
    %2781 = vmatprep.subr.bf16.mxu0 %v2461
    %2782 = vmatpush1.bf16.msra.mxu0 %v2460
    %2783 = vmatprep.subr.bf16.mxu0 %v2457
    %2784 = vmatpush1.bf16.msra.mxu0 %v2456
    %2785 = vmatprep.subr.bf16.mxu0 %v2453
    %2786 = vmatpush1.bf16.msra.mxu0 %v2452
    %2787 = vmatprep.subr.bf16.mxu0 %v2513
    %2788 = vmatpush2.bf16.msra.mxu0 %v2512
    %2789 = vmatprep.subr.bf16.mxu0 %v2509
    %2790 = vmatpush2.bf16.msra.mxu0 %v2508
    %2791 = vmatprep.subr.bf16.mxu0 %v2505
    %2792 = vmatpush2.bf16.msra.mxu0 %v2504
    %2793 = vmatprep.subr.bf16.mxu0 %v2501
    %2794 = vmatpush2.bf16.msra.mxu0 %v2500
    %2795 = vmatprep.subr.bf16.mxu0 %v2497
    %2796 = vmatpush2.bf16.msra.mxu0 %v2496
    %2797 = vmatprep.subr.bf16.mxu0 %v2493
    %2798 = vmatpush2.bf16.msra.mxu0 %v2492
    %2799 = vmatprep.subr.bf16.mxu0 %v2489
    %2800 = vmatpush2.bf16.msra.mxu0 %v2488
    %2801 = vmatprep.subr.bf16.mxu0 %v2485
    %2802 = vmatpush2.bf16.msra.mxu0 %v2484
    %2803 = vmatprep.mubr.bf16.mxu0 %v1850
    %2804 = vmatmul.mubr.bf16.gmra.mxu0 %v1849
    %v2805 = vpop.f32.mrf.mxu0
    %v2806 = vadd.f32 %v2763, %v2805
    %v2807 = vpop.f32.mrf.mxu0
    %v2808 = vadd.f32 %v2765, %v2807
    %v2809 = vpop.f32.mrf.mxu0
    %v2810 = vadd.f32 %v2767, %v2809
    %v2811 = vpop.f32.mrf.mxu0
    %v2812 = vadd.f32 %v2769, %v2811
    %2813 = vdwg.mxu0
    %v2814 = vadd.f32 %v2720, %v2722
    %v2815 = vadd.f32 %v2814, %v2806
    %v2816 = vadd.f32 %v2815, %v2808
    %2817 = vadd.xlane.f32.xlu0 %v2816
    %v2818 = vpop.xlane.xlu0 %2817
    %v2819 = vadd.f32 %v2724, %v2726
    %v2820 = vadd.f32 %v2819, %v2810
    %v2821 = vadd.f32 %v2820, %v2812
    %2822 = vadd.xlane.f32.xlu0 %v2821
    %v2823 = vpop.xlane.xlu0 %2822
    %v2824 = vmul.f32 %v2818, %v1738
    %v2825 = vmul.f32 %v2823, %v1738
    %v2826 = vmul.f32 %v2720, %v2720
    %v2827 = vmul.f32 %v2722, %v2722
    %v2828 = vmul.f32 %v2806, %v2806
    %v2829 = vmul.f32 %v2808, %v2808
    %v2830 = vmul.f32 %v2724, %v2724
    %v2831 = vmul.f32 %v2726, %v2726
    %v2832 = vmul.f32 %v2810, %v2810
    %v2833 = vmul.f32 %v2812, %v2812
    %v2834 = vadd.f32 %v2826, %v2827
    %v2835 = vadd.f32 %v2834, %v2828
    %v2836 = vadd.f32 %v2835, %v2829
    %2837 = vadd.xlane.f32.xlu0 %v2836
    %v2838 = vpop.xlane.xlu0 %2837
    %v2839 = vadd.f32 %v2830, %v2831
    %v2840 = vadd.f32 %v2839, %v2832
    %v2841 = vadd.f32 %v2840, %v2833
    %2842 = vadd.xlane.f32.xlu0 %v2841
    %v2843 = vpop.xlane.xlu0 %2842
    %v2844 = vmul.f32 %v2838, %v1738
    %v2845 = vmul.f32 %v2843, %v1738
    %v2846 = vmul.f32 %v2824, %v2824
    %v2847 = vmul.f32 %v2825, %v2825
    %v2848 = vsub.f32 %v2844, %v2846
    %v2849 = vsub.f32 %v2845, %v2847
    %v2850 = vadd.f32 %v2848, 1e-05
    %v2851 = vadd.f32 %v2849, 1e-05
    %v2852 = vrsqrt.pop %v2850
    %v2853 = vrsqrt.pop %v2851
    %v2854 = vsub.f32 %v2720, %v2824
    %v2855 = vsub.f32 %v2722, %v2824
    %v2856 = vsub.f32 %v2806, %v2824
    %v2857 = vsub.f32 %v2808, %v2824
    %v2858 = vsub.f32 %v2724, %v2825
    %v2859 = vsub.f32 %v2726, %v2825
    %v2860 = vsub.f32 %v2810, %v2825
    %v2861 = vsub.f32 %v2812, %v2825
    %v2862 = vmul.f32 %v2854, %v2852
    %v2863 = vmul.f32 %v2855, %v2852
    %v2864 = vmul.f32 %v2856, %v2852
    %v2865 = vmul.f32 %v2857, %v2852
    %v2866 = vmul.f32 %v2858, %v2853
    %v2867 = vmul.f32 %v2859, %v2853
    %v2868 = vmul.f32 %v2860, %v2853
    %v2869 = vmul.f32 %v2861, %v2853
    %s2870 = scalar_lea.vmem %s2, 6
    %v2871 = vld [vmem:[%s2870] ss:$8 sm:$0xf]
    %v2873 = vlaneseq
    %v2874 = vshrl.u32 %v2873, 7
    %v2875 = vsub.s32 0, %v2874
    %v2876 = vrot.slane %v2871, %v2875
    %v2877 = vlaneseq
    %v2878 = vshrl.u32 %v2877, 7
    %v2879 = vsub.s32 1, %v2878
    %v2880 = vrot.slane %v2871, %v2879
    %v2881 = vlaneseq
    %v2882 = vshrl.u32 %v2881, 7
    %v2883 = vsub.s32 2, %v2882
    %v2884 = vrot.slane %v2871, %v2883
    %v2885 = vlaneseq
    %v2886 = vshrl.u32 %v2885, 7
    %v2887 = vsub.s32 3, %v2886
    %v2888 = vrot.slane %v2871, %v2887
    %v2893 = vmul.f32 %v2862, %v2876
    %v2894 = vmul.f32 %v2863, %v2880
    %v2895 = vmul.f32 %v2864, %v2884
    %v2896 = vmul.f32 %v2865, %v2888
    %v2897 = vmul.f32 %v2866, %v2876
    %v2898 = vmul.f32 %v2867, %v2880
    %v2899 = vmul.f32 %v2868, %v2884
    %v2900 = vmul.f32 %v2869, %v2888
    %s2901 = scalar_lea.vmem %s2, 7
    %v2902 = vld [vmem:[%s2901] ss:$8 sm:$0xf]
    %v2904 = vlaneseq
    %v2905 = vshrl.u32 %v2904, 7
    %v2906 = vsub.s32 0, %v2905
    %v2907 = vrot.slane %v2902, %v2906
    %v2908 = vlaneseq
    %v2909 = vshrl.u32 %v2908, 7
    %v2910 = vsub.s32 1, %v2909
    %v2911 = vrot.slane %v2902, %v2910
    %v2912 = vlaneseq
    %v2913 = vshrl.u32 %v2912, 7
    %v2914 = vsub.s32 2, %v2913
    %v2915 = vrot.slane %v2902, %v2914
    %v2916 = vlaneseq
    %v2917 = vshrl.u32 %v2916, 7
    %v2918 = vsub.s32 3, %v2917
    %v2919 = vrot.slane %v2902, %v2918
    %v2924 = vadd.f32 %v2893, %v2907
    %v2925 = vadd.f32 %v2894, %v2911
    %v2926 = vadd.f32 %v2895, %v2915
    %v2927 = vadd.f32 %v2896, %v2919
    %v2928 = vadd.f32 %v2897, %v2907
    %v2929 = vadd.f32 %v2898, %v2911
    %v2930 = vadd.f32 %v2899, %v2915
    %v2931 = vadd.f32 %v2900, %v2919
    %v2932 = vmul.f32 %v2924, 0.5
    %v2933 = vmul.f32 %v2925, 0.5
    %v2934 = vmul.f32 %v2926, 0.5
    %v2935 = vmul.f32 %v2927, 0.5
    %v2936 = vmul.f32 %v2928, 0.5
    %v2937 = vmul.f32 %v2929, 0.5
    %v2938 = vmul.f32 %v2930, 0.5
    %v2939 = vmul.f32 %v2931, 0.5
    %v2940 = vtanh.pop %v2932
    %v2941 = vtanh.pop %v2933
    %v2942 = vtanh.pop %v2934
    %v2943 = vtanh.pop %v2935
    %v2944 = vtanh.pop %v2936
    %v2945 = vtanh.pop %v2937
    %v2946 = vtanh.pop %v2938
    %v2947 = vtanh.pop %v2939
    %v2948 = vmul.f32 %v2940, 0.5
    %v2949 = vmul.f32 %v2941, 0.5
    %v2950 = vmul.f32 %v2942, 0.5
    %v2951 = vmul.f32 %v2943, 0.5
    %v2952 = vmul.f32 %v2944, 0.5
    %v2953 = vmul.f32 %v2945, 0.5
    %v2954 = vmul.f32 %v2946, 0.5
    %v2955 = vmul.f32 %v2947, 0.5
    %v2956 = vadd.f32 %v2948, 0.5
    %v2957 = vadd.f32 %v2949, 0.5
    %v2958 = vadd.f32 %v2950, 0.5
    %v2959 = vadd.f32 %v2951, 0.5
    %v2960 = vadd.f32 %v2952, 0.5
    %v2961 = vadd.f32 %v2953, 0.5
    %v2962 = vadd.f32 %v2954, 0.5
    %v2963 = vadd.f32 %v2955, 0.5
    %v2964 = vmul.f32 %v2924, %v2956
    %v2965 = vmul.f32 %v2925, %v2957
    %v2966 = vmul.f32 %v2926, %v2958
    %v2967 = vmul.f32 %v2927, %v2959
    %v2968 = vmul.f32 %v2928, %v2960
    %v2969 = vmul.f32 %v2929, %v2961
    %v2970 = vmul.f32 %v2930, %v2962
    %v2971 = vmul.f32 %v2931, %v2963
    %v2972 = vpack.c.bf16 %v2968, %v2964
    %v2973 = vpack.c.bf16 %v2969, %v2965
    %v2974 = vpack.c.bf16 %v2970, %v2966
    %v2975 = vpack.c.bf16 %v2971, %v2967
    %v2976 = vld [vmem:[#allocation12] sm:$0xff]
    %v2977 = vld [vmem:[#allocation12 + $0x8] sm:$0xff]
    %v2978 = vld [vmem:[#allocation12 + $0x10] sm:$0xff]
    %v2979 = vld [vmem:[#allocation12 + $0x18] sm:$0xff]
    %v2980 = vld [vmem:[#allocation12 + $0x20] sm:$0xff]
    %v2981 = vld [vmem:[#allocation12 + $0x28] sm:$0xff]
    %v2982 = vld [vmem:[#allocation12 + $0x30] sm:$0xff]
    %v2983 = vld [vmem:[#allocation12 + $0x38] sm:$0xff]
    %v2984 = vld [vmem:[#allocation12 + $0x40] sm:$0xff]
    %v2985 = vld [vmem:[#allocation12 + $0x48] sm:$0xff]
    %v2986 = vld [vmem:[#allocation12 + $0x50] sm:$0xff]
    %v2987 = vld [vmem:[#allocation12 + $0x58] sm:$0xff]
    %v2988 = vld [vmem:[#allocation12 + $0x60] sm:$0xff]
    %v2989 = vld [vmem:[#allocation12 + $0x68] sm:$0xff]
    %v2990 = vld [vmem:[#allocation12 + $0x70] sm:$0xff]
    %v2991 = vld [vmem:[#allocation12 + $0x78] sm:$0xff]
    %v2992 = vld [vmem:[#allocation12 + $0x80] sm:$0xff]
    %v2993 = vld [vmem:[#allocation12 + $0x88] sm:$0xff]
    %v2994 = vld [vmem:[#allocation12 + $0x90] sm:$0xff]
    %v2995 = vld [vmem:[#allocation12 + $0x98] sm:$0xff]
    %v2996 = vld [vmem:[#allocation12 + $0xa0] sm:$0xff]
    %v2997 = vld [vmem:[#allocation12 + $0xa8] sm:$0xff]
    %v2998 = vld [vmem:[#allocation12 + $0xb0] sm:$0xff]
    %v2999 = vld [vmem:[#allocation12 + $0xb8] sm:$0xff]
    %v3000 = vld [vmem:[#allocation12 + $0xc0] sm:$0xff]
    %v3001 = vld [vmem:[#allocation12 + $0xc8] sm:$0xff]
    %v3002 = vld [vmem:[#allocation12 + $0xd0] sm:$0xff]
    %v3003 = vld [vmem:[#allocation12 + $0xd8] sm:$0xff]
    %v3004 = vld [vmem:[#allocation12 + $0xe0] sm:$0xff]
    %v3005 = vld [vmem:[#allocation12 + $0xe8] sm:$0xff]
    %v3006 = vld [vmem:[#allocation12 + $0xf0] sm:$0xff]
    %v3007 = vld [vmem:[#allocation12 + $0xf8] sm:$0xff]
    %v3008 = vld [vmem:[#allocation12 + $0x100] sm:$0xff]
    %v3009 = vld [vmem:[#allocation12 + $0x108] sm:$0xff]
    %v3010 = vld [vmem:[#allocation12 + $0x110] sm:$0xff]
    %v3011 = vld [vmem:[#allocation12 + $0x118] sm:$0xff]
    %v3012 = vld [vmem:[#allocation12 + $0x120] sm:$0xff]
    %v3013 = vld [vmem:[#allocation12 + $0x128] sm:$0xff]
    %v3014 = vld [vmem:[#allocation12 + $0x130] sm:$0xff]
    %v3015 = vld [vmem:[#allocation12 + $0x138] sm:$0xff]
    %v3016 = vld [vmem:[#allocation12 + $0x140] sm:$0xff]
    %v3017 = vld [vmem:[#allocation12 + $0x148] sm:$0xff]
    %v3018 = vld [vmem:[#allocation12 + $0x150] sm:$0xff]
    %v3019 = vld [vmem:[#allocation12 + $0x158] sm:$0xff]
    %v3020 = vld [vmem:[#allocation12 + $0x160] sm:$0xff]
    %v3021 = vld [vmem:[#allocation12 + $0x168] sm:$0xff]
    %v3022 = vld [vmem:[#allocation12 + $0x170] sm:$0xff]
    %v3023 = vld [vmem:[#allocation12 + $0x178] sm:$0xff]
    %v3024 = vld [vmem:[#allocation12 + $0x180] sm:$0xff]
    %v3025 = vld [vmem:[#allocation12 + $0x188] sm:$0xff]
    %v3026 = vld [vmem:[#allocation12 + $0x190] sm:$0xff]
    %v3027 = vld [vmem:[#allocation12 + $0x198] sm:$0xff]
    %v3028 = vld [vmem:[#allocation12 + $0x1a0] sm:$0xff]
    %v3029 = vld [vmem:[#allocation12 + $0x1a8] sm:$0xff]
    %v3030 = vld [vmem:[#allocation12 + $0x1b0] sm:$0xff]
    %v3031 = vld [vmem:[#allocation12 + $0x1b8] sm:$0xff]
    %v3032 = vld [vmem:[#allocation12 + $0x1c0] sm:$0xff]
    %v3033 = vld [vmem:[#allocation12 + $0x1c8] sm:$0xff]
    %v3034 = vld [vmem:[#allocation12 + $0x1d0] sm:$0xff]
    %v3035 = vld [vmem:[#allocation12 + $0x1d8] sm:$0xff]
    %v3036 = vld [vmem:[#allocation12 + $0x1e0] sm:$0xff]
    %v3037 = vld [vmem:[#allocation12 + $0x1e8] sm:$0xff]
    %v3038 = vld [vmem:[#allocation12 + $0x1f0] sm:$0xff]
    %v3039 = vld [vmem:[#allocation12 + $0x1f8] sm:$0xff]
    %v3040 = vld [vmem:[#allocation12 + $0x200] sm:$0xff]
    %v3041 = vld [vmem:[#allocation12 + $0x208] sm:$0xff]
    %v3042 = vld [vmem:[#allocation12 + $0x210] sm:$0xff]
    %v3043 = vld [vmem:[#allocation12 + $0x218] sm:$0xff]
    %v3044 = vld [vmem:[#allocation12 + $0x220] sm:$0xff]
    %v3045 = vld [vmem:[#allocation12 + $0x228] sm:$0xff]
    %v3046 = vld [vmem:[#allocation12 + $0x230] sm:$0xff]
    %v3047 = vld [vmem:[#allocation12 + $0x238] sm:$0xff]
    %v3048 = vld [vmem:[#allocation12 + $0x240] sm:$0xff]
    %v3049 = vld [vmem:[#allocation12 + $0x248] sm:$0xff]
    %v3050 = vld [vmem:[#allocation12 + $0x250] sm:$0xff]
    %v3051 = vld [vmem:[#allocation12 + $0x258] sm:$0xff]
    %v3052 = vld [vmem:[#allocation12 + $0x260] sm:$0xff]
    %v3053 = vld [vmem:[#allocation12 + $0x268] sm:$0xff]
    %v3054 = vld [vmem:[#allocation12 + $0x270] sm:$0xff]
    %v3055 = vld [vmem:[#allocation12 + $0x278] sm:$0xff]
    %v3056 = vld [vmem:[#allocation12 + $0x280] sm:$0xff]
    %v3057 = vld [vmem:[#allocation12 + $0x288] sm:$0xff]
    %v3058 = vld [vmem:[#allocation12 + $0x290] sm:$0xff]
    %v3059 = vld [vmem:[#allocation12 + $0x298] sm:$0xff]
    %v3060 = vld [vmem:[#allocation12 + $0x2a0] sm:$0xff]
    %v3061 = vld [vmem:[#allocation12 + $0x2a8] sm:$0xff]
    %v3062 = vld [vmem:[#allocation12 + $0x2b0] sm:$0xff]
    %v3063 = vld [vmem:[#allocation12 + $0x2b8] sm:$0xff]
    %v3064 = vld [vmem:[#allocation12 + $0x2c0] sm:$0xff]
    %v3065 = vld [vmem:[#allocation12 + $0x2c8] sm:$0xff]
    %v3066 = vld [vmem:[#allocation12 + $0x2d0] sm:$0xff]
    %v3067 = vld [vmem:[#allocation12 + $0x2d8] sm:$0xff]
    %v3068 = vld [vmem:[#allocation12 + $0x2e0] sm:$0xff]
    %v3069 = vld [vmem:[#allocation12 + $0x2e8] sm:$0xff]
    %v3070 = vld [vmem:[#allocation12 + $0x2f0] sm:$0xff]
    %v3071 = vld [vmem:[#allocation12 + $0x2f8] sm:$0xff]
    %v3072 = vld [vmem:[#allocation12 + $0x300] sm:$0xff]
    %v3073 = vld [vmem:[#allocation12 + $0x308] sm:$0xff]
    %v3074 = vld [vmem:[#allocation12 + $0x310] sm:$0xff]
    %v3075 = vld [vmem:[#allocation12 + $0x318] sm:$0xff]
    %v3076 = vld [vmem:[#allocation12 + $0x320] sm:$0xff]
    %v3077 = vld [vmem:[#allocation12 + $0x328] sm:$0xff]
    %v3078 = vld [vmem:[#allocation12 + $0x330] sm:$0xff]
    %v3079 = vld [vmem:[#allocation12 + $0x338] sm:$0xff]
    %v3080 = vld [vmem:[#allocation12 + $0x340] sm:$0xff]
    %v3081 = vld [vmem:[#allocation12 + $0x348] sm:$0xff]
    %v3082 = vld [vmem:[#allocation12 + $0x350] sm:$0xff]
    %v3083 = vld [vmem:[#allocation12 + $0x358] sm:$0xff]
    %v3084 = vld [vmem:[#allocation12 + $0x360] sm:$0xff]
    %v3085 = vld [vmem:[#allocation12 + $0x368] sm:$0xff]
    %v3086 = vld [vmem:[#allocation12 + $0x370] sm:$0xff]
    %v3087 = vld [vmem:[#allocation12 + $0x378] sm:$0xff]
    %v3088 = vld [vmem:[#allocation12 + $0x380] sm:$0xff]
    %v3089 = vld [vmem:[#allocation12 + $0x388] sm:$0xff]
    %v3090 = vld [vmem:[#allocation12 + $0x390] sm:$0xff]
    %v3091 = vld [vmem:[#allocation12 + $0x398] sm:$0xff]
    %v3092 = vld [vmem:[#allocation12 + $0x3a0] sm:$0xff]
    %v3093 = vld [vmem:[#allocation12 + $0x3a8] sm:$0xff]
    %v3094 = vld [vmem:[#allocation12 + $0x3b0] sm:$0xff]
    %v3095 = vld [vmem:[#allocation12 + $0x3b8] sm:$0xff]
    %v3096 = vld [vmem:[#allocation12 + $0x3c0] sm:$0xff]
    %v3097 = vld [vmem:[#allocation12 + $0x3c8] sm:$0xff]
    %v3098 = vld [vmem:[#allocation12 + $0x3d0] sm:$0xff]
    %v3099 = vld [vmem:[#allocation12 + $0x3d8] sm:$0xff]
    %v3100 = vld [vmem:[#allocation12 + $0x3e0] sm:$0xff]
    %v3101 = vld [vmem:[#allocation12 + $0x3e8] sm:$0xff]
    %v3102 = vld [vmem:[#allocation12 + $0x3f0] sm:$0xff]
    %v3103 = vld [vmem:[#allocation12 + $0x3f8] sm:$0xff]
    %v3232 = vunpack.c.l.b16 %v2976
    %v3233 = vunpack.c.h.b16 %v2976
    %v3234 = vunpack.c.l.b16 %v2977
    %v3235 = vunpack.c.h.b16 %v2977
    %v3236 = vunpack.c.l.b16 %v2978
    %v3237 = vunpack.c.h.b16 %v2978
    %v3238 = vunpack.c.l.b16 %v2979
    %v3239 = vunpack.c.h.b16 %v2979
    %v3240 = vunpack.c.l.b16 %v2980
    %v3241 = vunpack.c.h.b16 %v2980
    %v3242 = vunpack.c.l.b16 %v2981
    %v3243 = vunpack.c.h.b16 %v2981
    %v3244 = vunpack.c.l.b16 %v2982
    %v3245 = vunpack.c.h.b16 %v2982
    %v3246 = vunpack.c.l.b16 %v2983
    %v3247 = vunpack.c.h.b16 %v2983
    %v3248 = vunpack.c.l.b16 %v2984
    %v3249 = vunpack.c.h.b16 %v2984
    %v3250 = vunpack.c.l.b16 %v2985
    %v3251 = vunpack.c.h.b16 %v2985
    %v3252 = vunpack.c.l.b16 %v2986
    %v3253 = vunpack.c.h.b16 %v2986
    %v3254 = vunpack.c.l.b16 %v2987
    %v3255 = vunpack.c.h.b16 %v2987
    %v3256 = vunpack.c.l.b16 %v2988
    %v3257 = vunpack.c.h.b16 %v2988
    %v3258 = vunpack.c.l.b16 %v2989
    %v3259 = vunpack.c.h.b16 %v2989
    %v3260 = vunpack.c.l.b16 %v2990
    %v3261 = vunpack.c.h.b16 %v2990
    %v3262 = vunpack.c.l.b16 %v2991
    %v3263 = vunpack.c.h.b16 %v2991
    %v3264 = vunpack.c.l.b16 %v2992
    %v3265 = vunpack.c.h.b16 %v2992
    %v3266 = vunpack.c.l.b16 %v2993
    %v3267 = vunpack.c.h.b16 %v2993
    %v3268 = vunpack.c.l.b16 %v2994
    %v3269 = vunpack.c.h.b16 %v2994
    %v3270 = vunpack.c.l.b16 %v2995
    %v3271 = vunpack.c.h.b16 %v2995
    %v3272 = vunpack.c.l.b16 %v2996
    %v3273 = vunpack.c.h.b16 %v2996
    %v3274 = vunpack.c.l.b16 %v2997
    %v3275 = vunpack.c.h.b16 %v2997
    %v3276 = vunpack.c.l.b16 %v2998
    %v3277 = vunpack.c.h.b16 %v2998
    %v3278 = vunpack.c.l.b16 %v2999
    %v3279 = vunpack.c.h.b16 %v2999
    %v3280 = vunpack.c.l.b16 %v3000
    %v3281 = vunpack.c.h.b16 %v3000
    %v3282 = vunpack.c.l.b16 %v3001
    %v3283 = vunpack.c.h.b16 %v3001
    %v3284 = vunpack.c.l.b16 %v3002
    %v3285 = vunpack.c.h.b16 %v3002
    %v3286 = vunpack.c.l.b16 %v3003
    %v3287 = vunpack.c.h.b16 %v3003
    %v3288 = vunpack.c.l.b16 %v3004
    %v3289 = vunpack.c.h.b16 %v3004
    %v3290 = vunpack.c.l.b16 %v3005
    %v3291 = vunpack.c.h.b16 %v3005
    %v3292 = vunpack.c.l.b16 %v3006
    %v3293 = vunpack.c.h.b16 %v3006
    %v3294 = vunpack.c.l.b16 %v3007
    %v3295 = vunpack.c.h.b16 %v3007
    %v3296 = vunpack.c.l.b16 %v3008
    %v3297 = vunpack.c.h.b16 %v3008
    %v3298 = vunpack.c.l.b16 %v3009
    %v3299 = vunpack.c.h.b16 %v3009
    %v3300 = vunpack.c.l.b16 %v3010
    %v3301 = vunpack.c.h.b16 %v3010
    %v3302 = vunpack.c.l.b16 %v3011
    %v3303 = vunpack.c.h.b16 %v3011
    %v3304 = vunpack.c.l.b16 %v3012
    %v3305 = vunpack.c.h.b16 %v3012
    %v3306 = vunpack.c.l.b16 %v3013
    %v3307 = vunpack.c.h.b16 %v3013
    %v3308 = vunpack.c.l.b16 %v3014
    %v3309 = vunpack.c.h.b16 %v3014
    %v3310 = vunpack.c.l.b16 %v3015
    %v3311 = vunpack.c.h.b16 %v3015
    %v3312 = vunpack.c.l.b16 %v3016
    %v3313 = vunpack.c.h.b16 %v3016
    %v3314 = vunpack.c.l.b16 %v3017
    %v3315 = vunpack.c.h.b16 %v3017
    %v3316 = vunpack.c.l.b16 %v3018
    %v3317 = vunpack.c.h.b16 %v3018
    %v3318 = vunpack.c.l.b16 %v3019
    %v3319 = vunpack.c.h.b16 %v3019
    %v3320 = vunpack.c.l.b16 %v3020
    %v3321 = vunpack.c.h.b16 %v3020
    %v3322 = vunpack.c.l.b16 %v3021
    %v3323 = vunpack.c.h.b16 %v3021
    %v3324 = vunpack.c.l.b16 %v3022
    %v3325 = vunpack.c.h.b16 %v3022
    %v3326 = vunpack.c.l.b16 %v3023
    %v3327 = vunpack.c.h.b16 %v3023
    %v3328 = vunpack.c.l.b16 %v3024
    %v3329 = vunpack.c.h.b16 %v3024
    %v3330 = vunpack.c.l.b16 %v3025
    %v3331 = vunpack.c.h.b16 %v3025
    %v3332 = vunpack.c.l.b16 %v3026
    %v3333 = vunpack.c.h.b16 %v3026
    %v3334 = vunpack.c.l.b16 %v3027
    %v3335 = vunpack.c.h.b16 %v3027
    %v3336 = vunpack.c.l.b16 %v3028
    %v3337 = vunpack.c.h.b16 %v3028
    %v3338 = vunpack.c.l.b16 %v3029
    %v3339 = vunpack.c.h.b16 %v3029
    %v3340 = vunpack.c.l.b16 %v3030
    %v3341 = vunpack.c.h.b16 %v3030
    %v3342 = vunpack.c.l.b16 %v3031
    %v3343 = vunpack.c.h.b16 %v3031
    %v3344 = vunpack.c.l.b16 %v3032
    %v3345 = vunpack.c.h.b16 %v3032
    %v3346 = vunpack.c.l.b16 %v3033
    %v3347 = vunpack.c.h.b16 %v3033
    %v3348 = vunpack.c.l.b16 %v3034
    %v3349 = vunpack.c.h.b16 %v3034
    %v3350 = vunpack.c.l.b16 %v3035
    %v3351 = vunpack.c.h.b16 %v3035
    %v3352 = vunpack.c.l.b16 %v3036
    %v3353 = vunpack.c.h.b16 %v3036
    %v3354 = vunpack.c.l.b16 %v3037
    %v3355 = vunpack.c.h.b16 %v3037
    %v3356 = vunpack.c.l.b16 %v3038
    %v3357 = vunpack.c.h.b16 %v3038
    %v3358 = vunpack.c.l.b16 %v3039
    %v3359 = vunpack.c.h.b16 %v3039
    %v3360 = vunpack.c.l.b16 %v3040
    %v3361 = vunpack.c.h.b16 %v3040
    %v3362 = vunpack.c.l.b16 %v3041
    %v3363 = vunpack.c.h.b16 %v3041
    %v3364 = vunpack.c.l.b16 %v3042
    %v3365 = vunpack.c.h.b16 %v3042
    %v3366 = vunpack.c.l.b16 %v3043
    %v3367 = vunpack.c.h.b16 %v3043
    %v3368 = vunpack.c.l.b16 %v3044
    %v3369 = vunpack.c.h.b16 %v3044
    %v3370 = vunpack.c.l.b16 %v3045
    %v3371 = vunpack.c.h.b16 %v3045
    %v3372 = vunpack.c.l.b16 %v3046
    %v3373 = vunpack.c.h.b16 %v3046
    %v3374 = vunpack.c.l.b16 %v3047
    %v3375 = vunpack.c.h.b16 %v3047
    %v3376 = vunpack.c.l.b16 %v3048
    %v3377 = vunpack.c.h.b16 %v3048
    %v3378 = vunpack.c.l.b16 %v3049
    %v3379 = vunpack.c.h.b16 %v3049
    %v3380 = vunpack.c.l.b16 %v3050
    %v3381 = vunpack.c.h.b16 %v3050
    %v3382 = vunpack.c.l.b16 %v3051
    %v3383 = vunpack.c.h.b16 %v3051
    %v3384 = vunpack.c.l.b16 %v3052
    %v3385 = vunpack.c.h.b16 %v3052
    %v3386 = vunpack.c.l.b16 %v3053
    %v3387 = vunpack.c.h.b16 %v3053
    %v3388 = vunpack.c.l.b16 %v3054
    %v3389 = vunpack.c.h.b16 %v3054
    %v3390 = vunpack.c.l.b16 %v3055
    %v3391 = vunpack.c.h.b16 %v3055
    %v3392 = vunpack.c.l.b16 %v3056
    %v3393 = vunpack.c.h.b16 %v3056
    %v3394 = vunpack.c.l.b16 %v3057
    %v3395 = vunpack.c.h.b16 %v3057
    %v3396 = vunpack.c.l.b16 %v3058
    %v3397 = vunpack.c.h.b16 %v3058
    %v3398 = vunpack.c.l.b16 %v3059
    %v3399 = vunpack.c.h.b16 %v3059
    %v3400 = vunpack.c.l.b16 %v3060
    %v3401 = vunpack.c.h.b16 %v3060
    %v3402 = vunpack.c.l.b16 %v3061
    %v3403 = vunpack.c.h.b16 %v3061
    %v3404 = vunpack.c.l.b16 %v3062
    %v3405 = vunpack.c.h.b16 %v3062
    %v3406 = vunpack.c.l.b16 %v3063
    %v3407 = vunpack.c.h.b16 %v3063
    %v3408 = vunpack.c.l.b16 %v3064
    %v3409 = vunpack.c.h.b16 %v3064
    %v3410 = vunpack.c.l.b16 %v3065
    %v3411 = vunpack.c.h.b16 %v3065
    %v3412 = vunpack.c.l.b16 %v3066
    %v3413 = vunpack.c.h.b16 %v3066
    %v3414 = vunpack.c.l.b16 %v3067
    %v3415 = vunpack.c.h.b16 %v3067
    %v3416 = vunpack.c.l.b16 %v3068
    %v3417 = vunpack.c.h.b16 %v3068
    %v3418 = vunpack.c.l.b16 %v3069
    %v3419 = vunpack.c.h.b16 %v3069
    %v3420 = vunpack.c.l.b16 %v3070
    %v3421 = vunpack.c.h.b16 %v3070
    %v3422 = vunpack.c.l.b16 %v3071
    %v3423 = vunpack.c.h.b16 %v3071
    %v3424 = vunpack.c.l.b16 %v3072
    %v3425 = vunpack.c.h.b16 %v3072
    %v3426 = vunpack.c.l.b16 %v3073
    %v3427 = vunpack.c.h.b16 %v3073
    %v3428 = vunpack.c.l.b16 %v3074
    %v3429 = vunpack.c.h.b16 %v3074
    %v3430 = vunpack.c.l.b16 %v3075
    %v3431 = vunpack.c.h.b16 %v3075
    %v3432 = vunpack.c.l.b16 %v3076
    %v3433 = vunpack.c.h.b16 %v3076
    %v3434 = vunpack.c.l.b16 %v3077
    %v3435 = vunpack.c.h.b16 %v3077
    %v3436 = vunpack.c.l.b16 %v3078
    %v3437 = vunpack.c.h.b16 %v3078
    %v3438 = vunpack.c.l.b16 %v3079
    %v3439 = vunpack.c.h.b16 %v3079
    %v3440 = vunpack.c.l.b16 %v3080
    %v3441 = vunpack.c.h.b16 %v3080
    %v3442 = vunpack.c.l.b16 %v3081
    %v3443 = vunpack.c.h.b16 %v3081
    %v3444 = vunpack.c.l.b16 %v3082
    %v3445 = vunpack.c.h.b16 %v3082
    %v3446 = vunpack.c.l.b16 %v3083
    %v3447 = vunpack.c.h.b16 %v3083
    %v3448 = vunpack.c.l.b16 %v3084
    %v3449 = vunpack.c.h.b16 %v3084
    %v3450 = vunpack.c.l.b16 %v3085
    %v3451 = vunpack.c.h.b16 %v3085
    %v3452 = vunpack.c.l.b16 %v3086
    %v3453 = vunpack.c.h.b16 %v3086
    %v3454 = vunpack.c.l.b16 %v3087
    %v3455 = vunpack.c.h.b16 %v3087
    %v3456 = vunpack.c.l.b16 %v3088
    %v3457 = vunpack.c.h.b16 %v3088
    %v3458 = vunpack.c.l.b16 %v3089
    %v3459 = vunpack.c.h.b16 %v3089
    %v3460 = vunpack.c.l.b16 %v3090
    %v3461 = vunpack.c.h.b16 %v3090
    %v3462 = vunpack.c.l.b16 %v3091
    %v3463 = vunpack.c.h.b16 %v3091
    %v3464 = vunpack.c.l.b16 %v3092
    %v3465 = vunpack.c.h.b16 %v3092
    %v3466 = vunpack.c.l.b16 %v3093
    %v3467 = vunpack.c.h.b16 %v3093
    %v3468 = vunpack.c.l.b16 %v3094
    %v3469 = vunpack.c.h.b16 %v3094
    %v3470 = vunpack.c.l.b16 %v3095
    %v3471 = vunpack.c.h.b16 %v3095
    %v3472 = vunpack.c.l.b16 %v3096
    %v3473 = vunpack.c.h.b16 %v3096
    %v3474 = vunpack.c.l.b16 %v3097
    %v3475 = vunpack.c.h.b16 %v3097
    %v3476 = vunpack.c.l.b16 %v3098
    %v3477 = vunpack.c.h.b16 %v3098
    %v3478 = vunpack.c.l.b16 %v3099
    %v3479 = vunpack.c.h.b16 %v3099
    %v3480 = vunpack.c.l.b16 %v3100
    %v3481 = vunpack.c.h.b16 %v3100
    %v3482 = vunpack.c.l.b16 %v3101
    %v3483 = vunpack.c.h.b16 %v3101
    %v3484 = vunpack.c.l.b16 %v3102
    %v3485 = vunpack.c.h.b16 %v3102
    %v3486 = vunpack.c.l.b16 %v3103
    %v3487 = vunpack.c.h.b16 %v3103
    %v3488 = vpack.c.b16 %v3236, %v3232
    %v3489 = vpack.c.b16 %v3237, %v3233
    %v3490 = vpack.c.b16 %v3238, %v3234
    %v3491 = vpack.c.b16 %v3239, %v3235
    %v3492 = vpack.c.b16 %v3244, %v3240
    %v3493 = vpack.c.b16 %v3245, %v3241
    %v3494 = vpack.c.b16 %v3246, %v3242
    %v3495 = vpack.c.b16 %v3247, %v3243
    %v3496 = vpack.c.b16 %v3252, %v3248
    %v3497 = vpack.c.b16 %v3253, %v3249
    %v3498 = vpack.c.b16 %v3254, %v3250
    %v3499 = vpack.c.b16 %v3255, %v3251
    %v3500 = vpack.c.b16 %v3260, %v3256
    %v3501 = vpack.c.b16 %v3261, %v3257
    %v3502 = vpack.c.b16 %v3262, %v3258
    %v3503 = vpack.c.b16 %v3263, %v3259
    %v3504 = vpack.c.b16 %v3268, %v3264
    %v3505 = vpack.c.b16 %v3269, %v3265
    %v3506 = vpack.c.b16 %v3270, %v3266
    %v3507 = vpack.c.b16 %v3271, %v3267
    %v3508 = vpack.c.b16 %v3276, %v3272
    %v3509 = vpack.c.b16 %v3277, %v3273
    %v3510 = vpack.c.b16 %v3278, %v3274
    %v3511 = vpack.c.b16 %v3279, %v3275
    %v3512 = vpack.c.b16 %v3284, %v3280
    %v3513 = vpack.c.b16 %v3285, %v3281
    %v3514 = vpack.c.b16 %v3286, %v3282
    %v3515 = vpack.c.b16 %v3287, %v3283
    %v3516 = vpack.c.b16 %v3292, %v3288
    %v3517 = vpack.c.b16 %v3293, %v3289
    %v3518 = vpack.c.b16 %v3294, %v3290
    %v3519 = vpack.c.b16 %v3295, %v3291
    %v3520 = vpack.c.b16 %v3300, %v3296
    %v3521 = vpack.c.b16 %v3301, %v3297
    %v3522 = vpack.c.b16 %v3302, %v3298
    %v3523 = vpack.c.b16 %v3303, %v3299
    %v3524 = vpack.c.b16 %v3308, %v3304
    %v3525 = vpack.c.b16 %v3309, %v3305
    %v3526 = vpack.c.b16 %v3310, %v3306
    %v3527 = vpack.c.b16 %v3311, %v3307
    %v3528 = vpack.c.b16 %v3316, %v3312
    %v3529 = vpack.c.b16 %v3317, %v3313
    %v3530 = vpack.c.b16 %v3318, %v3314
    %v3531 = vpack.c.b16 %v3319, %v3315
    %v3532 = vpack.c.b16 %v3324, %v3320
    %v3533 = vpack.c.b16 %v3325, %v3321
    %v3534 = vpack.c.b16 %v3326, %v3322
    %v3535 = vpack.c.b16 %v3327, %v3323
    %v3536 = vpack.c.b16 %v3332, %v3328
    %v3537 = vpack.c.b16 %v3333, %v3329
    %v3538 = vpack.c.b16 %v3334, %v3330
    %v3539 = vpack.c.b16 %v3335, %v3331
    %v3540 = vpack.c.b16 %v3340, %v3336
    %v3541 = vpack.c.b16 %v3341, %v3337
    %v3542 = vpack.c.b16 %v3342, %v3338
    %v3543 = vpack.c.b16 %v3343, %v3339
    %v3544 = vpack.c.b16 %v3348, %v3344
    %v3545 = vpack.c.b16 %v3349, %v3345
    %v3546 = vpack.c.b16 %v3350, %v3346
    %v3547 = vpack.c.b16 %v3351, %v3347
    %v3548 = vpack.c.b16 %v3356, %v3352
    %v3549 = vpack.c.b16 %v3357, %v3353
    %v3550 = vpack.c.b16 %v3358, %v3354
    %v3551 = vpack.c.b16 %v3359, %v3355
    %v3552 = vpack.c.b16 %v3364, %v3360
    %v3553 = vpack.c.b16 %v3365, %v3361
    %v3554 = vpack.c.b16 %v3366, %v3362
    %v3555 = vpack.c.b16 %v3367, %v3363
    %v3556 = vpack.c.b16 %v3372, %v3368
    %v3557 = vpack.c.b16 %v3373, %v3369
    %v3558 = vpack.c.b16 %v3374, %v3370
    %v3559 = vpack.c.b16 %v3375, %v3371
    %v3560 = vpack.c.b16 %v3380, %v3376
    %v3561 = vpack.c.b16 %v3381, %v3377
    %v3562 = vpack.c.b16 %v3382, %v3378
    %v3563 = vpack.c.b16 %v3383, %v3379
    %v3564 = vpack.c.b16 %v3388, %v3384
    %v3565 = vpack.c.b16 %v3389, %v3385
    %v3566 = vpack.c.b16 %v3390, %v3386
    %v3567 = vpack.c.b16 %v3391, %v3387
    %v3568 = vpack.c.b16 %v3396, %v3392
    %v3569 = vpack.c.b16 %v3397, %v3393
    %v3570 = vpack.c.b16 %v3398, %v3394
    %v3571 = vpack.c.b16 %v3399, %v3395
    %v3572 = vpack.c.b16 %v3404, %v3400
    %v3573 = vpack.c.b16 %v3405, %v3401
    %v3574 = vpack.c.b16 %v3406, %v3402
    %v3575 = vpack.c.b16 %v3407, %v3403
    %v3576 = vpack.c.b16 %v3412, %v3408
    %v3577 = vpack.c.b16 %v3413, %v3409
    %v3578 = vpack.c.b16 %v3414, %v3410
    %v3579 = vpack.c.b16 %v3415, %v3411
    %v3580 = vpack.c.b16 %v3420, %v3416
    %v3581 = vpack.c.b16 %v3421, %v3417
    %v3582 = vpack.c.b16 %v3422, %v3418
    %v3583 = vpack.c.b16 %v3423, %v3419
    %v3584 = vpack.c.b16 %v3428, %v3424
    %v3585 = vpack.c.b16 %v3429, %v3425
    %v3586 = vpack.c.b16 %v3430, %v3426
    %v3587 = vpack.c.b16 %v3431, %v3427
    %v3588 = vpack.c.b16 %v3436, %v3432
    %v3589 = vpack.c.b16 %v3437, %v3433
    %v3590 = vpack.c.b16 %v3438, %v3434
    %v3591 = vpack.c.b16 %v3439, %v3435
    %v3592 = vpack.c.b16 %v3444, %v3440
    %v3593 = vpack.c.b16 %v3445, %v3441
    %v3594 = vpack.c.b16 %v3446, %v3442
    %v3595 = vpack.c.b16 %v3447, %v3443
    %v3596 = vpack.c.b16 %v3452, %v3448
    %v3597 = vpack.c.b16 %v3453, %v3449
    %v3598 = vpack.c.b16 %v3454, %v3450
    %v3599 = vpack.c.b16 %v3455, %v3451
    %v3600 = vpack.c.b16 %v3460, %v3456
    %v3601 = vpack.c.b16 %v3461, %v3457
    %v3602 = vpack.c.b16 %v3462, %v3458
    %v3603 = vpack.c.b16 %v3463, %v3459
    %v3604 = vpack.c.b16 %v3468, %v3464
    %v3605 = vpack.c.b16 %v3469, %v3465
    %v3606 = vpack.c.b16 %v3470, %v3466
    %v3607 = vpack.c.b16 %v3471, %v3467
    %v3608 = vpack.c.b16 %v3476, %v3472
    %v3609 = vpack.c.b16 %v3477, %v3473
    %v3610 = vpack.c.b16 %v3478, %v3474
    %v3611 = vpack.c.b16 %v3479, %v3475
    %v3612 = vpack.c.b16 %v3484, %v3480
    %v3613 = vpack.c.b16 %v3485, %v3481
    %v3614 = vpack.c.b16 %v3486, %v3482
    %v3615 = vpack.c.b16 %v3487, %v3483
    %3744 = vmatprep.subr.bf16.mxu0 %v3517
    %3745 = vmatpush1.bf16.msra.mxu0 %v3516
    %3746 = vmatprep.subr.bf16.mxu0 %v3513
    %3747 = vmatpush1.bf16.msra.mxu0 %v3512
    %3748 = vmatprep.subr.bf16.mxu0 %v3509
    %3749 = vmatpush1.bf16.msra.mxu0 %v3508
    %3750 = vmatprep.subr.bf16.mxu0 %v3505
    %3751 = vmatpush1.bf16.msra.mxu0 %v3504
    %3752 = vmatprep.subr.bf16.mxu0 %v3501
    %3753 = vmatpush1.bf16.msra.mxu0 %v3500
    %3754 = vmatprep.subr.bf16.mxu0 %v3497
    %3755 = vmatpush1.bf16.msra.mxu0 %v3496
    %3756 = vmatprep.subr.bf16.mxu0 %v3493
    %3757 = vmatpush1.bf16.msra.mxu0 %v3492
    %3758 = vmatprep.subr.bf16.mxu0 %v3489
    %3759 = vmatpush1.bf16.msra.mxu0 %v3488
    %3760 = vmatprep.subr.bf16.mxu0 %v3549
    %3761 = vmatpush2.bf16.msra.mxu0 %v3548
    %3762 = vmatprep.subr.bf16.mxu0 %v3545
    %3763 = vmatpush2.bf16.msra.mxu0 %v3544
    %3764 = vmatprep.subr.bf16.mxu0 %v3541
    %3765 = vmatpush2.bf16.msra.mxu0 %v3540
    %3766 = vmatprep.subr.bf16.mxu0 %v3537
    %3767 = vmatpush2.bf16.msra.mxu0 %v3536
    %3768 = vmatprep.subr.bf16.mxu0 %v3533
    %3769 = vmatpush2.bf16.msra.mxu0 %v3532
    %3770 = vmatprep.subr.bf16.mxu0 %v3529
    %3771 = vmatpush2.bf16.msra.mxu0 %v3528
    %3772 = vmatprep.subr.bf16.mxu0 %v3525
    %3773 = vmatpush2.bf16.msra.mxu0 %v3524
    %3774 = vmatprep.subr.bf16.mxu0 %v3521
    %3775 = vmatpush2.bf16.msra.mxu0 %v3520
    %3776 = vmatprep.mubr.bf16.mxu0 %v2973
    %3777 = vmatmul.mubr.bf16.gmra.mxu0 %v2972
    %v3778 = vpop.f32.mrf.mxu0
    %v3779 = vadd.f32 0.0, %v3778
    %v3780 = vpop.f32.mrf.mxu0
    %v3781 = vadd.f32 0.0, %v3780
    %v3782 = vpop.f32.mrf.mxu0
    %v3783 = vadd.f32 0.0, %v3782
    %v3784 = vpop.f32.mrf.mxu0
    %v3785 = vadd.f32 0.0, %v3784
    %3786 = vdwg.mxu0
    %3787 = vmatprep.subr.bf16.mxu0 %v3581
    %3788 = vmatpush1.bf16.msra.mxu0 %v3580
    %3789 = vmatprep.subr.bf16.mxu0 %v3577
    %3790 = vmatpush1.bf16.msra.mxu0 %v3576
    %3791 = vmatprep.subr.bf16.mxu0 %v3573
    %3792 = vmatpush1.bf16.msra.mxu0 %v3572
    %3793 = vmatprep.subr.bf16.mxu0 %v3569
    %3794 = vmatpush1.bf16.msra.mxu0 %v3568
    %3795 = vmatprep.subr.bf16.mxu0 %v3565
    %3796 = vmatpush1.bf16.msra.mxu0 %v3564
    %3797 = vmatprep.subr.bf16.mxu0 %v3561
    %3798 = vmatpush1.bf16.msra.mxu0 %v3560
    %3799 = vmatprep.subr.bf16.mxu0 %v3557
    %3800 = vmatpush1.bf16.msra.mxu0 %v3556
    %3801 = vmatprep.subr.bf16.mxu0 %v3553
    %3802 = vmatpush1.bf16.msra.mxu0 %v3552
    %3803 = vmatprep.subr.bf16.mxu0 %v3613
    %3804 = vmatpush2.bf16.msra.mxu0 %v3612
    %3805 = vmatprep.subr.bf16.mxu0 %v3609
    %3806 = vmatpush2.bf16.msra.mxu0 %v3608
    %3807 = vmatprep.subr.bf16.mxu0 %v3605
    %3808 = vmatpush2.bf16.msra.mxu0 %v3604
    %3809 = vmatprep.subr.bf16.mxu0 %v3601
    %3810 = vmatpush2.bf16.msra.mxu0 %v3600
    %3811 = vmatprep.subr.bf16.mxu0 %v3597
    %3812 = vmatpush2.bf16.msra.mxu0 %v3596
    %3813 = vmatprep.subr.bf16.mxu0 %v3593
    %3814 = vmatpush2.bf16.msra.mxu0 %v3592
    %3815 = vmatprep.subr.bf16.mxu0 %v3589
    %3816 = vmatpush2.bf16.msra.mxu0 %v3588
    %3817 = vmatprep.subr.bf16.mxu0 %v3585
    %3818 = vmatpush2.bf16.msra.mxu0 %v3584
    %3819 = vmatprep.mubr.bf16.mxu0 %v2975
    %3820 = vmatmul.mubr.bf16.gmra.mxu0 %v2974
    %v3821 = vpop.f32.mrf.mxu0
    %v3822 = vadd.f32 %v3779, %v3821
    %v3823 = vpop.f32.mrf.mxu0
    %v3824 = vadd.f32 %v3781, %v3823
    %v3825 = vpop.f32.mrf.mxu0
    %v3826 = vadd.f32 %v3783, %v3825
    %v3827 = vpop.f32.mrf.mxu0
    %v3828 = vadd.f32 %v3785, %v3827
    %3829 = vdwg.mxu0
    %3830 = vmatprep.subr.bf16.mxu0 %v3519
    %3831 = vmatpush1.bf16.msra.mxu0 %v3518
    %3832 = vmatprep.subr.bf16.mxu0 %v3515
    %3833 = vmatpush1.bf16.msra.mxu0 %v3514
    %3834 = vmatprep.subr.bf16.mxu0 %v3511
    %3835 = vmatpush1.bf16.msra.mxu0 %v3510
    %3836 = vmatprep.subr.bf16.mxu0 %v3507
    %3837 = vmatpush1.bf16.msra.mxu0 %v3506
    %3838 = vmatprep.subr.bf16.mxu0 %v3503
    %3839 = vmatpush1.bf16.msra.mxu0 %v3502
    %3840 = vmatprep.subr.bf16.mxu0 %v3499
    %3841 = vmatpush1.bf16.msra.mxu0 %v3498
    %3842 = vmatprep.subr.bf16.mxu0 %v3495
    %3843 = vmatpush1.bf16.msra.mxu0 %v3494
    %3844 = vmatprep.subr.bf16.mxu0 %v3491
    %3845 = vmatpush1.bf16.msra.mxu0 %v3490
    %3846 = vmatprep.subr.bf16.mxu0 %v3551
    %3847 = vmatpush2.bf16.msra.mxu0 %v3550
    %3848 = vmatprep.subr.bf16.mxu0 %v3547
    %3849 = vmatpush2.bf16.msra.mxu0 %v3546
    %3850 = vmatprep.subr.bf16.mxu0 %v3543
    %3851 = vmatpush2.bf16.msra.mxu0 %v3542
    %3852 = vmatprep.subr.bf16.mxu0 %v3539
    %3853 = vmatpush2.bf16.msra.mxu0 %v3538
    %3854 = vmatprep.subr.bf16.mxu0 %v3535
    %3855 = vmatpush2.bf16.msra.mxu0 %v3534
    %3856 = vmatprep.subr.bf16.mxu0 %v3531
    %3857 = vmatpush2.bf16.msra.mxu0 %v3530
    %3858 = vmatprep.subr.bf16.mxu0 %v3527
    %3859 = vmatpush2.bf16.msra.mxu0 %v3526
    %3860 = vmatprep.subr.bf16.mxu0 %v3523
    %3861 = vmatpush2.bf16.msra.mxu0 %v3522
    %3862 = vmatprep.mubr.bf16.mxu0 %v2973
    %3863 = vmatmul.mubr.bf16.gmra.mxu0 %v2972
    %v3864 = vpop.f32.mrf.mxu0
    %v3865 = vadd.f32 0.0, %v3864
    %v3866 = vpop.f32.mrf.mxu0
    %v3867 = vadd.f32 0.0, %v3866
    %v3868 = vpop.f32.mrf.mxu0
    %v3869 = vadd.f32 0.0, %v3868
    %v3870 = vpop.f32.mrf.mxu0
    %v3871 = vadd.f32 0.0, %v3870
    %3872 = vdwg.mxu0
    %3873 = vmatprep.subr.bf16.mxu0 %v3583
    %3874 = vmatpush1.bf16.msra.mxu0 %v3582
    %3875 = vmatprep.subr.bf16.mxu0 %v3579
    %3876 = vmatpush1.bf16.msra.mxu0 %v3578
    %3877 = vmatprep.subr.bf16.mxu0 %v3575
    %3878 = vmatpush1.bf16.msra.mxu0 %v3574
    %3879 = vmatprep.subr.bf16.mxu0 %v3571
    %3880 = vmatpush1.bf16.msra.mxu0 %v3570
    %3881 = vmatprep.subr.bf16.mxu0 %v3567
    %3882 = vmatpush1.bf16.msra.mxu0 %v3566
    %3883 = vmatprep.subr.bf16.mxu0 %v3563
    %3884 = vmatpush1.bf16.msra.mxu0 %v3562
    %3885 = vmatprep.subr.bf16.mxu0 %v3559
    %3886 = vmatpush1.bf16.msra.mxu0 %v3558
    %3887 = vmatprep.subr.bf16.mxu0 %v3555
    %3888 = vmatpush1.bf16.msra.mxu0 %v3554
    %3889 = vmatprep.subr.bf16.mxu0 %v3615
    %3890 = vmatpush2.bf16.msra.mxu0 %v3614
    %3891 = vmatprep.subr.bf16.mxu0 %v3611
    %3892 = vmatpush2.bf16.msra.mxu0 %v3610
    %3893 = vmatprep.subr.bf16.mxu0 %v3607
    %3894 = vmatpush2.bf16.msra.mxu0 %v3606
    %3895 = vmatprep.subr.bf16.mxu0 %v3603
    %3896 = vmatpush2.bf16.msra.mxu0 %v3602
    %3897 = vmatprep.subr.bf16.mxu0 %v3599
    %3898 = vmatpush2.bf16.msra.mxu0 %v3598
    %3899 = vmatprep.subr.bf16.mxu0 %v3595
    %3900 = vmatpush2.bf16.msra.mxu0 %v3594
    %3901 = vmatprep.subr.bf16.mxu0 %v3591
    %3902 = vmatpush2.bf16.msra.mxu0 %v3590
    %3903 = vmatprep.subr.bf16.mxu0 %v3587
    %3904 = vmatpush2.bf16.msra.mxu0 %v3586
    %3905 = vmatprep.mubr.bf16.mxu0 %v2975
    %3906 = vmatmul.mubr.bf16.gmra.mxu0 %v2974
    %v3907 = vpop.f32.mrf.mxu0
    %v3908 = vadd.f32 %v3865, %v3907
    %v3909 = vpop.f32.mrf.mxu0
    %v3910 = vadd.f32 %v3867, %v3909
    %v3911 = vpop.f32.mrf.mxu0
    %v3912 = vadd.f32 %v3869, %v3911
    %v3913 = vpop.f32.mrf.mxu0
    %v3914 = vadd.f32 %v3871, %v3913
    %3915 = vdwg.mxu0
    %v3916 = vadd.f32 %v1839, %v3822
    %v3917 = vadd.f32 %v1840, %v3824
    %v3918 = vadd.f32 %v1841, %v3908
    %v3919 = vadd.f32 %v1842, %v3910
    %v3920 = vadd.f32 %v1843, %v3826
    %v3921 = vadd.f32 %v1844, %v3828
    %v3922 = vadd.f32 %v1845, %v3912
    %v3923 = vadd.f32 %v1846, %v3914
    %s3924 = scalar_lea.vmem %s2, 32
    %v3925 = vld [vmem:[%s3924] ss:$8 sm:$0xf]
    %v3927 = vlaneseq
    %v3928 = vshrl.u32 %v3927, 7
    %v3929 = vsub.s32 0, %v3928
    %v3930 = vrot.slane %v3925, %v3929
    %v3931 = vlaneseq
    %v3932 = vshrl.u32 %v3931, 7
    %v3933 = vsub.s32 1, %v3932
    %v3934 = vrot.slane %v3925, %v3933
    %v3935 = vlaneseq
    %v3936 = vshrl.u32 %v3935, 7
    %v3937 = vsub.s32 2, %v3936
    %v3938 = vrot.slane %v3925, %v3937
    %v3939 = vlaneseq
    %v3940 = vshrl.u32 %v3939, 7
    %v3941 = vsub.s32 3, %v3940
    %v3942 = vrot.slane %v3925, %v3941
    %v3947 = vadd.f32 %v3916, %v3930
    %v3948 = vadd.f32 %v3917, %v3934
    %v3949 = vadd.f32 %v3918, %v3938
    %v3950 = vadd.f32 %v3919, %v3942
    %v3951 = vadd.f32 %v3920, %v3930
    %v3952 = vadd.f32 %v3921, %v3934
    %v3953 = vadd.f32 %v3922, %v3938
    %v3954 = vadd.f32 %v3923, %v3942
    %v3955 = vpack.c.bf16 %v3951, %v3947
    %v3956 = vpack.c.bf16 %v3952, %v3948
    %v3957 = vpack.c.bf16 %v3953, %v3949
    %v3958 = vpack.c.bf16 %v3954, %v3950
    %v3959 = vld [vmem:[#allocation13] sm:$0xff]
    %v3960 = vld [vmem:[#allocation13 + $0x8] sm:$0xff]
    %v3961 = vld [vmem:[#allocation13 + $0x10] sm:$0xff]
    %v3962 = vld [vmem:[#allocation13 + $0x18] sm:$0xff]
    %v3963 = vld [vmem:[#allocation13 + $0x20] sm:$0xff]
    %v3964 = vld [vmem:[#allocation13 + $0x28] sm:$0xff]
    %v3965 = vld [vmem:[#allocation13 + $0x30] sm:$0xff]
    %v3966 = vld [vmem:[#allocation13 + $0x38] sm:$0xff]
    %v3967 = vld [vmem:[#allocation13 + $0x40] sm:$0xff]
    %v3968 = vld [vmem:[#allocation13 + $0x48] sm:$0xff]
    %v3969 = vld [vmem:[#allocation13 + $0x50] sm:$0xff]
    %v3970 = vld [vmem:[#allocation13 + $0x58] sm:$0xff]
    %v3971 = vld [vmem:[#allocation13 + $0x60] sm:$0xff]
    %v3972 = vld [vmem:[#allocation13 + $0x68] sm:$0xff]
    %v3973 = vld [vmem:[#allocation13 + $0x70] sm:$0xff]
    %v3974 = vld [vmem:[#allocation13 + $0x78] sm:$0xff]
    %v3975 = vld [vmem:[#allocation13 + $0x80] sm:$0xff]
    %v3976 = vld [vmem:[#allocation13 + $0x88] sm:$0xff]
    %v3977 = vld [vmem:[#allocation13 + $0x90] sm:$0xff]
    %v3978 = vld [vmem:[#allocation13 + $0x98] sm:$0xff]
    %v3979 = vld [vmem:[#allocation13 + $0xa0] sm:$0xff]
    %v3980 = vld [vmem:[#allocation13 + $0xa8] sm:$0xff]
    %v3981 = vld [vmem:[#allocation13 + $0xb0] sm:$0xff]
    %v3982 = vld [vmem:[#allocation13 + $0xb8] sm:$0xff]
    %v3983 = vld [vmem:[#allocation13 + $0xc0] sm:$0xff]
    %v3984 = vld [vmem:[#allocation13 + $0xc8] sm:$0xff]
    %v3985 = vld [vmem:[#allocation13 + $0xd0] sm:$0xff]
    %v3986 = vld [vmem:[#allocation13 + $0xd8] sm:$0xff]
    %v3987 = vld [vmem:[#allocation13 + $0xe0] sm:$0xff]
    %v3988 = vld [vmem:[#allocation13 + $0xe8] sm:$0xff]
    %v3989 = vld [vmem:[#allocation13 + $0xf0] sm:$0xff]
    %v3990 = vld [vmem:[#allocation13 + $0xf8] sm:$0xff]
    %v3991 = vld [vmem:[#allocation13 + $0x100] sm:$0xff]
    %v3992 = vld [vmem:[#allocation13 + $0x108] sm:$0xff]
    %v3993 = vld [vmem:[#allocation13 + $0x110] sm:$0xff]
    %v3994 = vld [vmem:[#allocation13 + $0x118] sm:$0xff]
    %v3995 = vld [vmem:[#allocation13 + $0x120] sm:$0xff]
    %v3996 = vld [vmem:[#allocation13 + $0x128] sm:$0xff]
    %v3997 = vld [vmem:[#allocation13 + $0x130] sm:$0xff]
    %v3998 = vld [vmem:[#allocation13 + $0x138] sm:$0xff]
    %v3999 = vld [vmem:[#allocation13 + $0x140] sm:$0xff]
    %v4000 = vld [vmem:[#allocation13 + $0x148] sm:$0xff]
    %v4001 = vld [vmem:[#allocation13 + $0x150] sm:$0xff]
    %v4002 = vld [vmem:[#allocation13 + $0x158] sm:$0xff]
    %v4003 = vld [vmem:[#allocation13 + $0x160] sm:$0xff]
    %v4004 = vld [vmem:[#allocation13 + $0x168] sm:$0xff]
    %v4005 = vld [vmem:[#allocation13 + $0x170] sm:$0xff]
    %v4006 = vld [vmem:[#allocation13 + $0x178] sm:$0xff]
    %v4007 = vld [vmem:[#allocation13 + $0x180] sm:$0xff]
    %v4008 = vld [vmem:[#allocation13 + $0x188] sm:$0xff]
    %v4009 = vld [vmem:[#allocation13 + $0x190] sm:$0xff]
    %v4010 = vld [vmem:[#allocation13 + $0x198] sm:$0xff]
    %v4011 = vld [vmem:[#allocation13 + $0x1a0] sm:$0xff]
    %v4012 = vld [vmem:[#allocation13 + $0x1a8] sm:$0xff]
    %v4013 = vld [vmem:[#allocation13 + $0x1b0] sm:$0xff]
    %v4014 = vld [vmem:[#allocation13 + $0x1b8] sm:$0xff]
    %v4015 = vld [vmem:[#allocation13 + $0x1c0] sm:$0xff]
    %v4016 = vld [vmem:[#allocation13 + $0x1c8] sm:$0xff]
    %v4017 = vld [vmem:[#allocation13 + $0x1d0] sm:$0xff]
    %v4018 = vld [vmem:[#allocation13 + $0x1d8] sm:$0xff]
    %v4019 = vld [vmem:[#allocation13 + $0x1e0] sm:$0xff]
    %v4020 = vld [vmem:[#allocation13 + $0x1e8] sm:$0xff]
    %v4021 = vld [vmem:[#allocation13 + $0x1f0] sm:$0xff]
    %v4022 = vld [vmem:[#allocation13 + $0x1f8] sm:$0xff]
    %v4023 = vld [vmem:[#allocation13 + $0x200] sm:$0xff]
    %v4024 = vld [vmem:[#allocation13 + $0x208] sm:$0xff]
    %v4025 = vld [vmem:[#allocation13 + $0x210] sm:$0xff]
    %v4026 = vld [vmem:[#allocation13 + $0x218] sm:$0xff]
    %v4027 = vld [vmem:[#allocation13 + $0x220] sm:$0xff]
    %v4028 = vld [vmem:[#allocation13 + $0x228] sm:$0xff]
    %v4029 = vld [vmem:[#allocation13 + $0x230] sm:$0xff]
    %v4030 = vld [vmem:[#allocation13 + $0x238] sm:$0xff]
    %v4031 = vld [vmem:[#allocation13 + $0x240] sm:$0xff]
    %v4032 = vld [vmem:[#allocation13 + $0x248] sm:$0xff]
    %v4033 = vld [vmem:[#allocation13 + $0x250] sm:$0xff]
    %v4034 = vld [vmem:[#allocation13 + $0x258] sm:$0xff]
    %v4035 = vld [vmem:[#allocation13 + $0x260] sm:$0xff]
    %v4036 = vld [vmem:[#allocation13 + $0x268] sm:$0xff]
    %v4037 = vld [vmem:[#allocation13 + $0x270] sm:$0xff]
    %v4038 = vld [vmem:[#allocation13 + $0x278] sm:$0xff]
    %v4039 = vld [vmem:[#allocation13 + $0x280] sm:$0xff]
    %v4040 = vld [vmem:[#allocation13 + $0x288] sm:$0xff]
    %v4041 = vld [vmem:[#allocation13 + $0x290] sm:$0xff]
    %v4042 = vld [vmem:[#allocation13 + $0x298] sm:$0xff]
    %v4043 = vld [vmem:[#allocation13 + $0x2a0] sm:$0xff]
    %v4044 = vld [vmem:[#allocation13 + $0x2a8] sm:$0xff]
    %v4045 = vld [vmem:[#allocation13 + $0x2b0] sm:$0xff]
    %v4046 = vld [vmem:[#allocation13 + $0x2b8] sm:$0xff]
    %v4047 = vld [vmem:[#allocation13 + $0x2c0] sm:$0xff]
    %v4048 = vld [vmem:[#allocation13 + $0x2c8] sm:$0xff]
    %v4049 = vld [vmem:[#allocation13 + $0x2d0] sm:$0xff]
    %v4050 = vld [vmem:[#allocation13 + $0x2d8] sm:$0xff]
    %v4051 = vld [vmem:[#allocation13 + $0x2e0] sm:$0xff]
    %v4052 = vld [vmem:[#allocation13 + $0x2e8] sm:$0xff]
    %v4053 = vld [vmem:[#allocation13 + $0x2f0] sm:$0xff]
    %v4054 = vld [vmem:[#allocation13 + $0x2f8] sm:$0xff]
    %v4055 = vld [vmem:[#allocation13 + $0x300] sm:$0xff]
    %v4056 = vld [vmem:[#allocation13 + $0x308] sm:$0xff]
    %v4057 = vld [vmem:[#allocation13 + $0x310] sm:$0xff]
    %v4058 = vld [vmem:[#allocation13 + $0x318] sm:$0xff]
    %v4059 = vld [vmem:[#allocation13 + $0x320] sm:$0xff]
    %v4060 = vld [vmem:[#allocation13 + $0x328] sm:$0xff]
    %v4061 = vld [vmem:[#allocation13 + $0x330] sm:$0xff]
    %v4062 = vld [vmem:[#allocation13 + $0x338] sm:$0xff]
    %v4063 = vld [vmem:[#allocation13 + $0x340] sm:$0xff]
    %v4064 = vld [vmem:[#allocation13 + $0x348] sm:$0xff]
    %v4065 = vld [vmem:[#allocation13 + $0x350] sm:$0xff]
    %v4066 = vld [vmem:[#allocation13 + $0x358] sm:$0xff]
    %v4067 = vld [vmem:[#allocation13 + $0x360] sm:$0xff]
    %v4068 = vld [vmem:[#allocation13 + $0x368] sm:$0xff]
    %v4069 = vld [vmem:[#allocation13 + $0x370] sm:$0xff]
    %v4070 = vld [vmem:[#allocation13 + $0x378] sm:$0xff]
    %v4071 = vld [vmem:[#allocation13 + $0x380] sm:$0xff]
    %v4072 = vld [vmem:[#allocation13 + $0x388] sm:$0xff]
    %v4073 = vld [vmem:[#allocation13 + $0x390] sm:$0xff]
    %v4074 = vld [vmem:[#allocation13 + $0x398] sm:$0xff]
    %v4075 = vld [vmem:[#allocation13 + $0x3a0] sm:$0xff]
    %v4076 = vld [vmem:[#allocation13 + $0x3a8] sm:$0xff]
    %v4077 = vld [vmem:[#allocation13 + $0x3b0] sm:$0xff]
    %v4078 = vld [vmem:[#allocation13 + $0x3b8] sm:$0xff]
    %v4079 = vld [vmem:[#allocation13 + $0x3c0] sm:$0xff]
    %v4080 = vld [vmem:[#allocation13 + $0x3c8] sm:$0xff]
    %v4081 = vld [vmem:[#allocation13 + $0x3d0] sm:$0xff]
    %v4082 = vld [vmem:[#allocation13 + $0x3d8] sm:$0xff]
    %v4083 = vld [vmem:[#allocation13 + $0x3e0] sm:$0xff]
    %v4084 = vld [vmem:[#allocation13 + $0x3e8] sm:$0xff]
    %v4085 = vld [vmem:[#allocation13 + $0x3f0] sm:$0xff]
    %v4086 = vld [vmem:[#allocation13 + $0x3f8] sm:$0xff]
    %s4087 = scalar_lea.vmem %s2, 33
    %v4088 = vld [vmem:[%s4087] ss:$8 sm:$0xf]
    %v4090 = vlaneseq
    %v4091 = vshrl.u32 %v4090, 7
    %v4092 = vsub.s32 0, %v4091
    %v4093 = vrot.slane %v4088, %v4092
    %v4094 = vlaneseq
    %v4095 = vshrl.u32 %v4094, 7
    %v4096 = vsub.s32 1, %v4095
    %v4097 = vrot.slane %v4088, %v4096
    %v4098 = vlaneseq
    %v4099 = vshrl.u32 %v4098, 7
    %v4100 = vsub.s32 2, %v4099
    %v4101 = vrot.slane %v4088, %v4100
    %v4102 = vlaneseq
    %v4103 = vshrl.u32 %v4102, 7
    %v4104 = vsub.s32 3, %v4103
    %v4105 = vrot.slane %v4088, %v4104
    %v4238 = vunpack.c.l.b16 %v3959
    %v4239 = vunpack.c.h.b16 %v3959
    %v4240 = vunpack.c.l.b16 %v3960
    %v4241 = vunpack.c.h.b16 %v3960
    %v4242 = vunpack.c.l.b16 %v3961
    %v4243 = vunpack.c.h.b16 %v3961
    %v4244 = vunpack.c.l.b16 %v3962
    %v4245 = vunpack.c.h.b16 %v3962
    %v4246 = vunpack.c.l.b16 %v3963
    %v4247 = vunpack.c.h.b16 %v3963
    %v4248 = vunpack.c.l.b16 %v3964
    %v4249 = vunpack.c.h.b16 %v3964
    %v4250 = vunpack.c.l.b16 %v3965
    %v4251 = vunpack.c.h.b16 %v3965
    %v4252 = vunpack.c.l.b16 %v3966
    %v4253 = vunpack.c.h.b16 %v3966
    %v4254 = vunpack.c.l.b16 %v3967
    %v4255 = vunpack.c.h.b16 %v3967
    %v4256 = vunpack.c.l.b16 %v3968
    %v4257 = vunpack.c.h.b16 %v3968
    %v4258 = vunpack.c.l.b16 %v3969
    %v4259 = vunpack.c.h.b16 %v3969
    %v4260 = vunpack.c.l.b16 %v3970
    %v4261 = vunpack.c.h.b16 %v3970
    %v4262 = vunpack.c.l.b16 %v3971
    %v4263 = vunpack.c.h.b16 %v3971
    %v4264 = vunpack.c.l.b16 %v3972
    %v4265 = vunpack.c.h.b16 %v3972
    %v4266 = vunpack.c.l.b16 %v3973
    %v4267 = vunpack.c.h.b16 %v3973
    %v4268 = vunpack.c.l.b16 %v3974
    %v4269 = vunpack.c.h.b16 %v3974
    %v4270 = vunpack.c.l.b16 %v3975
    %v4271 = vunpack.c.h.b16 %v3975
    %v4272 = vunpack.c.l.b16 %v3976
    %v4273 = vunpack.c.h.b16 %v3976
    %v4274 = vunpack.c.l.b16 %v3977
    %v4275 = vunpack.c.h.b16 %v3977
    %v4276 = vunpack.c.l.b16 %v3978
    %v4277 = vunpack.c.h.b16 %v3978
    %v4278 = vunpack.c.l.b16 %v3979
    %v4279 = vunpack.c.h.b16 %v3979
    %v4280 = vunpack.c.l.b16 %v3980
    %v4281 = vunpack.c.h.b16 %v3980
    %v4282 = vunpack.c.l.b16 %v3981
    %v4283 = vunpack.c.h.b16 %v3981
    %v4284 = vunpack.c.l.b16 %v3982
    %v4285 = vunpack.c.h.b16 %v3982
    %v4286 = vunpack.c.l.b16 %v3983
    %v4287 = vunpack.c.h.b16 %v3983
    %v4288 = vunpack.c.l.b16 %v3984
    %v4289 = vunpack.c.h.b16 %v3984
    %v4290 = vunpack.c.l.b16 %v3985
    %v4291 = vunpack.c.h.b16 %v3985
    %v4292 = vunpack.c.l.b16 %v3986
    %v4293 = vunpack.c.h.b16 %v3986
    %v4294 = vunpack.c.l.b16 %v3987
    %v4295 = vunpack.c.h.b16 %v3987
    %v4296 = vunpack.c.l.b16 %v3988
    %v4297 = vunpack.c.h.b16 %v3988
    %v4298 = vunpack.c.l.b16 %v3989
    %v4299 = vunpack.c.h.b16 %v3989
    %v4300 = vunpack.c.l.b16 %v3990
    %v4301 = vunpack.c.h.b16 %v3990
    %v4302 = vunpack.c.l.b16 %v3991
    %v4303 = vunpack.c.h.b16 %v3991
    %v4304 = vunpack.c.l.b16 %v3992
    %v4305 = vunpack.c.h.b16 %v3992
    %v4306 = vunpack.c.l.b16 %v3993
    %v4307 = vunpack.c.h.b16 %v3993
    %v4308 = vunpack.c.l.b16 %v3994
    %v4309 = vunpack.c.h.b16 %v3994
    %v4310 = vunpack.c.l.b16 %v3995
    %v4311 = vunpack.c.h.b16 %v3995
    %v4312 = vunpack.c.l.b16 %v3996
    %v4313 = vunpack.c.h.b16 %v3996
    %v4314 = vunpack.c.l.b16 %v3997
    %v4315 = vunpack.c.h.b16 %v3997
    %v4316 = vunpack.c.l.b16 %v3998
    %v4317 = vunpack.c.h.b16 %v3998
    %v4318 = vunpack.c.l.b16 %v3999
    %v4319 = vunpack.c.h.b16 %v3999
    %v4320 = vunpack.c.l.b16 %v4000
    %v4321 = vunpack.c.h.b16 %v4000
    %v4322 = vunpack.c.l.b16 %v4001
    %v4323 = vunpack.c.h.b16 %v4001
    %v4324 = vunpack.c.l.b16 %v4002
    %v4325 = vunpack.c.h.b16 %v4002
    %v4326 = vunpack.c.l.b16 %v4003
    %v4327 = vunpack.c.h.b16 %v4003
    %v4328 = vunpack.c.l.b16 %v4004
    %v4329 = vunpack.c.h.b16 %v4004
    %v4330 = vunpack.c.l.b16 %v4005
    %v4331 = vunpack.c.h.b16 %v4005
    %v4332 = vunpack.c.l.b16 %v4006
    %v4333 = vunpack.c.h.b16 %v4006
    %v4334 = vunpack.c.l.b16 %v4007
    %v4335 = vunpack.c.h.b16 %v4007
    %v4336 = vunpack.c.l.b16 %v4008
    %v4337 = vunpack.c.h.b16 %v4008
    %v4338 = vunpack.c.l.b16 %v4009
    %v4339 = vunpack.c.h.b16 %v4009
    %v4340 = vunpack.c.l.b16 %v4010
    %v4341 = vunpack.c.h.b16 %v4010
    %v4342 = vunpack.c.l.b16 %v4011
    %v4343 = vunpack.c.h.b16 %v4011
    %v4344 = vunpack.c.l.b16 %v4012
    %v4345 = vunpack.c.h.b16 %v4012
    %v4346 = vunpack.c.l.b16 %v4013
    %v4347 = vunpack.c.h.b16 %v4013
    %v4348 = vunpack.c.l.b16 %v4014
    %v4349 = vunpack.c.h.b16 %v4014
    %v4350 = vunpack.c.l.b16 %v4015
    %v4351 = vunpack.c.h.b16 %v4015
    %v4352 = vunpack.c.l.b16 %v4016
    %v4353 = vunpack.c.h.b16 %v4016
    %v4354 = vunpack.c.l.b16 %v4017
    %v4355 = vunpack.c.h.b16 %v4017
    %v4356 = vunpack.c.l.b16 %v4018
    %v4357 = vunpack.c.h.b16 %v4018
    %v4358 = vunpack.c.l.b16 %v4019
    %v4359 = vunpack.c.h.b16 %v4019
    %v4360 = vunpack.c.l.b16 %v4020
    %v4361 = vunpack.c.h.b16 %v4020
    %v4362 = vunpack.c.l.b16 %v4021
    %v4363 = vunpack.c.h.b16 %v4021
    %v4364 = vunpack.c.l.b16 %v4022
    %v4365 = vunpack.c.h.b16 %v4022
    %v4366 = vunpack.c.l.b16 %v4023
    %v4367 = vunpack.c.h.b16 %v4023
    %v4368 = vunpack.c.l.b16 %v4024
    %v4369 = vunpack.c.h.b16 %v4024
    %v4370 = vunpack.c.l.b16 %v4025
    %v4371 = vunpack.c.h.b16 %v4025
    %v4372 = vunpack.c.l.b16 %v4026
    %v4373 = vunpack.c.h.b16 %v4026
    %v4374 = vunpack.c.l.b16 %v4027
    %v4375 = vunpack.c.h.b16 %v4027
    %v4376 = vunpack.c.l.b16 %v4028
    %v4377 = vunpack.c.h.b16 %v4028
    %v4378 = vunpack.c.l.b16 %v4029
    %v4379 = vunpack.c.h.b16 %v4029
    %v4380 = vunpack.c.l.b16 %v4030
    %v4381 = vunpack.c.h.b16 %v4030
    %v4382 = vunpack.c.l.b16 %v4031
    %v4383 = vunpack.c.h.b16 %v4031
    %v4384 = vunpack.c.l.b16 %v4032
    %v4385 = vunpack.c.h.b16 %v4032
    %v4386 = vunpack.c.l.b16 %v4033
    %v4387 = vunpack.c.h.b16 %v4033
    %v4388 = vunpack.c.l.b16 %v4034
    %v4389 = vunpack.c.h.b16 %v4034
    %v4390 = vunpack.c.l.b16 %v4035
    %v4391 = vunpack.c.h.b16 %v4035
    %v4392 = vunpack.c.l.b16 %v4036
    %v4393 = vunpack.c.h.b16 %v4036
    %v4394 = vunpack.c.l.b16 %v4037
    %v4395 = vunpack.c.h.b16 %v4037
    %v4396 = vunpack.c.l.b16 %v4038
    %v4397 = vunpack.c.h.b16 %v4038
    %v4398 = vunpack.c.l.b16 %v4039
    %v4399 = vunpack.c.h.b16 %v4039
    %v4400 = vunpack.c.l.b16 %v4040
    %v4401 = vunpack.c.h.b16 %v4040
    %v4402 = vunpack.c.l.b16 %v4041
    %v4403 = vunpack.c.h.b16 %v4041
    %v4404 = vunpack.c.l.b16 %v4042
    %v4405 = vunpack.c.h.b16 %v4042
    %v4406 = vunpack.c.l.b16 %v4043
    %v4407 = vunpack.c.h.b16 %v4043
    %v4408 = vunpack.c.l.b16 %v4044
    %v4409 = vunpack.c.h.b16 %v4044
    %v4410 = vunpack.c.l.b16 %v4045
    %v4411 = vunpack.c.h.b16 %v4045
    %v4412 = vunpack.c.l.b16 %v4046
    %v4413 = vunpack.c.h.b16 %v4046
    %v4414 = vunpack.c.l.b16 %v4047
    %v4415 = vunpack.c.h.b16 %v4047
    %v4416 = vunpack.c.l.b16 %v4048
    %v4417 = vunpack.c.h.b16 %v4048
    %v4418 = vunpack.c.l.b16 %v4049
    %v4419 = vunpack.c.h.b16 %v4049
    %v4420 = vunpack.c.l.b16 %v4050
    %v4421 = vunpack.c.h.b16 %v4050
    %v4422 = vunpack.c.l.b16 %v4051
    %v4423 = vunpack.c.h.b16 %v4051
    %v4424 = vunpack.c.l.b16 %v4052
    %v4425 = vunpack.c.h.b16 %v4052
    %v4426 = vunpack.c.l.b16 %v4053
    %v4427 = vunpack.c.h.b16 %v4053
    %v4428 = vunpack.c.l.b16 %v4054
    %v4429 = vunpack.c.h.b16 %v4054
    %v4430 = vunpack.c.l.b16 %v4055
    %v4431 = vunpack.c.h.b16 %v4055
    %v4432 = vunpack.c.l.b16 %v4056
    %v4433 = vunpack.c.h.b16 %v4056
    %v4434 = vunpack.c.l.b16 %v4057
    %v4435 = vunpack.c.h.b16 %v4057
    %v4436 = vunpack.c.l.b16 %v4058
    %v4437 = vunpack.c.h.b16 %v4058
    %v4438 = vunpack.c.l.b16 %v4059
    %v4439 = vunpack.c.h.b16 %v4059
    %v4440 = vunpack.c.l.b16 %v4060
    %v4441 = vunpack.c.h.b16 %v4060
    %v4442 = vunpack.c.l.b16 %v4061
    %v4443 = vunpack.c.h.b16 %v4061
    %v4444 = vunpack.c.l.b16 %v4062
    %v4445 = vunpack.c.h.b16 %v4062
    %v4446 = vunpack.c.l.b16 %v4063
    %v4447 = vunpack.c.h.b16 %v4063
    %v4448 = vunpack.c.l.b16 %v4064
    %v4449 = vunpack.c.h.b16 %v4064
    %v4450 = vunpack.c.l.b16 %v4065
    %v4451 = vunpack.c.h.b16 %v4065
    %v4452 = vunpack.c.l.b16 %v4066
    %v4453 = vunpack.c.h.b16 %v4066
    %v4454 = vunpack.c.l.b16 %v4067
    %v4455 = vunpack.c.h.b16 %v4067
    %v4456 = vunpack.c.l.b16 %v4068
    %v4457 = vunpack.c.h.b16 %v4068
    %v4458 = vunpack.c.l.b16 %v4069
    %v4459 = vunpack.c.h.b16 %v4069
    %v4460 = vunpack.c.l.b16 %v4070
    %v4461 = vunpack.c.h.b16 %v4070
    %v4462 = vunpack.c.l.b16 %v4071
    %v4463 = vunpack.c.h.b16 %v4071
    %v4464 = vunpack.c.l.b16 %v4072
    %v4465 = vunpack.c.h.b16 %v4072
    %v4466 = vunpack.c.l.b16 %v4073
    %v4467 = vunpack.c.h.b16 %v4073
    %v4468 = vunpack.c.l.b16 %v4074
    %v4469 = vunpack.c.h.b16 %v4074
    %v4470 = vunpack.c.l.b16 %v4075
    %v4471 = vunpack.c.h.b16 %v4075
    %v4472 = vunpack.c.l.b16 %v4076
    %v4473 = vunpack.c.h.b16 %v4076
    %v4474 = vunpack.c.l.b16 %v4077
    %v4475 = vunpack.c.h.b16 %v4077
    %v4476 = vunpack.c.l.b16 %v4078
    %v4477 = vunpack.c.h.b16 %v4078
    %v4478 = vunpack.c.l.b16 %v4079
    %v4479 = vunpack.c.h.b16 %v4079
    %v4480 = vunpack.c.l.b16 %v4080
    %v4481 = vunpack.c.h.b16 %v4080
    %v4482 = vunpack.c.l.b16 %v4081
    %v4483 = vunpack.c.h.b16 %v4081
    %v4484 = vunpack.c.l.b16 %v4082
    %v4485 = vunpack.c.h.b16 %v4082
    %v4486 = vunpack.c.l.b16 %v4083
    %v4487 = vunpack.c.h.b16 %v4083
    %v4488 = vunpack.c.l.b16 %v4084
    %v4489 = vunpack.c.h.b16 %v4084
    %v4490 = vunpack.c.l.b16 %v4085
    %v4491 = vunpack.c.h.b16 %v4085
    %v4492 = vunpack.c.l.b16 %v4086
    %v4493 = vunpack.c.h.b16 %v4086
    %v4494 = vpack.c.b16 %v4242, %v4238
    %v4495 = vpack.c.b16 %v4243, %v4239
    %v4496 = vpack.c.b16 %v4244, %v4240
    %v4497 = vpack.c.b16 %v4245, %v4241
    %v4498 = vpack.c.b16 %v4250, %v4246
    %v4499 = vpack.c.b16 %v4251, %v4247
    %v4500 = vpack.c.b16 %v4252, %v4248
    %v4501 = vpack.c.b16 %v4253, %v4249
    %v4502 = vpack.c.b16 %v4258, %v4254
    %v4503 = vpack.c.b16 %v4259, %v4255
    %v4504 = vpack.c.b16 %v4260, %v4256
    %v4505 = vpack.c.b16 %v4261, %v4257
    %v4506 = vpack.c.b16 %v4266, %v4262
    %v4507 = vpack.c.b16 %v4267, %v4263
    %v4508 = vpack.c.b16 %v4268, %v4264
    %v4509 = vpack.c.b16 %v4269, %v4265
    %v4510 = vpack.c.b16 %v4274, %v4270
    %v4511 = vpack.c.b16 %v4275, %v4271
    %v4512 = vpack.c.b16 %v4276, %v4272
    %v4513 = vpack.c.b16 %v4277, %v4273
    %v4514 = vpack.c.b16 %v4282, %v4278
    %v4515 = vpack.c.b16 %v4283, %v4279
    %v4516 = vpack.c.b16 %v4284, %v4280
    %v4517 = vpack.c.b16 %v4285, %v4281
    %v4518 = vpack.c.b16 %v4290, %v4286
    %v4519 = vpack.c.b16 %v4291, %v4287
    %v4520 = vpack.c.b16 %v4292, %v4288
    %v4521 = vpack.c.b16 %v4293, %v4289
    %v4522 = vpack.c.b16 %v4298, %v4294
    %v4523 = vpack.c.b16 %v4299, %v4295
    %v4524 = vpack.c.b16 %v4300, %v4296
    %v4525 = vpack.c.b16 %v4301, %v4297
    %v4526 = vpack.c.b16 %v4306, %v4302
    %v4527 = vpack.c.b16 %v4307, %v4303
    %v4528 = vpack.c.b16 %v4308, %v4304
    %v4529 = vpack.c.b16 %v4309, %v4305
    %v4530 = vpack.c.b16 %v4314, %v4310
    %v4531 = vpack.c.b16 %v4315, %v4311
    %v4532 = vpack.c.b16 %v4316, %v4312
    %v4533 = vpack.c.b16 %v4317, %v4313
    %v4534 = vpack.c.b16 %v4322, %v4318
    %v4535 = vpack.c.b16 %v4323, %v4319
    %v4536 = vpack.c.b16 %v4324, %v4320
    %v4537 = vpack.c.b16 %v4325, %v4321
    %v4538 = vpack.c.b16 %v4330, %v4326
    %v4539 = vpack.c.b16 %v4331, %v4327
    %v4540 = vpack.c.b16 %v4332, %v4328
    %v4541 = vpack.c.b16 %v4333, %v4329
    %v4542 = vpack.c.b16 %v4338, %v4334
    %v4543 = vpack.c.b16 %v4339, %v4335
    %v4544 = vpack.c.b16 %v4340, %v4336
    %v4545 = vpack.c.b16 %v4341, %v4337
    %v4546 = vpack.c.b16 %v4346, %v4342
    %v4547 = vpack.c.b16 %v4347, %v4343
    %v4548 = vpack.c.b16 %v4348, %v4344
    %v4549 = vpack.c.b16 %v4349, %v4345
    %v4550 = vpack.c.b16 %v4354, %v4350
    %v4551 = vpack.c.b16 %v4355, %v4351
    %v4552 = vpack.c.b16 %v4356, %v4352
    %v4553 = vpack.c.b16 %v4357, %v4353
    %v4554 = vpack.c.b16 %v4362, %v4358
    %v4555 = vpack.c.b16 %v4363, %v4359
    %v4556 = vpack.c.b16 %v4364, %v4360
    %v4557 = vpack.c.b16 %v4365, %v4361
    %v4558 = vpack.c.b16 %v4370, %v4366
    %v4559 = vpack.c.b16 %v4371, %v4367
    %v4560 = vpack.c.b16 %v4372, %v4368
    %v4561 = vpack.c.b16 %v4373, %v4369
    %v4562 = vpack.c.b16 %v4378, %v4374
    %v4563 = vpack.c.b16 %v4379, %v4375
    %v4564 = vpack.c.b16 %v4380, %v4376
    %v4565 = vpack.c.b16 %v4381, %v4377
    %v4566 = vpack.c.b16 %v4386, %v4382
    %v4567 = vpack.c.b16 %v4387, %v4383
    %v4568 = vpack.c.b16 %v4388, %v4384
    %v4569 = vpack.c.b16 %v4389, %v4385
    %v4570 = vpack.c.b16 %v4394, %v4390
    %v4571 = vpack.c.b16 %v4395, %v4391
    %v4572 = vpack.c.b16 %v4396, %v4392
    %v4573 = vpack.c.b16 %v4397, %v4393
    %v4574 = vpack.c.b16 %v4402, %v4398
    %v4575 = vpack.c.b16 %v4403, %v4399
    %v4576 = vpack.c.b16 %v4404, %v4400
    %v4577 = vpack.c.b16 %v4405, %v4401
    %v4578 = vpack.c.b16 %v4410, %v4406
    %v4579 = vpack.c.b16 %v4411, %v4407
    %v4580 = vpack.c.b16 %v4412, %v4408
    %v4581 = vpack.c.b16 %v4413, %v4409
    %v4582 = vpack.c.b16 %v4418, %v4414
    %v4583 = vpack.c.b16 %v4419, %v4415
    %v4584 = vpack.c.b16 %v4420, %v4416
    %v4585 = vpack.c.b16 %v4421, %v4417
    %v4586 = vpack.c.b16 %v4426, %v4422
    %v4587 = vpack.c.b16 %v4427, %v4423
    %v4588 = vpack.c.b16 %v4428, %v4424
    %v4589 = vpack.c.b16 %v4429, %v4425
    %v4590 = vpack.c.b16 %v4434, %v4430
    %v4591 = vpack.c.b16 %v4435, %v4431
    %v4592 = vpack.c.b16 %v4436, %v4432
    %v4593 = vpack.c.b16 %v4437, %v4433
    %v4594 = vpack.c.b16 %v4442, %v4438
    %v4595 = vpack.c.b16 %v4443, %v4439
    %v4596 = vpack.c.b16 %v4444, %v4440
    %v4597 = vpack.c.b16 %v4445, %v4441
    %v4598 = vpack.c.b16 %v4450, %v4446
    %v4599 = vpack.c.b16 %v4451, %v4447
    %v4600 = vpack.c.b16 %v4452, %v4448
    %v4601 = vpack.c.b16 %v4453, %v4449
    %v4602 = vpack.c.b16 %v4458, %v4454
    %v4603 = vpack.c.b16 %v4459, %v4455
    %v4604 = vpack.c.b16 %v4460, %v4456
    %v4605 = vpack.c.b16 %v4461, %v4457
    %v4606 = vpack.c.b16 %v4466, %v4462
    %v4607 = vpack.c.b16 %v4467, %v4463
    %v4608 = vpack.c.b16 %v4468, %v4464
    %v4609 = vpack.c.b16 %v4469, %v4465
    %v4610 = vpack.c.b16 %v4474, %v4470
    %v4611 = vpack.c.b16 %v4475, %v4471
    %v4612 = vpack.c.b16 %v4476, %v4472
    %v4613 = vpack.c.b16 %v4477, %v4473
    %v4614 = vpack.c.b16 %v4482, %v4478
    %v4615 = vpack.c.b16 %v4483, %v4479
    %v4616 = vpack.c.b16 %v4484, %v4480
    %v4617 = vpack.c.b16 %v4485, %v4481
    %v4618 = vpack.c.b16 %v4490, %v4486
    %v4619 = vpack.c.b16 %v4491, %v4487
    %v4620 = vpack.c.b16 %v4492, %v4488
    %v4621 = vpack.c.b16 %v4493, %v4489
    %4750 = vmatprep.subr.bf16.mxu0 %v4523
    %4751 = vmatpush1.bf16.msra.mxu0 %v4522
    %4752 = vmatprep.subr.bf16.mxu0 %v4519
    %4753 = vmatpush1.bf16.msra.mxu0 %v4518
    %4754 = vmatprep.subr.bf16.mxu0 %v4515
    %4755 = vmatpush1.bf16.msra.mxu0 %v4514
    %4756 = vmatprep.subr.bf16.mxu0 %v4511
    %4757 = vmatpush1.bf16.msra.mxu0 %v4510
    %4758 = vmatprep.subr.bf16.mxu0 %v4507
    %4759 = vmatpush1.bf16.msra.mxu0 %v4506
    %4760 = vmatprep.subr.bf16.mxu0 %v4503
    %4761 = vmatpush1.bf16.msra.mxu0 %v4502
    %4762 = vmatprep.subr.bf16.mxu0 %v4499
    %4763 = vmatpush1.bf16.msra.mxu0 %v4498
    %4764 = vmatprep.subr.bf16.mxu0 %v4495
    %4765 = vmatpush1.bf16.msra.mxu0 %v4494
    %4766 = vmatprep.subr.bf16.mxu0 %v4555
    %4767 = vmatpush2.bf16.msra.mxu0 %v4554
    %4768 = vmatprep.subr.bf16.mxu0 %v4551
    %4769 = vmatpush2.bf16.msra.mxu0 %v4550
    %4770 = vmatprep.subr.bf16.mxu0 %v4547
    %4771 = vmatpush2.bf16.msra.mxu0 %v4546
    %4772 = vmatprep.subr.bf16.mxu0 %v4543
    %4773 = vmatpush2.bf16.msra.mxu0 %v4542
    %4774 = vmatprep.subr.bf16.mxu0 %v4539
    %4775 = vmatpush2.bf16.msra.mxu0 %v4538
    %4776 = vmatprep.subr.bf16.mxu0 %v4535
    %4777 = vmatpush2.bf16.msra.mxu0 %v4534
    %4778 = vmatprep.subr.bf16.mxu0 %v4531
    %4779 = vmatpush2.bf16.msra.mxu0 %v4530
    %4780 = vmatprep.subr.bf16.mxu0 %v4527
    %4781 = vmatpush2.bf16.msra.mxu0 %v4526
    %4782 = vmatprep.mubr.bf16.mxu0 %v3956
    %4783 = vmatmul.mubr.bf16.gmra.mxu0 %v3955
    %v4784 = vpop.f32.mrf.mxu0
    %v4785 = vadd.f32 %v4093, %v4784
    %v4786 = vpop.f32.mrf.mxu0
    %v4787 = vadd.f32 %v4097, %v4786
    %v4788 = vpop.f32.mrf.mxu0
    %v4789 = vadd.f32 %v4093, %v4788
    %v4790 = vpop.f32.mrf.mxu0
    %v4791 = vadd.f32 %v4097, %v4790
    %4792 = vdwg.mxu0
    %4793 = vmatprep.subr.bf16.mxu0 %v4587
    %4794 = vmatpush1.bf16.msra.mxu0 %v4586
    %4795 = vmatprep.subr.bf16.mxu0 %v4583
    %4796 = vmatpush1.bf16.msra.mxu0 %v4582
    %4797 = vmatprep.subr.bf16.mxu0 %v4579
    %4798 = vmatpush1.bf16.msra.mxu0 %v4578
    %4799 = vmatprep.subr.bf16.mxu0 %v4575
    %4800 = vmatpush1.bf16.msra.mxu0 %v4574
    %4801 = vmatprep.subr.bf16.mxu0 %v4571
    %4802 = vmatpush1.bf16.msra.mxu0 %v4570
    %4803 = vmatprep.subr.bf16.mxu0 %v4567
    %4804 = vmatpush1.bf16.msra.mxu0 %v4566
    %4805 = vmatprep.subr.bf16.mxu0 %v4563
    %4806 = vmatpush1.bf16.msra.mxu0 %v4562
    %4807 = vmatprep.subr.bf16.mxu0 %v4559
    %4808 = vmatpush1.bf16.msra.mxu0 %v4558
    %4809 = vmatprep.subr.bf16.mxu0 %v4619
    %4810 = vmatpush2.bf16.msra.mxu0 %v4618
    %4811 = vmatprep.subr.bf16.mxu0 %v4615
    %4812 = vmatpush2.bf16.msra.mxu0 %v4614
    %4813 = vmatprep.subr.bf16.mxu0 %v4611
    %4814 = vmatpush2.bf16.msra.mxu0 %v4610
    %4815 = vmatprep.subr.bf16.mxu0 %v4607
    %4816 = vmatpush2.bf16.msra.mxu0 %v4606
    %4817 = vmatprep.subr.bf16.mxu0 %v4603
    %4818 = vmatpush2.bf16.msra.mxu0 %v4602
    %4819 = vmatprep.subr.bf16.mxu0 %v4599
    %4820 = vmatpush2.bf16.msra.mxu0 %v4598
    %4821 = vmatprep.subr.bf16.mxu0 %v4595
    %4822 = vmatpush2.bf16.msra.mxu0 %v4594
    %4823 = vmatprep.subr.bf16.mxu0 %v4591
    %4824 = vmatpush2.bf16.msra.mxu0 %v4590
    %4825 = vmatprep.mubr.bf16.mxu0 %v3958
    %4826 = vmatmul.mubr.bf16.gmra.mxu0 %v3957
    %v4827 = vpop.f32.mrf.mxu0
    %v4828 = vadd.f32 %v4785, %v4827
    %v4829 = vpop.f32.mrf.mxu0
    %v4830 = vadd.f32 %v4787, %v4829
    %v4831 = vpop.f32.mrf.mxu0
    %v4832 = vadd.f32 %v4789, %v4831
    %v4833 = vpop.f32.mrf.mxu0
    %v4834 = vadd.f32 %v4791, %v4833
    %4835 = vdwg.mxu0
    %4836 = vmatprep.subr.bf16.mxu0 %v4525
    %4837 = vmatpush1.bf16.msra.mxu0 %v4524
    %4838 = vmatprep.subr.bf16.mxu0 %v4521
    %4839 = vmatpush1.bf16.msra.mxu0 %v4520
    %4840 = vmatprep.subr.bf16.mxu0 %v4517
    %4841 = vmatpush1.bf16.msra.mxu0 %v4516
    %4842 = vmatprep.subr.bf16.mxu0 %v4513
    %4843 = vmatpush1.bf16.msra.mxu0 %v4512
    %4844 = vmatprep.subr.bf16.mxu0 %v4509
    %4845 = vmatpush1.bf16.msra.mxu0 %v4508
    %4846 = vmatprep.subr.bf16.mxu0 %v4505
    %4847 = vmatpush1.bf16.msra.mxu0 %v4504
    %4848 = vmatprep.subr.bf16.mxu0 %v4501
    %4849 = vmatpush1.bf16.msra.mxu0 %v4500
    %4850 = vmatprep.subr.bf16.mxu0 %v4497
    %4851 = vmatpush1.bf16.msra.mxu0 %v4496
    %4852 = vmatprep.subr.bf16.mxu0 %v4557
    %4853 = vmatpush2.bf16.msra.mxu0 %v4556
    %4854 = vmatprep.subr.bf16.mxu0 %v4553
    %4855 = vmatpush2.bf16.msra.mxu0 %v4552
    %4856 = vmatprep.subr.bf16.mxu0 %v4549
    %4857 = vmatpush2.bf16.msra.mxu0 %v4548
    %4858 = vmatprep.subr.bf16.mxu0 %v4545
    %4859 = vmatpush2.bf16.msra.mxu0 %v4544
    %4860 = vmatprep.subr.bf16.mxu0 %v4541
    %4861 = vmatpush2.bf16.msra.mxu0 %v4540
    %4862 = vmatprep.subr.bf16.mxu0 %v4537
    %4863 = vmatpush2.bf16.msra.mxu0 %v4536
    %4864 = vmatprep.subr.bf16.mxu0 %v4533
    %4865 = vmatpush2.bf16.msra.mxu0 %v4532
    %4866 = vmatprep.subr.bf16.mxu0 %v4529
    %4867 = vmatpush2.bf16.msra.mxu0 %v4528
    %4868 = vmatprep.mubr.bf16.mxu0 %v3956
    %4869 = vmatmul.mubr.bf16.gmra.mxu0 %v3955
    %v4870 = vpop.f32.mrf.mxu0
    %v4871 = vadd.f32 %v4101, %v4870
    %v4872 = vpop.f32.mrf.mxu0
    %v4873 = vadd.f32 %v4105, %v4872
    %v4874 = vpop.f32.mrf.mxu0
    %v4875 = vadd.f32 %v4101, %v4874
    %v4876 = vpop.f32.mrf.mxu0
    %v4877 = vadd.f32 %v4105, %v4876
    %4878 = vdwg.mxu0
    %4879 = vmatprep.subr.bf16.mxu0 %v4589
    %4880 = vmatpush1.bf16.msra.mxu0 %v4588
    %4881 = vmatprep.subr.bf16.mxu0 %v4585
    %4882 = vmatpush1.bf16.msra.mxu0 %v4584
    %4883 = vmatprep.subr.bf16.mxu0 %v4581
    %4884 = vmatpush1.bf16.msra.mxu0 %v4580
    %4885 = vmatprep.subr.bf16.mxu0 %v4577
    %4886 = vmatpush1.bf16.msra.mxu0 %v4576
    %4887 = vmatprep.subr.bf16.mxu0 %v4573
    %4888 = vmatpush1.bf16.msra.mxu0 %v4572
    %4889 = vmatprep.subr.bf16.mxu0 %v4569
    %4890 = vmatpush1.bf16.msra.mxu0 %v4568
    %4891 = vmatprep.subr.bf16.mxu0 %v4565
    %4892 = vmatpush1.bf16.msra.mxu0 %v4564
    %4893 = vmatprep.subr.bf16.mxu0 %v4561
    %4894 = vmatpush1.bf16.msra.mxu0 %v4560
    %4895 = vmatprep.subr.bf16.mxu0 %v4621
    %4896 = vmatpush2.bf16.msra.mxu0 %v4620
    %4897 = vmatprep.subr.bf16.mxu0 %v4617
    %4898 = vmatpush2.bf16.msra.mxu0 %v4616
    %4899 = vmatprep.subr.bf16.mxu0 %v4613
    %4900 = vmatpush2.bf16.msra.mxu0 %v4612
    %4901 = vmatprep.subr.bf16.mxu0 %v4609
    %4902 = vmatpush2.bf16.msra.mxu0 %v4608
    %4903 = vmatprep.subr.bf16.mxu0 %v4605
    %4904 = vmatpush2.bf16.msra.mxu0 %v4604
    %4905 = vmatprep.subr.bf16.mxu0 %v4601
    %4906 = vmatpush2.bf16.msra.mxu0 %v4600
    %4907 = vmatprep.subr.bf16.mxu0 %v4597
    %4908 = vmatpush2.bf16.msra.mxu0 %v4596
    %4909 = vmatprep.subr.bf16.mxu0 %v4593
    %4910 = vmatpush2.bf16.msra.mxu0 %v4592
    %4911 = vmatprep.mubr.bf16.mxu0 %v3958
    %4912 = vmatmul.mubr.bf16.gmra.mxu0 %v3957
    %v4913 = vpop.f32.mrf.mxu0
    %v4914 = vadd.f32 %v4871, %v4913
    %v4915 = vpop.f32.mrf.mxu0
    %v4916 = vadd.f32 %v4873, %v4915
    %v4917 = vpop.f32.mrf.mxu0
    %v4918 = vadd.f32 %v4875, %v4917
    %v4919 = vpop.f32.mrf.mxu0
    %v4920 = vadd.f32 %v4877, %v4919
    %4921 = vdwg.mxu0
    %v4922 = vadd.f32 %v4828, %v4830
    %v4923 = vadd.f32 %v4922, %v4914
    %v4924 = vadd.f32 %v4923, %v4916
    %4925 = vadd.xlane.f32.xlu0 %v4924
    %v4926 = vpop.xlane.xlu0 %4925
    %v4927 = vadd.f32 %v4832, %v4834
    %v4928 = vadd.f32 %v4927, %v4918
    %v4929 = vadd.f32 %v4928, %v4920
    %4930 = vadd.xlane.f32.xlu0 %v4929
    %v4931 = vpop.xlane.xlu0 %4930
    %v4932 = vmul.f32 %v4926, %v1738
    %v4933 = vmul.f32 %v4931, %v1738
    %v4934 = vmul.f32 %v4828, %v4828
    %v4935 = vmul.f32 %v4830, %v4830
    %v4936 = vmul.f32 %v4914, %v4914
    %v4937 = vmul.f32 %v4916, %v4916
    %v4938 = vmul.f32 %v4832, %v4832
    %v4939 = vmul.f32 %v4834, %v4834
    %v4940 = vmul.f32 %v4918, %v4918
    %v4941 = vmul.f32 %v4920, %v4920
    %v4942 = vadd.f32 %v4934, %v4935
    %v4943 = vadd.f32 %v4942, %v4936
    %v4944 = vadd.f32 %v4943, %v4937
    %4945 = vadd.xlane.f32.xlu0 %v4944
    %v4946 = vpop.xlane.xlu0 %4945
    %v4947 = vadd.f32 %v4938, %v4939
    %v4948 = vadd.f32 %v4947, %v4940
    %v4949 = vadd.f32 %v4948, %v4941
    %4950 = vadd.xlane.f32.xlu0 %v4949
    %v4951 = vpop.xlane.xlu0 %4950
    %v4952 = vmul.f32 %v4946, %v1738
    %v4953 = vmul.f32 %v4951, %v1738
    %v4954 = vmul.f32 %v4932, %v4932
    %v4955 = vmul.f32 %v4933, %v4933
    %v4956 = vsub.f32 %v4952, %v4954
    %v4957 = vsub.f32 %v4953, %v4955
    %v4958 = vadd.f32 %v4956, 1e-05
    %v4959 = vadd.f32 %v4957, 1e-05
    %v4960 = vrsqrt.pop %v4958
    %v4961 = vrsqrt.pop %v4959
    %v4962 = vsub.f32 %v4828, %v4932
    %v4963 = vsub.f32 %v4830, %v4932
    %v4964 = vsub.f32 %v4914, %v4932
    %v4965 = vsub.f32 %v4916, %v4932
    %v4966 = vsub.f32 %v4832, %v4933
    %v4967 = vsub.f32 %v4834, %v4933
    %v4968 = vsub.f32 %v4918, %v4933
    %v4969 = vsub.f32 %v4920, %v4933
    %v4970 = vmul.f32 %v4962, %v4960
    %v4971 = vmul.f32 %v4963, %v4960
    %v4972 = vmul.f32 %v4964, %v4960
    %v4973 = vmul.f32 %v4965, %v4960
    %v4974 = vmul.f32 %v4966, %v4961
    %v4975 = vmul.f32 %v4967, %v4961
    %v4976 = vmul.f32 %v4968, %v4961
    %v4977 = vmul.f32 %v4969, %v4961
    %s4978 = scalar_lea.vmem %s2, 34
    %v4979 = vld [vmem:[%s4978] ss:$8 sm:$0xf]
    %v4981 = vlaneseq
    %v4982 = vshrl.u32 %v4981, 7
    %v4983 = vsub.s32 0, %v4982
    %v4984 = vrot.slane %v4979, %v4983
    %v4985 = vlaneseq
    %v4986 = vshrl.u32 %v4985, 7
    %v4987 = vsub.s32 1, %v4986
    %v4988 = vrot.slane %v4979, %v4987
    %v4989 = vlaneseq
    %v4990 = vshrl.u32 %v4989, 7
    %v4991 = vsub.s32 2, %v4990
    %v4992 = vrot.slane %v4979, %v4991
    %v4993 = vlaneseq
    %v4994 = vshrl.u32 %v4993, 7
    %v4995 = vsub.s32 3, %v4994
    %v4996 = vrot.slane %v4979, %v4995
    %v5001 = vmul.f32 %v4970, %v4984
    %v5002 = vmul.f32 %v4971, %v4988
    %v5003 = vmul.f32 %v4972, %v4992
    %v5004 = vmul.f32 %v4973, %v4996
    %v5005 = vmul.f32 %v4974, %v4984
    %v5006 = vmul.f32 %v4975, %v4988
    %v5007 = vmul.f32 %v4976, %v4992
    %v5008 = vmul.f32 %v4977, %v4996
    %s5009 = scalar_lea.vmem %s2, 35
    %v5010 = vld [vmem:[%s5009] ss:$8 sm:$0xf]
    %v5012 = vlaneseq
    %v5013 = vshrl.u32 %v5012, 7
    %v5014 = vsub.s32 0, %v5013
    %v5015 = vrot.slane %v5010, %v5014
    %v5016 = vlaneseq
    %v5017 = vshrl.u32 %v5016, 7
    %v5018 = vsub.s32 1, %v5017
    %v5019 = vrot.slane %v5010, %v5018
    %v5020 = vlaneseq
    %v5021 = vshrl.u32 %v5020, 7
    %v5022 = vsub.s32 2, %v5021
    %v5023 = vrot.slane %v5010, %v5022
    %v5024 = vlaneseq
    %v5025 = vshrl.u32 %v5024, 7
    %v5026 = vsub.s32 3, %v5025
    %v5027 = vrot.slane %v5010, %v5026
    %v5032 = vadd.f32 %v5001, %v5015
    %v5033 = vadd.f32 %v5002, %v5019
    %v5034 = vadd.f32 %v5003, %v5023
    %v5035 = vadd.f32 %v5004, %v5027
    %v5036 = vadd.f32 %v5005, %v5015
    %v5037 = vadd.f32 %v5006, %v5019
    %v5038 = vadd.f32 %v5007, %v5023
    %v5039 = vadd.f32 %v5008, %v5027
    %v5040 = vmul.f32 %v5032, 0.5
    %v5041 = vmul.f32 %v5033, 0.5
    %v5042 = vmul.f32 %v5034, 0.5
    %v5043 = vmul.f32 %v5035, 0.5
    %v5044 = vmul.f32 %v5036, 0.5
    %v5045 = vmul.f32 %v5037, 0.5
    %v5046 = vmul.f32 %v5038, 0.5
    %v5047 = vmul.f32 %v5039, 0.5
    %v5048 = vtanh.pop %v5040
    %v5049 = vtanh.pop %v5041
    %v5050 = vtanh.pop %v5042
    %v5051 = vtanh.pop %v5043
    %v5052 = vtanh.pop %v5044
    %v5053 = vtanh.pop %v5045
    %v5054 = vtanh.pop %v5046
    %v5055 = vtanh.pop %v5047
    %v5056 = vmul.f32 %v5048, 0.5
    %v5057 = vmul.f32 %v5049, 0.5
    %v5058 = vmul.f32 %v5050, 0.5
    %v5059 = vmul.f32 %v5051, 0.5
    %v5060 = vmul.f32 %v5052, 0.5
    %v5061 = vmul.f32 %v5053, 0.5
    %v5062 = vmul.f32 %v5054, 0.5
    %v5063 = vmul.f32 %v5055, 0.5
    %v5064 = vadd.f32 %v5056, 0.5
    %v5065 = vadd.f32 %v5057, 0.5
    %v5066 = vadd.f32 %v5058, 0.5
    %v5067 = vadd.f32 %v5059, 0.5
    %v5068 = vadd.f32 %v5060, 0.5
    %v5069 = vadd.f32 %v5061, 0.5
    %v5070 = vadd.f32 %v5062, 0.5
    %v5071 = vadd.f32 %v5063, 0.5
    %v5072 = vmul.f32 %v5032, %v5064
    %v5073 = vmul.f32 %v5033, %v5065
    %v5074 = vmul.f32 %v5034, %v5066
    %v5075 = vmul.f32 %v5035, %v5067
    %v5076 = vmul.f32 %v5036, %v5068
    %v5077 = vmul.f32 %v5037, %v5069
    %v5078 = vmul.f32 %v5038, %v5070
    %v5079 = vmul.f32 %v5039, %v5071
    %v5080 = vpack.c.bf16 %v5076, %v5072
    %v5081 = vpack.c.bf16 %v5077, %v5073
    %v5082 = vpack.c.bf16 %v5078, %v5074
    %v5083 = vpack.c.bf16 %v5079, %v5075
    %v5084 = vld [vmem:[#allocation15] sm:$0xff]
    %v5085 = vld [vmem:[#allocation15 + $0x8] sm:$0xff]
    %v5086 = vld [vmem:[#allocation15 + $0x10] sm:$0xff]
    %v5087 = vld [vmem:[#allocation15 + $0x18] sm:$0xff]
    %v5088 = vld [vmem:[#allocation15 + $0x20] sm:$0xff]
    %v5089 = vld [vmem:[#allocation15 + $0x28] sm:$0xff]
    %v5090 = vld [vmem:[#allocation15 + $0x30] sm:$0xff]
    %v5091 = vld [vmem:[#allocation15 + $0x38] sm:$0xff]
    %v5092 = vld [vmem:[#allocation15 + $0x40] sm:$0xff]
    %v5093 = vld [vmem:[#allocation15 + $0x48] sm:$0xff]
    %v5094 = vld [vmem:[#allocation15 + $0x50] sm:$0xff]
    %v5095 = vld [vmem:[#allocation15 + $0x58] sm:$0xff]
    %v5096 = vld [vmem:[#allocation15 + $0x60] sm:$0xff]
    %v5097 = vld [vmem:[#allocation15 + $0x68] sm:$0xff]
    %v5098 = vld [vmem:[#allocation15 + $0x70] sm:$0xff]
    %v5099 = vld [vmem:[#allocation15 + $0x78] sm:$0xff]
    %v5100 = vld [vmem:[#allocation15 + $0x80] sm:$0xff]
    %v5101 = vld [vmem:[#allocation15 + $0x88] sm:$0xff]
    %v5102 = vld [vmem:[#allocation15 + $0x90] sm:$0xff]
    %v5103 = vld [vmem:[#allocation15 + $0x98] sm:$0xff]
    %v5104 = vld [vmem:[#allocation15 + $0xa0] sm:$0xff]
    %v5105 = vld [vmem:[#allocation15 + $0xa8] sm:$0xff]
    %v5106 = vld [vmem:[#allocation15 + $0xb0] sm:$0xff]
    %v5107 = vld [vmem:[#allocation15 + $0xb8] sm:$0xff]
    %v5108 = vld [vmem:[#allocation15 + $0xc0] sm:$0xff]
    %v5109 = vld [vmem:[#allocation15 + $0xc8] sm:$0xff]
    %v5110 = vld [vmem:[#allocation15 + $0xd0] sm:$0xff]
    %v5111 = vld [vmem:[#allocation15 + $0xd8] sm:$0xff]
    %v5112 = vld [vmem:[#allocation15 + $0xe0] sm:$0xff]
    %v5113 = vld [vmem:[#allocation15 + $0xe8] sm:$0xff]
    %v5114 = vld [vmem:[#allocation15 + $0xf0] sm:$0xff]
    %v5115 = vld [vmem:[#allocation15 + $0xf8] sm:$0xff]
    %v5116 = vld [vmem:[#allocation15 + $0x100] sm:$0xff]
    %v5117 = vld [vmem:[#allocation15 + $0x108] sm:$0xff]
    %v5118 = vld [vmem:[#allocation15 + $0x110] sm:$0xff]
    %v5119 = vld [vmem:[#allocation15 + $0x118] sm:$0xff]
    %v5120 = vld [vmem:[#allocation15 + $0x120] sm:$0xff]
    %v5121 = vld [vmem:[#allocation15 + $0x128] sm:$0xff]
    %v5122 = vld [vmem:[#allocation15 + $0x130] sm:$0xff]
    %v5123 = vld [vmem:[#allocation15 + $0x138] sm:$0xff]
    %v5124 = vld [vmem:[#allocation15 + $0x140] sm:$0xff]
    %v5125 = vld [vmem:[#allocation15 + $0x148] sm:$0xff]
    %v5126 = vld [vmem:[#allocation15 + $0x150] sm:$0xff]
    %v5127 = vld [vmem:[#allocation15 + $0x158] sm:$0xff]
    %v5128 = vld [vmem:[#allocation15 + $0x160] sm:$0xff]
    %v5129 = vld [vmem:[#allocation15 + $0x168] sm:$0xff]
    %v5130 = vld [vmem:[#allocation15 + $0x170] sm:$0xff]
    %v5131 = vld [vmem:[#allocation15 + $0x178] sm:$0xff]
    %v5132 = vld [vmem:[#allocation15 + $0x180] sm:$0xff]
    %v5133 = vld [vmem:[#allocation15 + $0x188] sm:$0xff]
    %v5134 = vld [vmem:[#allocation15 + $0x190] sm:$0xff]
    %v5135 = vld [vmem:[#allocation15 + $0x198] sm:$0xff]
    %v5136 = vld [vmem:[#allocation15 + $0x1a0] sm:$0xff]
    %v5137 = vld [vmem:[#allocation15 + $0x1a8] sm:$0xff]
    %v5138 = vld [vmem:[#allocation15 + $0x1b0] sm:$0xff]
    %v5139 = vld [vmem:[#allocation15 + $0x1b8] sm:$0xff]
    %v5140 = vld [vmem:[#allocation15 + $0x1c0] sm:$0xff]
    %v5141 = vld [vmem:[#allocation15 + $0x1c8] sm:$0xff]
    %v5142 = vld [vmem:[#allocation15 + $0x1d0] sm:$0xff]
    %v5143 = vld [vmem:[#allocation15 + $0x1d8] sm:$0xff]
    %v5144 = vld [vmem:[#allocation15 + $0x1e0] sm:$0xff]
    %v5145 = vld [vmem:[#allocation15 + $0x1e8] sm:$0xff]
    %v5146 = vld [vmem:[#allocation15 + $0x1f0] sm:$0xff]
    %v5147 = vld [vmem:[#allocation15 + $0x1f8] sm:$0xff]
    %v5148 = vld [vmem:[#allocation15 + $0x200] sm:$0xff]
    %v5149 = vld [vmem:[#allocation15 + $0x208] sm:$0xff]
    %v5150 = vld [vmem:[#allocation15 + $0x210] sm:$0xff]
    %v5151 = vld [vmem:[#allocation15 + $0x218] sm:$0xff]
    %v5152 = vld [vmem:[#allocation15 + $0x220] sm:$0xff]
    %v5153 = vld [vmem:[#allocation15 + $0x228] sm:$0xff]
    %v5154 = vld [vmem:[#allocation15 + $0x230] sm:$0xff]
    %v5155 = vld [vmem:[#allocation15 + $0x238] sm:$0xff]
    %v5156 = vld [vmem:[#allocation15 + $0x240] sm:$0xff]
    %v5157 = vld [vmem:[#allocation15 + $0x248] sm:$0xff]
    %v5158 = vld [vmem:[#allocation15 + $0x250] sm:$0xff]
    %v5159 = vld [vmem:[#allocation15 + $0x258] sm:$0xff]
    %v5160 = vld [vmem:[#allocation15 + $0x260] sm:$0xff]
    %v5161 = vld [vmem:[#allocation15 + $0x268] sm:$0xff]
    %v5162 = vld [vmem:[#allocation15 + $0x270] sm:$0xff]
    %v5163 = vld [vmem:[#allocation15 + $0x278] sm:$0xff]
    %v5164 = vld [vmem:[#allocation15 + $0x280] sm:$0xff]
    %v5165 = vld [vmem:[#allocation15 + $0x288] sm:$0xff]
    %v5166 = vld [vmem:[#allocation15 + $0x290] sm:$0xff]
    %v5167 = vld [vmem:[#allocation15 + $0x298] sm:$0xff]
    %v5168 = vld [vmem:[#allocation15 + $0x2a0] sm:$0xff]
    %v5169 = vld [vmem:[#allocation15 + $0x2a8] sm:$0xff]
    %v5170 = vld [vmem:[#allocation15 + $0x2b0] sm:$0xff]
    %v5171 = vld [vmem:[#allocation15 + $0x2b8] sm:$0xff]
    %v5172 = vld [vmem:[#allocation15 + $0x2c0] sm:$0xff]
    %v5173 = vld [vmem:[#allocation15 + $0x2c8] sm:$0xff]
    %v5174 = vld [vmem:[#allocation15 + $0x2d0] sm:$0xff]
    %v5175 = vld [vmem:[#allocation15 + $0x2d8] sm:$0xff]
    %v5176 = vld [vmem:[#allocation15 + $0x2e0] sm:$0xff]
    %v5177 = vld [vmem:[#allocation15 + $0x2e8] sm:$0xff]
    %v5178 = vld [vmem:[#allocation15 + $0x2f0] sm:$0xff]
    %v5179 = vld [vmem:[#allocation15 + $0x2f8] sm:$0xff]
    %v5180 = vld [vmem:[#allocation15 + $0x300] sm:$0xff]
    %v5181 = vld [vmem:[#allocation15 + $0x308] sm:$0xff]
    %v5182 = vld [vmem:[#allocation15 + $0x310] sm:$0xff]
    %v5183 = vld [vmem:[#allocation15 + $0x318] sm:$0xff]
    %v5184 = vld [vmem:[#allocation15 + $0x320] sm:$0xff]
    %v5185 = vld [vmem:[#allocation15 + $0x328] sm:$0xff]
    %v5186 = vld [vmem:[#allocation15 + $0x330] sm:$0xff]
    %v5187 = vld [vmem:[#allocation15 + $0x338] sm:$0xff]
    %v5188 = vld [vmem:[#allocation15 + $0x340] sm:$0xff]
    %v5189 = vld [vmem:[#allocation15 + $0x348] sm:$0xff]
    %v5190 = vld [vmem:[#allocation15 + $0x350] sm:$0xff]
    %v5191 = vld [vmem:[#allocation15 + $0x358] sm:$0xff]
    %v5192 = vld [vmem:[#allocation15 + $0x360] sm:$0xff]
    %v5193 = vld [vmem:[#allocation15 + $0x368] sm:$0xff]
    %v5194 = vld [vmem:[#allocation15 + $0x370] sm:$0xff]
    %v5195 = vld [vmem:[#allocation15 + $0x378] sm:$0xff]
    %v5196 = vld [vmem:[#allocation15 + $0x380] sm:$0xff]
    %v5197 = vld [vmem:[#allocation15 + $0x388] sm:$0xff]
    %v5198 = vld [vmem:[#allocation15 + $0x390] sm:$0xff]
    %v5199 = vld [vmem:[#allocation15 + $0x398] sm:$0xff]
    %v5200 = vld [vmem:[#allocation15 + $0x3a0] sm:$0xff]
    %v5201 = vld [vmem:[#allocation15 + $0x3a8] sm:$0xff]
    %v5202 = vld [vmem:[#allocation15 + $0x3b0] sm:$0xff]
    %v5203 = vld [vmem:[#allocation15 + $0x3b8] sm:$0xff]
    %v5204 = vld [vmem:[#allocation15 + $0x3c0] sm:$0xff]
    %v5205 = vld [vmem:[#allocation15 + $0x3c8] sm:$0xff]
    %v5206 = vld [vmem:[#allocation15 + $0x3d0] sm:$0xff]
    %v5207 = vld [vmem:[#allocation15 + $0x3d8] sm:$0xff]
    %v5208 = vld [vmem:[#allocation15 + $0x3e0] sm:$0xff]
    %v5209 = vld [vmem:[#allocation15 + $0x3e8] sm:$0xff]
    %v5210 = vld [vmem:[#allocation15 + $0x3f0] sm:$0xff]
    %v5211 = vld [vmem:[#allocation15 + $0x3f8] sm:$0xff]
    %v5340 = vunpack.c.l.b16 %v5084
    %v5341 = vunpack.c.h.b16 %v5084
    %v5342 = vunpack.c.l.b16 %v5085
    %v5343 = vunpack.c.h.b16 %v5085
    %v5344 = vunpack.c.l.b16 %v5086
    %v5345 = vunpack.c.h.b16 %v5086
    %v5346 = vunpack.c.l.b16 %v5087
    %v5347 = vunpack.c.h.b16 %v5087
    %v5348 = vunpack.c.l.b16 %v5088
    %v5349 = vunpack.c.h.b16 %v5088
    %v5350 = vunpack.c.l.b16 %v5089
    %v5351 = vunpack.c.h.b16 %v5089
    %v5352 = vunpack.c.l.b16 %v5090
    %v5353 = vunpack.c.h.b16 %v5090
    %v5354 = vunpack.c.l.b16 %v5091
    %v5355 = vunpack.c.h.b16 %v5091
    %v5356 = vunpack.c.l.b16 %v5092
    %v5357 = vunpack.c.h.b16 %v5092
    %v5358 = vunpack.c.l.b16 %v5093
    %v5359 = vunpack.c.h.b16 %v5093
    %v5360 = vunpack.c.l.b16 %v5094
    %v5361 = vunpack.c.h.b16 %v5094
    %v5362 = vunpack.c.l.b16 %v5095
    %v5363 = vunpack.c.h.b16 %v5095
    %v5364 = vunpack.c.l.b16 %v5096
    %v5365 = vunpack.c.h.b16 %v5096
    %v5366 = vunpack.c.l.b16 %v5097
    %v5367 = vunpack.c.h.b16 %v5097
    %v5368 = vunpack.c.l.b16 %v5098
    %v5369 = vunpack.c.h.b16 %v5098
    %v5370 = vunpack.c.l.b16 %v5099
    %v5371 = vunpack.c.h.b16 %v5099
    %v5372 = vunpack.c.l.b16 %v5100
    %v5373 = vunpack.c.h.b16 %v5100
    %v5374 = vunpack.c.l.b16 %v5101
    %v5375 = vunpack.c.h.b16 %v5101
    %v5376 = vunpack.c.l.b16 %v5102
    %v5377 = vunpack.c.h.b16 %v5102
    %v5378 = vunpack.c.l.b16 %v5103
    %v5379 = vunpack.c.h.b16 %v5103
    %v5380 = vunpack.c.l.b16 %v5104
    %v5381 = vunpack.c.h.b16 %v5104
    %v5382 = vunpack.c.l.b16 %v5105
    %v5383 = vunpack.c.h.b16 %v5105
    %v5384 = vunpack.c.l.b16 %v5106
    %v5385 = vunpack.c.h.b16 %v5106
    %v5386 = vunpack.c.l.b16 %v5107
    %v5387 = vunpack.c.h.b16 %v5107
    %v5388 = vunpack.c.l.b16 %v5108
    %v5389 = vunpack.c.h.b16 %v5108
    %v5390 = vunpack.c.l.b16 %v5109
    %v5391 = vunpack.c.h.b16 %v5109
    %v5392 = vunpack.c.l.b16 %v5110
    %v5393 = vunpack.c.h.b16 %v5110
    %v5394 = vunpack.c.l.b16 %v5111
    %v5395 = vunpack.c.h.b16 %v5111
    %v5396 = vunpack.c.l.b16 %v5112
    %v5397 = vunpack.c.h.b16 %v5112
    %v5398 = vunpack.c.l.b16 %v5113
    %v5399 = vunpack.c.h.b16 %v5113
    %v5400 = vunpack.c.l.b16 %v5114
    %v5401 = vunpack.c.h.b16 %v5114
    %v5402 = vunpack.c.l.b16 %v5115
    %v5403 = vunpack.c.h.b16 %v5115
    %v5404 = vunpack.c.l.b16 %v5116
    %v5405 = vunpack.c.h.b16 %v5116
    %v5406 = vunpack.c.l.b16 %v5117
    %v5407 = vunpack.c.h.b16 %v5117
    %v5408 = vunpack.c.l.b16 %v5118
    %v5409 = vunpack.c.h.b16 %v5118
    %v5410 = vunpack.c.l.b16 %v5119
    %v5411 = vunpack.c.h.b16 %v5119
    %v5412 = vunpack.c.l.b16 %v5120
    %v5413 = vunpack.c.h.b16 %v5120
    %v5414 = vunpack.c.l.b16 %v5121
    %v5415 = vunpack.c.h.b16 %v5121
    %v5416 = vunpack.c.l.b16 %v5122
    %v5417 = vunpack.c.h.b16 %v5122
    %v5418 = vunpack.c.l.b16 %v5123
    %v5419 = vunpack.c.h.b16 %v5123
    %v5420 = vunpack.c.l.b16 %v5124
    %v5421 = vunpack.c.h.b16 %v5124
    %v5422 = vunpack.c.l.b16 %v5125
    %v5423 = vunpack.c.h.b16 %v5125
    %v5424 = vunpack.c.l.b16 %v5126
    %v5425 = vunpack.c.h.b16 %v5126
    %v5426 = vunpack.c.l.b16 %v5127
    %v5427 = vunpack.c.h.b16 %v5127
    %v5428 = vunpack.c.l.b16 %v5128
    %v5429 = vunpack.c.h.b16 %v5128
    %v5430 = vunpack.c.l.b16 %v5129
    %v5431 = vunpack.c.h.b16 %v5129
    %v5432 = vunpack.c.l.b16 %v5130
    %v5433 = vunpack.c.h.b16 %v5130
    %v5434 = vunpack.c.l.b16 %v5131
    %v5435 = vunpack.c.h.b16 %v5131
    %v5436 = vunpack.c.l.b16 %v5132
    %v5437 = vunpack.c.h.b16 %v5132
    %v5438 = vunpack.c.l.b16 %v5133
    %v5439 = vunpack.c.h.b16 %v5133
    %v5440 = vunpack.c.l.b16 %v5134
    %v5441 = vunpack.c.h.b16 %v5134
    %v5442 = vunpack.c.l.b16 %v5135
    %v5443 = vunpack.c.h.b16 %v5135
    %v5444 = vunpack.c.l.b16 %v5136
    %v5445 = vunpack.c.h.b16 %v5136
    %v5446 = vunpack.c.l.b16 %v5137
    %v5447 = vunpack.c.h.b16 %v5137
    %v5448 = vunpack.c.l.b16 %v5138
    %v5449 = vunpack.c.h.b16 %v5138
    %v5450 = vunpack.c.l.b16 %v5139
    %v5451 = vunpack.c.h.b16 %v5139
    %v5452 = vunpack.c.l.b16 %v5140
    %v5453 = vunpack.c.h.b16 %v5140
    %v5454 = vunpack.c.l.b16 %v5141
    %v5455 = vunpack.c.h.b16 %v5141
    %v5456 = vunpack.c.l.b16 %v5142
    %v5457 = vunpack.c.h.b16 %v5142
    %v5458 = vunpack.c.l.b16 %v5143
    %v5459 = vunpack.c.h.b16 %v5143
    %v5460 = vunpack.c.l.b16 %v5144
    %v5461 = vunpack.c.h.b16 %v5144
    %v5462 = vunpack.c.l.b16 %v5145
    %v5463 = vunpack.c.h.b16 %v5145
    %v5464 = vunpack.c.l.b16 %v5146
    %v5465 = vunpack.c.h.b16 %v5146
    %v5466 = vunpack.c.l.b16 %v5147
    %v5467 = vunpack.c.h.b16 %v5147
    %v5468 = vunpack.c.l.b16 %v5148
    %v5469 = vunpack.c.h.b16 %v5148
    %v5470 = vunpack.c.l.b16 %v5149
    %v5471 = vunpack.c.h.b16 %v5149
    %v5472 = vunpack.c.l.b16 %v5150
    %v5473 = vunpack.c.h.b16 %v5150
    %v5474 = vunpack.c.l.b16 %v5151
    %v5475 = vunpack.c.h.b16 %v5151
    %v5476 = vunpack.c.l.b16 %v5152
    %v5477 = vunpack.c.h.b16 %v5152
    %v5478 = vunpack.c.l.b16 %v5153
    %v5479 = vunpack.c.h.b16 %v5153
    %v5480 = vunpack.c.l.b16 %v5154
    %v5481 = vunpack.c.h.b16 %v5154
    %v5482 = vunpack.c.l.b16 %v5155
    %v5483 = vunpack.c.h.b16 %v5155
    %v5484 = vunpack.c.l.b16 %v5156
    %v5485 = vunpack.c.h.b16 %v5156
    %v5486 = vunpack.c.l.b16 %v5157
    %v5487 = vunpack.c.h.b16 %v5157
    %v5488 = vunpack.c.l.b16 %v5158
    %v5489 = vunpack.c.h.b16 %v5158
    %v5490 = vunpack.c.l.b16 %v5159
    %v5491 = vunpack.c.h.b16 %v5159
    %v5492 = vunpack.c.l.b16 %v5160
    %v5493 = vunpack.c.h.b16 %v5160
    %v5494 = vunpack.c.l.b16 %v5161
    %v5495 = vunpack.c.h.b16 %v5161
    %v5496 = vunpack.c.l.b16 %v5162
    %v5497 = vunpack.c.h.b16 %v5162
    %v5498 = vunpack.c.l.b16 %v5163
    %v5499 = vunpack.c.h.b16 %v5163
    %v5500 = vunpack.c.l.b16 %v5164
    %v5501 = vunpack.c.h.b16 %v5164
    %v5502 = vunpack.c.l.b16 %v5165
    %v5503 = vunpack.c.h.b16 %v5165
    %v5504 = vunpack.c.l.b16 %v5166
    %v5505 = vunpack.c.h.b16 %v5166
    %v5506 = vunpack.c.l.b16 %v5167
    %v5507 = vunpack.c.h.b16 %v5167
    %v5508 = vunpack.c.l.b16 %v5168
    %v5509 = vunpack.c.h.b16 %v5168
    %v5510 = vunpack.c.l.b16 %v5169
    %v5511 = vunpack.c.h.b16 %v5169
    %v5512 = vunpack.c.l.b16 %v5170
    %v5513 = vunpack.c.h.b16 %v5170
    %v5514 = vunpack.c.l.b16 %v5171
    %v5515 = vunpack.c.h.b16 %v5171
    %v5516 = vunpack.c.l.b16 %v5172
    %v5517 = vunpack.c.h.b16 %v5172
    %v5518 = vunpack.c.l.b16 %v5173
    %v5519 = vunpack.c.h.b16 %v5173
    %v5520 = vunpack.c.l.b16 %v5174
    %v5521 = vunpack.c.h.b16 %v5174
    %v5522 = vunpack.c.l.b16 %v5175
    %v5523 = vunpack.c.h.b16 %v5175
    %v5524 = vunpack.c.l.b16 %v5176
    %v5525 = vunpack.c.h.b16 %v5176
    %v5526 = vunpack.c.l.b16 %v5177
    %v5527 = vunpack.c.h.b16 %v5177
    %v5528 = vunpack.c.l.b16 %v5178
    %v5529 = vunpack.c.h.b16 %v5178
    %v5530 = vunpack.c.l.b16 %v5179
    %v5531 = vunpack.c.h.b16 %v5179
    %v5532 = vunpack.c.l.b16 %v5180
    %v5533 = vunpack.c.h.b16 %v5180
    %v5534 = vunpack.c.l.b16 %v5181
    %v5535 = vunpack.c.h.b16 %v5181
    %v5536 = vunpack.c.l.b16 %v5182
    %v5537 = vunpack.c.h.b16 %v5182
    %v5538 = vunpack.c.l.b16 %v5183
    %v5539 = vunpack.c.h.b16 %v5183
    %v5540 = vunpack.c.l.b16 %v5184
    %v5541 = vunpack.c.h.b16 %v5184
    %v5542 = vunpack.c.l.b16 %v5185
    %v5543 = vunpack.c.h.b16 %v5185
    %v5544 = vunpack.c.l.b16 %v5186
    %v5545 = vunpack.c.h.b16 %v5186
    %v5546 = vunpack.c.l.b16 %v5187
    %v5547 = vunpack.c.h.b16 %v5187
    %v5548 = vunpack.c.l.b16 %v5188
    %v5549 = vunpack.c.h.b16 %v5188
    %v5550 = vunpack.c.l.b16 %v5189
    %v5551 = vunpack.c.h.b16 %v5189
    %v5552 = vunpack.c.l.b16 %v5190
    %v5553 = vunpack.c.h.b16 %v5190
    %v5554 = vunpack.c.l.b16 %v5191
    %v5555 = vunpack.c.h.b16 %v5191
    %v5556 = vunpack.c.l.b16 %v5192
    %v5557 = vunpack.c.h.b16 %v5192
    %v5558 = vunpack.c.l.b16 %v5193
    %v5559 = vunpack.c.h.b16 %v5193
    %v5560 = vunpack.c.l.b16 %v5194
    %v5561 = vunpack.c.h.b16 %v5194
    %v5562 = vunpack.c.l.b16 %v5195
    %v5563 = vunpack.c.h.b16 %v5195
    %v5564 = vunpack.c.l.b16 %v5196
    %v5565 = vunpack.c.h.b16 %v5196
    %v5566 = vunpack.c.l.b16 %v5197
    %v5567 = vunpack.c.h.b16 %v5197
    %v5568 = vunpack.c.l.b16 %v5198
    %v5569 = vunpack.c.h.b16 %v5198
    %v5570 = vunpack.c.l.b16 %v5199
    %v5571 = vunpack.c.h.b16 %v5199
    %v5572 = vunpack.c.l.b16 %v5200
    %v5573 = vunpack.c.h.b16 %v5200
    %v5574 = vunpack.c.l.b16 %v5201
    %v5575 = vunpack.c.h.b16 %v5201
    %v5576 = vunpack.c.l.b16 %v5202
    %v5577 = vunpack.c.h.b16 %v5202
    %v5578 = vunpack.c.l.b16 %v5203
    %v5579 = vunpack.c.h.b16 %v5203
    %v5580 = vunpack.c.l.b16 %v5204
    %v5581 = vunpack.c.h.b16 %v5204
    %v5582 = vunpack.c.l.b16 %v5205
    %v5583 = vunpack.c.h.b16 %v5205
    %v5584 = vunpack.c.l.b16 %v5206
    %v5585 = vunpack.c.h.b16 %v5206
    %v5586 = vunpack.c.l.b16 %v5207
    %v5587 = vunpack.c.h.b16 %v5207
    %v5588 = vunpack.c.l.b16 %v5208
    %v5589 = vunpack.c.h.b16 %v5208
    %v5590 = vunpack.c.l.b16 %v5209
    %v5591 = vunpack.c.h.b16 %v5209
    %v5592 = vunpack.c.l.b16 %v5210
    %v5593 = vunpack.c.h.b16 %v5210
    %v5594 = vunpack.c.l.b16 %v5211
    %v5595 = vunpack.c.h.b16 %v5211
    %v5596 = vpack.c.b16 %v5344, %v5340
    %v5597 = vpack.c.b16 %v5345, %v5341
    %v5598 = vpack.c.b16 %v5346, %v5342
    %v5599 = vpack.c.b16 %v5347, %v5343
    %v5600 = vpack.c.b16 %v5352, %v5348
    %v5601 = vpack.c.b16 %v5353, %v5349
    %v5602 = vpack.c.b16 %v5354, %v5350
    %v5603 = vpack.c.b16 %v5355, %v5351
    %v5604 = vpack.c.b16 %v5360, %v5356
    %v5605 = vpack.c.b16 %v5361, %v5357
    %v5606 = vpack.c.b16 %v5362, %v5358
    %v5607 = vpack.c.b16 %v5363, %v5359
    %v5608 = vpack.c.b16 %v5368, %v5364
    %v5609 = vpack.c.b16 %v5369, %v5365
    %v5610 = vpack.c.b16 %v5370, %v5366
    %v5611 = vpack.c.b16 %v5371, %v5367
    %v5612 = vpack.c.b16 %v5376, %v5372
    %v5613 = vpack.c.b16 %v5377, %v5373
    %v5614 = vpack.c.b16 %v5378, %v5374
    %v5615 = vpack.c.b16 %v5379, %v5375
    %v5616 = vpack.c.b16 %v5384, %v5380
    %v5617 = vpack.c.b16 %v5385, %v5381
    %v5618 = vpack.c.b16 %v5386, %v5382
    %v5619 = vpack.c.b16 %v5387, %v5383
    %v5620 = vpack.c.b16 %v5392, %v5388
    %v5621 = vpack.c.b16 %v5393, %v5389
    %v5622 = vpack.c.b16 %v5394, %v5390
    %v5623 = vpack.c.b16 %v5395, %v5391
    %v5624 = vpack.c.b16 %v5400, %v5396
    %v5625 = vpack.c.b16 %v5401, %v5397
    %v5626 = vpack.c.b16 %v5402, %v5398
    %v5627 = vpack.c.b16 %v5403, %v5399
    %v5628 = vpack.c.b16 %v5408, %v5404
    %v5629 = vpack.c.b16 %v5409, %v5405
    %v5630 = vpack.c.b16 %v5410, %v5406
    %v5631 = vpack.c.b16 %v5411, %v5407
    %v5632 = vpack.c.b16 %v5416, %v5412
    %v5633 = vpack.c.b16 %v5417, %v5413
    %v5634 = vpack.c.b16 %v5418, %v5414
    %v5635 = vpack.c.b16 %v5419, %v5415
    %v5636 = vpack.c.b16 %v5424, %v5420
    %v5637 = vpack.c.b16 %v5425, %v5421
    %v5638 = vpack.c.b16 %v5426, %v5422
    %v5639 = vpack.c.b16 %v5427, %v5423
    %v5640 = vpack.c.b16 %v5432, %v5428
    %v5641 = vpack.c.b16 %v5433, %v5429
    %v5642 = vpack.c.b16 %v5434, %v5430
    %v5643 = vpack.c.b16 %v5435, %v5431
    %v5644 = vpack.c.b16 %v5440, %v5436
    %v5645 = vpack.c.b16 %v5441, %v5437
    %v5646 = vpack.c.b16 %v5442, %v5438
    %v5647 = vpack.c.b16 %v5443, %v5439
    %v5648 = vpack.c.b16 %v5448, %v5444
    %v5649 = vpack.c.b16 %v5449, %v5445
    %v5650 = vpack.c.b16 %v5450, %v5446
    %v5651 = vpack.c.b16 %v5451, %v5447
    %v5652 = vpack.c.b16 %v5456, %v5452
    %v5653 = vpack.c.b16 %v5457, %v5453
    %v5654 = vpack.c.b16 %v5458, %v5454
    %v5655 = vpack.c.b16 %v5459, %v5455
    %v5656 = vpack.c.b16 %v5464, %v5460
    %v5657 = vpack.c.b16 %v5465, %v5461
    %v5658 = vpack.c.b16 %v5466, %v5462
    %v5659 = vpack.c.b16 %v5467, %v5463
    %v5660 = vpack.c.b16 %v5472, %v5468
    %v5661 = vpack.c.b16 %v5473, %v5469
    %v5662 = vpack.c.b16 %v5474, %v5470
    %v5663 = vpack.c.b16 %v5475, %v5471
    %v5664 = vpack.c.b16 %v5480, %v5476
    %v5665 = vpack.c.b16 %v5481, %v5477
    %v5666 = vpack.c.b16 %v5482, %v5478
    %v5667 = vpack.c.b16 %v5483, %v5479
    %v5668 = vpack.c.b16 %v5488, %v5484
    %v5669 = vpack.c.b16 %v5489, %v5485
    %v5670 = vpack.c.b16 %v5490, %v5486
    %v5671 = vpack.c.b16 %v5491, %v5487
    %v5672 = vpack.c.b16 %v5496, %v5492
    %v5673 = vpack.c.b16 %v5497, %v5493
    %v5674 = vpack.c.b16 %v5498, %v5494
    %v5675 = vpack.c.b16 %v5499, %v5495
    %v5676 = vpack.c.b16 %v5504, %v5500
    %v5677 = vpack.c.b16 %v5505, %v5501
    %v5678 = vpack.c.b16 %v5506, %v5502
    %v5679 = vpack.c.b16 %v5507, %v5503
    %v5680 = vpack.c.b16 %v5512, %v5508
    %v5681 = vpack.c.b16 %v5513, %v5509
    %v5682 = vpack.c.b16 %v5514, %v5510
    %v5683 = vpack.c.b16 %v5515, %v5511
    %v5684 = vpack.c.b16 %v5520, %v5516
    %v5685 = vpack.c.b16 %v5521, %v5517
    %v5686 = vpack.c.b16 %v5522, %v5518
    %v5687 = vpack.c.b16 %v5523, %v5519
    %v5688 = vpack.c.b16 %v5528, %v5524
    %v5689 = vpack.c.b16 %v5529, %v5525
    %v5690 = vpack.c.b16 %v5530, %v5526
    %v5691 = vpack.c.b16 %v5531, %v5527
    %v5692 = vpack.c.b16 %v5536, %v5532
    %v5693 = vpack.c.b16 %v5537, %v5533
    %v5694 = vpack.c.b16 %v5538, %v5534
    %v5695 = vpack.c.b16 %v5539, %v5535
    %v5696 = vpack.c.b16 %v5544, %v5540
    %v5697 = vpack.c.b16 %v5545, %v5541
    %v5698 = vpack.c.b16 %v5546, %v5542
    %v5699 = vpack.c.b16 %v5547, %v5543
    %v5700 = vpack.c.b16 %v5552, %v5548
    %v5701 = vpack.c.b16 %v5553, %v5549
    %v5702 = vpack.c.b16 %v5554, %v5550
    %v5703 = vpack.c.b16 %v5555, %v5551
    %v5704 = vpack.c.b16 %v5560, %v5556
    %v5705 = vpack.c.b16 %v5561, %v5557
    %v5706 = vpack.c.b16 %v5562, %v5558
    %v5707 = vpack.c.b16 %v5563, %v5559
    %v5708 = vpack.c.b16 %v5568, %v5564
    %v5709 = vpack.c.b16 %v5569, %v5565
    %v5710 = vpack.c.b16 %v5570, %v5566
    %v5711 = vpack.c.b16 %v5571, %v5567
    %v5712 = vpack.c.b16 %v5576, %v5572
    %v5713 = vpack.c.b16 %v5577, %v5573
    %v5714 = vpack.c.b16 %v5578, %v5574
    %v5715 = vpack.c.b16 %v5579, %v5575
    %v5716 = vpack.c.b16 %v5584, %v5580
    %v5717 = vpack.c.b16 %v5585, %v5581
    %v5718 = vpack.c.b16 %v5586, %v5582
    %v5719 = vpack.c.b16 %v5587, %v5583
    %v5720 = vpack.c.b16 %v5592, %v5588
    %v5721 = vpack.c.b16 %v5593, %v5589
    %v5722 = vpack.c.b16 %v5594, %v5590
    %v5723 = vpack.c.b16 %v5595, %v5591
    %5852 = vmatprep.subr.bf16.mxu0 %v5625
    %5853 = vmatpush1.bf16.msra.mxu0 %v5624
    %5854 = vmatprep.subr.bf16.mxu0 %v5621
    %5855 = vmatpush1.bf16.msra.mxu0 %v5620
    %5856 = vmatprep.subr.bf16.mxu0 %v5617
    %5857 = vmatpush1.bf16.msra.mxu0 %v5616
    %5858 = vmatprep.subr.bf16.mxu0 %v5613
    %5859 = vmatpush1.bf16.msra.mxu0 %v5612
    %5860 = vmatprep.subr.bf16.mxu0 %v5609
    %5861 = vmatpush1.bf16.msra.mxu0 %v5608
    %5862 = vmatprep.subr.bf16.mxu0 %v5605
    %5863 = vmatpush1.bf16.msra.mxu0 %v5604
    %5864 = vmatprep.subr.bf16.mxu0 %v5601
    %5865 = vmatpush1.bf16.msra.mxu0 %v5600
    %5866 = vmatprep.subr.bf16.mxu0 %v5597
    %5867 = vmatpush1.bf16.msra.mxu0 %v5596
    %5868 = vmatprep.subr.bf16.mxu0 %v5657
    %5869 = vmatpush2.bf16.msra.mxu0 %v5656
    %5870 = vmatprep.subr.bf16.mxu0 %v5653
    %5871 = vmatpush2.bf16.msra.mxu0 %v5652
    %5872 = vmatprep.subr.bf16.mxu0 %v5649
    %5873 = vmatpush2.bf16.msra.mxu0 %v5648
    %5874 = vmatprep.subr.bf16.mxu0 %v5645
    %5875 = vmatpush2.bf16.msra.mxu0 %v5644
    %5876 = vmatprep.subr.bf16.mxu0 %v5641
    %5877 = vmatpush2.bf16.msra.mxu0 %v5640
    %5878 = vmatprep.subr.bf16.mxu0 %v5637
    %5879 = vmatpush2.bf16.msra.mxu0 %v5636
    %5880 = vmatprep.subr.bf16.mxu0 %v5633
    %5881 = vmatpush2.bf16.msra.mxu0 %v5632
    %5882 = vmatprep.subr.bf16.mxu0 %v5629
    %5883 = vmatpush2.bf16.msra.mxu0 %v5628
    %5884 = vmatprep.mubr.bf16.mxu0 %v5081
    %5885 = vmatmul.mubr.bf16.gmra.mxu0 %v5080
    %v5886 = vpop.f32.mrf.mxu0
    %v5887 = vadd.f32 0.0, %v5886
    %v5888 = vpop.f32.mrf.mxu0
    %v5889 = vadd.f32 0.0, %v5888
    %v5890 = vpop.f32.mrf.mxu0
    %v5891 = vadd.f32 0.0, %v5890
    %v5892 = vpop.f32.mrf.mxu0
    %v5893 = vadd.f32 0.0, %v5892
    %5894 = vdwg.mxu0
    %5895 = vmatprep.subr.bf16.mxu0 %v5689
    %5896 = vmatpush1.bf16.msra.mxu0 %v5688
    %5897 = vmatprep.subr.bf16.mxu0 %v5685
    %5898 = vmatpush1.bf16.msra.mxu0 %v5684
    %5899 = vmatprep.subr.bf16.mxu0 %v5681
    %5900 = vmatpush1.bf16.msra.mxu0 %v5680
    %5901 = vmatprep.subr.bf16.mxu0 %v5677
    %5902 = vmatpush1.bf16.msra.mxu0 %v5676
    %5903 = vmatprep.subr.bf16.mxu0 %v5673
    %5904 = vmatpush1.bf16.msra.mxu0 %v5672
    %5905 = vmatprep.subr.bf16.mxu0 %v5669
    %5906 = vmatpush1.bf16.msra.mxu0 %v5668
    %5907 = vmatprep.subr.bf16.mxu0 %v5665
    %5908 = vmatpush1.bf16.msra.mxu0 %v5664
    %5909 = vmatprep.subr.bf16.mxu0 %v5661
    %5910 = vmatpush1.bf16.msra.mxu0 %v5660
    %5911 = vmatprep.subr.bf16.mxu0 %v5721
    %5912 = vmatpush2.bf16.msra.mxu0 %v5720
    %5913 = vmatprep.subr.bf16.mxu0 %v5717
    %5914 = vmatpush2.bf16.msra.mxu0 %v5716
    %5915 = vmatprep.subr.bf16.mxu0 %v5713
    %5916 = vmatpush2.bf16.msra.mxu0 %v5712
    %5917 = vmatprep.subr.bf16.mxu0 %v5709
    %5918 = vmatpush2.bf16.msra.mxu0 %v5708
    %5919 = vmatprep.subr.bf16.mxu0 %v5705
    %5920 = vmatpush2.bf16.msra.mxu0 %v5704
    %5921 = vmatprep.subr.bf16.mxu0 %v5701
    %5922 = vmatpush2.bf16.msra.mxu0 %v5700
    %5923 = vmatprep.subr.bf16.mxu0 %v5697
    %5924 = vmatpush2.bf16.msra.mxu0 %v5696
    %5925 = vmatprep.subr.bf16.mxu0 %v5693
    %5926 = vmatpush2.bf16.msra.mxu0 %v5692
    %5927 = vmatprep.mubr.bf16.mxu0 %v5083
    %5928 = vmatmul.mubr.bf16.gmra.mxu0 %v5082
    %v5929 = vpop.f32.mrf.mxu0
    %v5930 = vadd.f32 %v5887, %v5929
    %v5931 = vpop.f32.mrf.mxu0
    %v5932 = vadd.f32 %v5889, %v5931
    %v5933 = vpop.f32.mrf.mxu0
    %v5934 = vadd.f32 %v5891, %v5933
    %v5935 = vpop.f32.mrf.mxu0
    %v5936 = vadd.f32 %v5893, %v5935
    %5937 = vdwg.mxu0
    %5938 = vmatprep.subr.bf16.mxu0 %v5627
    %5939 = vmatpush1.bf16.msra.mxu0 %v5626
    %5940 = vmatprep.subr.bf16.mxu0 %v5623
    %5941 = vmatpush1.bf16.msra.mxu0 %v5622
    %5942 = vmatprep.subr.bf16.mxu0 %v5619
    %5943 = vmatpush1.bf16.msra.mxu0 %v5618
    %5944 = vmatprep.subr.bf16.mxu0 %v5615
    %5945 = vmatpush1.bf16.msra.mxu0 %v5614
    %5946 = vmatprep.subr.bf16.mxu0 %v5611
    %5947 = vmatpush1.bf16.msra.mxu0 %v5610
    %5948 = vmatprep.subr.bf16.mxu0 %v5607
    %5949 = vmatpush1.bf16.msra.mxu0 %v5606
    %5950 = vmatprep.subr.bf16.mxu0 %v5603
    %5951 = vmatpush1.bf16.msra.mxu0 %v5602
    %5952 = vmatprep.subr.bf16.mxu0 %v5599
    %5953 = vmatpush1.bf16.msra.mxu0 %v5598
    %5954 = vmatprep.subr.bf16.mxu0 %v5659
    %5955 = vmatpush2.bf16.msra.mxu0 %v5658
    %5956 = vmatprep.subr.bf16.mxu0 %v5655
    %5957 = vmatpush2.bf16.msra.mxu0 %v5654
    %5958 = vmatprep.subr.bf16.mxu0 %v5651
    %5959 = vmatpush2.bf16.msra.mxu0 %v5650
    %5960 = vmatprep.subr.bf16.mxu0 %v5647
    %5961 = vmatpush2.bf16.msra.mxu0 %v5646
    %5962 = vmatprep.subr.bf16.mxu0 %v5643
    %5963 = vmatpush2.bf16.msra.mxu0 %v5642
    %5964 = vmatprep.subr.bf16.mxu0 %v5639
    %5965 = vmatpush2.bf16.msra.mxu0 %v5638
    %5966 = vmatprep.subr.bf16.mxu0 %v5635
    %5967 = vmatpush2.bf16.msra.mxu0 %v5634
    %5968 = vmatprep.subr.bf16.mxu0 %v5631
    %5969 = vmatpush2.bf16.msra.mxu0 %v5630
    %5970 = vmatprep.mubr.bf16.mxu0 %v5081
    %5971 = vmatmul.mubr.bf16.gmra.mxu0 %v5080
    %v5972 = vpop.f32.mrf.mxu0
    %v5973 = vadd.f32 0.0, %v5972
    %v5974 = vpop.f32.mrf.mxu0
    %v5975 = vadd.f32 0.0, %v5974
    %v5976 = vpop.f32.mrf.mxu0
    %v5977 = vadd.f32 0.0, %v5976
    %v5978 = vpop.f32.mrf.mxu0
    %v5979 = vadd.f32 0.0, %v5978
    %5980 = vdwg.mxu0
    %5981 = vmatprep.subr.bf16.mxu0 %v5691
    %5982 = vmatpush1.bf16.msra.mxu0 %v5690
    %5983 = vmatprep.subr.bf16.mxu0 %v5687
    %5984 = vmatpush1.bf16.msra.mxu0 %v5686
    %5985 = vmatprep.subr.bf16.mxu0 %v5683
    %5986 = vmatpush1.bf16.msra.mxu0 %v5682
    %5987 = vmatprep.subr.bf16.mxu0 %v5679
    %5988 = vmatpush1.bf16.msra.mxu0 %v5678
    %5989 = vmatprep.subr.bf16.mxu0 %v5675
    %5990 = vmatpush1.bf16.msra.mxu0 %v5674
    %5991 = vmatprep.subr.bf16.mxu0 %v5671
    %5992 = vmatpush1.bf16.msra.mxu0 %v5670
    %5993 = vmatprep.subr.bf16.mxu0 %v5667
    %5994 = vmatpush1.bf16.msra.mxu0 %v5666
    %5995 = vmatprep.subr.bf16.mxu0 %v5663
    %5996 = vmatpush1.bf16.msra.mxu0 %v5662
    %5997 = vmatprep.subr.bf16.mxu0 %v5723
    %5998 = vmatpush2.bf16.msra.mxu0 %v5722
    %5999 = vmatprep.subr.bf16.mxu0 %v5719
    %6000 = vmatpush2.bf16.msra.mxu0 %v5718
    %6001 = vmatprep.subr.bf16.mxu0 %v5715
    %6002 = vmatpush2.bf16.msra.mxu0 %v5714
    %6003 = vmatprep.subr.bf16.mxu0 %v5711
    %6004 = vmatpush2.bf16.msra.mxu0 %v5710
    %6005 = vmatprep.subr.bf16.mxu0 %v5707
    %6006 = vmatpush2.bf16.msra.mxu0 %v5706
    %6007 = vmatprep.subr.bf16.mxu0 %v5703
    %6008 = vmatpush2.bf16.msra.mxu0 %v5702
    %6009 = vmatprep.subr.bf16.mxu0 %v5699
    %6010 = vmatpush2.bf16.msra.mxu0 %v5698
    %6011 = vmatprep.subr.bf16.mxu0 %v5695
    %6012 = vmatpush2.bf16.msra.mxu0 %v5694
    %6013 = vmatprep.mubr.bf16.mxu0 %v5083
    %6014 = vmatmul.mubr.bf16.gmra.mxu0 %v5082
    %v6015 = vpop.f32.mrf.mxu0
    %v6016 = vadd.f32 %v5973, %v6015
    %v6017 = vpop.f32.mrf.mxu0
    %v6018 = vadd.f32 %v5975, %v6017
    %v6019 = vpop.f32.mrf.mxu0
    %v6020 = vadd.f32 %v5977, %v6019
    %v6021 = vpop.f32.mrf.mxu0
    %v6022 = vadd.f32 %v5979, %v6021
    %6023 = vdwg.mxu0
    %v6024 = vadd.f32 %v3947, %v5930
    %v6025 = vadd.f32 %v3948, %v5932
    %v6026 = vadd.f32 %v3949, %v6016
    %v6027 = vadd.f32 %v3950, %v6018
    %v6028 = vadd.f32 %v3951, %v5934
    %v6029 = vadd.f32 %v3952, %v5936
    %v6030 = vadd.f32 %v3953, %v6020
    %v6031 = vadd.f32 %v3954, %v6022
    %s6032 = scalar_lea.vmem %s2, 36
    %v6033 = vld [vmem:[%s6032] ss:$8 sm:$0xf]
    %v6035 = vlaneseq
    %v6036 = vshrl.u32 %v6035, 7
    %v6037 = vsub.s32 0, %v6036
    %v6038 = vrot.slane %v6033, %v6037
    %v6039 = vlaneseq
    %v6040 = vshrl.u32 %v6039, 7
    %v6041 = vsub.s32 1, %v6040
    %v6042 = vrot.slane %v6033, %v6041
    %v6043 = vlaneseq
    %v6044 = vshrl.u32 %v6043, 7
    %v6045 = vsub.s32 2, %v6044
    %v6046 = vrot.slane %v6033, %v6045
    %v6047 = vlaneseq
    %v6048 = vshrl.u32 %v6047, 7
    %v6049 = vsub.s32 3, %v6048
    %v6050 = vrot.slane %v6033, %v6049
    %v6055 = vadd.f32 %v6024, %v6038
    %v6056 = vadd.f32 %v6025, %v6042
    %v6057 = vadd.f32 %v6026, %v6046
    %v6058 = vadd.f32 %v6027, %v6050
    %v6059 = vadd.f32 %v6028, %v6038
    %v6060 = vadd.f32 %v6029, %v6042
    %v6061 = vadd.f32 %v6030, %v6046
    %v6062 = vadd.f32 %v6031, %v6050
    %v6063 = vpack.c.bf16 %v6059, %v6055
    %v6064 = vpack.c.bf16 %v6060, %v6056
    %v6065 = vpack.c.bf16 %v6061, %v6057
    %v6066 = vpack.c.bf16 %v6062, %v6058
    %v6067 = vld [vmem:[#allocation16] sm:$0xf]
    %v6068 = vld [vmem:[#allocation16 + $0x4] sm:$0xf]
    %v6069 = vld [vmem:[#allocation16 + $0x8] sm:$0xf]
    %v6070 = vld [vmem:[#allocation16 + $0xc] sm:$0xf]
    %v6071 = vld [vmem:[#allocation16 + $0x10] sm:$0xf]
    %v6072 = vld [vmem:[#allocation16 + $0x14] sm:$0xf]
    %v6073 = vld [vmem:[#allocation16 + $0x18] sm:$0xf]
    %v6074 = vld [vmem:[#allocation16 + $0x1c] sm:$0xf]
    %v6075 = vld [vmem:[#allocation16 + $0x20] sm:$0xf]
    %v6076 = vld [vmem:[#allocation16 + $0x24] sm:$0xf]
    %v6077 = vld [vmem:[#allocation16 + $0x28] sm:$0xf]
    %v6078 = vld [vmem:[#allocation16 + $0x2c] sm:$0xf]
    %v6079 = vld [vmem:[#allocation16 + $0x30] sm:$0xf]
    %v6080 = vld [vmem:[#allocation16 + $0x34] sm:$0xf]
    %v6081 = vld [vmem:[#allocation16 + $0x38] sm:$0xf]
    %v6082 = vld [vmem:[#allocation16 + $0x3c] sm:$0xf]
    %v6083 = vld [vmem:[#allocation16 + $0x40] sm:$0xf]
    %v6084 = vld [vmem:[#allocation16 + $0x44] sm:$0xf]
    %v6085 = vld [vmem:[#allocation16 + $0x48] sm:$0xf]
    %v6086 = vld [vmem:[#allocation16 + $0x4c] sm:$0xf]
    %v6087 = vld [vmem:[#allocation16 + $0x50] sm:$0xf]
    %v6088 = vld [vmem:[#allocation16 + $0x54] sm:$0xf]
    %v6089 = vld [vmem:[#allocation16 + $0x58] sm:$0xf]
    %v6090 = vld [vmem:[#allocation16 + $0x5c] sm:$0xf]
    %v6091 = vld [vmem:[#allocation16 + $0x60] sm:$0xf]
    %v6092 = vld [vmem:[#allocation16 + $0x64] sm:$0xf]
    %v6093 = vld [vmem:[#allocation16 + $0x68] sm:$0xf]
    %v6094 = vld [vmem:[#allocation16 + $0x6c] sm:$0xf]
    %v6095 = vld [vmem:[#allocation16 + $0x70] sm:$0xf]
    %v6096 = vld [vmem:[#allocation16 + $0x74] sm:$0xf]
    %v6097 = vld [vmem:[#allocation16 + $0x78] sm:$0xf]
    %v6098 = vld [vmem:[#allocation16 + $0x7c] sm:$0xf]
    %v6099 = vld [vmem:[#allocation16 + $0x80] sm:$0xf]
    %v6100 = vld [vmem:[#allocation16 + $0x84] sm:$0xf]
    %v6101 = vld [vmem:[#allocation16 + $0x88] sm:$0xf]
    %v6102 = vld [vmem:[#allocation16 + $0x8c] sm:$0xf]
    %v6103 = vld [vmem:[#allocation16 + $0x90] sm:$0xf]
    %v6104 = vld [vmem:[#allocation16 + $0x94] sm:$0xf]
    %v6105 = vld [vmem:[#allocation16 + $0x98] sm:$0xf]
    %v6106 = vld [vmem:[#allocation16 + $0x9c] sm:$0xf]
    %v6107 = vld [vmem:[#allocation16 + $0xa0] sm:$0xf]
    %v6108 = vld [vmem:[#allocation16 + $0xa4] sm:$0xf]
    %v6109 = vld [vmem:[#allocation16 + $0xa8] sm:$0xf]
    %v6110 = vld [vmem:[#allocation16 + $0xac] sm:$0xf]
    %v6111 = vld [vmem:[#allocation16 + $0xb0] sm:$0xf]
    %v6112 = vld [vmem:[#allocation16 + $0xb4] sm:$0xf]
    %v6113 = vld [vmem:[#allocation16 + $0xb8] sm:$0xf]
    %v6114 = vld [vmem:[#allocation16 + $0xbc] sm:$0xf]
    %v6115 = vld [vmem:[#allocation16 + $0xc0] sm:$0xf]
    %v6116 = vld [vmem:[#allocation16 + $0xc4] sm:$0xf]
    %v6117 = vld [vmem:[#allocation16 + $0xc8] sm:$0xf]
    %v6118 = vld [vmem:[#allocation16 + $0xcc] sm:$0xf]
    %v6119 = vld [vmem:[#allocation16 + $0xd0] sm:$0xf]
    %v6120 = vld [vmem:[#allocation16 + $0xd4] sm:$0xf]
    %v6121 = vld [vmem:[#allocation16 + $0xd8] sm:$0xf]
    %v6122 = vld [vmem:[#allocation16 + $0xdc] sm:$0xf]
    %v6123 = vld [vmem:[#allocation16 + $0xe0] sm:$0xf]
    %v6124 = vld [vmem:[#allocation16 + $0xe4] sm:$0xf]
    %v6125 = vld [vmem:[#allocation16 + $0xe8] sm:$0xf]
    %v6126 = vld [vmem:[#allocation16 + $0xec] sm:$0xf]
    %v6127 = vld [vmem:[#allocation16 + $0xf0] sm:$0xf]
    %v6128 = vld [vmem:[#allocation16 + $0xf4] sm:$0xf]
    %v6129 = vld [vmem:[#allocation16 + $0xf8] sm:$0xf]
    %v6130 = vld [vmem:[#allocation16 + $0xfc] sm:$0xf]
    %v6131 = vld [vmem:[%s2 + $0x25] ss:$0 sm:$0xff]
    %v6196 = vunpack.c.l.b16 %v6067
    %v6197 = vunpack.c.l.b16 %v6068
    %v6198 = vunpack.c.l.b16 %v6069
    %v6199 = vunpack.c.l.b16 %v6070
    %v6200 = vunpack.c.l.b16 %v6071
    %v6201 = vunpack.c.l.b16 %v6072
    %v6202 = vunpack.c.l.b16 %v6073
    %v6203 = vunpack.c.l.b16 %v6074
    %v6204 = vunpack.c.l.b16 %v6075
    %v6205 = vunpack.c.l.b16 %v6076
    %v6206 = vunpack.c.l.b16 %v6077
    %v6207 = vunpack.c.l.b16 %v6078
    %v6208 = vunpack.c.l.b16 %v6079
    %v6209 = vunpack.c.l.b16 %v6080
    %v6210 = vunpack.c.l.b16 %v6081
    %v6211 = vunpack.c.l.b16 %v6082
    %v6212 = vunpack.c.l.b16 %v6083
    %v6213 = vunpack.c.l.b16 %v6084
    %v6214 = vunpack.c.l.b16 %v6085
    %v6215 = vunpack.c.l.b16 %v6086
    %v6216 = vunpack.c.l.b16 %v6087
    %v6217 = vunpack.c.l.b16 %v6088
    %v6218 = vunpack.c.l.b16 %v6089
    %v6219 = vunpack.c.l.b16 %v6090
    %v6220 = vunpack.c.l.b16 %v6091
    %v6221 = vunpack.c.l.b16 %v6092
    %v6222 = vunpack.c.l.b16 %v6093
    %v6223 = vunpack.c.l.b16 %v6094
    %v6224 = vunpack.c.l.b16 %v6095
    %v6225 = vunpack.c.l.b16 %v6096
    %v6226 = vunpack.c.l.b16 %v6097
    %v6227 = vunpack.c.l.b16 %v6098
    %v6228 = vunpack.c.l.b16 %v6099
    %v6229 = vunpack.c.l.b16 %v6100
    %v6230 = vunpack.c.l.b16 %v6101
    %v6231 = vunpack.c.l.b16 %v6102
    %v6232 = vunpack.c.l.b16 %v6103
    %v6233 = vunpack.c.l.b16 %v6104
    %v6234 = vunpack.c.l.b16 %v6105
    %v6235 = vunpack.c.l.b16 %v6106
    %v6236 = vunpack.c.l.b16 %v6107
    %v6237 = vunpack.c.l.b16 %v6108
    %v6238 = vunpack.c.l.b16 %v6109
    %v6239 = vunpack.c.l.b16 %v6110
    %v6240 = vunpack.c.l.b16 %v6111
    %v6241 = vunpack.c.l.b16 %v6112
    %v6242 = vunpack.c.l.b16 %v6113
    %v6243 = vunpack.c.l.b16 %v6114
    %v6244 = vunpack.c.l.b16 %v6115
    %v6245 = vunpack.c.l.b16 %v6116
    %v6246 = vunpack.c.l.b16 %v6117
    %v6247 = vunpack.c.l.b16 %v6118
    %v6248 = vunpack.c.l.b16 %v6119
    %v6249 = vunpack.c.l.b16 %v6120
    %v6250 = vunpack.c.l.b16 %v6121
    %v6251 = vunpack.c.l.b16 %v6122
    %v6252 = vunpack.c.l.b16 %v6123
    %v6253 = vunpack.c.l.b16 %v6124
    %v6254 = vunpack.c.l.b16 %v6125
    %v6255 = vunpack.c.l.b16 %v6126
    %v6256 = vunpack.c.l.b16 %v6127
    %v6257 = vunpack.c.l.b16 %v6128
    %v6258 = vunpack.c.l.b16 %v6129
    %v6259 = vunpack.c.l.b16 %v6130
    %v6260 = vpack.c.b16 %v6197, %v6196
    %v6261 = vpack.c.b16 %v6199, %v6198
    %v6262 = vpack.c.b16 %v6201, %v6200
    %v6263 = vpack.c.b16 %v6203, %v6202
    %v6264 = vpack.c.b16 %v6205, %v6204
    %v6265 = vpack.c.b16 %v6207, %v6206
    %v6266 = vpack.c.b16 %v6209, %v6208
    %v6267 = vpack.c.b16 %v6211, %v6210
    %v6268 = vpack.c.b16 %v6213, %v6212
    %v6269 = vpack.c.b16 %v6215, %v6214
    %v6270 = vpack.c.b16 %v6217, %v6216
    %v6271 = vpack.c.b16 %v6219, %v6218
    %v6272 = vpack.c.b16 %v6221, %v6220
    %v6273 = vpack.c.b16 %v6223, %v6222
    %v6274 = vpack.c.b16 %v6225, %v6224
    %v6275 = vpack.c.b16 %v6227, %v6226
    %v6276 = vpack.c.b16 %v6229, %v6228
    %v6277 = vpack.c.b16 %v6231, %v6230
    %v6278 = vpack.c.b16 %v6233, %v6232
    %v6279 = vpack.c.b16 %v6235, %v6234
    %v6280 = vpack.c.b16 %v6237, %v6236
    %v6281 = vpack.c.b16 %v6239, %v6238
    %v6282 = vpack.c.b16 %v6241, %v6240
    %v6283 = vpack.c.b16 %v6243, %v6242
    %v6284 = vpack.c.b16 %v6245, %v6244
    %v6285 = vpack.c.b16 %v6247, %v6246
    %v6286 = vpack.c.b16 %v6249, %v6248
    %v6287 = vpack.c.b16 %v6251, %v6250
    %v6288 = vpack.c.b16 %v6253, %v6252
    %v6289 = vpack.c.b16 %v6255, %v6254
    %v6290 = vpack.c.b16 %v6257, %v6256
    %v6291 = vpack.c.b16 %v6259, %v6258
    %6324 = vmatprep.subr.bf16.mxu0 0
    %6325 = vmatpush1.bf16.msra.mxu0 %v6267
    %6326 = vmatprep.subr.bf16.mxu0 0
    %6327 = vmatpush1.bf16.msra.mxu0 %v6266
    %6328 = vmatprep.subr.bf16.mxu0 0
    %6329 = vmatpush1.bf16.msra.mxu0 %v6265
    %6330 = vmatprep.subr.bf16.mxu0 0
    %6331 = vmatpush1.bf16.msra.mxu0 %v6264
    %6332 = vmatprep.subr.bf16.mxu0 0
    %6333 = vmatpush1.bf16.msra.mxu0 %v6263
    %6334 = vmatprep.subr.bf16.mxu0 0
    %6335 = vmatpush1.bf16.msra.mxu0 %v6262
    %6336 = vmatprep.subr.bf16.mxu0 0
    %6337 = vmatpush1.bf16.msra.mxu0 %v6261
    %6338 = vmatprep.subr.bf16.mxu0 0
    %6339 = vmatpush1.bf16.msra.mxu0 %v6260
    %6340 = vmatprep.subr.bf16.mxu0 0
    %6341 = vmatpush2.bf16.msra.mxu0 %v6275
    %6342 = vmatprep.subr.bf16.mxu0 0
    %6343 = vmatpush2.bf16.msra.mxu0 %v6274
    %6344 = vmatprep.subr.bf16.mxu0 0
    %6345 = vmatpush2.bf16.msra.mxu0 %v6273
    %6346 = vmatprep.subr.bf16.mxu0 0
    %6347 = vmatpush2.bf16.msra.mxu0 %v6272
    %6348 = vmatprep.subr.bf16.mxu0 0
    %6349 = vmatpush2.bf16.msra.mxu0 %v6271
    %6350 = vmatprep.subr.bf16.mxu0 0
    %6351 = vmatpush2.bf16.msra.mxu0 %v6270
    %6352 = vmatprep.subr.bf16.mxu0 0
    %6353 = vmatpush2.bf16.msra.mxu0 %v6269
    %6354 = vmatprep.subr.bf16.mxu0 0
    %6355 = vmatpush2.bf16.msra.mxu0 %v6268
    %6356 = vmatprep.mubr.bf16.mxu0 %v6064
    %6357 = vmatmul.mubr.bf16.gmra.mxu0 %v6063
    %v6358 = vpop.f32.mrf.mxu0
    %v6359 = vadd.f32 %v6131, %v6358
    %v6360 = vpop.f32.mrf.mxu0
    %v6361 = vpop.f32.mrf.mxu0
    %v6362 = vadd.f32 %v6131, %v6361
    %v6363 = vpop.f32.mrf.mxu0
    %6364 = vdwg.mxu0
    %6365 = vmatprep.subr.bf16.mxu0 0
    %6366 = vmatpush1.bf16.msra.mxu0 %v6283
    %6367 = vmatprep.subr.bf16.mxu0 0
    %6368 = vmatpush1.bf16.msra.mxu0 %v6282
    %6369 = vmatprep.subr.bf16.mxu0 0
    %6370 = vmatpush1.bf16.msra.mxu0 %v6281
    %6371 = vmatprep.subr.bf16.mxu0 0
    %6372 = vmatpush1.bf16.msra.mxu0 %v6280
    %6373 = vmatprep.subr.bf16.mxu0 0
    %6374 = vmatpush1.bf16.msra.mxu0 %v6279
    %6375 = vmatprep.subr.bf16.mxu0 0
    %6376 = vmatpush1.bf16.msra.mxu0 %v6278
    %6377 = vmatprep.subr.bf16.mxu0 0
    %6378 = vmatpush1.bf16.msra.mxu0 %v6277
    %6379 = vmatprep.subr.bf16.mxu0 0
    %6380 = vmatpush1.bf16.msra.mxu0 %v6276
    %6381 = vmatprep.subr.bf16.mxu0 0
    %6382 = vmatpush2.bf16.msra.mxu0 %v6291
    %6383 = vmatprep.subr.bf16.mxu0 0
    %6384 = vmatpush2.bf16.msra.mxu0 %v6290
    %6385 = vmatprep.subr.bf16.mxu0 0
    %6386 = vmatpush2.bf16.msra.mxu0 %v6289
    %6387 = vmatprep.subr.bf16.mxu0 0
    %6388 = vmatpush2.bf16.msra.mxu0 %v6288
    %6389 = vmatprep.subr.bf16.mxu0 0
    %6390 = vmatpush2.bf16.msra.mxu0 %v6287
    %6391 = vmatprep.subr.bf16.mxu0 0
    %6392 = vmatpush2.bf16.msra.mxu0 %v6286
    %6393 = vmatprep.subr.bf16.mxu0 0
    %6394 = vmatpush2.bf16.msra.mxu0 %v6285
    %6395 = vmatprep.subr.bf16.mxu0 0
    %6396 = vmatpush2.bf16.msra.mxu0 %v6284
    %6397 = vmatprep.mubr.bf16.mxu0 %v6066
    %6398 = vmatmul.mubr.bf16.gmra.mxu0 %v6065
    %v6399 = vpop.f32.mrf.mxu0
    %v6400 = vadd.f32 %v6359, %v6399
    %v6401 = vpop.f32.mrf.mxu0
    %v6402 = vpop.f32.mrf.mxu0
    %v6403 = vadd.f32 %v6362, %v6402
    %v6404 = vpop.f32.mrf.mxu0
    %6405 = vdwg.mxu0
    %6406 = vst [vmem:[%s13] sm:$0xff] %v6400
    %6407 = vst [vmem:[%s13 + $0x8] sm:$0xff] %v6403
    // Predicated region
    $region94: #{_ddpm_forward_impl.1} parent=1 // pred_check
      _
    $region95: #{_ddpm_forward_impl.1} parent=1 // pred_check_branch
      %6409 = sbr.rel (0) target = $region97
    $region96: #{_ddpm_forward_impl.1} parent=1 // pred_region
      _
    $region97: #{_ddpm_forward_impl.1} parent=1 // pred_fallthru
      _
    // Predicated region
    $region98: #{_ddpm_forward_impl.1} parent=1 // pred_check
      _
    $region99: #{_ddpm_forward_impl.1} parent=1 // pred_check_branch
      %6411 = sbr.rel (0) target = $region101
    $region100: #{_ddpm_forward_impl.1} parent=1 // pred_region
      _
    $region101: #{_ddpm_forward_impl.1} parent=1 // pred_fallthru
      _
    %6412 = vsyncpa [#allocation3], 1
    %6413 = vsyncpa [#allocation5], 1
    %6414 = vsyncpa [#allocation8], 1
    %6415 = vsyncpa [#allocation11], 1
    %6416 = vsyncpa [#allocation14], 1
    %6417 = vsyncpa [#allocation17], 1

// kernel: _ddpm_forward_impl.1
$region0: #{_ddpm_forward_impl.1}
  #allocation0 [shape = 'u32[]', space=smem, size = 0x4, offset = 0x4, fixed_abs, tag = 'smem constant byte address 0x4 - core index']
  #allocation1 [shape = 'u32[144,128]{1,0:T(1,128)}', space=vmem, size = 0x12000, scoped, tag = 'internal scratch']
  %s0 = inlined_call_operand.vmem [shape: f32[16,128], index: 0, kind: input, shape index: {}]
  %s1 = inlined_call_operand.vmem [shape: s32[16,1], index: 1, kind: input, shape index: {}]
  %s2 = inlined_call_operand.vmem [shape: f32[16,512], index: 2, kind: input, shape index: {}]
  %s3 = inlined_call_operand.hbm [shape: bf16[256,256], index: 3, kind: input, shape index: {}]
  %s4 = inlined_call_operand.hbm [shape: bf16[256,256], index: 4, kind: input, shape index: {}]
  %s5 = inlined_call_operand.hbm [shape: bf16[256,256], index: 5, kind: input, shape index: {}]
  %s6 = inlined_call_operand.hbm [shape: bf16[128,512], index: 6, kind: input, shape index: {}]
  %s7 = inlined_call_operand.hbm [shape: bf16[256,512], index: 7, kind: input, shape index: {}]
  %s8 = inlined_call_operand.hbm [shape: bf16[512,512], index: 8, kind: input, shape index: {}]
  %s9 = inlined_call_operand.hbm [shape: bf16[512,512], index: 9, kind: input, shape index: {}]
  %s10 = inlined_call_operand.hbm [shape: bf16[512,512], index: 10, kind: input, shape index: {}]
  %s11 = inlined_call_operand.hbm [shape: bf16[512,512], index: 11, kind: input, shape index: {}]
  %s12 = inlined_call_operand.hbm [shape: bf16[512,128], index: 12, kind: input, shape index: {}]
  %s13 = inlined_call_operand.vmem [shape: f32[16,128], index: 13, kind: output, shape index: {}]
  %s14 = sld [smem:[#allocation0]]
  $region102: #{_ddpm_forward_impl.1} parent=0
    _
  %s16 = ssub.s32 1, %s14
  %s17 = scalar_select 0, %s16, %s14
  $region1: #{_ddpm_forward_impl.1} parent=0
    #allocation2 [shape = 'u8[131072]{0}', space=vmem, size = 0x20000, scoped, tag = 'input window, operand 3, single buffered']
    #allocation3 [shape = 's32[1]{0}', space=sflag, size = 0x4, scoped, tag = 'scoped memory for _ddpm_forward_impl.1']
    #allocation4 [shape = 'u8[131072]{0}', space=vmem, size = 0x20000, scoped, tag = 'input window, operand 4, single buffered']
    #allocation5 [shape = 's32[1]{0}', space=sflag, size = 0x4, scoped, tag = 'scoped memory for _ddpm_forward_impl.1']
    #allocation6 [shape = 'u8[131072]{0}', space=vmem, size = 0x20000, scoped, tag = 'input window, operand 5, single buffered']
    #allocation7 [shape = 'u8[131072]{0}', space=vmem, size = 0x20000, scoped, tag = 'input window, operand 6, single buffered']
    #allocation8 [shape = 's32[1]{0}', space=sflag, size = 0x4, scoped, tag = 'scoped memory for _ddpm_forward_impl.1']
    #allocation9 [shape = 'u8[262144]{0}', space=vmem, size = 0x40000, scoped, tag = 'input window, operand 7, single buffered']
    #allocation10 [shape = 'u8[524288]{0}', space=vmem, size = 0x80000, scoped, tag = 'input window, operand 8, single buffered']
    #allocation11 [shape = 's32[1]{0}', space=sflag, size = 0x4, scoped, tag = 'scoped memory for _ddpm_forward_impl.1']
    #allocation12 [shape = 'u8[524288]{0}', space=vmem, size = 0x80000, scoped, tag = 'input window, operand 9, single buffered']
    #allocation13 [shape = 'u8[524288]{0}', space=vmem, size = 0x80000, scoped, tag = 'input window, operand 10, single buffered']
    #allocation14 [shape = 's32[1]{0}', space=sflag, size = 0x4, scoped, tag = 'scoped memory for _ddpm_forward_impl.1']
    #allocation15 [shape = 'u8[524288]{0}', space=vmem, size = 0x80000, scoped, tag = 'input window, operand 11, single buffered']
    #allocation16 [shape = 'u8[131072]{0}', space=vmem, size = 0x20000, scoped, tag = 'input window, operand 12, single buffered']
    #allocation17 [shape = 's32[1]{0}', space=sflag, size = 0x4, scoped, tag = 'scoped memory for _ddpm_forward_impl.1']
    %18 = vsyncpa [#allocation3], 0
    %19 = vsyncpa [#allocation5], 0
    %20 = vsyncpa [#allocation8], 0
    %21 = vsyncpa [#allocation11], 0
    %22 = vsyncpa [#allocation14], 0
    %23 = vsyncpa [#allocation17], 0
    // Predicated region
    $region2: #{_ddpm_forward_impl.1} parent=1 // pred_check
      _
    $region3: #{_ddpm_forward_impl.1} parent=1 // pred_check_branch
      %25 = sbr.rel (0) target = $region5
    $region4: #{_ddpm_forward_impl.1} parent=1 // pred_region
      _
    $region5: #{_ddpm_forward_impl.1} parent=1 // pred_fallthru
      _
    // Predicated region
    $region6: #{_ddpm_forward_impl.1} parent=1 // pred_check
      _
    $region7: #{_ddpm_forward_impl.1} parent=1 // pred_check_branch
      %27 = sbr.rel (0) target = $region9
    $region8: #{_ddpm_forward_impl.1} parent=1 // pred_region
      _
    $region9: #{_ddpm_forward_impl.1} parent=1 // pred_fallthru
      _
    // Predicated region
    $region10: #{_ddpm_forward_impl.1} parent=1 // pred_check
      _
    $region11: #{_ddpm_forward_impl.1} parent=1 // pred_check_branch
      %29 = sbr.rel (0) target = $region13
    $region12: #{_ddpm_forward_impl.1} parent=1 // pred_region
      _
    $region13: #{_ddpm_forward_impl.1} parent=1 // pred_fallthru
      _
    // Predicated region
    $region14: #{_ddpm_forward_impl.1} parent=1 // pred_check
      _
    $region15: #{_ddpm_forward_impl.1} parent=1 // pred_check_branch
      %31 = sbr.rel (0) target = $region17
    $region16: #{_ddpm_forward_impl.1} parent=1 // pred_region
      %s33 = ssub.s32 4096, 4096
      %34 = vsyncadd [#allocation3], %s33
      %s35 = sshll.u32 [#allocation2], 4
      %s36 = int_to_ptr.vmem [resolvable:$true] %s35
      %41 = dma.hbm_to_vmem [thread:$0]  %s3, 4096, %s36, [#allocation3], 128, 128, 8
    $region17: #{_ddpm_forward_impl.1} parent=1 // pred_fallthru
      _
    // Predicated region
    $region18: #{_ddpm_forward_impl.1} parent=1 // pred_check
      _
    $region19: #{_ddpm_forward_impl.1} parent=1 // pred_check_branch
      %43 = sbr.rel (0) target = $region21
    $region20: #{_ddpm_forward_impl.1} parent=1 // pred_region
      %s45 = ssub.s32 4096, 4096
      %46 = vsyncadd [#allocation5], %s45
      %s47 = sshll.u32 [#allocation4], 4
      %s48 = int_to_ptr.vmem [resolvable:$true] %s47
      %53 = dma.hbm_to_vmem [thread:$0]  %s4, 4096, %s48, [#allocation5], 128, 128, 8
    $region21: #{_ddpm_forward_impl.1} parent=1 // pred_fallthru
      _
    // Predicated region
    $region22: #{_ddpm_forward_impl.1} parent=1 // pred_check
      _
    $region23: #{_ddpm_forward_impl.1} parent=1 // pred_check_branch
      %55 = sbr.rel (0) target = $region25
    $region24: #{_ddpm_forward_impl.1} parent=1 // pred_region
      %s57 = ssub.s32 4096, 4096
      %58 = vsyncadd [#allocation5], %s57
      %s59 = sshll.u32 [#allocation6], 4
      %s60 = int_to_ptr.vmem [resolvable:$true] %s59
      %65 = dma.hbm_to_vmem [thread:$0]  %s5, 4096, %s60, [#allocation5], 128, 128, 8
    $region25: #{_ddpm_forward_impl.1} parent=1 // pred_fallthru
      _
    // Predicated region
    $region26: #{_ddpm_forward_impl.1} parent=1 // pred_check
      _
    $region27: #{_ddpm_forward_impl.1} parent=1 // pred_check_branch
      %67 = sbr.rel (0) target = $region29
    $region28: #{_ddpm_forward_impl.1} parent=1 // pred_region
      %s69 = ssub.s32 4096, 4096
      %70 = vsyncadd [#allocation8], %s69
      %s71 = sshll.u32 [#allocation7], 4
      %s72 = int_to_ptr.vmem [resolvable:$true] %s71
      %77 = dma.hbm_to_vmem [thread:$0]  %s6, 4096, %s72, [#allocation8], 256, 256, 16
    $region29: #{_ddpm_forward_impl.1} parent=1 // pred_fallthru
      _
    // Predicated region
    $region30: #{_ddpm_forward_impl.1} parent=1 // pred_check
      _
    $region31: #{_ddpm_forward_impl.1} parent=1 // pred_check_branch
      %79 = sbr.rel (0) target = $region33
    $region32: #{_ddpm_forward_impl.1} parent=1 // pred_region
      %s81 = ssub.s32 8192, 8192
      %82 = vsyncadd [#allocation8], %s81
      %s83 = sshll.u32 [#allocation9], 4
      %s84 = int_to_ptr.vmem [resolvable:$true] %s83
      %89 = dma.hbm_to_vmem [thread:$0]  %s7, 8192, %s84, [#allocation8], 256, 256, 16
    $region33: #{_ddpm_forward_impl.1} parent=1 // pred_fallthru
      _
    // Predicated region
    $region34: #{_ddpm_forward_impl.1} parent=1 // pred_check
      _
    $region35: #{_ddpm_forward_impl.1} parent=1 // pred_check_branch
      %91 = sbr.rel (0) target = $region37
    $region36: #{_ddpm_forward_impl.1} parent=1 // pred_region
      %s93 = ssub.s32 16384, 16384
      %94 = vsyncadd [#allocation11], %s93
      %s95 = sshll.u32 [#allocation10], 4
      %s96 = int_to_ptr.vmem [resolvable:$true] %s95
      %101 = dma.hbm_to_vmem [thread:$0]  %s8, 16384, %s96, [#allocation11], 256, 256, 16
    $region37: #{_ddpm_forward_impl.1} parent=1 // pred_fallthru
      _
    // Predicated region
    $region38: #{_ddpm_forward_impl.1} parent=1 // pred_check
      _
    $region39: #{_ddpm_forward_impl.1} parent=1 // pred_check_branch
      %103 = sbr.rel (0) target = $region41
    $region40: #{_ddpm_forward_impl.1} parent=1 // pred_region
      %s105 = ssub.s32 16384, 16384
      %106 = vsyncadd [#allocation11], %s105
      %s107 = sshll.u32 [#allocation12], 4
      %s108 = int_to_ptr.vmem [resolvable:$true] %s107
      %113 = dma.hbm_to_vmem [thread:$0]  %s9, 16384, %s108, [#allocation11], 256, 256, 16
    $region41: #{_ddpm_forward_impl.1} parent=1 // pred_fallthru
      _
    // Predicated region
    $region42: #{_ddpm_forward_impl.1} parent=1 // pred_check
      _
    $region43: #{_ddpm_forward_impl.1} parent=1 // pred_check_branch
      %115 = sbr.rel (0) target = $region45
    $region44: #{_ddpm_forward_impl.1} parent=1 // pred_region
      %s117 = ssub.s32 16384, 16384
      %118 = vsyncadd [#allocation14], %s117
      %s119 = sshll.u32 [#allocation13], 4
      %s120 = int_to_ptr.vmem [resolvable:$true] %s119
      %125 = dma.hbm_to_vmem [thread:$0]  %s10, 16384, %s120, [#allocation14], 256, 256, 16
    $region45: #{_ddpm_forward_impl.1} parent=1 // pred_fallthru
      _
    // Predicated region
    $region46: #{_ddpm_forward_impl.1} parent=1 // pred_check
      _
    $region47: #{_ddpm_forward_impl.1} parent=1 // pred_check_branch
      %127 = sbr.rel (0) target = $region49
    $region48: #{_ddpm_forward_impl.1} parent=1 // pred_region
      %s129 = ssub.s32 16384, 16384
      %130 = vsyncadd [#allocation14], %s129
      %s131 = sshll.u32 [#allocation15], 4
      %s132 = int_to_ptr.vmem [resolvable:$true] %s131
      %137 = dma.hbm_to_vmem [thread:$0]  %s11, 16384, %s132, [#allocation14], 256, 256, 16
    $region49: #{_ddpm_forward_impl.1} parent=1 // pred_fallthru
      _
    // Predicated region
    $region50: #{_ddpm_forward_impl.1} parent=1 // pred_check
      _
    $region51: #{_ddpm_forward_impl.1} parent=1 // pred_check_branch
      %139 = sbr.rel (0) target = $region53
    $region52: #{_ddpm_forward_impl.1} parent=1 // pred_region
      %s141 = ssub.s32 4096, 4096
      %142 = vsyncadd [#allocation17], %s141
      %s143 = sshll.u32 [#allocation16], 4
      %s144 = int_to_ptr.vmem [resolvable:$true] %s143
      %149 = dma.hbm_to_vmem [thread:$0]  %s12, 4096, %s144, [#allocation17], 64, 64, 4
    $region53: #{_ddpm_forward_impl.1} parent=1 // pred_fallthru
      _
    // Predicated region
    $region54: #{_ddpm_forward_impl.1} parent=1 // pred_check
      _
    $region55: #{_ddpm_forward_impl.1} parent=1 // pred_check_branch
      %151 = sbr.rel (0) target = $region57
    $region56: #{_ddpm_forward_impl.1} parent=1 // pred_region
      %152 = dma.done [#allocation3], 4096
    $region57: #{_ddpm_forward_impl.1} parent=1 // pred_fallthru
      _
    // Predicated region
    $region58: #{_ddpm_forward_impl.1} parent=1 // pred_check
      _
    $region59: #{_ddpm_forward_impl.1} parent=1 // pred_check_branch
      %154 = sbr.rel (0) target = $region61
    $region60: #{_ddpm_forward_impl.1} parent=1 // pred_region
      %155 = dma.done [#allocation5], 4096
    $region61: #{_ddpm_forward_impl.1} parent=1 // pred_fallthru
      _
    // Predicated region
    $region62: #{_ddpm_forward_impl.1} parent=1 // pred_check
      _
    $region63: #{_ddpm_forward_impl.1} parent=1 // pred_check_branch
      %157 = sbr.rel (0) target = $region65
    $region64: #{_ddpm_forward_impl.1} parent=1 // pred_region
      %158 = dma.done [#allocation5], 4096
    $region65: #{_ddpm_forward_impl.1} parent=1 // pred_fallthru
      _
    // Predicated region
    $region66: #{_ddpm_forward_impl.1} parent=1 // pred_check
      _
    $region67: #{_ddpm_forward_impl.1} parent=1 // pred_check_branch
      %160 = sbr.rel (0) target = $region69
    $region68: #{_ddpm_forward_impl.1} parent=1 // pred_region
      %161 = dma.done [#allocation8], 4096
    $region69: #{_ddpm_forward_impl.1} parent=1 // pred_fallthru
      _
    // Predicated region
    $region70: #{_ddpm_forward_impl.1} parent=1 // pred_check
      _
    $region71: #{_ddpm_forward_impl.1} parent=1 // pred_check_branch
      %163 = sbr.rel (0) target = $region73
    $region72: #{_ddpm_forward_impl.1} parent=1 // pred_region
      %164 = dma.done [#allocation8], 8192
    $region73: #{_ddpm_forward_impl.1} parent=1 // pred_fallthru
      _
    // Predicated region
    $region74: #{_ddpm_forward_impl.1} parent=1 // pred_check
      _
    $region75: #{_ddpm_forward_impl.1} parent=1 // pred_check_branch
      %166 = sbr.rel (0) target = $region77
    $region76: #{_ddpm_forward_impl.1} parent=1 // pred_region
      %167 = dma.done [#allocation11], 16384
    $region77: #{_ddpm_forward_impl.1} parent=1 // pred_fallthru
      _
    // Predicated region
    $region78: #{_ddpm_forward_impl.1} parent=1 // pred_check
      _
    $region79: #{_ddpm_forward_impl.1} parent=1 // pred_check_branch
      %169 = sbr.rel (0) target = $region81
    $region80: #{_ddpm_forward_impl.1} parent=1 // pred_region
      %170 = dma.done [#allocation11], 16384
    $region81: #{_ddpm_forward_impl.1} parent=1 // pred_fallthru
      _
    // Predicated region
    $region82: #{_ddpm_forward_impl.1} parent=1 // pred_check
      _
    $region83: #{_ddpm_forward_impl.1} parent=1 // pred_check_branch
      %172 = sbr.rel (0) target = $region85
    $region84: #{_ddpm_forward_impl.1} parent=1 // pred_region
      %173 = dma.done [#allocation14], 16384
    $region85: #{_ddpm_forward_impl.1} parent=1 // pred_fallthru
      _
    // Predicated region
    $region86: #{_ddpm_forward_impl.1} parent=1 // pred_check
      _
    $region87: #{_ddpm_forward_impl.1} parent=1 // pred_check_branch
      %175 = sbr.rel (0) target = $region89
    $region88: #{_ddpm_forward_impl.1} parent=1 // pred_region
      %176 = dma.done [#allocation14], 16384
    $region89: #{_ddpm_forward_impl.1} parent=1 // pred_fallthru
      _
    // Predicated region
    $region90: #{_ddpm_forward_impl.1} parent=1 // pred_check
      _
    $region91: #{_ddpm_forward_impl.1} parent=1 // pred_check_branch
      %178 = sbr.rel (0) target = $region93
    $region92: #{_ddpm_forward_impl.1} parent=1 // pred_region
      %179 = dma.done [#allocation17], 4096
    $region93: #{_ddpm_forward_impl.1} parent=1 // pred_fallthru
      _
    %v181 = vld [vmem:[%s1] sm:$0xff]
    %v182 = vld [vmem:[%s1 + $0x8] sm:$0xff]
    %v183 = vlaneseq
    %v184 = vand.u32 %v183, 127
    %v185 = vadd.s32 %v184, 128
    %186 = vset.pattern.permute.xlu0 0
    %187 = vperm.xlu0 %186, %v181
    %v188 = vpop.permute.xlu0 %187
    %189 = vset.pattern.permute.xlu0 0
    %190 = vperm.xlu0 %189, %v182
    %v191 = vpop.permute.xlu0 %190
    %vm192 = vcmp.eq.s32.totalorder %v188, %v184
    %vm193 = vcmp.eq.s32.totalorder %v188, %v185
    %vm194 = vcmp.eq.s32.totalorder %v191, %v184
    %vm195 = vcmp.eq.s32.totalorder %v191, %v185
    %v196 = vsel %vm192, 1, 0
    %v197 = vsel %vm193, 1, 0
    %v198 = vsel %vm194, 1, 0
    %v199 = vsel %vm195, 1, 0
    %v200 = vcvt.s32.f32 %v196
    %v201 = vcvt.s32.f32 %v197
    %v202 = vcvt.s32.f32 %v198
    %v203 = vcvt.s32.f32 %v199
    %v204 = vpack.c.bf16 %v202, %v200
    %v205 = vpack.c.bf16 %v203, %v201
    %v206 = vld [vmem:[#allocation2] sm:$0xff]
    %v207 = vld [vmem:[#allocation2 + $0x8] sm:$0xff]
    %v208 = vld [vmem:[#allocation2 + $0x10] sm:$0xff]
    %v209 = vld [vmem:[#allocation2 + $0x18] sm:$0xff]
    %v210 = vld [vmem:[#allocation2 + $0x20] sm:$0xff]
    %v211 = vld [vmem:[#allocation2 + $0x28] sm:$0xff]
    %v212 = vld [vmem:[#allocation2 + $0x30] sm:$0xff]
    %v213 = vld [vmem:[#allocation2 + $0x38] sm:$0xff]
    %v214 = vld [vmem:[#allocation2 + $0x40] sm:$0xff]
    %v215 = vld [vmem:[#allocation2 + $0x48] sm:$0xff]
    %v216 = vld [vmem:[#allocation2 + $0x50] sm:$0xff]
    %v217 = vld [vmem:[#allocation2 + $0x58] sm:$0xff]
    %v218 = vld [vmem:[#allocation2 + $0x60] sm:$0xff]
    %v219 = vld [vmem:[#allocation2 + $0x68] sm:$0xff]
    %v220 = vld [vmem:[#allocation2 + $0x70] sm:$0xff]
    %v221 = vld [vmem:[#allocation2 + $0x78] sm:$0xff]
    %v222 = vld [vmem:[#allocation2 + $0x80] sm:$0xff]
    %v223 = vld [vmem:[#allocation2 + $0x88] sm:$0xff]
    %v224 = vld [vmem:[#allocation2 + $0x90] sm:$0xff]
    %v225 = vld [vmem:[#allocation2 + $0x98] sm:$0xff]
    %v226 = vld [vmem:[#allocation2 + $0xa0] sm:$0xff]
    %v227 = vld [vmem:[#allocation2 + $0xa8] sm:$0xff]
    %v228 = vld [vmem:[#allocation2 + $0xb0] sm:$0xff]
    %v229 = vld [vmem:[#allocation2 + $0xb8] sm:$0xff]
    %v230 = vld [vmem:[#allocation2 + $0xc0] sm:$0xff]
    %v231 = vld [vmem:[#allocation2 + $0xc8] sm:$0xff]
    %v232 = vld [vmem:[#allocation2 + $0xd0] sm:$0xff]
    %v233 = vld [vmem:[#allocation2 + $0xd8] sm:$0xff]
    %v234 = vld [vmem:[#allocation2 + $0xe0] sm:$0xff]
    %v235 = vld [vmem:[#allocation2 + $0xe8] sm:$0xff]
    %v236 = vld [vmem:[#allocation2 + $0xf0] sm:$0xff]
    %v237 = vld [vmem:[#allocation2 + $0xf8] sm:$0xff]
    %v270 = vunpack.c.l.b16 %v206
    %v271 = vunpack.c.h.b16 %v206
    %v272 = vunpack.c.l.b16 %v207
    %v273 = vunpack.c.h.b16 %v207
    %v274 = vunpack.c.l.b16 %v208
    %v275 = vunpack.c.h.b16 %v208
    %v276 = vunpack.c.l.b16 %v209
    %v277 = vunpack.c.h.b16 %v209
    %v278 = vunpack.c.l.b16 %v210
    %v279 = vunpack.c.h.b16 %v210
    %v280 = vunpack.c.l.b16 %v211
    %v281 = vunpack.c.h.b16 %v211
    %v282 = vunpack.c.l.b16 %v212
    %v283 = vunpack.c.h.b16 %v212
    %v284 = vunpack.c.l.b16 %v213
    %v285 = vunpack.c.h.b16 %v213
    %v286 = vunpack.c.l.b16 %v214
    %v287 = vunpack.c.h.b16 %v214
    %v288 = vunpack.c.l.b16 %v215
    %v289 = vunpack.c.h.b16 %v215
    %v290 = vunpack.c.l.b16 %v216
    %v291 = vunpack.c.h.b16 %v216
    %v292 = vunpack.c.l.b16 %v217
    %v293 = vunpack.c.h.b16 %v217
    %v294 = vunpack.c.l.b16 %v218
    %v295 = vunpack.c.h.b16 %v218
    %v296 = vunpack.c.l.b16 %v219
    %v297 = vunpack.c.h.b16 %v219
    %v298 = vunpack.c.l.b16 %v220
    %v299 = vunpack.c.h.b16 %v220
    %v300 = vunpack.c.l.b16 %v221
    %v301 = vunpack.c.h.b16 %v221
    %v302 = vunpack.c.l.b16 %v222
    %v303 = vunpack.c.h.b16 %v222
    %v304 = vunpack.c.l.b16 %v223
    %v305 = vunpack.c.h.b16 %v223
    %v306 = vunpack.c.l.b16 %v224
    %v307 = vunpack.c.h.b16 %v224
    %v308 = vunpack.c.l.b16 %v225
    %v309 = vunpack.c.h.b16 %v225
    %v310 = vunpack.c.l.b16 %v226
    %v311 = vunpack.c.h.b16 %v226
    %v312 = vunpack.c.l.b16 %v227
    %v313 = vunpack.c.h.b16 %v227
    %v314 = vunpack.c.l.b16 %v228
    %v315 = vunpack.c.h.b16 %v228
    %v316 = vunpack.c.l.b16 %v229
    %v317 = vunpack.c.h.b16 %v229
    %v318 = vunpack.c.l.b16 %v230
    %v319 = vunpack.c.h.b16 %v230
    %v320 = vunpack.c.l.b16 %v231
    %v321 = vunpack.c.h.b16 %v231
    %v322 = vunpack.c.l.b16 %v232
    %v323 = vunpack.c.h.b16 %v232
    %v324 = vunpack.c.l.b16 %v233
    %v325 = vunpack.c.h.b16 %v233
    %v326 = vunpack.c.l.b16 %v234
    %v327 = vunpack.c.h.b16 %v234
    %v328 = vunpack.c.l.b16 %v235
    %v329 = vunpack.c.h.b16 %v235
    %v330 = vunpack.c.l.b16 %v236
    %v331 = vunpack.c.h.b16 %v236
    %v332 = vunpack.c.l.b16 %v237
    %v333 = vunpack.c.h.b16 %v237
    %v334 = vpack.c.b16 %v272, %v270
    %v335 = vpack.c.b16 %v273, %v271
    %v336 = vpack.c.b16 %v276, %v274
    %v337 = vpack.c.b16 %v277, %v275
    %v338 = vpack.c.b16 %v280, %v278
    %v339 = vpack.c.b16 %v281, %v279
    %v340 = vpack.c.b16 %v284, %v282
    %v341 = vpack.c.b16 %v285, %v283
    %v342 = vpack.c.b16 %v288, %v286
    %v343 = vpack.c.b16 %v289, %v287
    %v344 = vpack.c.b16 %v292, %v290
    %v345 = vpack.c.b16 %v293, %v291
    %v346 = vpack.c.b16 %v296, %v294
    %v347 = vpack.c.b16 %v297, %v295
    %v348 = vpack.c.b16 %v300, %v298
    %v349 = vpack.c.b16 %v301, %v299
    %v350 = vpack.c.b16 %v304, %v302
    %v351 = vpack.c.b16 %v305, %v303
    %v352 = vpack.c.b16 %v308, %v306
    %v353 = vpack.c.b16 %v309, %v307
    %v354 = vpack.c.b16 %v312, %v310
    %v355 = vpack.c.b16 %v313, %v311
    %v356 = vpack.c.b16 %v316, %v314
    %v357 = vpack.c.b16 %v317, %v315
    %v358 = vpack.c.b16 %v320, %v318
    %v359 = vpack.c.b16 %v321, %v319
    %v360 = vpack.c.b16 %v324, %v322
    %v361 = vpack.c.b16 %v325, %v323
    %v362 = vpack.c.b16 %v328, %v326
    %v363 = vpack.c.b16 %v329, %v327
    %v364 = vpack.c.b16 %v332, %v330
    %v365 = vpack.c.b16 %v333, %v331
    %398 = vmatprep.subr.bf16.mxu0 %v349
    %399 = vmatpush1.bf16.msra.mxu0 %v348
    %400 = vmatprep.subr.bf16.mxu0 %v347
    %401 = vmatpush1.bf16.msra.mxu0 %v346
    %402 = vmatprep.subr.bf16.mxu0 %v345
    %403 = vmatpush1.bf16.msra.mxu0 %v344
    %404 = vmatprep.subr.bf16.mxu0 %v343
    %405 = vmatpush1.bf16.msra.mxu0 %v342
    %406 = vmatprep.subr.bf16.mxu0 %v341
    %407 = vmatpush1.bf16.msra.mxu0 %v340
    %408 = vmatprep.subr.bf16.mxu0 %v339
    %409 = vmatpush1.bf16.msra.mxu0 %v338
    %410 = vmatprep.subr.bf16.mxu0 %v337
    %411 = vmatpush1.bf16.msra.mxu0 %v336
    %412 = vmatprep.subr.bf16.mxu0 %v335
    %413 = vmatpush1.bf16.msra.mxu0 %v334
    %414 = vmatprep.subr.bf16.mxu0 %v365
    %415 = vmatpush2.bf16.msra.mxu0 %v364
    %416 = vmatprep.subr.bf16.mxu0 %v363
    %417 = vmatpush2.bf16.msra.mxu0 %v362
    %418 = vmatprep.subr.bf16.mxu0 %v361
    %419 = vmatpush2.bf16.msra.mxu0 %v360
    %420 = vmatprep.subr.bf16.mxu0 %v359
    %421 = vmatpush2.bf16.msra.mxu0 %v358
    %422 = vmatprep.subr.bf16.mxu0 %v357
    %423 = vmatpush2.bf16.msra.mxu0 %v356
    %424 = vmatprep.subr.bf16.mxu0 %v355
    %425 = vmatpush2.bf16.msra.mxu0 %v354
    %426 = vmatprep.subr.bf16.mxu0 %v353
    %427 = vmatpush2.bf16.msra.mxu0 %v352
    %428 = vmatprep.subr.bf16.mxu0 %v351
    %429 = vmatpush2.bf16.msra.mxu0 %v350
    %430 = vmatprep.mubr.bf16.mxu0 %v205
    %431 = vmatmul.mubr.bf16.gmra.mxu0 %v204
    %v432 = vpop.f32.mrf.mxu0
    %v433 = vadd.f32 0.0, %v432
    %v434 = vpop.f32.mrf.mxu0
    %v435 = vadd.f32 0.0, %v434
    %v436 = vpop.f32.mrf.mxu0
    %v437 = vadd.f32 0.0, %v436
    %v438 = vpop.f32.mrf.mxu0
    %v439 = vadd.f32 0.0, %v438
    %440 = vdwg.mxu0
    %v441 = vpack.c.bf16 %v437, %v433
    %v442 = vpack.c.bf16 %v439, %v435
    %v443 = vld [vmem:[#allocation4] sm:$0xff]
    %v444 = vld [vmem:[#allocation4 + $0x8] sm:$0xff]
    %v445 = vld [vmem:[#allocation4 + $0x10] sm:$0xff]
    %v446 = vld [vmem:[#allocation4 + $0x18] sm:$0xff]
    %v447 = vld [vmem:[#allocation4 + $0x20] sm:$0xff]
    %v448 = vld [vmem:[#allocation4 + $0x28] sm:$0xff]
    %v449 = vld [vmem:[#allocation4 + $0x30] sm:$0xff]
    %v450 = vld [vmem:[#allocation4 + $0x38] sm:$0xff]
    %v451 = vld [vmem:[#allocation4 + $0x40] sm:$0xff]
    %v452 = vld [vmem:[#allocation4 + $0x48] sm:$0xff]
    %v453 = vld [vmem:[#allocation4 + $0x50] sm:$0xff]
    %v454 = vld [vmem:[#allocation4 + $0x58] sm:$0xff]
    %v455 = vld [vmem:[#allocation4 + $0x60] sm:$0xff]
    %v456 = vld [vmem:[#allocation4 + $0x68] sm:$0xff]
    %v457 = vld [vmem:[#allocation4 + $0x70] sm:$0xff]
    %v458 = vld [vmem:[#allocation4 + $0x78] sm:$0xff]
    %v459 = vld [vmem:[#allocation4 + $0x80] sm:$0xff]
    %v460 = vld [vmem:[#allocation4 + $0x88] sm:$0xff]
    %v461 = vld [vmem:[#allocation4 + $0x90] sm:$0xff]
    %v462 = vld [vmem:[#allocation4 + $0x98] sm:$0xff]
    %v463 = vld [vmem:[#allocation4 + $0xa0] sm:$0xff]
    %v464 = vld [vmem:[#allocation4 + $0xa8] sm:$0xff]
    %v465 = vld [vmem:[#allocation4 + $0xb0] sm:$0xff]
    %v466 = vld [vmem:[#allocation4 + $0xb8] sm:$0xff]
    %v467 = vld [vmem:[#allocation4 + $0xc0] sm:$0xff]
    %v468 = vld [vmem:[#allocation4 + $0xc8] sm:$0xff]
    %v469 = vld [vmem:[#allocation4 + $0xd0] sm:$0xff]
    %v470 = vld [vmem:[#allocation4 + $0xd8] sm:$0xff]
    %v471 = vld [vmem:[#allocation4 + $0xe0] sm:$0xff]
    %v472 = vld [vmem:[#allocation4 + $0xe8] sm:$0xff]
    %v473 = vld [vmem:[#allocation4 + $0xf0] sm:$0xff]
    %v474 = vld [vmem:[#allocation4 + $0xf8] sm:$0xff]
    %v475 = vld [vmem:[%s2] ss:$8 sm:$0x3]
    %v477 = vlaneseq
    %v478 = vshrl.u32 %v477, 7
    %v479 = vsub.s32 0, %v478
    %v480 = vrot.slane %v475, %v479
    %v481 = vlaneseq
    %v482 = vshrl.u32 %v481, 7
    %v483 = vsub.s32 1, %v482
    %v484 = vrot.slane %v475, %v483
    %v519 = vunpack.c.l.b16 %v443
    %v520 = vunpack.c.h.b16 %v443
    %v521 = vunpack.c.l.b16 %v444
    %v522 = vunpack.c.h.b16 %v444
    %v523 = vunpack.c.l.b16 %v445
    %v524 = vunpack.c.h.b16 %v445
    %v525 = vunpack.c.l.b16 %v446
    %v526 = vunpack.c.h.b16 %v446
    %v527 = vunpack.c.l.b16 %v447
    %v528 = vunpack.c.h.b16 %v447
    %v529 = vunpack.c.l.b16 %v448
    %v530 = vunpack.c.h.b16 %v448
    %v531 = vunpack.c.l.b16 %v449
    %v532 = vunpack.c.h.b16 %v449
    %v533 = vunpack.c.l.b16 %v450
    %v534 = vunpack.c.h.b16 %v450
    %v535 = vunpack.c.l.b16 %v451
    %v536 = vunpack.c.h.b16 %v451
    %v537 = vunpack.c.l.b16 %v452
    %v538 = vunpack.c.h.b16 %v452
    %v539 = vunpack.c.l.b16 %v453
    %v540 = vunpack.c.h.b16 %v453
    %v541 = vunpack.c.l.b16 %v454
    %v542 = vunpack.c.h.b16 %v454
    %v543 = vunpack.c.l.b16 %v455
    %v544 = vunpack.c.h.b16 %v455
    %v545 = vunpack.c.l.b16 %v456
    %v546 = vunpack.c.h.b16 %v456
    %v547 = vunpack.c.l.b16 %v457
    %v548 = vunpack.c.h.b16 %v457
    %v549 = vunpack.c.l.b16 %v458
    %v550 = vunpack.c.h.b16 %v458
    %v551 = vunpack.c.l.b16 %v459
    %v552 = vunpack.c.h.b16 %v459
    %v553 = vunpack.c.l.b16 %v460
    %v554 = vunpack.c.h.b16 %v460
    %v555 = vunpack.c.l.b16 %v461
    %v556 = vunpack.c.h.b16 %v461
    %v557 = vunpack.c.l.b16 %v462
    %v558 = vunpack.c.h.b16 %v462
    %v559 = vunpack.c.l.b16 %v463
    %v560 = vunpack.c.h.b16 %v463
    %v561 = vunpack.c.l.b16 %v464
    %v562 = vunpack.c.h.b16 %v464
    %v563 = vunpack.c.l.b16 %v465
    %v564 = vunpack.c.h.b16 %v465
    %v565 = vunpack.c.l.b16 %v466
    %v566 = vunpack.c.h.b16 %v466
    %v567 = vunpack.c.l.b16 %v467
    %v568 = vunpack.c.h.b16 %v467
    %v569 = vunpack.c.l.b16 %v468
    %v570 = vunpack.c.h.b16 %v468
    %v571 = vunpack.c.l.b16 %v469
    %v572 = vunpack.c.h.b16 %v469
    %v573 = vunpack.c.l.b16 %v470
    %v574 = vunpack.c.h.b16 %v470
    %v575 = vunpack.c.l.b16 %v471
    %v576 = vunpack.c.h.b16 %v471
    %v577 = vunpack.c.l.b16 %v472
    %v578 = vunpack.c.h.b16 %v472
    %v579 = vunpack.c.l.b16 %v473
    %v580 = vunpack.c.h.b16 %v473
    %v581 = vunpack.c.l.b16 %v474
    %v582 = vunpack.c.h.b16 %v474
    %v583 = vpack.c.b16 %v521, %v519
    %v584 = vpack.c.b16 %v522, %v520
    %v585 = vpack.c.b16 %v525, %v523
    %v586 = vpack.c.b16 %v526, %v524
    %v587 = vpack.c.b16 %v529, %v527
    %v588 = vpack.c.b16 %v530, %v528
    %v589 = vpack.c.b16 %v533, %v531
    %v590 = vpack.c.b16 %v534, %v532
    %v591 = vpack.c.b16 %v537, %v535
    %v592 = vpack.c.b16 %v538, %v536
    %v593 = vpack.c.b16 %v541, %v539
    %v594 = vpack.c.b16 %v542, %v540
    %v595 = vpack.c.b16 %v545, %v543
    %v596 = vpack.c.b16 %v546, %v544
    %v597 = vpack.c.b16 %v549, %v547
    %v598 = vpack.c.b16 %v550, %v548
    %v599 = vpack.c.b16 %v553, %v551
    %v600 = vpack.c.b16 %v554, %v552
    %v601 = vpack.c.b16 %v557, %v555
    %v602 = vpack.c.b16 %v558, %v556
    %v603 = vpack.c.b16 %v561, %v559
    %v604 = vpack.c.b16 %v562, %v560
    %v605 = vpack.c.b16 %v565, %v563
    %v606 = vpack.c.b16 %v566, %v564
    %v607 = vpack.c.b16 %v569, %v567
    %v608 = vpack.c.b16 %v570, %v568
    %v609 = vpack.c.b16 %v573, %v571
    %v610 = vpack.c.b16 %v574, %v572
    %v611 = vpack.c.b16 %v577, %v575
    %v612 = vpack.c.b16 %v578, %v576
    %v613 = vpack.c.b16 %v581, %v579
    %v614 = vpack.c.b16 %v582, %v580
    %647 = vmatprep.subr.bf16.mxu0 %v598
    %648 = vmatpush1.bf16.msra.mxu0 %v597
    %649 = vmatprep.subr.bf16.mxu0 %v596
    %650 = vmatpush1.bf16.msra.mxu0 %v595
    %651 = vmatprep.subr.bf16.mxu0 %v594
    %652 = vmatpush1.bf16.msra.mxu0 %v593
    %653 = vmatprep.subr.bf16.mxu0 %v592
    %654 = vmatpush1.bf16.msra.mxu0 %v591
    %655 = vmatprep.subr.bf16.mxu0 %v590
    %656 = vmatpush1.bf16.msra.mxu0 %v589
    %657 = vmatprep.subr.bf16.mxu0 %v588
    %658 = vmatpush1.bf16.msra.mxu0 %v587
    %659 = vmatprep.subr.bf16.mxu0 %v586
    %660 = vmatpush1.bf16.msra.mxu0 %v585
    %661 = vmatprep.subr.bf16.mxu0 %v584
    %662 = vmatpush1.bf16.msra.mxu0 %v583
    %663 = vmatprep.subr.bf16.mxu0 %v614
    %664 = vmatpush2.bf16.msra.mxu0 %v613
    %665 = vmatprep.subr.bf16.mxu0 %v612
    %666 = vmatpush2.bf16.msra.mxu0 %v611
    %667 = vmatprep.subr.bf16.mxu0 %v610
    %668 = vmatpush2.bf16.msra.mxu0 %v609
    %669 = vmatprep.subr.bf16.mxu0 %v608
    %670 = vmatpush2.bf16.msra.mxu0 %v607
    %671 = vmatprep.subr.bf16.mxu0 %v606
    %672 = vmatpush2.bf16.msra.mxu0 %v605
    %673 = vmatprep.subr.bf16.mxu0 %v604
    %674 = vmatpush2.bf16.msra.mxu0 %v603
    %675 = vmatprep.subr.bf16.mxu0 %v602
    %676 = vmatpush2.bf16.msra.mxu0 %v601
    %677 = vmatprep.subr.bf16.mxu0 %v600
    %678 = vmatpush2.bf16.msra.mxu0 %v599
    %679 = vmatprep.mubr.bf16.mxu0 %v442
    %680 = vmatmul.mubr.bf16.gmra.mxu0 %v441
    %v681 = vpop.f32.mrf.mxu0
    %v682 = vadd.f32 %v480, %v681
    %v683 = vpop.f32.mrf.mxu0
    %v684 = vadd.f32 %v484, %v683
    %v685 = vpop.f32.mrf.mxu0
    %v686 = vadd.f32 %v480, %v685
    %v687 = vpop.f32.mrf.mxu0
    %v688 = vadd.f32 %v484, %v687
    %689 = vdwg.mxu0
    %v690 = vmax.f32 %v682, 0.0
    %v691 = vmax.f32 %v684, 0.0
    %v692 = vmax.f32 %v686, 0.0
    %v693 = vmax.f32 %v688, 0.0
    %v694 = vpack.c.bf16 %v692, %v690
    %v695 = vpack.c.bf16 %v693, %v691
    %v696 = vld [vmem:[#allocation6] sm:$0xff]
    %v697 = vld [vmem:[#allocation6 + $0x8] sm:$0xff]
    %v698 = vld [vmem:[#allocation6 + $0x10] sm:$0xff]
    %v699 = vld [vmem:[#allocation6 + $0x18] sm:$0xff]
    %v700 = vld [vmem:[#allocation6 + $0x20] sm:$0xff]
    %v701 = vld [vmem:[#allocation6 + $0x28] sm:$0xff]
    %v702 = vld [vmem:[#allocation6 + $0x30] sm:$0xff]
    %v703 = vld [vmem:[#allocation6 + $0x38] sm:$0xff]
    %v704 = vld [vmem:[#allocation6 + $0x40] sm:$0xff]
    %v705 = vld [vmem:[#allocation6 + $0x48] sm:$0xff]
    %v706 = vld [vmem:[#allocation6 + $0x50] sm:$0xff]
    %v707 = vld [vmem:[#allocation6 + $0x58] sm:$0xff]
    %v708 = vld [vmem:[#allocation6 + $0x60] sm:$0xff]
    %v709 = vld [vmem:[#allocation6 + $0x68] sm:$0xff]
    %v710 = vld [vmem:[#allocation6 + $0x70] sm:$0xff]
    %v711 = vld [vmem:[#allocation6 + $0x78] sm:$0xff]
    %v712 = vld [vmem:[#allocation6 + $0x80] sm:$0xff]
    %v713 = vld [vmem:[#allocation6 + $0x88] sm:$0xff]
    %v714 = vld [vmem:[#allocation6 + $0x90] sm:$0xff]
    %v715 = vld [vmem:[#allocation6 + $0x98] sm:$0xff]
    %v716 = vld [vmem:[#allocation6 + $0xa0] sm:$0xff]
    %v717 = vld [vmem:[#allocation6 + $0xa8] sm:$0xff]
    %v718 = vld [vmem:[#allocation6 + $0xb0] sm:$0xff]
    %v719 = vld [vmem:[#allocation6 + $0xb8] sm:$0xff]
    %v720 = vld [vmem:[#allocation6 + $0xc0] sm:$0xff]
    %v721 = vld [vmem:[#allocation6 + $0xc8] sm:$0xff]
    %v722 = vld [vmem:[#allocation6 + $0xd0] sm:$0xff]
    %v723 = vld [vmem:[#allocation6 + $0xd8] sm:$0xff]
    %v724 = vld [vmem:[#allocation6 + $0xe0] sm:$0xff]
    %v725 = vld [vmem:[#allocation6 + $0xe8] sm:$0xff]
    %v726 = vld [vmem:[#allocation6 + $0xf0] sm:$0xff]
    %v727 = vld [vmem:[#allocation6 + $0xf8] sm:$0xff]
    %s728 = scalar_lea.vmem %s2, 1
    %v729 = vld [vmem:[%s728] ss:$8 sm:$0x3]
    %v731 = vlaneseq
    %v732 = vshrl.u32 %v731, 7
    %v733 = vsub.s32 0, %v732
    %v734 = vrot.slane %v729, %v733
    %v735 = vlaneseq
    %v736 = vshrl.u32 %v735, 7
    %v737 = vsub.s32 1, %v736
    %v738 = vrot.slane %v729, %v737
    %v773 = vunpack.c.l.b16 %v696
    %v774 = vunpack.c.h.b16 %v696
    %v775 = vunpack.c.l.b16 %v697
    %v776 = vunpack.c.h.b16 %v697
    %v777 = vunpack.c.l.b16 %v698
    %v778 = vunpack.c.h.b16 %v698
    %v779 = vunpack.c.l.b16 %v699
    %v780 = vunpack.c.h.b16 %v699
    %v781 = vunpack.c.l.b16 %v700
    %v782 = vunpack.c.h.b16 %v700
    %v783 = vunpack.c.l.b16 %v701
    %v784 = vunpack.c.h.b16 %v701
    %v785 = vunpack.c.l.b16 %v702
    %v786 = vunpack.c.h.b16 %v702
    %v787 = vunpack.c.l.b16 %v703
    %v788 = vunpack.c.h.b16 %v703
    %v789 = vunpack.c.l.b16 %v704
    %v790 = vunpack.c.h.b16 %v704
    %v791 = vunpack.c.l.b16 %v705
    %v792 = vunpack.c.h.b16 %v705
    %v793 = vunpack.c.l.b16 %v706
    %v794 = vunpack.c.h.b16 %v706
    %v795 = vunpack.c.l.b16 %v707
    %v796 = vunpack.c.h.b16 %v707
    %v797 = vunpack.c.l.b16 %v708
    %v798 = vunpack.c.h.b16 %v708
    %v799 = vunpack.c.l.b16 %v709
    %v800 = vunpack.c.h.b16 %v709
    %v801 = vunpack.c.l.b16 %v710
    %v802 = vunpack.c.h.b16 %v710
    %v803 = vunpack.c.l.b16 %v711
    %v804 = vunpack.c.h.b16 %v711
    %v805 = vunpack.c.l.b16 %v712
    %v806 = vunpack.c.h.b16 %v712
    %v807 = vunpack.c.l.b16 %v713
    %v808 = vunpack.c.h.b16 %v713
    %v809 = vunpack.c.l.b16 %v714
    %v810 = vunpack.c.h.b16 %v714
    %v811 = vunpack.c.l.b16 %v715
    %v812 = vunpack.c.h.b16 %v715
    %v813 = vunpack.c.l.b16 %v716
    %v814 = vunpack.c.h.b16 %v716
    %v815 = vunpack.c.l.b16 %v717
    %v816 = vunpack.c.h.b16 %v717
    %v817 = vunpack.c.l.b16 %v718
    %v818 = vunpack.c.h.b16 %v718
    %v819 = vunpack.c.l.b16 %v719
    %v820 = vunpack.c.h.b16 %v719
    %v821 = vunpack.c.l.b16 %v720
    %v822 = vunpack.c.h.b16 %v720
    %v823 = vunpack.c.l.b16 %v721
    %v824 = vunpack.c.h.b16 %v721
    %v825 = vunpack.c.l.b16 %v722
    %v826 = vunpack.c.h.b16 %v722
    %v827 = vunpack.c.l.b16 %v723
    %v828 = vunpack.c.h.b16 %v723
    %v829 = vunpack.c.l.b16 %v724
    %v830 = vunpack.c.h.b16 %v724
    %v831 = vunpack.c.l.b16 %v725
    %v832 = vunpack.c.h.b16 %v725
    %v833 = vunpack.c.l.b16 %v726
    %v834 = vunpack.c.h.b16 %v726
    %v835 = vunpack.c.l.b16 %v727
    %v836 = vunpack.c.h.b16 %v727
    %v837 = vpack.c.b16 %v775, %v773
    %v838 = vpack.c.b16 %v776, %v774
    %v839 = vpack.c.b16 %v779, %v777
    %v840 = vpack.c.b16 %v780, %v778
    %v841 = vpack.c.b16 %v783, %v781
    %v842 = vpack.c.b16 %v784, %v782
    %v843 = vpack.c.b16 %v787, %v785
    %v844 = vpack.c.b16 %v788, %v786
    %v845 = vpack.c.b16 %v791, %v789
    %v846 = vpack.c.b16 %v792, %v790
    %v847 = vpack.c.b16 %v795, %v793
    %v848 = vpack.c.b16 %v796, %v794
    %v849 = vpack.c.b16 %v799, %v797
    %v850 = vpack.c.b16 %v800, %v798
    %v851 = vpack.c.b16 %v803, %v801
    %v852 = vpack.c.b16 %v804, %v802
    %v853 = vpack.c.b16 %v807, %v805
    %v854 = vpack.c.b16 %v808, %v806
    %v855 = vpack.c.b16 %v811, %v809
    %v856 = vpack.c.b16 %v812, %v810
    %v857 = vpack.c.b16 %v815, %v813
    %v858 = vpack.c.b16 %v816, %v814
    %v859 = vpack.c.b16 %v819, %v817
    %v860 = vpack.c.b16 %v820, %v818
    %v861 = vpack.c.b16 %v823, %v821
    %v862 = vpack.c.b16 %v824, %v822
    %v863 = vpack.c.b16 %v827, %v825
    %v864 = vpack.c.b16 %v828, %v826
    %v865 = vpack.c.b16 %v831, %v829
    %v866 = vpack.c.b16 %v832, %v830
    %v867 = vpack.c.b16 %v835, %v833
    %v868 = vpack.c.b16 %v836, %v834
    %901 = vmatprep.subr.bf16.mxu0 %v852
    %902 = vmatpush1.bf16.msra.mxu0 %v851
    %903 = vmatprep.subr.bf16.mxu0 %v850
    %904 = vmatpush1.bf16.msra.mxu0 %v849
    %905 = vmatprep.subr.bf16.mxu0 %v848
    %906 = vmatpush1.bf16.msra.mxu0 %v847
    %907 = vmatprep.subr.bf16.mxu0 %v846
    %908 = vmatpush1.bf16.msra.mxu0 %v845
    %909 = vmatprep.subr.bf16.mxu0 %v844
    %910 = vmatpush1.bf16.msra.mxu0 %v843
    %911 = vmatprep.subr.bf16.mxu0 %v842
    %912 = vmatpush1.bf16.msra.mxu0 %v841
    %913 = vmatprep.subr.bf16.mxu0 %v840
    %914 = vmatpush1.bf16.msra.mxu0 %v839
    %915 = vmatprep.subr.bf16.mxu0 %v838
    %916 = vmatpush1.bf16.msra.mxu0 %v837
    %917 = vmatprep.subr.bf16.mxu0 %v868
    %918 = vmatpush2.bf16.msra.mxu0 %v867
    %919 = vmatprep.subr.bf16.mxu0 %v866
    %920 = vmatpush2.bf16.msra.mxu0 %v865
    %921 = vmatprep.subr.bf16.mxu0 %v864
    %922 = vmatpush2.bf16.msra.mxu0 %v863
    %923 = vmatprep.subr.bf16.mxu0 %v862
    %924 = vmatpush2.bf16.msra.mxu0 %v861
    %925 = vmatprep.subr.bf16.mxu0 %v860
    %926 = vmatpush2.bf16.msra.mxu0 %v859
    %927 = vmatprep.subr.bf16.mxu0 %v858
    %928 = vmatpush2.bf16.msra.mxu0 %v857
    %929 = vmatprep.subr.bf16.mxu0 %v856
    %930 = vmatpush2.bf16.msra.mxu0 %v855
    %931 = vmatprep.subr.bf16.mxu0 %v854
    %932 = vmatpush2.bf16.msra.mxu0 %v853
    %933 = vmatprep.mubr.bf16.mxu0 %v695
    %934 = vmatmul.mubr.bf16.gmra.mxu0 %v694
    %v935 = vpop.f32.mrf.mxu0
    %v936 = vadd.f32 %v734, %v935
    %v937 = vpop.f32.mrf.mxu0
    %v938 = vadd.f32 %v738, %v937
    %v939 = vpop.f32.mrf.mxu0
    %v940 = vadd.f32 %v734, %v939
    %v941 = vpop.f32.mrf.mxu0
    %v942 = vadd.f32 %v738, %v941
    %943 = vdwg.mxu0
    %v944 = vld [vmem:[%s0] sm:$0xff]
    %v945 = vld [vmem:[%s0 + $0x8] sm:$0xff]
    %v946 = vpack.c.bf16 %v945, %v944
    %v947 = vld [vmem:[#allocation7] sm:$0xff]
    %v948 = vld [vmem:[#allocation7 + $0x8] sm:$0xff]
    %v949 = vld [vmem:[#allocation7 + $0x10] sm:$0xff]
    %v950 = vld [vmem:[#allocation7 + $0x18] sm:$0xff]
    %v951 = vld [vmem:[#allocation7 + $0x20] sm:$0xff]
    %v952 = vld [vmem:[#allocation7 + $0x28] sm:$0xff]
    %v953 = vld [vmem:[#allocation7 + $0x30] sm:$0xff]
    %v954 = vld [vmem:[#allocation7 + $0x38] sm:$0xff]
    %v955 = vld [vmem:[#allocation7 + $0x40] sm:$0xff]
    %v956 = vld [vmem:[#allocation7 + $0x48] sm:$0xff]
    %v957 = vld [vmem:[#allocation7 + $0x50] sm:$0xff]
    %v958 = vld [vmem:[#allocation7 + $0x58] sm:$0xff]
    %v959 = vld [vmem:[#allocation7 + $0x60] sm:$0xff]
    %v960 = vld [vmem:[#allocation7 + $0x68] sm:$0xff]
    %v961 = vld [vmem:[#allocation7 + $0x70] sm:$0xff]
    %v962 = vld [vmem:[#allocation7 + $0x78] sm:$0xff]
    %v963 = vld [vmem:[#allocation7 + $0x80] sm:$0xff]
    %v964 = vld [vmem:[#allocation7 + $0x88] sm:$0xff]
    %v965 = vld [vmem:[#allocation7 + $0x90] sm:$0xff]
    %v966 = vld [vmem:[#allocation7 + $0x98] sm:$0xff]
    %v967 = vld [vmem:[#allocation7 + $0xa0] sm:$0xff]
    %v968 = vld [vmem:[#allocation7 + $0xa8] sm:$0xff]
    %v969 = vld [vmem:[#allocation7 + $0xb0] sm:$0xff]
    %v970 = vld [vmem:[#allocation7 + $0xb8] sm:$0xff]
    %v971 = vld [vmem:[#allocation7 + $0xc0] sm:$0xff]
    %v972 = vld [vmem:[#allocation7 + $0xc8] sm:$0xff]
    %v973 = vld [vmem:[#allocation7 + $0xd0] sm:$0xff]
    %v974 = vld [vmem:[#allocation7 + $0xd8] sm:$0xff]
    %v975 = vld [vmem:[#allocation7 + $0xe0] sm:$0xff]
    %v976 = vld [vmem:[#allocation7 + $0xe8] sm:$0xff]
    %v977 = vld [vmem:[#allocation7 + $0xf0] sm:$0xff]
    %v978 = vld [vmem:[#allocation7 + $0xf8] sm:$0xff]
    %v979 = vpack.c.bf16 %v940, %v936
    %v980 = vpack.c.bf16 %v942, %v938
    %v981 = vld [vmem:[#allocation9] sm:$0xff]
    %v982 = vld [vmem:[#allocation9 + $0x8] sm:$0xff]
    %v983 = vld [vmem:[#allocation9 + $0x10] sm:$0xff]
    %v984 = vld [vmem:[#allocation9 + $0x18] sm:$0xff]
    %v985 = vld [vmem:[#allocation9 + $0x20] sm:$0xff]
    %v986 = vld [vmem:[#allocation9 + $0x28] sm:$0xff]
    %v987 = vld [vmem:[#allocation9 + $0x30] sm:$0xff]
    %v988 = vld [vmem:[#allocation9 + $0x38] sm:$0xff]
    %v989 = vld [vmem:[#allocation9 + $0x40] sm:$0xff]
    %v990 = vld [vmem:[#allocation9 + $0x48] sm:$0xff]
    %v991 = vld [vmem:[#allocation9 + $0x50] sm:$0xff]
    %v992 = vld [vmem:[#allocation9 + $0x58] sm:$0xff]
    %v993 = vld [vmem:[#allocation9 + $0x60] sm:$0xff]
    %v994 = vld [vmem:[#allocation9 + $0x68] sm:$0xff]
    %v995 = vld [vmem:[#allocation9 + $0x70] sm:$0xff]
    %v996 = vld [vmem:[#allocation9 + $0x78] sm:$0xff]
    %v997 = vld [vmem:[#allocation9 + $0x80] sm:$0xff]
    %v998 = vld [vmem:[#allocation9 + $0x88] sm:$0xff]
    %v999 = vld [vmem:[#allocation9 + $0x90] sm:$0xff]
    %v1000 = vld [vmem:[#allocation9 + $0x98] sm:$0xff]
    %v1001 = vld [vmem:[#allocation9 + $0xa0] sm:$0xff]
    %v1002 = vld [vmem:[#allocation9 + $0xa8] sm:$0xff]
    %v1003 = vld [vmem:[#allocation9 + $0xb0] sm:$0xff]
    %v1004 = vld [vmem:[#allocation9 + $0xb8] sm:$0xff]
    %v1005 = vld [vmem:[#allocation9 + $0xc0] sm:$0xff]
    %v1006 = vld [vmem:[#allocation9 + $0xc8] sm:$0xff]
    %v1007 = vld [vmem:[#allocation9 + $0xd0] sm:$0xff]
    %v1008 = vld [vmem:[#allocation9 + $0xd8] sm:$0xff]
    %v1009 = vld [vmem:[#allocation9 + $0xe0] sm:$0xff]
    %v1010 = vld [vmem:[#allocation9 + $0xe8] sm:$0xff]
    %v1011 = vld [vmem:[#allocation9 + $0xf0] sm:$0xff]
    %v1012 = vld [vmem:[#allocation9 + $0xf8] sm:$0xff]
    %v1013 = vld [vmem:[#allocation9 + $0x100] sm:$0xff]
    %v1014 = vld [vmem:[#allocation9 + $0x108] sm:$0xff]
    %v1015 = vld [vmem:[#allocation9 + $0x110] sm:$0xff]
    %v1016 = vld [vmem:[#allocation9 + $0x118] sm:$0xff]
    %v1017 = vld [vmem:[#allocation9 + $0x120] sm:$0xff]
    %v1018 = vld [vmem:[#allocation9 + $0x128] sm:$0xff]
    %v1019 = vld [vmem:[#allocation9 + $0x130] sm:$0xff]
    %v1020 = vld [vmem:[#allocation9 + $0x138] sm:$0xff]
    %v1021 = vld [vmem:[#allocation9 + $0x140] sm:$0xff]
    %v1022 = vld [vmem:[#allocation9 + $0x148] sm:$0xff]
    %v1023 = vld [vmem:[#allocation9 + $0x150] sm:$0xff]
    %v1024 = vld [vmem:[#allocation9 + $0x158] sm:$0xff]
    %v1025 = vld [vmem:[#allocation9 + $0x160] sm:$0xff]
    %v1026 = vld [vmem:[#allocation9 + $0x168] sm:$0xff]
    %v1027 = vld [vmem:[#allocation9 + $0x170] sm:$0xff]
    %v1028 = vld [vmem:[#allocation9 + $0x178] sm:$0xff]
    %v1029 = vld [vmem:[#allocation9 + $0x180] sm:$0xff]
    %v1030 = vld [vmem:[#allocation9 + $0x188] sm:$0xff]
    %v1031 = vld [vmem:[#allocation9 + $0x190] sm:$0xff]
    %v1032 = vld [vmem:[#allocation9 + $0x198] sm:$0xff]
    %v1033 = vld [vmem:[#allocation9 + $0x1a0] sm:$0xff]
    %v1034 = vld [vmem:[#allocation9 + $0x1a8] sm:$0xff]
    %v1035 = vld [vmem:[#allocation9 + $0x1b0] sm:$0xff]
    %v1036 = vld [vmem:[#allocation9 + $0x1b8] sm:$0xff]
    %v1037 = vld [vmem:[#allocation9 + $0x1c0] sm:$0xff]
    %v1038 = vld [vmem:[#allocation9 + $0x1c8] sm:$0xff]
    %v1039 = vld [vmem:[#allocation9 + $0x1d0] sm:$0xff]
    %v1040 = vld [vmem:[#allocation9 + $0x1d8] sm:$0xff]
    %v1041 = vld [vmem:[#allocation9 + $0x1e0] sm:$0xff]
    %v1042 = vld [vmem:[#allocation9 + $0x1e8] sm:$0xff]
    %v1043 = vld [vmem:[#allocation9 + $0x1f0] sm:$0xff]
    %v1044 = vld [vmem:[#allocation9 + $0x1f8] sm:$0xff]
    %v1109 = vunpack.c.l.b16 %v981
    %v1110 = vunpack.c.h.b16 %v981
    %v1111 = vunpack.c.l.b16 %v982
    %v1112 = vunpack.c.h.b16 %v982
    %v1113 = vunpack.c.l.b16 %v983
    %v1114 = vunpack.c.h.b16 %v983
    %v1115 = vunpack.c.l.b16 %v984
    %v1116 = vunpack.c.h.b16 %v984
    %v1117 = vunpack.c.l.b16 %v985
    %v1118 = vunpack.c.h.b16 %v985
    %v1119 = vunpack.c.l.b16 %v986
    %v1120 = vunpack.c.h.b16 %v986
    %v1121 = vunpack.c.l.b16 %v987
    %v1122 = vunpack.c.h.b16 %v987
    %v1123 = vunpack.c.l.b16 %v988
    %v1124 = vunpack.c.h.b16 %v988
    %v1125 = vunpack.c.l.b16 %v989
    %v1126 = vunpack.c.h.b16 %v989
    %v1127 = vunpack.c.l.b16 %v990
    %v1128 = vunpack.c.h.b16 %v990
    %v1129 = vunpack.c.l.b16 %v991
    %v1130 = vunpack.c.h.b16 %v991
    %v1131 = vunpack.c.l.b16 %v992
    %v1132 = vunpack.c.h.b16 %v992
    %v1133 = vunpack.c.l.b16 %v993
    %v1134 = vunpack.c.h.b16 %v993
    %v1135 = vunpack.c.l.b16 %v994
    %v1136 = vunpack.c.h.b16 %v994
    %v1137 = vunpack.c.l.b16 %v995
    %v1138 = vunpack.c.h.b16 %v995
    %v1139 = vunpack.c.l.b16 %v996
    %v1140 = vunpack.c.h.b16 %v996
    %v1141 = vunpack.c.l.b16 %v997
    %v1142 = vunpack.c.h.b16 %v997
    %v1143 = vunpack.c.l.b16 %v998
    %v1144 = vunpack.c.h.b16 %v998
    %v1145 = vunpack.c.l.b16 %v999
    %v1146 = vunpack.c.h.b16 %v999
    %v1147 = vunpack.c.l.b16 %v1000
    %v1148 = vunpack.c.h.b16 %v1000
    %v1149 = vunpack.c.l.b16 %v1001
    %v1150 = vunpack.c.h.b16 %v1001
    %v1151 = vunpack.c.l.b16 %v1002
    %v1152 = vunpack.c.h.b16 %v1002
    %v1153 = vunpack.c.l.b16 %v1003
    %v1154 = vunpack.c.h.b16 %v1003
    %v1155 = vunpack.c.l.b16 %v1004
    %v1156 = vunpack.c.h.b16 %v1004
    %v1157 = vunpack.c.l.b16 %v1005
    %v1158 = vunpack.c.h.b16 %v1005
    %v1159 = vunpack.c.l.b16 %v1006
    %v1160 = vunpack.c.h.b16 %v1006
    %v1161 = vunpack.c.l.b16 %v1007
    %v1162 = vunpack.c.h.b16 %v1007
    %v1163 = vunpack.c.l.b16 %v1008
    %v1164 = vunpack.c.h.b16 %v1008
    %v1165 = vunpack.c.l.b16 %v1009
    %v1166 = vunpack.c.h.b16 %v1009
    %v1167 = vunpack.c.l.b16 %v1010
    %v1168 = vunpack.c.h.b16 %v1010
    %v1169 = vunpack.c.l.b16 %v1011
    %v1170 = vunpack.c.h.b16 %v1011
    %v1171 = vunpack.c.l.b16 %v1012
    %v1172 = vunpack.c.h.b16 %v1012
    %v1173 = vunpack.c.l.b16 %v1013
    %v1174 = vunpack.c.h.b16 %v1013
    %v1175 = vunpack.c.l.b16 %v1014
    %v1176 = vunpack.c.h.b16 %v1014
    %v1177 = vunpack.c.l.b16 %v1015
    %v1178 = vunpack.c.h.b16 %v1015
    %v1179 = vunpack.c.l.b16 %v1016
    %v1180 = vunpack.c.h.b16 %v1016
    %v1181 = vunpack.c.l.b16 %v1017
    %v1182 = vunpack.c.h.b16 %v1017
    %v1183 = vunpack.c.l.b16 %v1018
    %v1184 = vunpack.c.h.b16 %v1018
    %v1185 = vunpack.c.l.b16 %v1019
    %v1186 = vunpack.c.h.b16 %v1019
    %v1187 = vunpack.c.l.b16 %v1020
    %v1188 = vunpack.c.h.b16 %v1020
    %v1189 = vunpack.c.l.b16 %v1021
    %v1190 = vunpack.c.h.b16 %v1021
    %v1191 = vunpack.c.l.b16 %v1022
    %v1192 = vunpack.c.h.b16 %v1022
    %v1193 = vunpack.c.l.b16 %v1023
    %v1194 = vunpack.c.h.b16 %v1023
    %v1195 = vunpack.c.l.b16 %v1024
    %v1196 = vunpack.c.h.b16 %v1024
    %v1197 = vunpack.c.l.b16 %v1025
    %v1198 = vunpack.c.h.b16 %v1025
    %v1199 = vunpack.c.l.b16 %v1026
    %v1200 = vunpack.c.h.b16 %v1026
    %v1201 = vunpack.c.l.b16 %v1027
    %v1202 = vunpack.c.h.b16 %v1027
    %v1203 = vunpack.c.l.b16 %v1028
    %v1204 = vunpack.c.h.b16 %v1028
    %v1205 = vunpack.c.l.b16 %v1029
    %v1206 = vunpack.c.h.b16 %v1029
    %v1207 = vunpack.c.l.b16 %v1030
    %v1208 = vunpack.c.h.b16 %v1030
    %v1209 = vunpack.c.l.b16 %v1031
    %v1210 = vunpack.c.h.b16 %v1031
    %v1211 = vunpack.c.l.b16 %v1032
    %v1212 = vunpack.c.h.b16 %v1032
    %v1213 = vunpack.c.l.b16 %v1033
    %v1214 = vunpack.c.h.b16 %v1033
    %v1215 = vunpack.c.l.b16 %v1034
    %v1216 = vunpack.c.h.b16 %v1034
    %v1217 = vunpack.c.l.b16 %v1035
    %v1218 = vunpack.c.h.b16 %v1035
    %v1219 = vunpack.c.l.b16 %v1036
    %v1220 = vunpack.c.h.b16 %v1036
    %v1221 = vunpack.c.l.b16 %v1037
    %v1222 = vunpack.c.h.b16 %v1037
    %v1223 = vunpack.c.l.b16 %v1038
    %v1224 = vunpack.c.h.b16 %v1038
    %v1225 = vunpack.c.l.b16 %v1039
    %v1226 = vunpack.c.h.b16 %v1039
    %v1227 = vunpack.c.l.b16 %v1040
    %v1228 = vunpack.c.h.b16 %v1040
    %v1229 = vunpack.c.l.b16 %v1041
    %v1230 = vunpack.c.h.b16 %v1041
    %v1231 = vunpack.c.l.b16 %v1042
    %v1232 = vunpack.c.h.b16 %v1042
    %v1233 = vunpack.c.l.b16 %v1043
    %v1234 = vunpack.c.h.b16 %v1043
    %v1235 = vunpack.c.l.b16 %v1044
    %v1236 = vunpack.c.h.b16 %v1044
    %v1237 = vpack.c.b16 %v1113, %v1109
    %v1238 = vpack.c.b16 %v1114, %v1110
    %v1239 = vpack.c.b16 %v1115, %v1111
    %v1240 = vpack.c.b16 %v1116, %v1112
    %v1241 = vpack.c.b16 %v1121, %v1117
    %v1242 = vpack.c.b16 %v1122, %v1118
    %v1243 = vpack.c.b16 %v1123, %v1119
    %v1244 = vpack.c.b16 %v1124, %v1120
    %v1245 = vpack.c.b16 %v1129, %v1125
    %v1246 = vpack.c.b16 %v1130, %v1126
    %v1247 = vpack.c.b16 %v1131, %v1127
    %v1248 = vpack.c.b16 %v1132, %v1128
    %v1249 = vpack.c.b16 %v1137, %v1133
    %v1250 = vpack.c.b16 %v1138, %v1134
    %v1251 = vpack.c.b16 %v1139, %v1135
    %v1252 = vpack.c.b16 %v1140, %v1136
    %v1253 = vpack.c.b16 %v1145, %v1141
    %v1254 = vpack.c.b16 %v1146, %v1142
    %v1255 = vpack.c.b16 %v1147, %v1143
    %v1256 = vpack.c.b16 %v1148, %v1144
    %v1257 = vpack.c.b16 %v1153, %v1149
    %v1258 = vpack.c.b16 %v1154, %v1150
    %v1259 = vpack.c.b16 %v1155, %v1151
    %v1260 = vpack.c.b16 %v1156, %v1152
    %v1261 = vpack.c.b16 %v1161, %v1157
    %v1262 = vpack.c.b16 %v1162, %v1158
    %v1263 = vpack.c.b16 %v1163, %v1159
    %v1264 = vpack.c.b16 %v1164, %v1160
    %v1265 = vpack.c.b16 %v1169, %v1165
    %v1266 = vpack.c.b16 %v1170, %v1166
    %v1267 = vpack.c.b16 %v1171, %v1167
    %v1268 = vpack.c.b16 %v1172, %v1168
    %v1269 = vpack.c.b16 %v1177, %v1173
    %v1270 = vpack.c.b16 %v1178, %v1174
    %v1271 = vpack.c.b16 %v1179, %v1175
    %v1272 = vpack.c.b16 %v1180, %v1176
    %v1273 = vpack.c.b16 %v1185, %v1181
    %v1274 = vpack.c.b16 %v1186, %v1182
    %v1275 = vpack.c.b16 %v1187, %v1183
    %v1276 = vpack.c.b16 %v1188, %v1184
    %v1277 = vpack.c.b16 %v1193, %v1189
    %v1278 = vpack.c.b16 %v1194, %v1190
    %v1279 = vpack.c.b16 %v1195, %v1191
    %v1280 = vpack.c.b16 %v1196, %v1192
    %v1281 = vpack.c.b16 %v1201, %v1197
    %v1282 = vpack.c.b16 %v1202, %v1198
    %v1283 = vpack.c.b16 %v1203, %v1199
    %v1284 = vpack.c.b16 %v1204, %v1200
    %v1285 = vpack.c.b16 %v1209, %v1205
    %v1286 = vpack.c.b16 %v1210, %v1206
    %v1287 = vpack.c.b16 %v1211, %v1207
    %v1288 = vpack.c.b16 %v1212, %v1208
    %v1289 = vpack.c.b16 %v1217, %v1213
    %v1290 = vpack.c.b16 %v1218, %v1214
    %v1291 = vpack.c.b16 %v1219, %v1215
    %v1292 = vpack.c.b16 %v1220, %v1216
    %v1293 = vpack.c.b16 %v1225, %v1221
    %v1294 = vpack.c.b16 %v1226, %v1222
    %v1295 = vpack.c.b16 %v1227, %v1223
    %v1296 = vpack.c.b16 %v1228, %v1224
    %v1297 = vpack.c.b16 %v1233, %v1229
    %v1298 = vpack.c.b16 %v1234, %v1230
    %v1299 = vpack.c.b16 %v1235, %v1231
    %v1300 = vpack.c.b16 %v1236, %v1232
    %1365 = vmatprep.subr.bf16.mxu0 %v1266
    %1366 = vmatpush1.bf16.msra.mxu0 %v1265
    %1367 = vmatprep.subr.bf16.mxu0 %v1262
    %1368 = vmatpush1.bf16.msra.mxu0 %v1261
    %1369 = vmatprep.subr.bf16.mxu0 %v1258
    %1370 = vmatpush1.bf16.msra.mxu0 %v1257
    %1371 = vmatprep.subr.bf16.mxu0 %v1254
    %1372 = vmatpush1.bf16.msra.mxu0 %v1253
    %1373 = vmatprep.subr.bf16.mxu0 %v1250
    %1374 = vmatpush1.bf16.msra.mxu0 %v1249
    %1375 = vmatprep.subr.bf16.mxu0 %v1246
    %1376 = vmatpush1.bf16.msra.mxu0 %v1245
    %1377 = vmatprep.subr.bf16.mxu0 %v1242
    %1378 = vmatpush1.bf16.msra.mxu0 %v1241
    %1379 = vmatprep.subr.bf16.mxu0 %v1238
    %1380 = vmatpush1.bf16.msra.mxu0 %v1237
    %1381 = vmatprep.subr.bf16.mxu0 %v1298
    %1382 = vmatpush2.bf16.msra.mxu0 %v1297
    %1383 = vmatprep.subr.bf16.mxu0 %v1294
    %1384 = vmatpush2.bf16.msra.mxu0 %v1293
    %1385 = vmatprep.subr.bf16.mxu0 %v1290
    %1386 = vmatpush2.bf16.msra.mxu0 %v1289
    %1387 = vmatprep.subr.bf16.mxu0 %v1286
    %1388 = vmatpush2.bf16.msra.mxu0 %v1285
    %1389 = vmatprep.subr.bf16.mxu0 %v1282
    %1390 = vmatpush2.bf16.msra.mxu0 %v1281
    %1391 = vmatprep.subr.bf16.mxu0 %v1278
    %1392 = vmatpush2.bf16.msra.mxu0 %v1277
    %1393 = vmatprep.subr.bf16.mxu0 %v1274
    %1394 = vmatpush2.bf16.msra.mxu0 %v1273
    %1395 = vmatprep.subr.bf16.mxu0 %v1270
    %1396 = vmatpush2.bf16.msra.mxu0 %v1269
    %1397 = vmatprep.mubr.bf16.mxu0 %v980
    %1398 = vmatmul.mubr.bf16.gmra.mxu0 %v979
    %v1399 = vpop.f32.mrf.mxu0
    %v1400 = vadd.f32 0.0, %v1399
    %v1401 = vpop.f32.mrf.mxu0
    %v1402 = vadd.f32 0.0, %v1401
    %v1403 = vpop.f32.mrf.mxu0
    %v1404 = vadd.f32 0.0, %v1403
    %v1405 = vpop.f32.mrf.mxu0
    %v1406 = vadd.f32 0.0, %v1405
    %1407 = vdwg.mxu0
    %1408 = vmatprep.subr.bf16.mxu0 %v1268
    %1409 = vmatpush1.bf16.msra.mxu0 %v1267
    %1410 = vmatprep.subr.bf16.mxu0 %v1264
    %1411 = vmatpush1.bf16.msra.mxu0 %v1263
    %1412 = vmatprep.subr.bf16.mxu0 %v1260
    %1413 = vmatpush1.bf16.msra.mxu0 %v1259
    %1414 = vmatprep.subr.bf16.mxu0 %v1256
    %1415 = vmatpush1.bf16.msra.mxu0 %v1255
    %1416 = vmatprep.subr.bf16.mxu0 %v1252
    %1417 = vmatpush1.bf16.msra.mxu0 %v1251
    %1418 = vmatprep.subr.bf16.mxu0 %v1248
    %1419 = vmatpush1.bf16.msra.mxu0 %v1247
    %1420 = vmatprep.subr.bf16.mxu0 %v1244
    %1421 = vmatpush1.bf16.msra.mxu0 %v1243
    %1422 = vmatprep.subr.bf16.mxu0 %v1240
    %1423 = vmatpush1.bf16.msra.mxu0 %v1239
    %1424 = vmatprep.subr.bf16.mxu0 %v1300
    %1425 = vmatpush2.bf16.msra.mxu0 %v1299
    %1426 = vmatprep.subr.bf16.mxu0 %v1296
    %1427 = vmatpush2.bf16.msra.mxu0 %v1295
    %1428 = vmatprep.subr.bf16.mxu0 %v1292
    %1429 = vmatpush2.bf16.msra.mxu0 %v1291
    %1430 = vmatprep.subr.bf16.mxu0 %v1288
    %1431 = vmatpush2.bf16.msra.mxu0 %v1287
    %1432 = vmatprep.subr.bf16.mxu0 %v1284
    %1433 = vmatpush2.bf16.msra.mxu0 %v1283
    %1434 = vmatprep.subr.bf16.mxu0 %v1280
    %1435 = vmatpush2.bf16.msra.mxu0 %v1279
    %1436 = vmatprep.subr.bf16.mxu0 %v1276
    %1437 = vmatpush2.bf16.msra.mxu0 %v1275
    %1438 = vmatprep.subr.bf16.mxu0 %v1272
    %1439 = vmatpush2.bf16.msra.mxu0 %v1271
    %1440 = vmatprep.mubr.bf16.mxu0 %v980
    %1441 = vmatmul.mubr.bf16.gmra.mxu0 %v979
    %v1442 = vpop.f32.mrf.mxu0
    %v1443 = vadd.f32 0.0, %v1442
    %v1444 = vpop.f32.mrf.mxu0
    %v1445 = vadd.f32 0.0, %v1444
    %v1446 = vpop.f32.mrf.mxu0
    %v1447 = vadd.f32 0.0, %v1446
    %v1448 = vpop.f32.mrf.mxu0
    %v1449 = vadd.f32 0.0, %v1448
    %1450 = vdwg.mxu0
    %v1483 = vunpack.c.l.b16 %v947
    %v1484 = vunpack.c.h.b16 %v947
    %v1485 = vunpack.c.l.b16 %v948
    %v1486 = vunpack.c.h.b16 %v948
    %v1487 = vunpack.c.l.b16 %v949
    %v1488 = vunpack.c.h.b16 %v949
    %v1489 = vunpack.c.l.b16 %v950
    %v1490 = vunpack.c.h.b16 %v950
    %v1491 = vunpack.c.l.b16 %v951
    %v1492 = vunpack.c.h.b16 %v951
    %v1493 = vunpack.c.l.b16 %v952
    %v1494 = vunpack.c.h.b16 %v952
    %v1495 = vunpack.c.l.b16 %v953
    %v1496 = vunpack.c.h.b16 %v953
    %v1497 = vunpack.c.l.b16 %v954
    %v1498 = vunpack.c.h.b16 %v954
    %v1499 = vunpack.c.l.b16 %v955
    %v1500 = vunpack.c.h.b16 %v955
    %v1501 = vunpack.c.l.b16 %v956
    %v1502 = vunpack.c.h.b16 %v956
    %v1503 = vunpack.c.l.b16 %v957
    %v1504 = vunpack.c.h.b16 %v957
    %v1505 = vunpack.c.l.b16 %v958
    %v1506 = vunpack.c.h.b16 %v958
    %v1507 = vunpack.c.l.b16 %v959
    %v1508 = vunpack.c.h.b16 %v959
    %v1509 = vunpack.c.l.b16 %v960
    %v1510 = vunpack.c.h.b16 %v960
    %v1511 = vunpack.c.l.b16 %v961
    %v1512 = vunpack.c.h.b16 %v961
    %v1513 = vunpack.c.l.b16 %v962
    %v1514 = vunpack.c.h.b16 %v962
    %v1515 = vunpack.c.l.b16 %v963
    %v1516 = vunpack.c.h.b16 %v963
    %v1517 = vunpack.c.l.b16 %v964
    %v1518 = vunpack.c.h.b16 %v964
    %v1519 = vunpack.c.l.b16 %v965
    %v1520 = vunpack.c.h.b16 %v965
    %v1521 = vunpack.c.l.b16 %v966
    %v1522 = vunpack.c.h.b16 %v966
    %v1523 = vunpack.c.l.b16 %v967
    %v1524 = vunpack.c.h.b16 %v967
    %v1525 = vunpack.c.l.b16 %v968
    %v1526 = vunpack.c.h.b16 %v968
    %v1527 = vunpack.c.l.b16 %v969
    %v1528 = vunpack.c.h.b16 %v969
    %v1529 = vunpack.c.l.b16 %v970
    %v1530 = vunpack.c.h.b16 %v970
    %v1531 = vunpack.c.l.b16 %v971
    %v1532 = vunpack.c.h.b16 %v971
    %v1533 = vunpack.c.l.b16 %v972
    %v1534 = vunpack.c.h.b16 %v972
    %v1535 = vunpack.c.l.b16 %v973
    %v1536 = vunpack.c.h.b16 %v973
    %v1537 = vunpack.c.l.b16 %v974
    %v1538 = vunpack.c.h.b16 %v974
    %v1539 = vunpack.c.l.b16 %v975
    %v1540 = vunpack.c.h.b16 %v975
    %v1541 = vunpack.c.l.b16 %v976
    %v1542 = vunpack.c.h.b16 %v976
    %v1543 = vunpack.c.l.b16 %v977
    %v1544 = vunpack.c.h.b16 %v977
    %v1545 = vunpack.c.l.b16 %v978
    %v1546 = vunpack.c.h.b16 %v978
    %v1547 = vpack.c.b16 %v1487, %v1483
    %v1548 = vpack.c.b16 %v1488, %v1484
    %v1549 = vpack.c.b16 %v1489, %v1485
    %v1550 = vpack.c.b16 %v1490, %v1486
    %v1551 = vpack.c.b16 %v1495, %v1491
    %v1552 = vpack.c.b16 %v1496, %v1492
    %v1553 = vpack.c.b16 %v1497, %v1493
    %v1554 = vpack.c.b16 %v1498, %v1494
    %v1555 = vpack.c.b16 %v1503, %v1499
    %v1556 = vpack.c.b16 %v1504, %v1500
    %v1557 = vpack.c.b16 %v1505, %v1501
    %v1558 = vpack.c.b16 %v1506, %v1502
    %v1559 = vpack.c.b16 %v1511, %v1507
    %v1560 = vpack.c.b16 %v1512, %v1508
    %v1561 = vpack.c.b16 %v1513, %v1509
    %v1562 = vpack.c.b16 %v1514, %v1510
    %v1563 = vpack.c.b16 %v1519, %v1515
    %v1564 = vpack.c.b16 %v1520, %v1516
    %v1565 = vpack.c.b16 %v1521, %v1517
    %v1566 = vpack.c.b16 %v1522, %v1518
    %v1567 = vpack.c.b16 %v1527, %v1523
    %v1568 = vpack.c.b16 %v1528, %v1524
    %v1569 = vpack.c.b16 %v1529, %v1525
    %v1570 = vpack.c.b16 %v1530, %v1526
    %v1571 = vpack.c.b16 %v1535, %v1531
    %v1572 = vpack.c.b16 %v1536, %v1532
    %v1573 = vpack.c.b16 %v1537, %v1533
    %v1574 = vpack.c.b16 %v1538, %v1534
    %v1575 = vpack.c.b16 %v1543, %v1539
    %v1576 = vpack.c.b16 %v1544, %v1540
    %v1577 = vpack.c.b16 %v1545, %v1541
    %v1578 = vpack.c.b16 %v1546, %v1542
    %1611 = vmatprep.subr.bf16.mxu0 %v1576
    %1612 = vmatpush1.bf16.msra.mxu0 %v1575
    %1613 = vmatprep.subr.bf16.mxu0 %v1572
    %1614 = vmatpush1.bf16.msra.mxu0 %v1571
    %1615 = vmatprep.subr.bf16.mxu0 %v1568
    %1616 = vmatpush1.bf16.msra.mxu0 %v1567
    %1617 = vmatprep.subr.bf16.mxu0 %v1564
    %1618 = vmatpush1.bf16.msra.mxu0 %v1563
    %1619 = vmatprep.subr.bf16.mxu0 %v1560
    %1620 = vmatpush1.bf16.msra.mxu0 %v1559
    %1621 = vmatprep.subr.bf16.mxu0 %v1556
    %1622 = vmatpush1.bf16.msra.mxu0 %v1555
    %1623 = vmatprep.subr.bf16.mxu0 %v1552
    %1624 = vmatpush1.bf16.msra.mxu0 %v1551
    %1625 = vmatprep.subr.bf16.mxu0 %v1548
    %1626 = vmatpush1.bf16.msra.mxu0 %v1547
    %1627 = vmatprep.subr.bf16.mxu0 0
    %1628 = vmatpush2.bf16.msra.mxu0 0
    %1629 = vmatprep.subr.bf16.mxu0 0
    %1630 = vmatpush2.bf16.msra.mxu0 0
    %1631 = vmatprep.subr.bf16.mxu0 0
    %1632 = vmatpush2.bf16.msra.mxu0 0
    %1633 = vmatprep.subr.bf16.mxu0 0
    %1634 = vmatpush2.bf16.msra.mxu0 0
    %1635 = vmatprep.subr.bf16.mxu0 0
    %1636 = vmatpush2.bf16.msra.mxu0 0
    %1637 = vmatprep.subr.bf16.mxu0 0
    %1638 = vmatpush2.bf16.msra.mxu0 0
    %1639 = vmatprep.subr.bf16.mxu0 0
    %1640 = vmatpush2.bf16.msra.mxu0 0
    %1641 = vmatprep.subr.bf16.mxu0 0
    %1642 = vmatpush2.bf16.msra.mxu0 0
    %1643 = vmatprep.mubr.bf16.mxu0 0
    %1644 = vmatmul.mubr.bf16.gmra.mxu0 %v946
    %v1645 = vpop.f32.mrf.mxu0
    %v1646 = vadd.f32 %v1400, %v1645
    %v1647 = vpop.f32.mrf.mxu0
    %v1648 = vadd.f32 %v1402, %v1647
    %v1649 = vpop.f32.mrf.mxu0
    %v1650 = vadd.f32 %v1404, %v1649
    %v1651 = vpop.f32.mrf.mxu0
    %v1652 = vadd.f32 %v1406, %v1651
    %1653 = vdwg.mxu0
    %1654 = vmatprep.subr.bf16.mxu0 %v1578
    %1655 = vmatpush1.bf16.msra.mxu0 %v1577
    %1656 = vmatprep.subr.bf16.mxu0 %v1574
    %1657 = vmatpush1.bf16.msra.mxu0 %v1573
    %1658 = vmatprep.subr.bf16.mxu0 %v1570
    %1659 = vmatpush1.bf16.msra.mxu0 %v1569
    %1660 = vmatprep.subr.bf16.mxu0 %v1566
    %1661 = vmatpush1.bf16.msra.mxu0 %v1565
    %1662 = vmatprep.subr.bf16.mxu0 %v1562
    %1663 = vmatpush1.bf16.msra.mxu0 %v1561
    %1664 = vmatprep.subr.bf16.mxu0 %v1558
    %1665 = vmatpush1.bf16.msra.mxu0 %v1557
    %1666 = vmatprep.subr.bf16.mxu0 %v1554
    %1667 = vmatpush1.bf16.msra.mxu0 %v1553
    %1668 = vmatprep.subr.bf16.mxu0 %v1550
    %1669 = vmatpush1.bf16.msra.mxu0 %v1549
    %1670 = vmatprep.subr.bf16.mxu0 0
    %1671 = vmatpush2.bf16.msra.mxu0 0
    %1672 = vmatprep.subr.bf16.mxu0 0
    %1673 = vmatpush2.bf16.msra.mxu0 0
    %1674 = vmatprep.subr.bf16.mxu0 0
    %1675 = vmatpush2.bf16.msra.mxu0 0
    %1676 = vmatprep.subr.bf16.mxu0 0
    %1677 = vmatpush2.bf16.msra.mxu0 0
    %1678 = vmatprep.subr.bf16.mxu0 0
    %1679 = vmatpush2.bf16.msra.mxu0 0
    %1680 = vmatprep.subr.bf16.mxu0 0
    %1681 = vmatpush2.bf16.msra.mxu0 0
    %1682 = vmatprep.subr.bf16.mxu0 0
    %1683 = vmatpush2.bf16.msra.mxu0 0
    %1684 = vmatprep.subr.bf16.mxu0 0
    %1685 = vmatpush2.bf16.msra.mxu0 0
    %1686 = vmatprep.mubr.bf16.mxu0 0
    %1687 = vmatmul.mubr.bf16.gmra.mxu0 %v946
    %v1688 = vpop.f32.mrf.mxu0
    %v1689 = vadd.f32 %v1443, %v1688
    %v1690 = vpop.f32.mrf.mxu0
    %v1691 = vadd.f32 %v1445, %v1690
    %v1692 = vpop.f32.mrf.mxu0
    %v1693 = vadd.f32 %v1447, %v1692
    %v1694 = vpop.f32.mrf.mxu0
    %v1695 = vadd.f32 %v1449, %v1694
    %1696 = vdwg.mxu0
    %s1697 = scalar_lea.vmem %s2, 2
    %v1698 = vld [vmem:[%s1697] ss:$8 sm:$0xf]
    %v1700 = vlaneseq
    %v1701 = vshrl.u32 %v1700, 7
    %v1702 = vsub.s32 0, %v1701
    %v1703 = vrot.slane %v1698, %v1702
    %v1704 = vlaneseq
    %v1705 = vshrl.u32 %v1704, 7
    %v1706 = vsub.s32 1, %v1705
    %v1707 = vrot.slane %v1698, %v1706
    %v1708 = vlaneseq
    %v1709 = vshrl.u32 %v1708, 7
    %v1710 = vsub.s32 2, %v1709
    %v1711 = vrot.slane %v1698, %v1710
    %v1712 = vlaneseq
    %v1713 = vshrl.u32 %v1712, 7
    %v1714 = vsub.s32 3, %v1713
    %v1715 = vrot.slane %v1698, %v1714
    %v1720 = vadd.f32 %v1646, %v1703
    %v1721 = vadd.f32 %v1648, %v1707
    %v1722 = vadd.f32 %v1689, %v1711
    %v1723 = vadd.f32 %v1691, %v1715
    %v1724 = vadd.f32 %v1650, %v1703
    %v1725 = vadd.f32 %v1652, %v1707
    %v1726 = vadd.f32 %v1693, %v1711
    %v1727 = vadd.f32 %v1695, %v1715
    %v1728 = vadd.f32 %v1720, %v1721
    %v1729 = vadd.f32 %v1728, %v1722
    %v1730 = vadd.f32 %v1729, %v1723
    %1731 = vadd.xlane.f32.xlu0 %v1730
    %v1732 = vpop.xlane.xlu0 %1731
    %v1733 = vadd.f32 %v1724, %v1725
    %v1734 = vadd.f32 %v1733, %v1726
    %v1735 = vadd.f32 %v1734, %v1727
    %1736 = vadd.xlane.f32.xlu0 %v1735
    %v1737 = vpop.xlane.xlu0 %1736
    %v1738 = vrcp.pop 512.0
    %v1739 = vmul.f32 %v1732, %v1738
    %v1740 = vmul.f32 %v1737, %v1738
    %v1741 = vmul.f32 %v1720, %v1720
    %v1742 = vmul.f32 %v1721, %v1721
    %v1743 = vmul.f32 %v1722, %v1722
    %v1744 = vmul.f32 %v1723, %v1723
    %v1745 = vmul.f32 %v1724, %v1724
    %v1746 = vmul.f32 %v1725, %v1725
    %v1747 = vmul.f32 %v1726, %v1726
    %v1748 = vmul.f32 %v1727, %v1727
    %v1749 = vadd.f32 %v1741, %v1742
    %v1750 = vadd.f32 %v1749, %v1743
    %v1751 = vadd.f32 %v1750, %v1744
    %1752 = vadd.xlane.f32.xlu0 %v1751
    %v1753 = vpop.xlane.xlu0 %1752
    %v1754 = vadd.f32 %v1745, %v1746
    %v1755 = vadd.f32 %v1754, %v1747
    %v1756 = vadd.f32 %v1755, %v1748
    %1757 = vadd.xlane.f32.xlu0 %v1756
    %v1758 = vpop.xlane.xlu0 %1757
    %v1759 = vmul.f32 %v1753, %v1738
    %v1760 = vmul.f32 %v1758, %v1738
    %v1761 = vmul.f32 %v1739, %v1739
    %v1762 = vmul.f32 %v1740, %v1740
    %v1763 = vsub.f32 %v1759, %v1761
    %v1764 = vsub.f32 %v1760, %v1762
    %v1765 = vadd.f32 %v1763, 1e-05
    %v1766 = vadd.f32 %v1764, 1e-05
    %v1767 = vrsqrt.pop %v1765
    %v1768 = vrsqrt.pop %v1766
    %v1769 = vsub.f32 %v1720, %v1739
    %v1770 = vsub.f32 %v1721, %v1739
    %v1771 = vsub.f32 %v1722, %v1739
    %v1772 = vsub.f32 %v1723, %v1739
    %v1773 = vsub.f32 %v1724, %v1740
    %v1774 = vsub.f32 %v1725, %v1740
    %v1775 = vsub.f32 %v1726, %v1740
    %v1776 = vsub.f32 %v1727, %v1740
    %v1777 = vmul.f32 %v1769, %v1767
    %v1778 = vmul.f32 %v1770, %v1767
    %v1779 = vmul.f32 %v1771, %v1767
    %v1780 = vmul.f32 %v1772, %v1767
    %v1781 = vmul.f32 %v1773, %v1768
    %v1782 = vmul.f32 %v1774, %v1768
    %v1783 = vmul.f32 %v1775, %v1768
    %v1784 = vmul.f32 %v1776, %v1768
    %s1785 = scalar_lea.vmem %s2, 3
    %v1786 = vld [vmem:[%s1785] ss:$8 sm:$0xf]
    %v1788 = vlaneseq
    %v1789 = vshrl.u32 %v1788, 7
    %v1790 = vsub.s32 0, %v1789
    %v1791 = vrot.slane %v1786, %v1790
    %v1792 = vlaneseq
    %v1793 = vshrl.u32 %v1792, 7
    %v1794 = vsub.s32 1, %v1793
    %v1795 = vrot.slane %v1786, %v1794
    %v1796 = vlaneseq
    %v1797 = vshrl.u32 %v1796, 7
    %v1798 = vsub.s32 2, %v1797
    %v1799 = vrot.slane %v1786, %v1798
    %v1800 = vlaneseq
    %v1801 = vshrl.u32 %v1800, 7
    %v1802 = vsub.s32 3, %v1801
    %v1803 = vrot.slane %v1786, %v1802
    %v1808 = vmul.f32 %v1777, %v1791
    %v1809 = vmul.f32 %v1778, %v1795
    %v1810 = vmul.f32 %v1779, %v1799
    %v1811 = vmul.f32 %v1780, %v1803
    %v1812 = vmul.f32 %v1781, %v1791
    %v1813 = vmul.f32 %v1782, %v1795
    %v1814 = vmul.f32 %v1783, %v1799
    %v1815 = vmul.f32 %v1784, %v1803
    %s1816 = scalar_lea.vmem %s2, 4
    %v1817 = vld [vmem:[%s1816] ss:$8 sm:$0xf]
    %v1819 = vlaneseq
    %v1820 = vshrl.u32 %v1819, 7
    %v1821 = vsub.s32 0, %v1820
    %v1822 = vrot.slane %v1817, %v1821
    %v1823 = vlaneseq
    %v1824 = vshrl.u32 %v1823, 7
    %v1825 = vsub.s32 1, %v1824
    %v1826 = vrot.slane %v1817, %v1825
    %v1827 = vlaneseq
    %v1828 = vshrl.u32 %v1827, 7
    %v1829 = vsub.s32 2, %v1828
    %v1830 = vrot.slane %v1817, %v1829
    %v1831 = vlaneseq
    %v1832 = vshrl.u32 %v1831, 7
    %v1833 = vsub.s32 3, %v1832
    %v1834 = vrot.slane %v1817, %v1833
    %v1839 = vadd.f32 %v1808, %v1822
    %v1840 = vadd.f32 %v1809, %v1826
    %v1841 = vadd.f32 %v1810, %v1830
    %v1842 = vadd.f32 %v1811, %v1834
    %v1843 = vadd.f32 %v1812, %v1822
    %v1844 = vadd.f32 %v1813, %v1826
    %v1845 = vadd.f32 %v1814, %v1830
    %v1846 = vadd.f32 %v1815, %v1834
    %v1847 = vpack.c.bf16 %v1843, %v1839
    %v1848 = vpack.c.bf16 %v1844, %v1840
    %v1849 = vpack.c.bf16 %v1845, %v1841
    %v1850 = vpack.c.bf16 %v1846, %v1842
    %v1851 = vld [vmem:[#allocation10] sm:$0xff]
    %v1852 = vld [vmem:[#allocation10 + $0x8] sm:$0xff]
    %v1853 = vld [vmem:[#allocation10 + $0x10] sm:$0xff]
    %v1854 = vld [vmem:[#allocation10 + $0x18] sm:$0xff]
    %v1855 = vld [vmem:[#allocation10 + $0x20] sm:$0xff]
    %v1856 = vld [vmem:[#allocation10 + $0x28] sm:$0xff]
    %v1857 = vld [vmem:[#allocation10 + $0x30] sm:$0xff]
    %v1858 = vld [vmem:[#allocation10 + $0x38] sm:$0xff]
    %v1859 = vld [vmem:[#allocation10 + $0x40] sm:$0xff]
    %v1860 = vld [vmem:[#allocation10 + $0x48] sm:$0xff]
    %v1861 = vld [vmem:[#allocation10 + $0x50] sm:$0xff]
    %v1862 = vld [vmem:[#allocation10 + $0x58] sm:$0xff]
    %v1863 = vld [vmem:[#allocation10 + $0x60] sm:$0xff]
    %v1864 = vld [vmem:[#allocation10 + $0x68] sm:$0xff]
    %v1865 = vld [vmem:[#allocation10 + $0x70] sm:$0xff]
    %v1866 = vld [vmem:[#allocation10 + $0x78] sm:$0xff]
    %v1867 = vld [vmem:[#allocation10 + $0x80] sm:$0xff]
    %v1868 = vld [vmem:[#allocation10 + $0x88] sm:$0xff]
    %v1869 = vld [vmem:[#allocation10 + $0x90] sm:$0xff]
    %v1870 = vld [vmem:[#allocation10 + $0x98] sm:$0xff]
    %v1871 = vld [vmem:[#allocation10 + $0xa0] sm:$0xff]
    %v1872 = vld [vmem:[#allocation10 + $0xa8] sm:$0xff]
    %v1873 = vld [vmem:[#allocation10 + $0xb0] sm:$0xff]
    %v1874 = vld [vmem:[#allocation10 + $0xb8] sm:$0xff]
    %v1875 = vld [vmem:[#allocation10 + $0xc0] sm:$0xff]
    %v1876 = vld [vmem:[#allocation10 + $0xc8] sm:$0xff]
    %v1877 = vld [vmem:[#allocation10 + $0xd0] sm:$0xff]
    %v1878 = vld [vmem:[#allocation10 + $0xd8] sm:$0xff]
    %v1879 = vld [vmem:[#allocation10 + $0xe0] sm:$0xff]
    %v1880 = vld [vmem:[#allocation10 + $0xe8] sm:$0xff]
    %v1881 = vld [vmem:[#allocation10 + $0xf0] sm:$0xff]
    %v1882 = vld [vmem:[#allocation10 + $0xf8] sm:$0xff]
    %v1883 = vld [vmem:[#allocation10 + $0x100] sm:$0xff]
    %v1884 = vld [vmem:[#allocation10 + $0x108] sm:$0xff]
    %v1885 = vld [vmem:[#allocation10 + $0x110] sm:$0xff]
    %v1886 = vld [vmem:[#allocation10 + $0x118] sm:$0xff]
    %v1887 = vld [vmem:[#allocation10 + $0x120] sm:$0xff]
    %v1888 = vld [vmem:[#allocation10 + $0x128] sm:$0xff]
    %v1889 = vld [vmem:[#allocation10 + $0x130] sm:$0xff]
    %v1890 = vld [vmem:[#allocation10 + $0x138] sm:$0xff]
    %v1891 = vld [vmem:[#allocation10 + $0x140] sm:$0xff]
    %v1892 = vld [vmem:[#allocation10 + $0x148] sm:$0xff]
    %v1893 = vld [vmem:[#allocation10 + $0x150] sm:$0xff]
    %v1894 = vld [vmem:[#allocation10 + $0x158] sm:$0xff]
    %v1895 = vld [vmem:[#allocation10 + $0x160] sm:$0xff]
    %v1896 = vld [vmem:[#allocation10 + $0x168] sm:$0xff]
    %v1897 = vld [vmem:[#allocation10 + $0x170] sm:$0xff]
    %v1898 = vld [vmem:[#allocation10 + $0x178] sm:$0xff]
    %v1899 = vld [vmem:[#allocation10 + $0x180] sm:$0xff]
    %v1900 = vld [vmem:[#allocation10 + $0x188] sm:$0xff]
    %v1901 = vld [vmem:[#allocation10 + $0x190] sm:$0xff]
    %v1902 = vld [vmem:[#allocation10 + $0x198] sm:$0xff]
    %v1903 = vld [vmem:[#allocation10 + $0x1a0] sm:$0xff]
    %v1904 = vld [vmem:[#allocation10 + $0x1a8] sm:$0xff]
    %v1905 = vld [vmem:[#allocation10 + $0x1b0] sm:$0xff]
    %v1906 = vld [vmem:[#allocation10 + $0x1b8] sm:$0xff]
    %v1907 = vld [vmem:[#allocation10 + $0x1c0] sm:$0xff]
    %v1908 = vld [vmem:[#allocation10 + $0x1c8] sm:$0xff]
    %v1909 = vld [vmem:[#allocation10 + $0x1d0] sm:$0xff]
    %v1910 = vld [vmem:[#allocation10 + $0x1d8] sm:$0xff]
    %v1911 = vld [vmem:[#allocation10 + $0x1e0] sm:$0xff]
    %v1912 = vld [vmem:[#allocation10 + $0x1e8] sm:$0xff]
    %v1913 = vld [vmem:[#allocation10 + $0x1f0] sm:$0xff]
    %v1914 = vld [vmem:[#allocation10 + $0x1f8] sm:$0xff]
    %v1915 = vld [vmem:[#allocation10 + $0x200] sm:$0xff]
    %v1916 = vld [vmem:[#allocation10 + $0x208] sm:$0xff]
    %v1917 = vld [vmem:[#allocation10 + $0x210] sm:$0xff]
    %v1918 = vld [vmem:[#allocation10 + $0x218] sm:$0xff]
    %v1919 = vld [vmem:[#allocation10 + $0x220] sm:$0xff]
    %v1920 = vld [vmem:[#allocation10 + $0x228] sm:$0xff]
    %v1921 = vld [vmem:[#allocation10 + $0x230] sm:$0xff]
    %v1922 = vld [vmem:[#allocation10 + $0x238] sm:$0xff]
    %v1923 = vld [vmem:[#allocation10 + $0x240] sm:$0xff]
    %v1924 = vld [vmem:[#allocation10 + $0x248] sm:$0xff]
    %v1925 = vld [vmem:[#allocation10 + $0x250] sm:$0xff]
    %v1926 = vld [vmem:[#allocation10 + $0x258] sm:$0xff]
    %v1927 = vld [vmem:[#allocation10 + $0x260] sm:$0xff]
    %v1928 = vld [vmem:[#allocation10 + $0x268] sm:$0xff]
    %v1929 = vld [vmem:[#allocation10 + $0x270] sm:$0xff]
    %v1930 = vld [vmem:[#allocation10 + $0x278] sm:$0xff]
    %v1931 = vld [vmem:[#allocation10 + $0x280] sm:$0xff]
    %v1932 = vld [vmem:[#allocation10 + $0x288] sm:$0xff]
    %v1933 = vld [vmem:[#allocation10 + $0x290] sm:$0xff]
    %v1934 = vld [vmem:[#allocation10 + $0x298] sm:$0xff]
    %v1935 = vld [vmem:[#allocation10 + $0x2a0] sm:$0xff]
    %v1936 = vld [vmem:[#allocation10 + $0x2a8] sm:$0xff]
    %v1937 = vld [vmem:[#allocation10 + $0x2b0] sm:$0xff]
    %v1938 = vld [vmem:[#allocation10 + $0x2b8] sm:$0xff]
    %v1939 = vld [vmem:[#allocation10 + $0x2c0] sm:$0xff]
    %v1940 = vld [vmem:[#allocation10 + $0x2c8] sm:$0xff]
    %v1941 = vld [vmem:[#allocation10 + $0x2d0] sm:$0xff]
    %v1942 = vld [vmem:[#allocation10 + $0x2d8] sm:$0xff]
    %v1943 = vld [vmem:[#allocation10 + $0x2e0] sm:$0xff]
    %v1944 = vld [vmem:[#allocation10 + $0x2e8] sm:$0xff]
    %v1945 = vld [vmem:[#allocation10 + $0x2f0] sm:$0xff]
    %v1946 = vld [vmem:[#allocation10 + $0x2f8] sm:$0xff]
    %v1947 = vld [vmem:[#allocation10 + $0x300] sm:$0xff]
    %v1948 = vld [vmem:[#allocation10 + $0x308] sm:$0xff]
    %v1949 = vld [vmem:[#allocation10 + $0x310] sm:$0xff]
    %v1950 = vld [vmem:[#allocation10 + $0x318] sm:$0xff]
    %v1951 = vld [vmem:[#allocation10 + $0x320] sm:$0xff]
    %v1952 = vld [vmem:[#allocation10 + $0x328] sm:$0xff]
    %v1953 = vld [vmem:[#allocation10 + $0x330] sm:$0xff]
    %v1954 = vld [vmem:[#allocation10 + $0x338] sm:$0xff]
    %v1955 = vld [vmem:[#allocation10 + $0x340] sm:$0xff]
    %v1956 = vld [vmem:[#allocation10 + $0x348] sm:$0xff]
    %v1957 = vld [vmem:[#allocation10 + $0x350] sm:$0xff]
    %v1958 = vld [vmem:[#allocation10 + $0x358] sm:$0xff]
    %v1959 = vld [vmem:[#allocation10 + $0x360] sm:$0xff]
    %v1960 = vld [vmem:[#allocation10 + $0x368] sm:$0xff]
    %v1961 = vld [vmem:[#allocation10 + $0x370] sm:$0xff]
    %v1962 = vld [vmem:[#allocation10 + $0x378] sm:$0xff]
    %v1963 = vld [vmem:[#allocation10 + $0x380] sm:$0xff]
    %v1964 = vld [vmem:[#allocation10 + $0x388] sm:$0xff]
    %v1965 = vld [vmem:[#allocation10 + $0x390] sm:$0xff]
    %v1966 = vld [vmem:[#allocation10 + $0x398] sm:$0xff]
    %v1967 = vld [vmem:[#allocation10 + $0x3a0] sm:$0xff]
    %v1968 = vld [vmem:[#allocation10 + $0x3a8] sm:$0xff]
    %v1969 = vld [vmem:[#allocation10 + $0x3b0] sm:$0xff]
    %v1970 = vld [vmem:[#allocation10 + $0x3b8] sm:$0xff]
    %v1971 = vld [vmem:[#allocation10 + $0x3c0] sm:$0xff]
    %v1972 = vld [vmem:[#allocation10 + $0x3c8] sm:$0xff]
    %v1973 = vld [vmem:[#allocation10 + $0x3d0] sm:$0xff]
    %v1974 = vld [vmem:[#allocation10 + $0x3d8] sm:$0xff]
    %v1975 = vld [vmem:[#allocation10 + $0x3e0] sm:$0xff]
    %v1976 = vld [vmem:[#allocation10 + $0x3e8] sm:$0xff]
    %v1977 = vld [vmem:[#allocation10 + $0x3f0] sm:$0xff]
    %v1978 = vld [vmem:[#allocation10 + $0x3f8] sm:$0xff]
    %s1979 = scalar_lea.vmem %s2, 5
    %v1980 = vld [vmem:[%s1979] ss:$8 sm:$0xf]
    %v1982 = vlaneseq
    %v1983 = vshrl.u32 %v1982, 7
    %v1984 = vsub.s32 0, %v1983
    %v1985 = vrot.slane %v1980, %v1984
    %v1986 = vlaneseq
    %v1987 = vshrl.u32 %v1986, 7
    %v1988 = vsub.s32 1, %v1987
    %v1989 = vrot.slane %v1980, %v1988
    %v1990 = vlaneseq
    %v1991 = vshrl.u32 %v1990, 7
    %v1992 = vsub.s32 2, %v1991
    %v1993 = vrot.slane %v1980, %v1992
    %v1994 = vlaneseq
    %v1995 = vshrl.u32 %v1994, 7
    %v1996 = vsub.s32 3, %v1995
    %v1997 = vrot.slane %v1980, %v1996
    %v2130 = vunpack.c.l.b16 %v1851
    %v2131 = vunpack.c.h.b16 %v1851
    %v2132 = vunpack.c.l.b16 %v1852
    %v2133 = vunpack.c.h.b16 %v1852
    %v2134 = vunpack.c.l.b16 %v1853
    %v2135 = vunpack.c.h.b16 %v1853
    %v2136 = vunpack.c.l.b16 %v1854
    %v2137 = vunpack.c.h.b16 %v1854
    %v2138 = vunpack.c.l.b16 %v1855
    %v2139 = vunpack.c.h.b16 %v1855
    %v2140 = vunpack.c.l.b16 %v1856
    %v2141 = vunpack.c.h.b16 %v1856
    %v2142 = vunpack.c.l.b16 %v1857
    %v2143 = vunpack.c.h.b16 %v1857
    %v2144 = vunpack.c.l.b16 %v1858
    %v2145 = vunpack.c.h.b16 %v1858
    %v2146 = vunpack.c.l.b16 %v1859
    %v2147 = vunpack.c.h.b16 %v1859
    %v2148 = vunpack.c.l.b16 %v1860
    %v2149 = vunpack.c.h.b16 %v1860
    %v2150 = vunpack.c.l.b16 %v1861
    %v2151 = vunpack.c.h.b16 %v1861
    %v2152 = vunpack.c.l.b16 %v1862
    %v2153 = vunpack.c.h.b16 %v1862
    %v2154 = vunpack.c.l.b16 %v1863
    %v2155 = vunpack.c.h.b16 %v1863
    %v2156 = vunpack.c.l.b16 %v1864
    %v2157 = vunpack.c.h.b16 %v1864
    %v2158 = vunpack.c.l.b16 %v1865
    %v2159 = vunpack.c.h.b16 %v1865
    %v2160 = vunpack.c.l.b16 %v1866
    %v2161 = vunpack.c.h.b16 %v1866
    %v2162 = vunpack.c.l.b16 %v1867
    %v2163 = vunpack.c.h.b16 %v1867
    %v2164 = vunpack.c.l.b16 %v1868
    %v2165 = vunpack.c.h.b16 %v1868
    %v2166 = vunpack.c.l.b16 %v1869
    %v2167 = vunpack.c.h.b16 %v1869
    %v2168 = vunpack.c.l.b16 %v1870
    %v2169 = vunpack.c.h.b16 %v1870
    %v2170 = vunpack.c.l.b16 %v1871
    %v2171 = vunpack.c.h.b16 %v1871
    %v2172 = vunpack.c.l.b16 %v1872
    %v2173 = vunpack.c.h.b16 %v1872
    %v2174 = vunpack.c.l.b16 %v1873
    %v2175 = vunpack.c.h.b16 %v1873
    %v2176 = vunpack.c.l.b16 %v1874
    %v2177 = vunpack.c.h.b16 %v1874
    %v2178 = vunpack.c.l.b16 %v1875
    %v2179 = vunpack.c.h.b16 %v1875
    %v2180 = vunpack.c.l.b16 %v1876
    %v2181 = vunpack.c.h.b16 %v1876
    %v2182 = vunpack.c.l.b16 %v1877
    %v2183 = vunpack.c.h.b16 %v1877
    %v2184 = vunpack.c.l.b16 %v1878
    %v2185 = vunpack.c.h.b16 %v1878
    %v2186 = vunpack.c.l.b16 %v1879
    %v2187 = vunpack.c.h.b16 %v1879
    %v2188 = vunpack.c.l.b16 %v1880
    %v2189 = vunpack.c.h.b16 %v1880
    %v2190 = vunpack.c.l.b16 %v1881
    %v2191 = vunpack.c.h.b16 %v1881
    %v2192 = vunpack.c.l.b16 %v1882
    %v2193 = vunpack.c.h.b16 %v1882
    %v2194 = vunpack.c.l.b16 %v1883
    %v2195 = vunpack.c.h.b16 %v1883
    %v2196 = vunpack.c.l.b16 %v1884
    %v2197 = vunpack.c.h.b16 %v1884
    %v2198 = vunpack.c.l.b16 %v1885
    %v2199 = vunpack.c.h.b16 %v1885
    %v2200 = vunpack.c.l.b16 %v1886
    %v2201 = vunpack.c.h.b16 %v1886
    %v2202 = vunpack.c.l.b16 %v1887
    %v2203 = vunpack.c.h.b16 %v1887
    %v2204 = vunpack.c.l.b16 %v1888
    %v2205 = vunpack.c.h.b16 %v1888
    %v2206 = vunpack.c.l.b16 %v1889
    %v2207 = vunpack.c.h.b16 %v1889
    %v2208 = vunpack.c.l.b16 %v1890
    %v2209 = vunpack.c.h.b16 %v1890
    %v2210 = vunpack.c.l.b16 %v1891
    %v2211 = vunpack.c.h.b16 %v1891
    %v2212 = vunpack.c.l.b16 %v1892
    %v2213 = vunpack.c.h.b16 %v1892
    %v2214 = vunpack.c.l.b16 %v1893
    %v2215 = vunpack.c.h.b16 %v1893
    %v2216 = vunpack.c.l.b16 %v1894
    %v2217 = vunpack.c.h.b16 %v1894
    %v2218 = vunpack.c.l.b16 %v1895
    %v2219 = vunpack.c.h.b16 %v1895
    %v2220 = vunpack.c.l.b16 %v1896
    %v2221 = vunpack.c.h.b16 %v1896
    %v2222 = vunpack.c.l.b16 %v1897
    %v2223 = vunpack.c.h.b16 %v1897
    %v2224 = vunpack.c.l.b16 %v1898
    %v2225 = vunpack.c.h.b16 %v1898
    %v2226 = vunpack.c.l.b16 %v1899
    %v2227 = vunpack.c.h.b16 %v1899
    %v2228 = vunpack.c.l.b16 %v1900
    %v2229 = vunpack.c.h.b16 %v1900
    %v2230 = vunpack.c.l.b16 %v1901
    %v2231 = vunpack.c.h.b16 %v1901
    %v2232 = vunpack.c.l.b16 %v1902
    %v2233 = vunpack.c.h.b16 %v1902
    %v2234 = vunpack.c.l.b16 %v1903
    %v2235 = vunpack.c.h.b16 %v1903
    %v2236 = vunpack.c.l.b16 %v1904
    %v2237 = vunpack.c.h.b16 %v1904
    %v2238 = vunpack.c.l.b16 %v1905
    %v2239 = vunpack.c.h.b16 %v1905
    %v2240 = vunpack.c.l.b16 %v1906
    %v2241 = vunpack.c.h.b16 %v1906
    %v2242 = vunpack.c.l.b16 %v1907
    %v2243 = vunpack.c.h.b16 %v1907
    %v2244 = vunpack.c.l.b16 %v1908
    %v2245 = vunpack.c.h.b16 %v1908
    %v2246 = vunpack.c.l.b16 %v1909
    %v2247 = vunpack.c.h.b16 %v1909
    %v2248 = vunpack.c.l.b16 %v1910
    %v2249 = vunpack.c.h.b16 %v1910
    %v2250 = vunpack.c.l.b16 %v1911
    %v2251 = vunpack.c.h.b16 %v1911
    %v2252 = vunpack.c.l.b16 %v1912
    %v2253 = vunpack.c.h.b16 %v1912
    %v2254 = vunpack.c.l.b16 %v1913
    %v2255 = vunpack.c.h.b16 %v1913
    %v2256 = vunpack.c.l.b16 %v1914
    %v2257 = vunpack.c.h.b16 %v1914
    %v2258 = vunpack.c.l.b16 %v1915
    %v2259 = vunpack.c.h.b16 %v1915
    %v2260 = vunpack.c.l.b16 %v1916
    %v2261 = vunpack.c.h.b16 %v1916
    %v2262 = vunpack.c.l.b16 %v1917
    %v2263 = vunpack.c.h.b16 %v1917
    %v2264 = vunpack.c.l.b16 %v1918
    %v2265 = vunpack.c.h.b16 %v1918
    %v2266 = vunpack.c.l.b16 %v1919
    %v2267 = vunpack.c.h.b16 %v1919
    %v2268 = vunpack.c.l.b16 %v1920
    %v2269 = vunpack.c.h.b16 %v1920
    %v2270 = vunpack.c.l.b16 %v1921
    %v2271 = vunpack.c.h.b16 %v1921
    %v2272 = vunpack.c.l.b16 %v1922
    %v2273 = vunpack.c.h.b16 %v1922
    %v2274 = vunpack.c.l.b16 %v1923
    %v2275 = vunpack.c.h.b16 %v1923
    %v2276 = vunpack.c.l.b16 %v1924
    %v2277 = vunpack.c.h.b16 %v1924
    %v2278 = vunpack.c.l.b16 %v1925
    %v2279 = vunpack.c.h.b16 %v1925
    %v2280 = vunpack.c.l.b16 %v1926
    %v2281 = vunpack.c.h.b16 %v1926
    %v2282 = vunpack.c.l.b16 %v1927
    %v2283 = vunpack.c.h.b16 %v1927
    %v2284 = vunpack.c.l.b16 %v1928
    %v2285 = vunpack.c.h.b16 %v1928
    %v2286 = vunpack.c.l.b16 %v1929
    %v2287 = vunpack.c.h.b16 %v1929
    %v2288 = vunpack.c.l.b16 %v1930
    %v2289 = vunpack.c.h.b16 %v1930
    %v2290 = vunpack.c.l.b16 %v1931
    %v2291 = vunpack.c.h.b16 %v1931
    %v2292 = vunpack.c.l.b16 %v1932
    %v2293 = vunpack.c.h.b16 %v1932
    %v2294 = vunpack.c.l.b16 %v1933
    %v2295 = vunpack.c.h.b16 %v1933
    %v2296 = vunpack.c.l.b16 %v1934
    %v2297 = vunpack.c.h.b16 %v1934
    %v2298 = vunpack.c.l.b16 %v1935
    %v2299 = vunpack.c.h.b16 %v1935
    %v2300 = vunpack.c.l.b16 %v1936
    %v2301 = vunpack.c.h.b16 %v1936
    %v2302 = vunpack.c.l.b16 %v1937
    %v2303 = vunpack.c.h.b16 %v1937
    %v2304 = vunpack.c.l.b16 %v1938
    %v2305 = vunpack.c.h.b16 %v1938
    %v2306 = vunpack.c.l.b16 %v1939
    %v2307 = vunpack.c.h.b16 %v1939
    %v2308 = vunpack.c.l.b16 %v1940
    %v2309 = vunpack.c.h.b16 %v1940
    %v2310 = vunpack.c.l.b16 %v1941
    %v2311 = vunpack.c.h.b16 %v1941
    %v2312 = vunpack.c.l.b16 %v1942
    %v2313 = vunpack.c.h.b16 %v1942
    %v2314 = vunpack.c.l.b16 %v1943
    %v2315 = vunpack.c.h.b16 %v1943
    %v2316 = vunpack.c.l.b16 %v1944
    %v2317 = vunpack.c.h.b16 %v1944
    %v2318 = vunpack.c.l.b16 %v1945
    %v2319 = vunpack.c.h.b16 %v1945
    %v2320 = vunpack.c.l.b16 %v1946
    %v2321 = vunpack.c.h.b16 %v1946
    %v2322 = vunpack.c.l.b16 %v1947
    %v2323 = vunpack.c.h.b16 %v1947
    %v2324 = vunpack.c.l.b16 %v1948
    %v2325 = vunpack.c.h.b16 %v1948
    %v2326 = vunpack.c.l.b16 %v1949
    %v2327 = vunpack.c.h.b16 %v1949
    %v2328 = vunpack.c.l.b16 %v1950
    %v2329 = vunpack.c.h.b16 %v1950
    %v2330 = vunpack.c.l.b16 %v1951
    %v2331 = vunpack.c.h.b16 %v1951
    %v2332 = vunpack.c.l.b16 %v1952
    %v2333 = vunpack.c.h.b16 %v1952
    %v2334 = vunpack.c.l.b16 %v1953
    %v2335 = vunpack.c.h.b16 %v1953
    %v2336 = vunpack.c.l.b16 %v1954
    %v2337 = vunpack.c.h.b16 %v1954
    %v2338 = vunpack.c.l.b16 %v1955
    %v2339 = vunpack.c.h.b16 %v1955
    %v2340 = vunpack.c.l.b16 %v1956
    %v2341 = vunpack.c.h.b16 %v1956
    %v2342 = vunpack.c.l.b16 %v1957
    %v2343 = vunpack.c.h.b16 %v1957
    %v2344 = vunpack.c.l.b16 %v1958
    %v2345 = vunpack.c.h.b16 %v1958
    %v2346 = vunpack.c.l.b16 %v1959
    %v2347 = vunpack.c.h.b16 %v1959
    %v2348 = vunpack.c.l.b16 %v1960
    %v2349 = vunpack.c.h.b16 %v1960
    %v2350 = vunpack.c.l.b16 %v1961
    %v2351 = vunpack.c.h.b16 %v1961
    %v2352 = vunpack.c.l.b16 %v1962
    %v2353 = vunpack.c.h.b16 %v1962
    %v2354 = vunpack.c.l.b16 %v1963
    %v2355 = vunpack.c.h.b16 %v1963
    %v2356 = vunpack.c.l.b16 %v1964
    %v2357 = vunpack.c.h.b16 %v1964
    %v2358 = vunpack.c.l.b16 %v1965
    %v2359 = vunpack.c.h.b16 %v1965
    %v2360 = vunpack.c.l.b16 %v1966
    %v2361 = vunpack.c.h.b16 %v1966
    %v2362 = vunpack.c.l.b16 %v1967
    %v2363 = vunpack.c.h.b16 %v1967
    %v2364 = vunpack.c.l.b16 %v1968
    %v2365 = vunpack.c.h.b16 %v1968
    %v2366 = vunpack.c.l.b16 %v1969
    %v2367 = vunpack.c.h.b16 %v1969
    %v2368 = vunpack.c.l.b16 %v1970
    %v2369 = vunpack.c.h.b16 %v1970
    %v2370 = vunpack.c.l.b16 %v1971
    %v2371 = vunpack.c.h.b16 %v1971
    %v2372 = vunpack.c.l.b16 %v1972
    %v2373 = vunpack.c.h.b16 %v1972
    %v2374 = vunpack.c.l.b16 %v1973
    %v2375 = vunpack.c.h.b16 %v1973
    %v2376 = vunpack.c.l.b16 %v1974
    %v2377 = vunpack.c.h.b16 %v1974
    %v2378 = vunpack.c.l.b16 %v1975
    %v2379 = vunpack.c.h.b16 %v1975
    %v2380 = vunpack.c.l.b16 %v1976
    %v2381 = vunpack.c.h.b16 %v1976
    %v2382 = vunpack.c.l.b16 %v1977
    %v2383 = vunpack.c.h.b16 %v1977
    %v2384 = vunpack.c.l.b16 %v1978
    %v2385 = vunpack.c.h.b16 %v1978
    %v2386 = vpack.c.b16 %v2134, %v2130
    %v2387 = vpack.c.b16 %v2135, %v2131
    %v2388 = vpack.c.b16 %v2136, %v2132
    %v2389 = vpack.c.b16 %v2137, %v2133
    %v2390 = vpack.c.b16 %v2142, %v2138
    %v2391 = vpack.c.b16 %v2143, %v2139
    %v2392 = vpack.c.b16 %v2144, %v2140
    %v2393 = vpack.c.b16 %v2145, %v2141
    %v2394 = vpack.c.b16 %v2150, %v2146
    %v2395 = vpack.c.b16 %v2151, %v2147
    %v2396 = vpack.c.b16 %v2152, %v2148
    %v2397 = vpack.c.b16 %v2153, %v2149
    %v2398 = vpack.c.b16 %v2158, %v2154
    %v2399 = vpack.c.b16 %v2159, %v2155
    %v2400 = vpack.c.b16 %v2160, %v2156
    %v2401 = vpack.c.b16 %v2161, %v2157
    %v2402 = vpack.c.b16 %v2166, %v2162
    %v2403 = vpack.c.b16 %v2167, %v2163
    %v2404 = vpack.c.b16 %v2168, %v2164
    %v2405 = vpack.c.b16 %v2169, %v2165
    %v2406 = vpack.c.b16 %v2174, %v2170
    %v2407 = vpack.c.b16 %v2175, %v2171
    %v2408 = vpack.c.b16 %v2176, %v2172
    %v2409 = vpack.c.b16 %v2177, %v2173
    %v2410 = vpack.c.b16 %v2182, %v2178
    %v2411 = vpack.c.b16 %v2183, %v2179
    %v2412 = vpack.c.b16 %v2184, %v2180
    %v2413 = vpack.c.b16 %v2185, %v2181
    %v2414 = vpack.c.b16 %v2190, %v2186
    %v2415 = vpack.c.b16 %v2191, %v2187
    %v2416 = vpack.c.b16 %v2192, %v2188
    %v2417 = vpack.c.b16 %v2193, %v2189
    %v2418 = vpack.c.b16 %v2198, %v2194
    %v2419 = vpack.c.b16 %v2199, %v2195
    %v2420 = vpack.c.b16 %v2200, %v2196
    %v2421 = vpack.c.b16 %v2201, %v2197
    %v2422 = vpack.c.b16 %v2206, %v2202
    %v2423 = vpack.c.b16 %v2207, %v2203
    %v2424 = vpack.c.b16 %v2208, %v2204
    %v2425 = vpack.c.b16 %v2209, %v2205
    %v2426 = vpack.c.b16 %v2214, %v2210
    %v2427 = vpack.c.b16 %v2215, %v2211
    %v2428 = vpack.c.b16 %v2216, %v2212
    %v2429 = vpack.c.b16 %v2217, %v2213
    %v2430 = vpack.c.b16 %v2222, %v2218
    %v2431 = vpack.c.b16 %v2223, %v2219
    %v2432 = vpack.c.b16 %v2224, %v2220
    %v2433 = vpack.c.b16 %v2225, %v2221
    %v2434 = vpack.c.b16 %v2230, %v2226
    %v2435 = vpack.c.b16 %v2231, %v2227
    %v2436 = vpack.c.b16 %v2232, %v2228
    %v2437 = vpack.c.b16 %v2233, %v2229
    %v2438 = vpack.c.b16 %v2238, %v2234
    %v2439 = vpack.c.b16 %v2239, %v2235
    %v2440 = vpack.c.b16 %v2240, %v2236
    %v2441 = vpack.c.b16 %v2241, %v2237
    %v2442 = vpack.c.b16 %v2246, %v2242
    %v2443 = vpack.c.b16 %v2247, %v2243
    %v2444 = vpack.c.b16 %v2248, %v2244
    %v2445 = vpack.c.b16 %v2249, %v2245
    %v2446 = vpack.c.b16 %v2254, %v2250
    %v2447 = vpack.c.b16 %v2255, %v2251
    %v2448 = vpack.c.b16 %v2256, %v2252
    %v2449 = vpack.c.b16 %v2257, %v2253
    %v2450 = vpack.c.b16 %v2262, %v2258
    %v2451 = vpack.c.b16 %v2263, %v2259
    %v2452 = vpack.c.b16 %v2264, %v2260
    %v2453 = vpack.c.b16 %v2265, %v2261
    %v2454 = vpack.c.b16 %v2270, %v2266
    %v2455 = vpack.c.b16 %v2271, %v2267
    %v2456 = vpack.c.b16 %v2272, %v2268
    %v2457 = vpack.c.b16 %v2273, %v2269
    %v2458 = vpack.c.b16 %v2278, %v2274
    %v2459 = vpack.c.b16 %v2279, %v2275
    %v2460 = vpack.c.b16 %v2280, %v2276
    %v2461 = vpack.c.b16 %v2281, %v2277
    %v2462 = vpack.c.b16 %v2286, %v2282
    %v2463 = vpack.c.b16 %v2287, %v2283
    %v2464 = vpack.c.b16 %v2288, %v2284
    %v2465 = vpack.c.b16 %v2289, %v2285
    %v2466 = vpack.c.b16 %v2294, %v2290
    %v2467 = vpack.c.b16 %v2295, %v2291
    %v2468 = vpack.c.b16 %v2296, %v2292
    %v2469 = vpack.c.b16 %v2297, %v2293
    %v2470 = vpack.c.b16 %v2302, %v2298
    %v2471 = vpack.c.b16 %v2303, %v2299
    %v2472 = vpack.c.b16 %v2304, %v2300
    %v2473 = vpack.c.b16 %v2305, %v2301
    %v2474 = vpack.c.b16 %v2310, %v2306
    %v2475 = vpack.c.b16 %v2311, %v2307
    %v2476 = vpack.c.b16 %v2312, %v2308
    %v2477 = vpack.c.b16 %v2313, %v2309
    %v2478 = vpack.c.b16 %v2318, %v2314
    %v2479 = vpack.c.b16 %v2319, %v2315
    %v2480 = vpack.c.b16 %v2320, %v2316
    %v2481 = vpack.c.b16 %v2321, %v2317
    %v2482 = vpack.c.b16 %v2326, %v2322
    %v2483 = vpack.c.b16 %v2327, %v2323
    %v2484 = vpack.c.b16 %v2328, %v2324
    %v2485 = vpack.c.b16 %v2329, %v2325
    %v2486 = vpack.c.b16 %v2334, %v2330
    %v2487 = vpack.c.b16 %v2335, %v2331
    %v2488 = vpack.c.b16 %v2336, %v2332
    %v2489 = vpack.c.b16 %v2337, %v2333
    %v2490 = vpack.c.b16 %v2342, %v2338
    %v2491 = vpack.c.b16 %v2343, %v2339
    %v2492 = vpack.c.b16 %v2344, %v2340
    %v2493 = vpack.c.b16 %v2345, %v2341
    %v2494 = vpack.c.b16 %v2350, %v2346
    %v2495 = vpack.c.b16 %v2351, %v2347
    %v2496 = vpack.c.b16 %v2352, %v2348
    %v2497 = vpack.c.b16 %v2353, %v2349
    %v2498 = vpack.c.b16 %v2358, %v2354
    %v2499 = vpack.c.b16 %v2359, %v2355
    %v2500 = vpack.c.b16 %v2360, %v2356
    %v2501 = vpack.c.b16 %v2361, %v2357
    %v2502 = vpack.c.b16 %v2366, %v2362
    %v2503 = vpack.c.b16 %v2367, %v2363
    %v2504 = vpack.c.b16 %v2368, %v2364
    %v2505 = vpack.c.b16 %v2369, %v2365
    %v2506 = vpack.c.b16 %v2374, %v2370
    %v2507 = vpack.c.b16 %v2375, %v2371
    %v2508 = vpack.c.b16 %v2376, %v2372
    %v2509 = vpack.c.b16 %v2377, %v2373
    %v2510 = vpack.c.b16 %v2382, %v2378
    %v2511 = vpack.c.b16 %v2383, %v2379
    %v2512 = vpack.c.b16 %v2384, %v2380
    %v2513 = vpack.c.b16 %v2385, %v2381
    %2642 = vmatprep.subr.bf16.mxu0 %v2415
    %2643 = vmatpush1.bf16.msra.mxu0 %v2414
    %2644 = vmatprep.subr.bf16.mxu0 %v2411
    %2645 = vmatpush1.bf16.msra.mxu0 %v2410
    %2646 = vmatprep.subr.bf16.mxu0 %v2407
    %2647 = vmatpush1.bf16.msra.mxu0 %v2406
    %2648 = vmatprep.subr.bf16.mxu0 %v2403
    %2649 = vmatpush1.bf16.msra.mxu0 %v2402
    %2650 = vmatprep.subr.bf16.mxu0 %v2399
    %2651 = vmatpush1.bf16.msra.mxu0 %v2398
    %2652 = vmatprep.subr.bf16.mxu0 %v2395
    %2653 = vmatpush1.bf16.msra.mxu0 %v2394
    %2654 = vmatprep.subr.bf16.mxu0 %v2391
    %2655 = vmatpush1.bf16.msra.mxu0 %v2390
    %2656 = vmatprep.subr.bf16.mxu0 %v2387
    %2657 = vmatpush1.bf16.msra.mxu0 %v2386
    %2658 = vmatprep.subr.bf16.mxu0 %v2447
    %2659 = vmatpush2.bf16.msra.mxu0 %v2446
    %2660 = vmatprep.subr.bf16.mxu0 %v2443
    %2661 = vmatpush2.bf16.msra.mxu0 %v2442
    %2662 = vmatprep.subr.bf16.mxu0 %v2439
    %2663 = vmatpush2.bf16.msra.mxu0 %v2438
    %2664 = vmatprep.subr.bf16.mxu0 %v2435
    %2665 = vmatpush2.bf16.msra.mxu0 %v2434
    %2666 = vmatprep.subr.bf16.mxu0 %v2431
    %2667 = vmatpush2.bf16.msra.mxu0 %v2430
    %2668 = vmatprep.subr.bf16.mxu0 %v2427
    %2669 = vmatpush2.bf16.msra.mxu0 %v2426
    %2670 = vmatprep.subr.bf16.mxu0 %v2423
    %2671 = vmatpush2.bf16.msra.mxu0 %v2422
    %2672 = vmatprep.subr.bf16.mxu0 %v2419
    %2673 = vmatpush2.bf16.msra.mxu0 %v2418
    %2674 = vmatprep.mubr.bf16.mxu0 %v1848
    %2675 = vmatmul.mubr.bf16.gmra.mxu0 %v1847
    %v2676 = vpop.f32.mrf.mxu0
    %v2677 = vadd.f32 %v1985, %v2676
    %v2678 = vpop.f32.mrf.mxu0
    %v2679 = vadd.f32 %v1989, %v2678
    %v2680 = vpop.f32.mrf.mxu0
    %v2681 = vadd.f32 %v1985, %v2680
    %v2682 = vpop.f32.mrf.mxu0
    %v2683 = vadd.f32 %v1989, %v2682
    %2684 = vdwg.mxu0
    %2685 = vmatprep.subr.bf16.mxu0 %v2479
    %2686 = vmatpush1.bf16.msra.mxu0 %v2478
    %2687 = vmatprep.subr.bf16.mxu0 %v2475
    %2688 = vmatpush1.bf16.msra.mxu0 %v2474
    %2689 = vmatprep.subr.bf16.mxu0 %v2471
    %2690 = vmatpush1.bf16.msra.mxu0 %v2470
    %2691 = vmatprep.subr.bf16.mxu0 %v2467
    %2692 = vmatpush1.bf16.msra.mxu0 %v2466
    %2693 = vmatprep.subr.bf16.mxu0 %v2463
    %2694 = vmatpush1.bf16.msra.mxu0 %v2462
    %2695 = vmatprep.subr.bf16.mxu0 %v2459
    %2696 = vmatpush1.bf16.msra.mxu0 %v2458
    %2697 = vmatprep.subr.bf16.mxu0 %v2455
    %2698 = vmatpush1.bf16.msra.mxu0 %v2454
    %2699 = vmatprep.subr.bf16.mxu0 %v2451
    %2700 = vmatpush1.bf16.msra.mxu0 %v2450
    %2701 = vmatprep.subr.bf16.mxu0 %v2511
    %2702 = vmatpush2.bf16.msra.mxu0 %v2510
    %2703 = vmatprep.subr.bf16.mxu0 %v2507
    %2704 = vmatpush2.bf16.msra.mxu0 %v2506
    %2705 = vmatprep.subr.bf16.mxu0 %v2503
    %2706 = vmatpush2.bf16.msra.mxu0 %v2502
    %2707 = vmatprep.subr.bf16.mxu0 %v2499
    %2708 = vmatpush2.bf16.msra.mxu0 %v2498
    %2709 = vmatprep.subr.bf16.mxu0 %v2495
    %2710 = vmatpush2.bf16.msra.mxu0 %v2494
    %2711 = vmatprep.subr.bf16.mxu0 %v2491
    %2712 = vmatpush2.bf16.msra.mxu0 %v2490
    %2713 = vmatprep.subr.bf16.mxu0 %v2487
    %2714 = vmatpush2.bf16.msra.mxu0 %v2486
    %2715 = vmatprep.subr.bf16.mxu0 %v2483
    %2716 = vmatpush2.bf16.msra.mxu0 %v2482
    %2717 = vmatprep.mubr.bf16.mxu0 %v1850
    %2718 = vmatmul.mubr.bf16.gmra.mxu0 %v1849
    %v2719 = vpop.f32.mrf.mxu0
    %v2720 = vadd.f32 %v2677, %v2719
    %v2721 = vpop.f32.mrf.mxu0
    %v2722 = vadd.f32 %v2679, %v2721
    %v2723 = vpop.f32.mrf.mxu0
    %v2724 = vadd.f32 %v2681, %v2723
    %v2725 = vpop.f32.mrf.mxu0
    %v2726 = vadd.f32 %v2683, %v2725
    %2727 = vdwg.mxu0
    %2728 = vmatprep.subr.bf16.mxu0 %v2417
    %2729 = vmatpush1.bf16.msra.mxu0 %v2416
    %2730 = vmatprep.subr.bf16.mxu0 %v2413
    %2731 = vmatpush1.bf16.msra.mxu0 %v2412
    %2732 = vmatprep.subr.bf16.mxu0 %v2409
    %2733 = vmatpush1.bf16.msra.mxu0 %v2408
    %2734 = vmatprep.subr.bf16.mxu0 %v2405
    %2735 = vmatpush1.bf16.msra.mxu0 %v2404
    %2736 = vmatprep.subr.bf16.mxu0 %v2401
    %2737 = vmatpush1.bf16.msra.mxu0 %v2400
    %2738 = vmatprep.subr.bf16.mxu0 %v2397
    %2739 = vmatpush1.bf16.msra.mxu0 %v2396
    %2740 = vmatprep.subr.bf16.mxu0 %v2393
    %2741 = vmatpush1.bf16.msra.mxu0 %v2392
    %2742 = vmatprep.subr.bf16.mxu0 %v2389
    %2743 = vmatpush1.bf16.msra.mxu0 %v2388
    %2744 = vmatprep.subr.bf16.mxu0 %v2449
    %2745 = vmatpush2.bf16.msra.mxu0 %v2448
    %2746 = vmatprep.subr.bf16.mxu0 %v2445
    %2747 = vmatpush2.bf16.msra.mxu0 %v2444
    %2748 = vmatprep.subr.bf16.mxu0 %v2441
    %2749 = vmatpush2.bf16.msra.mxu0 %v2440
    %2750 = vmatprep.subr.bf16.mxu0 %v2437
    %2751 = vmatpush2.bf16.msra.mxu0 %v2436
    %2752 = vmatprep.subr.bf16.mxu0 %v2433
    %2753 = vmatpush2.bf16.msra.mxu0 %v2432
    %2754 = vmatprep.subr.bf16.mxu0 %v2429
    %2755 = vmatpush2.bf16.msra.mxu0 %v2428
    %2756 = vmatprep.subr.bf16.mxu0 %v2425
    %2757 = vmatpush2.bf16.msra.mxu0 %v2424
    %2758 = vmatprep.subr.bf16.mxu0 %v2421
    %2759 = vmatpush2.bf16.msra.mxu0 %v2420
    %2760 = vmatprep.mubr.bf16.mxu0 %v1848
    %2761 = vmatmul.mubr.bf16.gmra.mxu0 %v1847
    %v2762 = vpop.f32.mrf.mxu0
    %v2763 = vadd.f32 %v1993, %v2762
    %v2764 = vpop.f32.mrf.mxu0
    %v2765 = vadd.f32 %v1997, %v2764
    %v2766 = vpop.f32.mrf.mxu0
    %v2767 = vadd.f32 %v1993, %v2766
    %v2768 = vpop.f32.mrf.mxu0
    %v2769 = vadd.f32 %v1997, %v2768
    %2770 = vdwg.mxu0
    %2771 = vmatprep.subr.bf16.mxu0 %v2481
    %2772 = vmatpush1.bf16.msra.mxu0 %v2480
    %2773 = vmatprep.subr.bf16.mxu0 %v2477
    %2774 = vmatpush1.bf16.msra.mxu0 %v2476
    %2775 = vmatprep.subr.bf16.mxu0 %v2473
    %2776 = vmatpush1.bf16.msra.mxu0 %v2472
    %2777 = vmatprep.subr.bf16.mxu0 %v2469
    %2778 = vmatpush1.bf16.msra.mxu0 %v2468
    %2779 = vmatprep.subr.bf16.mxu0 %v2465
    %2780 = vmatpush1.bf16.msra.mxu0 %v2464
    %2781 = vmatprep.subr.bf16.mxu0 %v2461
    %2782 = vmatpush1.bf16.msra.mxu0 %v2460
    %2783 = vmatprep.subr.bf16.mxu0 %v2457
    %2784 = vmatpush1.bf16.msra.mxu0 %v2456
    %2785 = vmatprep.subr.bf16.mxu0 %v2453
    %2786 = vmatpush1.bf16.msra.mxu0 %v2452
    %2787 = vmatprep.subr.bf16.mxu0 %v2513
    %2788 = vmatpush2.bf16.msra.mxu0 %v2512
    %2789 = vmatprep.subr.bf16.mxu0 %v2509
    %2790 = vmatpush2.bf16.msra.mxu0 %v2508
    %2791 = vmatprep.subr.bf16.mxu0 %v2505
    %2792 = vmatpush2.bf16.msra.mxu0 %v2504
    %2793 = vmatprep.subr.bf16.mxu0 %v2501
    %2794 = vmatpush2.bf16.msra.mxu0 %v2500
    %2795 = vmatprep.subr.bf16.mxu0 %v2497
    %2796 = vmatpush2.bf16.msra.mxu0 %v2496
    %2797 = vmatprep.subr.bf16.mxu0 %v2493
    %2798 = vmatpush2.bf16.msra.mxu0 %v2492
    %2799 = vmatprep.subr.bf16.mxu0 %v2489
    %2800 = vmatpush2.bf16.msra.mxu0 %v2488
    %2801 = vmatprep.subr.bf16.mxu0 %v2485
    %2802 = vmatpush2.bf16.msra.mxu0 %v2484
    %2803 = vmatprep.mubr.bf16.mxu0 %v1850
    %2804 = vmatmul.mubr.bf16.gmra.mxu0 %v1849
    %v2805 = vpop.f32.mrf.mxu0
    %v2806 = vadd.f32 %v2763, %v2805
    %v2807 = vpop.f32.mrf.mxu0
    %v2808 = vadd.f32 %v2765, %v2807
    %v2809 = vpop.f32.mrf.mxu0
    %v2810 = vadd.f32 %v2767, %v2809
    %v2811 = vpop.f32.mrf.mxu0
    %v2812 = vadd.f32 %v2769, %v2811
    %2813 = vdwg.mxu0
    %v2814 = vadd.f32 %v2720, %v2722
    %v2815 = vadd.f32 %v2814, %v2806
    %v2816 = vadd.f32 %v2815, %v2808
    %2817 = vadd.xlane.f32.xlu0 %v2816
    %v2818 = vpop.xlane.xlu0 %2817
    %v2819 = vadd.f32 %v2724, %v2726
    %v2820 = vadd.f32 %v2819, %v2810
    %v2821 = vadd.f32 %v2820, %v2812
    %2822 = vadd.xlane.f32.xlu0 %v2821
    %v2823 = vpop.xlane.xlu0 %2822
    %v2824 = vmul.f32 %v2818, %v1738
    %v2825 = vmul.f32 %v2823, %v1738
    %v2826 = vmul.f32 %v2720, %v2720
    %v2827 = vmul.f32 %v2722, %v2722
    %v2828 = vmul.f32 %v2806, %v2806
    %v2829 = vmul.f32 %v2808, %v2808
    %v2830 = vmul.f32 %v2724, %v2724
    %v2831 = vmul.f32 %v2726, %v2726
    %v2832 = vmul.f32 %v2810, %v2810
    %v2833 = vmul.f32 %v2812, %v2812
    %v2834 = vadd.f32 %v2826, %v2827
    %v2835 = vadd.f32 %v2834, %v2828
    %v2836 = vadd.f32 %v2835, %v2829
    %2837 = vadd.xlane.f32.xlu0 %v2836
    %v2838 = vpop.xlane.xlu0 %2837
    %v2839 = vadd.f32 %v2830, %v2831
    %v2840 = vadd.f32 %v2839, %v2832
    %v2841 = vadd.f32 %v2840, %v2833
    %2842 = vadd.xlane.f32.xlu0 %v2841
    %v2843 = vpop.xlane.xlu0 %2842
    %v2844 = vmul.f32 %v2838, %v1738
    %v2845 = vmul.f32 %v2843, %v1738
    %v2846 = vmul.f32 %v2824, %v2824
    %v2847 = vmul.f32 %v2825, %v2825
    %v2848 = vsub.f32 %v2844, %v2846
    %v2849 = vsub.f32 %v2845, %v2847
    %v2850 = vadd.f32 %v2848, 1e-05
    %v2851 = vadd.f32 %v2849, 1e-05
    %v2852 = vrsqrt.pop %v2850
    %v2853 = vrsqrt.pop %v2851
    %v2854 = vsub.f32 %v2720, %v2824
    %v2855 = vsub.f32 %v2722, %v2824
    %v2856 = vsub.f32 %v2806, %v2824
    %v2857 = vsub.f32 %v2808, %v2824
    %v2858 = vsub.f32 %v2724, %v2825
    %v2859 = vsub.f32 %v2726, %v2825
    %v2860 = vsub.f32 %v2810, %v2825
    %v2861 = vsub.f32 %v2812, %v2825
    %v2862 = vmul.f32 %v2854, %v2852
    %v2863 = vmul.f32 %v2855, %v2852
    %v2864 = vmul.f32 %v2856, %v2852
    %v2865 = vmul.f32 %v2857, %v2852
    %v2866 = vmul.f32 %v2858, %v2853
    %v2867 = vmul.f32 %v2859, %v2853
    %v2868 = vmul.f32 %v2860, %v2853
    %v2869 = vmul.f32 %v2861, %v2853
    %s2870 = scalar_lea.vmem %s2, 6
    %v2871 = vld [vmem:[%s2870] ss:$8 sm:$0xf]
    %v2873 = vlaneseq
    %v2874 = vshrl.u32 %v2873, 7
    %v2875 = vsub.s32 0, %v2874
    %v2876 = vrot.slane %v2871, %v2875
    %v2877 = vlaneseq
    %v2878 = vshrl.u32 %v2877, 7
    %v2879 = vsub.s32 1, %v2878
    %v2880 = vrot.slane %v2871, %v2879
    %v2881 = vlaneseq
    %v2882 = vshrl.u32 %v2881, 7
    %v2883 = vsub.s32 2, %v2882
    %v2884 = vrot.slane %v2871, %v2883
    %v2885 = vlaneseq
    %v2886 = vshrl.u32 %v2885, 7
    %v2887 = vsub.s32 3, %v2886
    %v2888 = vrot.slane %v2871, %v2887
    %v2893 = vmul.f32 %v2862, %v2876
    %v2894 = vmul.f32 %v2863, %v2880
    %v2895 = vmul.f32 %v2864, %v2884
    %v2896 = vmul.f32 %v2865, %v2888
    %v2897 = vmul.f32 %v2866, %v2876
    %v2898 = vmul.f32 %v2867, %v2880
    %v2899 = vmul.f32 %v2868, %v2884
    %v2900 = vmul.f32 %v2869, %v2888
    %s2901 = scalar_lea.vmem %s2, 7
    %v2902 = vld [vmem:[%s2901] ss:$8 sm:$0xf]
    %v2904 = vlaneseq
    %v2905 = vshrl.u32 %v2904, 7
    %v2906 = vsub.s32 0, %v2905
    %v2907 = vrot.slane %v2902, %v2906
    %v2908 = vlaneseq
    %v2909 = vshrl.u32 %v2908, 7
    %v2910 = vsub.s32 1, %v2909
    %v2911 = vrot.slane %v2902, %v2910
    %v2912 = vlaneseq
    %v2913 = vshrl.u32 %v2912, 7
    %v2914 = vsub.s32 2, %v2913
    %v2915 = vrot.slane %v2902, %v2914
    %v2916 = vlaneseq
    %v2917 = vshrl.u32 %v2916, 7
    %v2918 = vsub.s32 3, %v2917
    %v2919 = vrot.slane %v2902, %v2918
    %v2924 = vadd.f32 %v2893, %v2907
    %v2925 = vadd.f32 %v2894, %v2911
    %v2926 = vadd.f32 %v2895, %v2915
    %v2927 = vadd.f32 %v2896, %v2919
    %v2928 = vadd.f32 %v2897, %v2907
    %v2929 = vadd.f32 %v2898, %v2911
    %v2930 = vadd.f32 %v2899, %v2915
    %v2931 = vadd.f32 %v2900, %v2919
    %v2932 = vmul.f32 %v2924, 0.5
    %v2933 = vmul.f32 %v2925, 0.5
    %v2934 = vmul.f32 %v2926, 0.5
    %v2935 = vmul.f32 %v2927, 0.5
    %v2936 = vmul.f32 %v2928, 0.5
    %v2937 = vmul.f32 %v2929, 0.5
    %v2938 = vmul.f32 %v2930, 0.5
    %v2939 = vmul.f32 %v2931, 0.5
    %v2940 = vtanh.pop %v2932
    %v2941 = vtanh.pop %v2933
    %v2942 = vtanh.pop %v2934
    %v2943 = vtanh.pop %v2935
    %v2944 = vtanh.pop %v2936
    %v2945 = vtanh.pop %v2937
    %v2946 = vtanh.pop %v2938
    %v2947 = vtanh.pop %v2939
    %v2948 = vmul.f32 %v2940, 0.5
    %v2949 = vmul.f32 %v2941, 0.5
    %v2950 = vmul.f32 %v2942, 0.5
    %v2951 = vmul.f32 %v2943, 0.5
    %v2952 = vmul.f32 %v2944, 0.5
    %v2953 = vmul.f32 %v2945, 0.5
    %v2954 = vmul.f32 %v2946, 0.5
    %v2955 = vmul.f32 %v2947, 0.5
    %v2956 = vadd.f32 %v2948, 0.5
    %v2957 = vadd.f32 %v2949, 0.5
    %v2958 = vadd.f32 %v2950, 0.5
    %v2959 = vadd.f32 %v2951, 0.5
    %v2960 = vadd.f32 %v2952, 0.5
    %v2961 = vadd.f32 %v2953, 0.5
    %v2962 = vadd.f32 %v2954, 0.5
    %v2963 = vadd.f32 %v2955, 0.5
    %v2964 = vmul.f32 %v2924, %v2956
    %v2965 = vmul.f32 %v2925, %v2957
    %v2966 = vmul.f32 %v2926, %v2958
    %v2967 = vmul.f32 %v2927, %v2959
    %v2968 = vmul.f32 %v2928, %v2960
    %v2969 = vmul.f32 %v2929, %v2961
    %v2970 = vmul.f32 %v2930, %v2962
    %v2971 = vmul.f32 %v2931, %v2963
    %v2972 = vpack.c.bf16 %v2968, %v2964
    %v2973 = vpack.c.bf16 %v2969, %v2965
    %v2974 = vpack.c.bf16 %v2970, %v2966
    %v2975 = vpack.c.bf16 %v2971, %v2967
    %v2976 = vld [vmem:[#allocation12] sm:$0xff]
    %v2977 = vld [vmem:[#allocation12 + $0x8] sm:$0xff]
    %v2978 = vld [vmem:[#allocation12 + $0x10] sm:$0xff]
    %v2979 = vld [vmem:[#allocation12 + $0x18] sm:$0xff]
    %v2980 = vld [vmem:[#allocation12 + $0x20] sm:$0xff]
    %v2981 = vld [vmem:[#allocation12 + $0x28] sm:$0xff]
    %v2982 = vld [vmem:[#allocation12 + $0x30] sm:$0xff]
    %v2983 = vld [vmem:[#allocation12 + $0x38] sm:$0xff]
    %v2984 = vld [vmem:[#allocation12 + $0x40] sm:$0xff]
    %v2985 = vld [vmem:[#allocation12 + $0x48] sm:$0xff]
    %v2986 = vld [vmem:[#allocation12 + $0x50] sm:$0xff]
    %v2987 = vld [vmem:[#allocation12 + $0x58] sm:$0xff]
    %v2988 = vld [vmem:[#allocation12 + $0x60] sm:$0xff]
    %v2989 = vld [vmem:[#allocation12 + $0x68] sm:$0xff]
    %v2990 = vld [vmem:[#allocation12 + $0x70] sm:$0xff]
    %v2991 = vld [vmem:[#allocation12 + $0x78] sm:$0xff]
    %v2992 = vld [vmem:[#allocation12 + $0x80] sm:$0xff]
    %v2993 = vld [vmem:[#allocation12 + $0x88] sm:$0xff]
    %v2994 = vld [vmem:[#allocation12 + $0x90] sm:$0xff]
    %v2995 = vld [vmem:[#allocation12 + $0x98] sm:$0xff]
    %v2996 = vld [vmem:[#allocation12 + $0xa0] sm:$0xff]
    %v2997 = vld [vmem:[#allocation12 + $0xa8] sm:$0xff]
    %v2998 = vld [vmem:[#allocation12 + $0xb0] sm:$0xff]
    %v2999 = vld [vmem:[#allocation12 + $0xb8] sm:$0xff]
    %v3000 = vld [vmem:[#allocation12 + $0xc0] sm:$0xff]
    %v3001 = vld [vmem:[#allocation12 + $0xc8] sm:$0xff]
    %v3002 = vld [vmem:[#allocation12 + $0xd0] sm:$0xff]
    %v3003 = vld [vmem:[#allocation12 + $0xd8] sm:$0xff]
    %v3004 = vld [vmem:[#allocation12 + $0xe0] sm:$0xff]
    %v3005 = vld [vmem:[#allocation12 + $0xe8] sm:$0xff]
    %v3006 = vld [vmem:[#allocation12 + $0xf0] sm:$0xff]
    %v3007 = vld [vmem:[#allocation12 + $0xf8] sm:$0xff]
    %v3008 = vld [vmem:[#allocation12 + $0x100] sm:$0xff]
    %v3009 = vld [vmem:[#allocation12 + $0x108] sm:$0xff]
    %v3010 = vld [vmem:[#allocation12 + $0x110] sm:$0xff]
    %v3011 = vld [vmem:[#allocation12 + $0x118] sm:$0xff]
    %v3012 = vld [vmem:[#allocation12 + $0x120] sm:$0xff]
    %v3013 = vld [vmem:[#allocation12 + $0x128] sm:$0xff]
    %v3014 = vld [vmem:[#allocation12 + $0x130] sm:$0xff]
    %v3015 = vld [vmem:[#allocation12 + $0x138] sm:$0xff]
    %v3016 = vld [vmem:[#allocation12 + $0x140] sm:$0xff]
    %v3017 = vld [vmem:[#allocation12 + $0x148] sm:$0xff]
    %v3018 = vld [vmem:[#allocation12 + $0x150] sm:$0xff]
    %v3019 = vld [vmem:[#allocation12 + $0x158] sm:$0xff]
    %v3020 = vld [vmem:[#allocation12 + $0x160] sm:$0xff]
    %v3021 = vld [vmem:[#allocation12 + $0x168] sm:$0xff]
    %v3022 = vld [vmem:[#allocation12 + $0x170] sm:$0xff]
    %v3023 = vld [vmem:[#allocation12 + $0x178] sm:$0xff]
    %v3024 = vld [vmem:[#allocation12 + $0x180] sm:$0xff]
    %v3025 = vld [vmem:[#allocation12 + $0x188] sm:$0xff]
    %v3026 = vld [vmem:[#allocation12 + $0x190] sm:$0xff]
    %v3027 = vld [vmem:[#allocation12 + $0x198] sm:$0xff]
    %v3028 = vld [vmem:[#allocation12 + $0x1a0] sm:$0xff]
    %v3029 = vld [vmem:[#allocation12 + $0x1a8] sm:$0xff]
    %v3030 = vld [vmem:[#allocation12 + $0x1b0] sm:$0xff]
    %v3031 = vld [vmem:[#allocation12 + $0x1b8] sm:$0xff]
    %v3032 = vld [vmem:[#allocation12 + $0x1c0] sm:$0xff]
    %v3033 = vld [vmem:[#allocation12 + $0x1c8] sm:$0xff]
    %v3034 = vld [vmem:[#allocation12 + $0x1d0] sm:$0xff]
    %v3035 = vld [vmem:[#allocation12 + $0x1d8] sm:$0xff]
    %v3036 = vld [vmem:[#allocation12 + $0x1e0] sm:$0xff]
    %v3037 = vld [vmem:[#allocation12 + $0x1e8] sm:$0xff]
    %v3038 = vld [vmem:[#allocation12 + $0x1f0] sm:$0xff]
    %v3039 = vld [vmem:[#allocation12 + $0x1f8] sm:$0xff]
    %v3040 = vld [vmem:[#allocation12 + $0x200] sm:$0xff]
    %v3041 = vld [vmem:[#allocation12 + $0x208] sm:$0xff]
    %v3042 = vld [vmem:[#allocation12 + $0x210] sm:$0xff]
    %v3043 = vld [vmem:[#allocation12 + $0x218] sm:$0xff]
    %v3044 = vld [vmem:[#allocation12 + $0x220] sm:$0xff]
    %v3045 = vld [vmem:[#allocation12 + $0x228] sm:$0xff]
    %v3046 = vld [vmem:[#allocation12 + $0x230] sm:$0xff]
    %v3047 = vld [vmem:[#allocation12 + $0x238] sm:$0xff]
    %v3048 = vld [vmem:[#allocation12 + $0x240] sm:$0xff]
    %v3049 = vld [vmem:[#allocation12 + $0x248] sm:$0xff]
    %v3050 = vld [vmem:[#allocation12 + $0x250] sm:$0xff]
    %v3051 = vld [vmem:[#allocation12 + $0x258] sm:$0xff]
    %v3052 = vld [vmem:[#allocation12 + $0x260] sm:$0xff]
    %v3053 = vld [vmem:[#allocation12 + $0x268] sm:$0xff]
    %v3054 = vld [vmem:[#allocation12 + $0x270] sm:$0xff]
    %v3055 = vld [vmem:[#allocation12 + $0x278] sm:$0xff]
    %v3056 = vld [vmem:[#allocation12 + $0x280] sm:$0xff]
    %v3057 = vld [vmem:[#allocation12 + $0x288] sm:$0xff]
    %v3058 = vld [vmem:[#allocation12 + $0x290] sm:$0xff]
    %v3059 = vld [vmem:[#allocation12 + $0x298] sm:$0xff]
    %v3060 = vld [vmem:[#allocation12 + $0x2a0] sm:$0xff]
    %v3061 = vld [vmem:[#allocation12 + $0x2a8] sm:$0xff]
    %v3062 = vld [vmem:[#allocation12 + $0x2b0] sm:$0xff]
    %v3063 = vld [vmem:[#allocation12 + $0x2b8] sm:$0xff]
    %v3064 = vld [vmem:[#allocation12 + $0x2c0] sm:$0xff]
    %v3065 = vld [vmem:[#allocation12 + $0x2c8] sm:$0xff]
    %v3066 = vld [vmem:[#allocation12 + $0x2d0] sm:$0xff]
    %v3067 = vld [vmem:[#allocation12 + $0x2d8] sm:$0xff]
    %v3068 = vld [vmem:[#allocation12 + $0x2e0] sm:$0xff]
    %v3069 = vld [vmem:[#allocation12 + $0x2e8] sm:$0xff]
    %v3070 = vld [vmem:[#allocation12 + $0x2f0] sm:$0xff]
    %v3071 = vld [vmem:[#allocation12 + $0x2f8] sm:$0xff]
    %v3072 = vld [vmem:[#allocation12 + $0x300] sm:$0xff]
    %v3073 = vld [vmem:[#allocation12 + $0x308] sm:$0xff]
    %v3074 = vld [vmem:[#allocation12 + $0x310] sm:$0xff]
    %v3075 = vld [vmem:[#allocation12 + $0x318] sm:$0xff]
    %v3076 = vld [vmem:[#allocation12 + $0x320] sm:$0xff]
    %v3077 = vld [vmem:[#allocation12 + $0x328] sm:$0xff]
    %v3078 = vld [vmem:[#allocation12 + $0x330] sm:$0xff]
    %v3079 = vld [vmem:[#allocation12 + $0x338] sm:$0xff]
    %v3080 = vld [vmem:[#allocation12 + $0x340] sm:$0xff]
    %v3081 = vld [vmem:[#allocation12 + $0x348] sm:$0xff]
    %v3082 = vld [vmem:[#allocation12 + $0x350] sm:$0xff]
    %v3083 = vld [vmem:[#allocation12 + $0x358] sm:$0xff]
    %v3084 = vld [vmem:[#allocation12 + $0x360] sm:$0xff]
    %v3085 = vld [vmem:[#allocation12 + $0x368] sm:$0xff]
    %v3086 = vld [vmem:[#allocation12 + $0x370] sm:$0xff]
    %v3087 = vld [vmem:[#allocation12 + $0x378] sm:$0xff]
    %v3088 = vld [vmem:[#allocation12 + $0x380] sm:$0xff]
    %v3089 = vld [vmem:[#allocation12 + $0x388] sm:$0xff]
    %v3090 = vld [vmem:[#allocation12 + $0x390] sm:$0xff]
    %v3091 = vld [vmem:[#allocation12 + $0x398] sm:$0xff]
    %v3092 = vld [vmem:[#allocation12 + $0x3a0] sm:$0xff]
    %v3093 = vld [vmem:[#allocation12 + $0x3a8] sm:$0xff]
    %v3094 = vld [vmem:[#allocation12 + $0x3b0] sm:$0xff]
    %v3095 = vld [vmem:[#allocation12 + $0x3b8] sm:$0xff]
    %v3096 = vld [vmem:[#allocation12 + $0x3c0] sm:$0xff]
    %v3097 = vld [vmem:[#allocation12 + $0x3c8] sm:$0xff]
    %v3098 = vld [vmem:[#allocation12 + $0x3d0] sm:$0xff]
    %v3099 = vld [vmem:[#allocation12 + $0x3d8] sm:$0xff]
    %v3100 = vld [vmem:[#allocation12 + $0x3e0] sm:$0xff]
    %v3101 = vld [vmem:[#allocation12 + $0x3e8] sm:$0xff]
    %v3102 = vld [vmem:[#allocation12 + $0x3f0] sm:$0xff]
    %v3103 = vld [vmem:[#allocation12 + $0x3f8] sm:$0xff]
    %v3232 = vunpack.c.l.b16 %v2976
    %v3233 = vunpack.c.h.b16 %v2976
    %v3234 = vunpack.c.l.b16 %v2977
    %v3235 = vunpack.c.h.b16 %v2977
    %v3236 = vunpack.c.l.b16 %v2978
    %v3237 = vunpack.c.h.b16 %v2978
    %v3238 = vunpack.c.l.b16 %v2979
    %v3239 = vunpack.c.h.b16 %v2979
    %v3240 = vunpack.c.l.b16 %v2980
    %v3241 = vunpack.c.h.b16 %v2980
    %v3242 = vunpack.c.l.b16 %v2981
    %v3243 = vunpack.c.h.b16 %v2981
    %v3244 = vunpack.c.l.b16 %v2982
    %v3245 = vunpack.c.h.b16 %v2982
    %v3246 = vunpack.c.l.b16 %v2983
    %v3247 = vunpack.c.h.b16 %v2983
    %v3248 = vunpack.c.l.b16 %v2984
    %v3249 = vunpack.c.h.b16 %v2984
    %v3250 = vunpack.c.l.b16 %v2985
    %v3251 = vunpack.c.h.b16 %v2985
    %v3252 = vunpack.c.l.b16 %v2986
    %v3253 = vunpack.c.h.b16 %v2986
    %v3254 = vunpack.c.l.b16 %v2987
    %v3255 = vunpack.c.h.b16 %v2987
    %v3256 = vunpack.c.l.b16 %v2988
    %v3257 = vunpack.c.h.b16 %v2988
    %v3258 = vunpack.c.l.b16 %v2989
    %v3259 = vunpack.c.h.b16 %v2989
    %v3260 = vunpack.c.l.b16 %v2990
    %v3261 = vunpack.c.h.b16 %v2990
    %v3262 = vunpack.c.l.b16 %v2991
    %v3263 = vunpack.c.h.b16 %v2991
    %v3264 = vunpack.c.l.b16 %v2992
    %v3265 = vunpack.c.h.b16 %v2992
    %v3266 = vunpack.c.l.b16 %v2993
    %v3267 = vunpack.c.h.b16 %v2993
    %v3268 = vunpack.c.l.b16 %v2994
    %v3269 = vunpack.c.h.b16 %v2994
    %v3270 = vunpack.c.l.b16 %v2995
    %v3271 = vunpack.c.h.b16 %v2995
    %v3272 = vunpack.c.l.b16 %v2996
    %v3273 = vunpack.c.h.b16 %v2996
    %v3274 = vunpack.c.l.b16 %v2997
    %v3275 = vunpack.c.h.b16 %v2997
    %v3276 = vunpack.c.l.b16 %v2998
    %v3277 = vunpack.c.h.b16 %v2998
    %v3278 = vunpack.c.l.b16 %v2999
    %v3279 = vunpack.c.h.b16 %v2999
    %v3280 = vunpack.c.l.b16 %v3000
    %v3281 = vunpack.c.h.b16 %v3000
    %v3282 = vunpack.c.l.b16 %v3001
    %v3283 = vunpack.c.h.b16 %v3001
    %v3284 = vunpack.c.l.b16 %v3002
    %v3285 = vunpack.c.h.b16 %v3002
    %v3286 = vunpack.c.l.b16 %v3003
    %v3287 = vunpack.c.h.b16 %v3003
    %v3288 = vunpack.c.l.b16 %v3004
    %v3289 = vunpack.c.h.b16 %v3004
    %v3290 = vunpack.c.l.b16 %v3005
    %v3291 = vunpack.c.h.b16 %v3005
    %v3292 = vunpack.c.l.b16 %v3006
    %v3293 = vunpack.c.h.b16 %v3006
    %v3294 = vunpack.c.l.b16 %v3007
    %v3295 = vunpack.c.h.b16 %v3007
    %v3296 = vunpack.c.l.b16 %v3008
    %v3297 = vunpack.c.h.b16 %v3008
    %v3298 = vunpack.c.l.b16 %v3009
    %v3299 = vunpack.c.h.b16 %v3009
    %v3300 = vunpack.c.l.b16 %v3010
    %v3301 = vunpack.c.h.b16 %v3010
    %v3302 = vunpack.c.l.b16 %v3011
    %v3303 = vunpack.c.h.b16 %v3011
    %v3304 = vunpack.c.l.b16 %v3012
    %v3305 = vunpack.c.h.b16 %v3012
    %v3306 = vunpack.c.l.b16 %v3013
    %v3307 = vunpack.c.h.b16 %v3013
    %v3308 = vunpack.c.l.b16 %v3014
    %v3309 = vunpack.c.h.b16 %v3014
    %v3310 = vunpack.c.l.b16 %v3015
    %v3311 = vunpack.c.h.b16 %v3015
    %v3312 = vunpack.c.l.b16 %v3016
    %v3313 = vunpack.c.h.b16 %v3016
    %v3314 = vunpack.c.l.b16 %v3017
    %v3315 = vunpack.c.h.b16 %v3017
    %v3316 = vunpack.c.l.b16 %v3018
    %v3317 = vunpack.c.h.b16 %v3018
    %v3318 = vunpack.c.l.b16 %v3019
    %v3319 = vunpack.c.h.b16 %v3019
    %v3320 = vunpack.c.l.b16 %v3020
    %v3321 = vunpack.c.h.b16 %v3020
    %v3322 = vunpack.c.l.b16 %v3021
    %v3323 = vunpack.c.h.b16 %v3021
    %v3324 = vunpack.c.l.b16 %v3022
    %v3325 = vunpack.c.h.b16 %v3022
    %v3326 = vunpack.c.l.b16 %v3023
    %v3327 = vunpack.c.h.b16 %v3023
    %v3328 = vunpack.c.l.b16 %v3024
    %v3329 = vunpack.c.h.b16 %v3024
    %v3330 = vunpack.c.l.b16 %v3025
    %v3331 = vunpack.c.h.b16 %v3025
    %v3332 = vunpack.c.l.b16 %v3026
    %v3333 = vunpack.c.h.b16 %v3026
    %v3334 = vunpack.c.l.b16 %v3027
    %v3335 = vunpack.c.h.b16 %v3027
    %v3336 = vunpack.c.l.b16 %v3028
    %v3337 = vunpack.c.h.b16 %v3028
    %v3338 = vunpack.c.l.b16 %v3029
    %v3339 = vunpack.c.h.b16 %v3029
    %v3340 = vunpack.c.l.b16 %v3030
    %v3341 = vunpack.c.h.b16 %v3030
    %v3342 = vunpack.c.l.b16 %v3031
    %v3343 = vunpack.c.h.b16 %v3031
    %v3344 = vunpack.c.l.b16 %v3032
    %v3345 = vunpack.c.h.b16 %v3032
    %v3346 = vunpack.c.l.b16 %v3033
    %v3347 = vunpack.c.h.b16 %v3033
    %v3348 = vunpack.c.l.b16 %v3034
    %v3349 = vunpack.c.h.b16 %v3034
    %v3350 = vunpack.c.l.b16 %v3035
    %v3351 = vunpack.c.h.b16 %v3035
    %v3352 = vunpack.c.l.b16 %v3036
    %v3353 = vunpack.c.h.b16 %v3036
    %v3354 = vunpack.c.l.b16 %v3037
    %v3355 = vunpack.c.h.b16 %v3037
    %v3356 = vunpack.c.l.b16 %v3038
    %v3357 = vunpack.c.h.b16 %v3038
    %v3358 = vunpack.c.l.b16 %v3039
    %v3359 = vunpack.c.h.b16 %v3039
    %v3360 = vunpack.c.l.b16 %v3040
    %v3361 = vunpack.c.h.b16 %v3040
    %v3362 = vunpack.c.l.b16 %v3041
    %v3363 = vunpack.c.h.b16 %v3041
    %v3364 = vunpack.c.l.b16 %v3042
    %v3365 = vunpack.c.h.b16 %v3042
    %v3366 = vunpack.c.l.b16 %v3043
    %v3367 = vunpack.c.h.b16 %v3043
    %v3368 = vunpack.c.l.b16 %v3044
    %v3369 = vunpack.c.h.b16 %v3044
    %v3370 = vunpack.c.l.b16 %v3045
    %v3371 = vunpack.c.h.b16 %v3045
    %v3372 = vunpack.c.l.b16 %v3046
    %v3373 = vunpack.c.h.b16 %v3046
    %v3374 = vunpack.c.l.b16 %v3047
    %v3375 = vunpack.c.h.b16 %v3047
    %v3376 = vunpack.c.l.b16 %v3048
    %v3377 = vunpack.c.h.b16 %v3048
    %v3378 = vunpack.c.l.b16 %v3049
    %v3379 = vunpack.c.h.b16 %v3049
    %v3380 = vunpack.c.l.b16 %v3050
    %v3381 = vunpack.c.h.b16 %v3050
    %v3382 = vunpack.c.l.b16 %v3051
    %v3383 = vunpack.c.h.b16 %v3051
    %v3384 = vunpack.c.l.b16 %v3052
    %v3385 = vunpack.c.h.b16 %v3052
    %v3386 = vunpack.c.l.b16 %v3053
    %v3387 = vunpack.c.h.b16 %v3053
    %v3388 = vunpack.c.l.b16 %v3054
    %v3389 = vunpack.c.h.b16 %v3054
    %v3390 = vunpack.c.l.b16 %v3055
    %v3391 = vunpack.c.h.b16 %v3055
    %v3392 = vunpack.c.l.b16 %v3056
    %v3393 = vunpack.c.h.b16 %v3056
    %v3394 = vunpack.c.l.b16 %v3057
    %v3395 = vunpack.c.h.b16 %v3057
    %v3396 = vunpack.c.l.b16 %v3058
    %v3397 = vunpack.c.h.b16 %v3058
    %v3398 = vunpack.c.l.b16 %v3059
    %v3399 = vunpack.c.h.b16 %v3059
    %v3400 = vunpack.c.l.b16 %v3060
    %v3401 = vunpack.c.h.b16 %v3060
    %v3402 = vunpack.c.l.b16 %v3061
    %v3403 = vunpack.c.h.b16 %v3061
    %v3404 = vunpack.c.l.b16 %v3062
    %v3405 = vunpack.c.h.b16 %v3062
    %v3406 = vunpack.c.l.b16 %v3063
    %v3407 = vunpack.c.h.b16 %v3063
    %v3408 = vunpack.c.l.b16 %v3064
    %v3409 = vunpack.c.h.b16 %v3064
    %v3410 = vunpack.c.l.b16 %v3065
    %v3411 = vunpack.c.h.b16 %v3065
    %v3412 = vunpack.c.l.b16 %v3066
    %v3413 = vunpack.c.h.b16 %v3066
    %v3414 = vunpack.c.l.b16 %v3067
    %v3415 = vunpack.c.h.b16 %v3067
    %v3416 = vunpack.c.l.b16 %v3068
    %v3417 = vunpack.c.h.b16 %v3068
    %v3418 = vunpack.c.l.b16 %v3069
    %v3419 = vunpack.c.h.b16 %v3069
    %v3420 = vunpack.c.l.b16 %v3070
    %v3421 = vunpack.c.h.b16 %v3070
    %v3422 = vunpack.c.l.b16 %v3071
    %v3423 = vunpack.c.h.b16 %v3071
    %v3424 = vunpack.c.l.b16 %v3072
    %v3425 = vunpack.c.h.b16 %v3072
    %v3426 = vunpack.c.l.b16 %v3073
    %v3427 = vunpack.c.h.b16 %v3073
    %v3428 = vunpack.c.l.b16 %v3074
    %v3429 = vunpack.c.h.b16 %v3074
    %v3430 = vunpack.c.l.b16 %v3075
    %v3431 = vunpack.c.h.b16 %v3075
    %v3432 = vunpack.c.l.b16 %v3076
    %v3433 = vunpack.c.h.b16 %v3076
    %v3434 = vunpack.c.l.b16 %v3077
    %v3435 = vunpack.c.h.b16 %v3077
    %v3436 = vunpack.c.l.b16 %v3078
    %v3437 = vunpack.c.h.b16 %v3078
    %v3438 = vunpack.c.l.b16 %v3079
    %v3439 = vunpack.c.h.b16 %v3079
    %v3440 = vunpack.c.l.b16 %v3080
    %v3441 = vunpack.c.h.b16 %v3080
    %v3442 = vunpack.c.l.b16 %v3081
    %v3443 = vunpack.c.h.b16 %v3081
    %v3444 = vunpack.c.l.b16 %v3082
    %v3445 = vunpack.c.h.b16 %v3082
    %v3446 = vunpack.c.l.b16 %v3083
    %v3447 = vunpack.c.h.b16 %v3083
    %v3448 = vunpack.c.l.b16 %v3084
    %v3449 = vunpack.c.h.b16 %v3084
    %v3450 = vunpack.c.l.b16 %v3085
    %v3451 = vunpack.c.h.b16 %v3085
    %v3452 = vunpack.c.l.b16 %v3086
    %v3453 = vunpack.c.h.b16 %v3086
    %v3454 = vunpack.c.l.b16 %v3087
    %v3455 = vunpack.c.h.b16 %v3087
    %v3456 = vunpack.c.l.b16 %v3088
    %v3457 = vunpack.c.h.b16 %v3088
    %v3458 = vunpack.c.l.b16 %v3089
    %v3459 = vunpack.c.h.b16 %v3089
    %v3460 = vunpack.c.l.b16 %v3090
    %v3461 = vunpack.c.h.b16 %v3090
    %v3462 = vunpack.c.l.b16 %v3091
    %v3463 = vunpack.c.h.b16 %v3091
    %v3464 = vunpack.c.l.b16 %v3092
    %v3465 = vunpack.c.h.b16 %v3092
    %v3466 = vunpack.c.l.b16 %v3093
    %v3467 = vunpack.c.h.b16 %v3093
    %v3468 = vunpack.c.l.b16 %v3094
    %v3469 = vunpack.c.h.b16 %v3094
    %v3470 = vunpack.c.l.b16 %v3095
    %v3471 = vunpack.c.h.b16 %v3095
    %v3472 = vunpack.c.l.b16 %v3096
    %v3473 = vunpack.c.h.b16 %v3096
    %v3474 = vunpack.c.l.b16 %v3097
    %v3475 = vunpack.c.h.b16 %v3097
    %v3476 = vunpack.c.l.b16 %v3098
    %v3477 = vunpack.c.h.b16 %v3098
    %v3478 = vunpack.c.l.b16 %v3099
    %v3479 = vunpack.c.h.b16 %v3099
    %v3480 = vunpack.c.l.b16 %v3100
    %v3481 = vunpack.c.h.b16 %v3100
    %v3482 = vunpack.c.l.b16 %v3101
    %v3483 = vunpack.c.h.b16 %v3101
    %v3484 = vunpack.c.l.b16 %v3102
    %v3485 = vunpack.c.h.b16 %v3102
    %v3486 = vunpack.c.l.b16 %v3103
    %v3487 = vunpack.c.h.b16 %v3103
    %v3488 = vpack.c.b16 %v3236, %v3232
    %v3489 = vpack.c.b16 %v3237, %v3233
    %v3490 = vpack.c.b16 %v3238, %v3234
    %v3491 = vpack.c.b16 %v3239, %v3235
    %v3492 = vpack.c.b16 %v3244, %v3240
    %v3493 = vpack.c.b16 %v3245, %v3241
    %v3494 = vpack.c.b16 %v3246, %v3242
    %v3495 = vpack.c.b16 %v3247, %v3243
    %v3496 = vpack.c.b16 %v3252, %v3248
    %v3497 = vpack.c.b16 %v3253, %v3249
    %v3498 = vpack.c.b16 %v3254, %v3250
    %v3499 = vpack.c.b16 %v3255, %v3251
    %v3500 = vpack.c.b16 %v3260, %v3256
    %v3501 = vpack.c.b16 %v3261, %v3257
    %v3502 = vpack.c.b16 %v3262, %v3258
    %v3503 = vpack.c.b16 %v3263, %v3259
    %v3504 = vpack.c.b16 %v3268, %v3264
    %v3505 = vpack.c.b16 %v3269, %v3265
    %v3506 = vpack.c.b16 %v3270, %v3266
    %v3507 = vpack.c.b16 %v3271, %v3267
    %v3508 = vpack.c.b16 %v3276, %v3272
    %v3509 = vpack.c.b16 %v3277, %v3273
    %v3510 = vpack.c.b16 %v3278, %v3274
    %v3511 = vpack.c.b16 %v3279, %v3275
    %v3512 = vpack.c.b16 %v3284, %v3280
    %v3513 = vpack.c.b16 %v3285, %v3281
    %v3514 = vpack.c.b16 %v3286, %v3282
    %v3515 = vpack.c.b16 %v3287, %v3283
    %v3516 = vpack.c.b16 %v3292, %v3288
    %v3517 = vpack.c.b16 %v3293, %v3289
    %v3518 = vpack.c.b16 %v3294, %v3290
    %v3519 = vpack.c.b16 %v3295, %v3291
    %v3520 = vpack.c.b16 %v3300, %v3296
    %v3521 = vpack.c.b16 %v3301, %v3297
    %v3522 = vpack.c.b16 %v3302, %v3298
    %v3523 = vpack.c.b16 %v3303, %v3299
    %v3524 = vpack.c.b16 %v3308, %v3304
    %v3525 = vpack.c.b16 %v3309, %v3305
    %v3526 = vpack.c.b16 %v3310, %v3306
    %v3527 = vpack.c.b16 %v3311, %v3307
    %v3528 = vpack.c.b16 %v3316, %v3312
    %v3529 = vpack.c.b16 %v3317, %v3313
    %v3530 = vpack.c.b16 %v3318, %v3314
    %v3531 = vpack.c.b16 %v3319, %v3315
    %v3532 = vpack.c.b16 %v3324, %v3320
    %v3533 = vpack.c.b16 %v3325, %v3321
    %v3534 = vpack.c.b16 %v3326, %v3322
    %v3535 = vpack.c.b16 %v3327, %v3323
    %v3536 = vpack.c.b16 %v3332, %v3328
    %v3537 = vpack.c.b16 %v3333, %v3329
    %v3538 = vpack.c.b16 %v3334, %v3330
    %v3539 = vpack.c.b16 %v3335, %v3331
    %v3540 = vpack.c.b16 %v3340, %v3336
    %v3541 = vpack.c.b16 %v3341, %v3337
    %v3542 = vpack.c.b16 %v3342, %v3338
    %v3543 = vpack.c.b16 %v3343, %v3339
    %v3544 = vpack.c.b16 %v3348, %v3344
    %v3545 = vpack.c.b16 %v3349, %v3345
    %v3546 = vpack.c.b16 %v3350, %v3346
    %v3547 = vpack.c.b16 %v3351, %v3347
    %v3548 = vpack.c.b16 %v3356, %v3352
    %v3549 = vpack.c.b16 %v3357, %v3353
    %v3550 = vpack.c.b16 %v3358, %v3354
    %v3551 = vpack.c.b16 %v3359, %v3355
    %v3552 = vpack.c.b16 %v3364, %v3360
    %v3553 = vpack.c.b16 %v3365, %v3361
    %v3554 = vpack.c.b16 %v3366, %v3362
    %v3555 = vpack.c.b16 %v3367, %v3363
    %v3556 = vpack.c.b16 %v3372, %v3368
    %v3557 = vpack.c.b16 %v3373, %v3369
    %v3558 = vpack.c.b16 %v3374, %v3370
    %v3559 = vpack.c.b16 %v3375, %v3371
    %v3560 = vpack.c.b16 %v3380, %v3376
    %v3561 = vpack.c.b16 %v3381, %v3377
    %v3562 = vpack.c.b16 %v3382, %v3378
    %v3563 = vpack.c.b16 %v3383, %v3379
    %v3564 = vpack.c.b16 %v3388, %v3384
    %v3565 = vpack.c.b16 %v3389, %v3385
    %v3566 = vpack.c.b16 %v3390, %v3386
    %v3567 = vpack.c.b16 %v3391, %v3387
    %v3568 = vpack.c.b16 %v3396, %v3392
    %v3569 = vpack.c.b16 %v3397, %v3393
    %v3570 = vpack.c.b16 %v3398, %v3394
    %v3571 = vpack.c.b16 %v3399, %v3395
    %v3572 = vpack.c.b16 %v3404, %v3400
    %v3573 = vpack.c.b16 %v3405, %v3401
    %v3574 = vpack.c.b16 %v3406, %v3402
    %v3575 = vpack.c.b16 %v3407, %v3403
    %v3576 = vpack.c.b16 %v3412, %v3408
    %v3577 = vpack.c.b16 %v3413, %v3409
    %v3578 = vpack.c.b16 %v3414, %v3410
    %v3579 = vpack.c.b16 %v3415, %v3411
    %v3580 = vpack.c.b16 %v3420, %v3416
    %v3581 = vpack.c.b16 %v3421, %v3417
    %v3582 = vpack.c.b16 %v3422, %v3418
    %v3583 = vpack.c.b16 %v3423, %v3419
    %v3584 = vpack.c.b16 %v3428, %v3424
    %v3585 = vpack.c.b16 %v3429, %v3425
    %v3586 = vpack.c.b16 %v3430, %v3426
    %v3587 = vpack.c.b16 %v3431, %v3427
    %v3588 = vpack.c.b16 %v3436, %v3432
    %v3589 = vpack.c.b16 %v3437, %v3433
    %v3590 = vpack.c.b16 %v3438, %v3434
    %v3591 = vpack.c.b16 %v3439, %v3435
    %v3592 = vpack.c.b16 %v3444, %v3440
    %v3593 = vpack.c.b16 %v3445, %v3441
    %v3594 = vpack.c.b16 %v3446, %v3442
    %v3595 = vpack.c.b16 %v3447, %v3443
    %v3596 = vpack.c.b16 %v3452, %v3448
    %v3597 = vpack.c.b16 %v3453, %v3449
    %v3598 = vpack.c.b16 %v3454, %v3450
    %v3599 = vpack.c.b16 %v3455, %v3451
    %v3600 = vpack.c.b16 %v3460, %v3456
    %v3601 = vpack.c.b16 %v3461, %v3457
    %v3602 = vpack.c.b16 %v3462, %v3458
    %v3603 = vpack.c.b16 %v3463, %v3459
    %v3604 = vpack.c.b16 %v3468, %v3464
    %v3605 = vpack.c.b16 %v3469, %v3465
    %v3606 = vpack.c.b16 %v3470, %v3466
    %v3607 = vpack.c.b16 %v3471, %v3467
    %v3608 = vpack.c.b16 %v3476, %v3472
    %v3609 = vpack.c.b16 %v3477, %v3473
    %v3610 = vpack.c.b16 %v3478, %v3474
    %v3611 = vpack.c.b16 %v3479, %v3475
    %v3612 = vpack.c.b16 %v3484, %v3480
    %v3613 = vpack.c.b16 %v3485, %v3481
    %v3614 = vpack.c.b16 %v3486, %v3482
    %v3615 = vpack.c.b16 %v3487, %v3483
    %3744 = vmatprep.subr.bf16.mxu0 %v3517
    %3745 = vmatpush1.bf16.msra.mxu0 %v3516
    %3746 = vmatprep.subr.bf16.mxu0 %v3513
    %3747 = vmatpush1.bf16.msra.mxu0 %v3512
    %3748 = vmatprep.subr.bf16.mxu0 %v3509
    %3749 = vmatpush1.bf16.msra.mxu0 %v3508
    %3750 = vmatprep.subr.bf16.mxu0 %v3505
    %3751 = vmatpush1.bf16.msra.mxu0 %v3504
    %3752 = vmatprep.subr.bf16.mxu0 %v3501
    %3753 = vmatpush1.bf16.msra.mxu0 %v3500
    %3754 = vmatprep.subr.bf16.mxu0 %v3497
    %3755 = vmatpush1.bf16.msra.mxu0 %v3496
    %3756 = vmatprep.subr.bf16.mxu0 %v3493
    %3757 = vmatpush1.bf16.msra.mxu0 %v3492
    %3758 = vmatprep.subr.bf16.mxu0 %v3489
    %3759 = vmatpush1.bf16.msra.mxu0 %v3488
    %3760 = vmatprep.subr.bf16.mxu0 %v3549
    %3761 = vmatpush2.bf16.msra.mxu0 %v3548
    %3762 = vmatprep.subr.bf16.mxu0 %v3545
    %3763 = vmatpush2.bf16.msra.mxu0 %v3544
    %3764 = vmatprep.subr.bf16.mxu0 %v3541
    %3765 = vmatpush2.bf16.msra.mxu0 %v3540
    %3766 = vmatprep.subr.bf16.mxu0 %v3537
    %3767 = vmatpush2.bf16.msra.mxu0 %v3536
    %3768 = vmatprep.subr.bf16.mxu0 %v3533
    %3769 = vmatpush2.bf16.msra.mxu0 %v3532
    %3770 = vmatprep.subr.bf16.mxu0 %v3529
    %3771 = vmatpush2.bf16.msra.mxu0 %v3528
    %3772 = vmatprep.subr.bf16.mxu0 %v3525
    %3773 = vmatpush2.bf16.msra.mxu0 %v3524
    %3774 = vmatprep.subr.bf16.mxu0 %v3521
    %3775 = vmatpush2.bf16.msra.mxu0 %v3520
    %3776 = vmatprep.mubr.bf16.mxu0 %v2973
    %3777 = vmatmul.mubr.bf16.gmra.mxu0 %v2972
    %v3778 = vpop.f32.mrf.mxu0
    %v3779 = vadd.f32 0.0, %v3778
    %v3780 = vpop.f32.mrf.mxu0
    %v3781 = vadd.f32 0.0, %v3780
    %v3782 = vpop.f32.mrf.mxu0
    %v3783 = vadd.f32 0.0, %v3782
    %v3784 = vpop.f32.mrf.mxu0
    %v3785 = vadd.f32 0.0, %v3784
    %3786 = vdwg.mxu0
    %3787 = vmatprep.subr.bf16.mxu0 %v3581
    %3788 = vmatpush1.bf16.msra.mxu0 %v3580
    %3789 = vmatprep.subr.bf16.mxu0 %v3577
    %3790 = vmatpush1.bf16.msra.mxu0 %v3576
    %3791 = vmatprep.subr.bf16.mxu0 %v3573
    %3792 = vmatpush1.bf16.msra.mxu0 %v3572
    %3793 = vmatprep.subr.bf16.mxu0 %v3569
    %3794 = vmatpush1.bf16.msra.mxu0 %v3568
    %3795 = vmatprep.subr.bf16.mxu0 %v3565
    %3796 = vmatpush1.bf16.msra.mxu0 %v3564
    %3797 = vmatprep.subr.bf16.mxu0 %v3561
    %3798 = vmatpush1.bf16.msra.mxu0 %v3560
    %3799 = vmatprep.subr.bf16.mxu0 %v3557
    %3800 = vmatpush1.bf16.msra.mxu0 %v3556
    %3801 = vmatprep.subr.bf16.mxu0 %v3553
    %3802 = vmatpush1.bf16.msra.mxu0 %v3552
    %3803 = vmatprep.subr.bf16.mxu0 %v3613
    %3804 = vmatpush2.bf16.msra.mxu0 %v3612
    %3805 = vmatprep.subr.bf16.mxu0 %v3609
    %3806 = vmatpush2.bf16.msra.mxu0 %v3608
    %3807 = vmatprep.subr.bf16.mxu0 %v3605
    %3808 = vmatpush2.bf16.msra.mxu0 %v3604
    %3809 = vmatprep.subr.bf16.mxu0 %v3601
    %3810 = vmatpush2.bf16.msra.mxu0 %v3600
    %3811 = vmatprep.subr.bf16.mxu0 %v3597
    %3812 = vmatpush2.bf16.msra.mxu0 %v3596
    %3813 = vmatprep.subr.bf16.mxu0 %v3593
    %3814 = vmatpush2.bf16.msra.mxu0 %v3592
    %3815 = vmatprep.subr.bf16.mxu0 %v3589
    %3816 = vmatpush2.bf16.msra.mxu0 %v3588
    %3817 = vmatprep.subr.bf16.mxu0 %v3585
    %3818 = vmatpush2.bf16.msra.mxu0 %v3584
    %3819 = vmatprep.mubr.bf16.mxu0 %v2975
    %3820 = vmatmul.mubr.bf16.gmra.mxu0 %v2974
    %v3821 = vpop.f32.mrf.mxu0
    %v3822 = vadd.f32 %v3779, %v3821
    %v3823 = vpop.f32.mrf.mxu0
    %v3824 = vadd.f32 %v3781, %v3823
    %v3825 = vpop.f32.mrf.mxu0
    %v3826 = vadd.f32 %v3783, %v3825
    %v3827 = vpop.f32.mrf.mxu0
    %v3828 = vadd.f32 %v3785, %v3827
    %3829 = vdwg.mxu0
    %3830 = vmatprep.subr.bf16.mxu0 %v3519
    %3831 = vmatpush1.bf16.msra.mxu0 %v3518
    %3832 = vmatprep.subr.bf16.mxu0 %v3515
    %3833 = vmatpush1.bf16.msra.mxu0 %v3514
    %3834 = vmatprep.subr.bf16.mxu0 %v3511
    %3835 = vmatpush1.bf16.msra.mxu0 %v3510
    %3836 = vmatprep.subr.bf16.mxu0 %v3507
    %3837 = vmatpush1.bf16.msra.mxu0 %v3506
    %3838 = vmatprep.subr.bf16.mxu0 %v3503
    %3839 = vmatpush1.bf16.msra.mxu0 %v3502
    %3840 = vmatprep.subr.bf16.mxu0 %v3499
    %3841 = vmatpush1.bf16.msra.mxu0 %v3498
    %3842 = vmatprep.subr.bf16.mxu0 %v3495
    %3843 = vmatpush1.bf16.msra.mxu0 %v3494
    %3844 = vmatprep.subr.bf16.mxu0 %v3491
    %3845 = vmatpush1.bf16.msra.mxu0 %v3490
    %3846 = vmatprep.subr.bf16.mxu0 %v3551
    %3847 = vmatpush2.bf16.msra.mxu0 %v3550
    %3848 = vmatprep.subr.bf16.mxu0 %v3547
    %3849 = vmatpush2.bf16.msra.mxu0 %v3546
    %3850 = vmatprep.subr.bf16.mxu0 %v3543
    %3851 = vmatpush2.bf16.msra.mxu0 %v3542
    %3852 = vmatprep.subr.bf16.mxu0 %v3539
    %3853 = vmatpush2.bf16.msra.mxu0 %v3538
    %3854 = vmatprep.subr.bf16.mxu0 %v3535
    %3855 = vmatpush2.bf16.msra.mxu0 %v3534
    %3856 = vmatprep.subr.bf16.mxu0 %v3531
    %3857 = vmatpush2.bf16.msra.mxu0 %v3530
    %3858 = vmatprep.subr.bf16.mxu0 %v3527
    %3859 = vmatpush2.bf16.msra.mxu0 %v3526
    %3860 = vmatprep.subr.bf16.mxu0 %v3523
    %3861 = vmatpush2.bf16.msra.mxu0 %v3522
    %3862 = vmatprep.mubr.bf16.mxu0 %v2973
    %3863 = vmatmul.mubr.bf16.gmra.mxu0 %v2972
    %v3864 = vpop.f32.mrf.mxu0
    %v3865 = vadd.f32 0.0, %v3864
    %v3866 = vpop.f32.mrf.mxu0
    %v3867 = vadd.f32 0.0, %v3866
    %v3868 = vpop.f32.mrf.mxu0
    %v3869 = vadd.f32 0.0, %v3868
    %v3870 = vpop.f32.mrf.mxu0
    %v3871 = vadd.f32 0.0, %v3870
    %3872 = vdwg.mxu0
    %3873 = vmatprep.subr.bf16.mxu0 %v3583
    %3874 = vmatpush1.bf16.msra.mxu0 %v3582
    %3875 = vmatprep.subr.bf16.mxu0 %v3579
    %3876 = vmatpush1.bf16.msra.mxu0 %v3578
    %3877 = vmatprep.subr.bf16.mxu0 %v3575
    %3878 = vmatpush1.bf16.msra.mxu0 %v3574
    %3879 = vmatprep.subr.bf16.mxu0 %v3571
    %3880 = vmatpush1.bf16.msra.mxu0 %v3570
    %3881 = vmatprep.subr.bf16.mxu0 %v3567
    %3882 = vmatpush1.bf16.msra.mxu0 %v3566
    %3883 = vmatprep.subr.bf16.mxu0 %v3563
    %3884 = vmatpush1.bf16.msra.mxu0 %v3562
    %3885 = vmatprep.subr.bf16.mxu0 %v3559
    %3886 = vmatpush1.bf16.msra.mxu0 %v3558
    %3887 = vmatprep.subr.bf16.mxu0 %v3555
    %3888 = vmatpush1.bf16.msra.mxu0 %v3554
    %3889 = vmatprep.subr.bf16.mxu0 %v3615
    %3890 = vmatpush2.bf16.msra.mxu0 %v3614
    %3891 = vmatprep.subr.bf16.mxu0 %v3611
    %3892 = vmatpush2.bf16.msra.mxu0 %v3610
    %3893 = vmatprep.subr.bf16.mxu0 %v3607
    %3894 = vmatpush2.bf16.msra.mxu0 %v3606
    %3895 = vmatprep.subr.bf16.mxu0 %v3603
    %3896 = vmatpush2.bf16.msra.mxu0 %v3602
    %3897 = vmatprep.subr.bf16.mxu0 %v3599
    %3898 = vmatpush2.bf16.msra.mxu0 %v3598
    %3899 = vmatprep.subr.bf16.mxu0 %v3595
    %3900 = vmatpush2.bf16.msra.mxu0 %v3594
    %3901 = vmatprep.subr.bf16.mxu0 %v3591
    %3902 = vmatpush2.bf16.msra.mxu0 %v3590
    %3903 = vmatprep.subr.bf16.mxu0 %v3587
    %3904 = vmatpush2.bf16.msra.mxu0 %v3586
    %3905 = vmatprep.mubr.bf16.mxu0 %v2975
    %3906 = vmatmul.mubr.bf16.gmra.mxu0 %v2974
    %v3907 = vpop.f32.mrf.mxu0
    %v3908 = vadd.f32 %v3865, %v3907
    %v3909 = vpop.f32.mrf.mxu0
    %v3910 = vadd.f32 %v3867, %v3909
    %v3911 = vpop.f32.mrf.mxu0
    %v3912 = vadd.f32 %v3869, %v3911
    %v3913 = vpop.f32.mrf.mxu0
    %v3914 = vadd.f32 %v3871, %v3913
    %3915 = vdwg.mxu0
    %v3916 = vadd.f32 %v1839, %v3822
    %v3917 = vadd.f32 %v1840, %v3824
    %v3918 = vadd.f32 %v1841, %v3908
    %v3919 = vadd.f32 %v1842, %v3910
    %v3920 = vadd.f32 %v1843, %v3826
    %v3921 = vadd.f32 %v1844, %v3828
    %v3922 = vadd.f32 %v1845, %v3912
    %v3923 = vadd.f32 %v1846, %v3914
    %s3924 = scalar_lea.vmem %s2, 32
    %v3925 = vld [vmem:[%s3924] ss:$8 sm:$0xf]
    %v3927 = vlaneseq
    %v3928 = vshrl.u32 %v3927, 7
    %v3929 = vsub.s32 0, %v3928
    %v3930 = vrot.slane %v3925, %v3929
    %v3931 = vlaneseq
    %v3932 = vshrl.u32 %v3931, 7
    %v3933 = vsub.s32 1, %v3932
    %v3934 = vrot.slane %v3925, %v3933
    %v3935 = vlaneseq
    %v3936 = vshrl.u32 %v3935, 7
    %v3937 = vsub.s32 2, %v3936
    %v3938 = vrot.slane %v3925, %v3937
    %v3939 = vlaneseq
    %v3940 = vshrl.u32 %v3939, 7
    %v3941 = vsub.s32 3, %v3940
    %v3942 = vrot.slane %v3925, %v3941
    %v3947 = vadd.f32 %v3916, %v3930
    %v3948 = vadd.f32 %v3917, %v3934
    %v3949 = vadd.f32 %v3918, %v3938
    %v3950 = vadd.f32 %v3919, %v3942
    %v3951 = vadd.f32 %v3920, %v3930
    %v3952 = vadd.f32 %v3921, %v3934
    %v3953 = vadd.f32 %v3922, %v3938
    %v3954 = vadd.f32 %v3923, %v3942
    %v3955 = vpack.c.bf16 %v3951, %v3947
    %v3956 = vpack.c.bf16 %v3952, %v3948
    %v3957 = vpack.c.bf16 %v3953, %v3949
    %v3958 = vpack.c.bf16 %v3954, %v3950
    %v3959 = vld [vmem:[#allocation13] sm:$0xff]
    %v3960 = vld [vmem:[#allocation13 + $0x8] sm:$0xff]
    %v3961 = vld [vmem:[#allocation13 + $0x10] sm:$0xff]
    %v3962 = vld [vmem:[#allocation13 + $0x18] sm:$0xff]
    %v3963 = vld [vmem:[#allocation13 + $0x20] sm:$0xff]
    %v3964 = vld [vmem:[#allocation13 + $0x28] sm:$0xff]
    %v3965 = vld [vmem:[#allocation13 + $0x30] sm:$0xff]
    %v3966 = vld [vmem:[#allocation13 + $0x38] sm:$0xff]
    %v3967 = vld [vmem:[#allocation13 + $0x40] sm:$0xff]
    %v3968 = vld [vmem:[#allocation13 + $0x48] sm:$0xff]
    %v3969 = vld [vmem:[#allocation13 + $0x50] sm:$0xff]
    %v3970 = vld [vmem:[#allocation13 + $0x58] sm:$0xff]
    %v3971 = vld [vmem:[#allocation13 + $0x60] sm:$0xff]
    %v3972 = vld [vmem:[#allocation13 + $0x68] sm:$0xff]
    %v3973 = vld [vmem:[#allocation13 + $0x70] sm:$0xff]
    %v3974 = vld [vmem:[#allocation13 + $0x78] sm:$0xff]
    %v3975 = vld [vmem:[#allocation13 + $0x80] sm:$0xff]
    %v3976 = vld [vmem:[#allocation13 + $0x88] sm:$0xff]
    %v3977 = vld [vmem:[#allocation13 + $0x90] sm:$0xff]
    %v3978 = vld [vmem:[#allocation13 + $0x98] sm:$0xff]
    %v3979 = vld [vmem:[#allocation13 + $0xa0] sm:$0xff]
    %v3980 = vld [vmem:[#allocation13 + $0xa8] sm:$0xff]
    %v3981 = vld [vmem:[#allocation13 + $0xb0] sm:$0xff]
    %v3982 = vld [vmem:[#allocation13 + $0xb8] sm:$0xff]
    %v3983 = vld [vmem:[#allocation13 + $0xc0] sm:$0xff]
    %v3984 = vld [vmem:[#allocation13 + $0xc8] sm:$0xff]
    %v3985 = vld [vmem:[#allocation13 + $0xd0] sm:$0xff]
    %v3986 = vld [vmem:[#allocation13 + $0xd8] sm:$0xff]
    %v3987 = vld [vmem:[#allocation13 + $0xe0] sm:$0xff]
    %v3988 = vld [vmem:[#allocation13 + $0xe8] sm:$0xff]
    %v3989 = vld [vmem:[#allocation13 + $0xf0] sm:$0xff]
    %v3990 = vld [vmem:[#allocation13 + $0xf8] sm:$0xff]
    %v3991 = vld [vmem:[#allocation13 + $0x100] sm:$0xff]
    %v3992 = vld [vmem:[#allocation13 + $0x108] sm:$0xff]
    %v3993 = vld [vmem:[#allocation13 + $0x110] sm:$0xff]
    %v3994 = vld [vmem:[#allocation13 + $0x118] sm:$0xff]
    %v3995 = vld [vmem:[#allocation13 + $0x120] sm:$0xff]
    %v3996 = vld [vmem:[#allocation13 + $0x128] sm:$0xff]
    %v3997 = vld [vmem:[#allocation13 + $0x130] sm:$0xff]
    %v3998 = vld [vmem:[#allocation13 + $0x138] sm:$0xff]
    %v3999 = vld [vmem:[#allocation13 + $0x140] sm:$0xff]
    %v4000 = vld [vmem:[#allocation13 + $0x148] sm:$0xff]
    %v4001 = vld [vmem:[#allocation13 + $0x150] sm:$0xff]
    %v4002 = vld [vmem:[#allocation13 + $0x158] sm:$0xff]
    %v4003 = vld [vmem:[#allocation13 + $0x160] sm:$0xff]
    %v4004 = vld [vmem:[#allocation13 + $0x168] sm:$0xff]
    %v4005 = vld [vmem:[#allocation13 + $0x170] sm:$0xff]
    %v4006 = vld [vmem:[#allocation13 + $0x178] sm:$0xff]
    %v4007 = vld [vmem:[#allocation13 + $0x180] sm:$0xff]
    %v4008 = vld [vmem:[#allocation13 + $0x188] sm:$0xff]
    %v4009 = vld [vmem:[#allocation13 + $0x190] sm:$0xff]
    %v4010 = vld [vmem:[#allocation13 + $0x198] sm:$0xff]
    %v4011 = vld [vmem:[#allocation13 + $0x1a0] sm:$0xff]
    %v4012 = vld [vmem:[#allocation13 + $0x1a8] sm:$0xff]
    %v4013 = vld [vmem:[#allocation13 + $0x1b0] sm:$0xff]
    %v4014 = vld [vmem:[#allocation13 + $0x1b8] sm:$0xff]
    %v4015 = vld [vmem:[#allocation13 + $0x1c0] sm:$0xff]
    %v4016 = vld [vmem:[#allocation13 + $0x1c8] sm:$0xff]
    %v4017 = vld [vmem:[#allocation13 + $0x1d0] sm:$0xff]
    %v4018 = vld [vmem:[#allocation13 + $0x1d8] sm:$0xff]
    %v4019 = vld [vmem:[#allocation13 + $0x1e0] sm:$0xff]
    %v4020 = vld [vmem:[#allocation13 + $0x1e8] sm:$0xff]
    %v4021 = vld [vmem:[#allocation13 + $0x1f0] sm:$0xff]
    %v4022 = vld [vmem:[#allocation13 + $0x1f8] sm:$0xff]
    %v4023 = vld [vmem:[#allocation13 + $0x200] sm:$0xff]
    %v4024 = vld [vmem:[#allocation13 + $0x208] sm:$0xff]
    %v4025 = vld [vmem:[#allocation13 + $0x210] sm:$0xff]
    %v4026 = vld [vmem:[#allocation13 + $0x218] sm:$0xff]
    %v4027 = vld [vmem:[#allocation13 + $0x220] sm:$0xff]
    %v4028 = vld [vmem:[#allocation13 + $0x228] sm:$0xff]
    %v4029 = vld [vmem:[#allocation13 + $0x230] sm:$0xff]
    %v4030 = vld [vmem:[#allocation13 + $0x238] sm:$0xff]
    %v4031 = vld [vmem:[#allocation13 + $0x240] sm:$0xff]
    %v4032 = vld [vmem:[#allocation13 + $0x248] sm:$0xff]
    %v4033 = vld [vmem:[#allocation13 + $0x250] sm:$0xff]
    %v4034 = vld [vmem:[#allocation13 + $0x258] sm:$0xff]
    %v4035 = vld [vmem:[#allocation13 + $0x260] sm:$0xff]
    %v4036 = vld [vmem:[#allocation13 + $0x268] sm:$0xff]
    %v4037 = vld [vmem:[#allocation13 + $0x270] sm:$0xff]
    %v4038 = vld [vmem:[#allocation13 + $0x278] sm:$0xff]
    %v4039 = vld [vmem:[#allocation13 + $0x280] sm:$0xff]
    %v4040 = vld [vmem:[#allocation13 + $0x288] sm:$0xff]
    %v4041 = vld [vmem:[#allocation13 + $0x290] sm:$0xff]
    %v4042 = vld [vmem:[#allocation13 + $0x298] sm:$0xff]
    %v4043 = vld [vmem:[#allocation13 + $0x2a0] sm:$0xff]
    %v4044 = vld [vmem:[#allocation13 + $0x2a8] sm:$0xff]
    %v4045 = vld [vmem:[#allocation13 + $0x2b0] sm:$0xff]
    %v4046 = vld [vmem:[#allocation13 + $0x2b8] sm:$0xff]
    %v4047 = vld [vmem:[#allocation13 + $0x2c0] sm:$0xff]
    %v4048 = vld [vmem:[#allocation13 + $0x2c8] sm:$0xff]
    %v4049 = vld [vmem:[#allocation13 + $0x2d0] sm:$0xff]
    %v4050 = vld [vmem:[#allocation13 + $0x2d8] sm:$0xff]
    %v4051 = vld [vmem:[#allocation13 + $0x2e0] sm:$0xff]
    %v4052 = vld [vmem:[#allocation13 + $0x2e8] sm:$0xff]
    %v4053 = vld [vmem:[#allocation13 + $0x2f0] sm:$0xff]
    %v4054 = vld [vmem:[#allocation13 + $0x2f8] sm:$0xff]
    %v4055 = vld [vmem:[#allocation13 + $0x300] sm:$0xff]
    %v4056 = vld [vmem:[#allocation13 + $0x308] sm:$0xff]
    %v4057 = vld [vmem:[#allocation13 + $0x310] sm:$0xff]
    %v4058 = vld [vmem:[#allocation13 + $0x318] sm:$0xff]
    %v4059 = vld [vmem:[#allocation13 + $0x320] sm:$0xff]
    %v4060 = vld [vmem:[#allocation13 + $0x328] sm:$0xff]
    %v4061 = vld [vmem:[#allocation13 + $0x330] sm:$0xff]
    %v4062 = vld [vmem:[#allocation13 + $0x338] sm:$0xff]
    %v4063 = vld [vmem:[#allocation13 + $0x340] sm:$0xff]
    %v4064 = vld [vmem:[#allocation13 + $0x348] sm:$0xff]
    %v4065 = vld [vmem:[#allocation13 + $0x350] sm:$0xff]
    %v4066 = vld [vmem:[#allocation13 + $0x358] sm:$0xff]
    %v4067 = vld [vmem:[#allocation13 + $0x360] sm:$0xff]
    %v4068 = vld [vmem:[#allocation13 + $0x368] sm:$0xff]
    %v4069 = vld [vmem:[#allocation13 + $0x370] sm:$0xff]
    %v4070 = vld [vmem:[#allocation13 + $0x378] sm:$0xff]
    %v4071 = vld [vmem:[#allocation13 + $0x380] sm:$0xff]
    %v4072 = vld [vmem:[#allocation13 + $0x388] sm:$0xff]
    %v4073 = vld [vmem:[#allocation13 + $0x390] sm:$0xff]
    %v4074 = vld [vmem:[#allocation13 + $0x398] sm:$0xff]
    %v4075 = vld [vmem:[#allocation13 + $0x3a0] sm:$0xff]
    %v4076 = vld [vmem:[#allocation13 + $0x3a8] sm:$0xff]
    %v4077 = vld [vmem:[#allocation13 + $0x3b0] sm:$0xff]
    %v4078 = vld [vmem:[#allocation13 + $0x3b8] sm:$0xff]
    %v4079 = vld [vmem:[#allocation13 + $0x3c0] sm:$0xff]
    %v4080 = vld [vmem:[#allocation13 + $0x3c8] sm:$0xff]
    %v4081 = vld [vmem:[#allocation13 + $0x3d0] sm:$0xff]
    %v4082 = vld [vmem:[#allocation13 + $0x3d8] sm:$0xff]
    %v4083 = vld [vmem:[#allocation13 + $0x3e0] sm:$0xff]
    %v4084 = vld [vmem:[#allocation13 + $0x3e8] sm:$0xff]
    %v4085 = vld [vmem:[#allocation13 + $0x3f0] sm:$0xff]
    %v4086 = vld [vmem:[#allocation13 + $0x3f8] sm:$0xff]
    %s4087 = scalar_lea.vmem %s2, 33
    %v4088 = vld [vmem:[%s4087] ss:$8 sm:$0xf]
    %v4090 = vlaneseq
    %v4091 = vshrl.u32 %v4090, 7
    %v4092 = vsub.s32 0, %v4091
    %v4093 = vrot.slane %v4088, %v4092
    %v4094 = vlaneseq
    %v4095 = vshrl.u32 %v4094, 7
    %v4096 = vsub.s32 1, %v4095
    %v4097 = vrot.slane %v4088, %v4096
    %v4098 = vlaneseq
    %v4099 = vshrl.u32 %v4098, 7
    %v4100 = vsub.s32 2, %v4099
    %v4101 = vrot.slane %v4088, %v4100
    %v4102 = vlaneseq
    %v4103 = vshrl.u32 %v4102, 7
    %v4104 = vsub.s32 3, %v4103
    %v4105 = vrot.slane %v4088, %v4104
    %v4238 = vunpack.c.l.b16 %v3959
    %v4239 = vunpack.c.h.b16 %v3959
    %v4240 = vunpack.c.l.b16 %v3960
    %v4241 = vunpack.c.h.b16 %v3960
    %v4242 = vunpack.c.l.b16 %v3961
    %v4243 = vunpack.c.h.b16 %v3961
    %v4244 = vunpack.c.l.b16 %v3962
    %v4245 = vunpack.c.h.b16 %v3962
    %v4246 = vunpack.c.l.b16 %v3963
    %v4247 = vunpack.c.h.b16 %v3963
    %v4248 = vunpack.c.l.b16 %v3964
    %v4249 = vunpack.c.h.b16 %v3964
    %v4250 = vunpack.c.l.b16 %v3965
    %v4251 = vunpack.c.h.b16 %v3965
    %v4252 = vunpack.c.l.b16 %v3966
    %v4253 = vunpack.c.h.b16 %v3966
    %v4254 = vunpack.c.l.b16 %v3967
    %v4255 = vunpack.c.h.b16 %v3967
    %v4256 = vunpack.c.l.b16 %v3968
    %v4257 = vunpack.c.h.b16 %v3968
    %v4258 = vunpack.c.l.b16 %v3969
    %v4259 = vunpack.c.h.b16 %v3969
    %v4260 = vunpack.c.l.b16 %v3970
    %v4261 = vunpack.c.h.b16 %v3970
    %v4262 = vunpack.c.l.b16 %v3971
    %v4263 = vunpack.c.h.b16 %v3971
    %v4264 = vunpack.c.l.b16 %v3972
    %v4265 = vunpack.c.h.b16 %v3972
    %v4266 = vunpack.c.l.b16 %v3973
    %v4267 = vunpack.c.h.b16 %v3973
    %v4268 = vunpack.c.l.b16 %v3974
    %v4269 = vunpack.c.h.b16 %v3974
    %v4270 = vunpack.c.l.b16 %v3975
    %v4271 = vunpack.c.h.b16 %v3975
    %v4272 = vunpack.c.l.b16 %v3976
    %v4273 = vunpack.c.h.b16 %v3976
    %v4274 = vunpack.c.l.b16 %v3977
    %v4275 = vunpack.c.h.b16 %v3977
    %v4276 = vunpack.c.l.b16 %v3978
    %v4277 = vunpack.c.h.b16 %v3978
    %v4278 = vunpack.c.l.b16 %v3979
    %v4279 = vunpack.c.h.b16 %v3979
    %v4280 = vunpack.c.l.b16 %v3980
    %v4281 = vunpack.c.h.b16 %v3980
    %v4282 = vunpack.c.l.b16 %v3981
    %v4283 = vunpack.c.h.b16 %v3981
    %v4284 = vunpack.c.l.b16 %v3982
    %v4285 = vunpack.c.h.b16 %v3982
    %v4286 = vunpack.c.l.b16 %v3983
    %v4287 = vunpack.c.h.b16 %v3983
    %v4288 = vunpack.c.l.b16 %v3984
    %v4289 = vunpack.c.h.b16 %v3984
    %v4290 = vunpack.c.l.b16 %v3985
    %v4291 = vunpack.c.h.b16 %v3985
    %v4292 = vunpack.c.l.b16 %v3986
    %v4293 = vunpack.c.h.b16 %v3986
    %v4294 = vunpack.c.l.b16 %v3987
    %v4295 = vunpack.c.h.b16 %v3987
    %v4296 = vunpack.c.l.b16 %v3988
    %v4297 = vunpack.c.h.b16 %v3988
    %v4298 = vunpack.c.l.b16 %v3989
    %v4299 = vunpack.c.h.b16 %v3989
    %v4300 = vunpack.c.l.b16 %v3990
    %v4301 = vunpack.c.h.b16 %v3990
    %v4302 = vunpack.c.l.b16 %v3991
    %v4303 = vunpack.c.h.b16 %v3991
    %v4304 = vunpack.c.l.b16 %v3992
    %v4305 = vunpack.c.h.b16 %v3992
    %v4306 = vunpack.c.l.b16 %v3993
    %v4307 = vunpack.c.h.b16 %v3993
    %v4308 = vunpack.c.l.b16 %v3994
    %v4309 = vunpack.c.h.b16 %v3994
    %v4310 = vunpack.c.l.b16 %v3995
    %v4311 = vunpack.c.h.b16 %v3995
    %v4312 = vunpack.c.l.b16 %v3996
    %v4313 = vunpack.c.h.b16 %v3996
    %v4314 = vunpack.c.l.b16 %v3997
    %v4315 = vunpack.c.h.b16 %v3997
    %v4316 = vunpack.c.l.b16 %v3998
    %v4317 = vunpack.c.h.b16 %v3998
    %v4318 = vunpack.c.l.b16 %v3999
    %v4319 = vunpack.c.h.b16 %v3999
    %v4320 = vunpack.c.l.b16 %v4000
    %v4321 = vunpack.c.h.b16 %v4000
    %v4322 = vunpack.c.l.b16 %v4001
    %v4323 = vunpack.c.h.b16 %v4001
    %v4324 = vunpack.c.l.b16 %v4002
    %v4325 = vunpack.c.h.b16 %v4002
    %v4326 = vunpack.c.l.b16 %v4003
    %v4327 = vunpack.c.h.b16 %v4003
    %v4328 = vunpack.c.l.b16 %v4004
    %v4329 = vunpack.c.h.b16 %v4004
    %v4330 = vunpack.c.l.b16 %v4005
    %v4331 = vunpack.c.h.b16 %v4005
    %v4332 = vunpack.c.l.b16 %v4006
    %v4333 = vunpack.c.h.b16 %v4006
    %v4334 = vunpack.c.l.b16 %v4007
    %v4335 = vunpack.c.h.b16 %v4007
    %v4336 = vunpack.c.l.b16 %v4008
    %v4337 = vunpack.c.h.b16 %v4008
    %v4338 = vunpack.c.l.b16 %v4009
    %v4339 = vunpack.c.h.b16 %v4009
    %v4340 = vunpack.c.l.b16 %v4010
    %v4341 = vunpack.c.h.b16 %v4010
    %v4342 = vunpack.c.l.b16 %v4011
    %v4343 = vunpack.c.h.b16 %v4011
    %v4344 = vunpack.c.l.b16 %v4012
    %v4345 = vunpack.c.h.b16 %v4012
    %v4346 = vunpack.c.l.b16 %v4013
    %v4347 = vunpack.c.h.b16 %v4013
    %v4348 = vunpack.c.l.b16 %v4014
    %v4349 = vunpack.c.h.b16 %v4014
    %v4350 = vunpack.c.l.b16 %v4015
    %v4351 = vunpack.c.h.b16 %v4015
    %v4352 = vunpack.c.l.b16 %v4016
    %v4353 = vunpack.c.h.b16 %v4016
    %v4354 = vunpack.c.l.b16 %v4017
    %v4355 = vunpack.c.h.b16 %v4017
    %v4356 = vunpack.c.l.b16 %v4018
    %v4357 = vunpack.c.h.b16 %v4018
    %v4358 = vunpack.c.l.b16 %v4019
    %v4359 = vunpack.c.h.b16 %v4019
    %v4360 = vunpack.c.l.b16 %v4020
    %v4361 = vunpack.c.h.b16 %v4020
    %v4362 = vunpack.c.l.b16 %v4021
    %v4363 = vunpack.c.h.b16 %v4021
    %v4364 = vunpack.c.l.b16 %v4022
    %v4365 = vunpack.c.h.b16 %v4022
    %v4366 = vunpack.c.l.b16 %v4023
    %v4367 = vunpack.c.h.b16 %v4023
    %v4368 = vunpack.c.l.b16 %v4024
    %v4369 = vunpack.c.h.b16 %v4024
    %v4370 = vunpack.c.l.b16 %v4025
    %v4371 = vunpack.c.h.b16 %v4025
    %v4372 = vunpack.c.l.b16 %v4026
    %v4373 = vunpack.c.h.b16 %v4026
    %v4374 = vunpack.c.l.b16 %v4027
    %v4375 = vunpack.c.h.b16 %v4027
    %v4376 = vunpack.c.l.b16 %v4028
    %v4377 = vunpack.c.h.b16 %v4028
    %v4378 = vunpack.c.l.b16 %v4029
    %v4379 = vunpack.c.h.b16 %v4029
    %v4380 = vunpack.c.l.b16 %v4030
    %v4381 = vunpack.c.h.b16 %v4030
    %v4382 = vunpack.c.l.b16 %v4031
    %v4383 = vunpack.c.h.b16 %v4031
    %v4384 = vunpack.c.l.b16 %v4032
    %v4385 = vunpack.c.h.b16 %v4032
    %v4386 = vunpack.c.l.b16 %v4033
    %v4387 = vunpack.c.h.b16 %v4033
    %v4388 = vunpack.c.l.b16 %v4034
    %v4389 = vunpack.c.h.b16 %v4034
    %v4390 = vunpack.c.l.b16 %v4035
    %v4391 = vunpack.c.h.b16 %v4035
    %v4392 = vunpack.c.l.b16 %v4036
    %v4393 = vunpack.c.h.b16 %v4036
    %v4394 = vunpack.c.l.b16 %v4037
    %v4395 = vunpack.c.h.b16 %v4037
    %v4396 = vunpack.c.l.b16 %v4038
    %v4397 = vunpack.c.h.b16 %v4038
    %v4398 = vunpack.c.l.b16 %v4039
    %v4399 = vunpack.c.h.b16 %v4039
    %v4400 = vunpack.c.l.b16 %v4040
    %v4401 = vunpack.c.h.b16 %v4040
    %v4402 = vunpack.c.l.b16 %v4041
    %v4403 = vunpack.c.h.b16 %v4041
    %v4404 = vunpack.c.l.b16 %v4042
    %v4405 = vunpack.c.h.b16 %v4042
    %v4406 = vunpack.c.l.b16 %v4043
    %v4407 = vunpack.c.h.b16 %v4043
    %v4408 = vunpack.c.l.b16 %v4044
    %v4409 = vunpack.c.h.b16 %v4044
    %v4410 = vunpack.c.l.b16 %v4045
    %v4411 = vunpack.c.h.b16 %v4045
    %v4412 = vunpack.c.l.b16 %v4046
    %v4413 = vunpack.c.h.b16 %v4046
    %v4414 = vunpack.c.l.b16 %v4047
    %v4415 = vunpack.c.h.b16 %v4047
    %v4416 = vunpack.c.l.b16 %v4048
    %v4417 = vunpack.c.h.b16 %v4048
    %v4418 = vunpack.c.l.b16 %v4049
    %v4419 = vunpack.c.h.b16 %v4049
    %v4420 = vunpack.c.l.b16 %v4050
    %v4421 = vunpack.c.h.b16 %v4050
    %v4422 = vunpack.c.l.b16 %v4051
    %v4423 = vunpack.c.h.b16 %v4051
    %v4424 = vunpack.c.l.b16 %v4052
    %v4425 = vunpack.c.h.b16 %v4052
    %v4426 = vunpack.c.l.b16 %v4053
    %v4427 = vunpack.c.h.b16 %v4053
    %v4428 = vunpack.c.l.b16 %v4054
    %v4429 = vunpack.c.h.b16 %v4054
    %v4430 = vunpack.c.l.b16 %v4055
    %v4431 = vunpack.c.h.b16 %v4055
    %v4432 = vunpack.c.l.b16 %v4056
    %v4433 = vunpack.c.h.b16 %v4056
    %v4434 = vunpack.c.l.b16 %v4057
    %v4435 = vunpack.c.h.b16 %v4057
    %v4436 = vunpack.c.l.b16 %v4058
    %v4437 = vunpack.c.h.b16 %v4058
    %v4438 = vunpack.c.l.b16 %v4059
    %v4439 = vunpack.c.h.b16 %v4059
    %v4440 = vunpack.c.l.b16 %v4060
    %v4441 = vunpack.c.h.b16 %v4060
    %v4442 = vunpack.c.l.b16 %v4061
    %v4443 = vunpack.c.h.b16 %v4061
    %v4444 = vunpack.c.l.b16 %v4062
    %v4445 = vunpack.c.h.b16 %v4062
    %v4446 = vunpack.c.l.b16 %v4063
    %v4447 = vunpack.c.h.b16 %v4063
    %v4448 = vunpack.c.l.b16 %v4064
    %v4449 = vunpack.c.h.b16 %v4064
    %v4450 = vunpack.c.l.b16 %v4065
    %v4451 = vunpack.c.h.b16 %v4065
    %v4452 = vunpack.c.l.b16 %v4066
    %v4453 = vunpack.c.h.b16 %v4066
    %v4454 = vunpack.c.l.b16 %v4067
    %v4455 = vunpack.c.h.b16 %v4067
    %v4456 = vunpack.c.l.b16 %v4068
    %v4457 = vunpack.c.h.b16 %v4068
    %v4458 = vunpack.c.l.b16 %v4069
    %v4459 = vunpack.c.h.b16 %v4069
    %v4460 = vunpack.c.l.b16 %v4070
    %v4461 = vunpack.c.h.b16 %v4070
    %v4462 = vunpack.c.l.b16 %v4071
    %v4463 = vunpack.c.h.b16 %v4071
    %v4464 = vunpack.c.l.b16 %v4072
    %v4465 = vunpack.c.h.b16 %v4072
    %v4466 = vunpack.c.l.b16 %v4073
    %v4467 = vunpack.c.h.b16 %v4073
    %v4468 = vunpack.c.l.b16 %v4074
    %v4469 = vunpack.c.h.b16 %v4074
    %v4470 = vunpack.c.l.b16 %v4075
    %v4471 = vunpack.c.h.b16 %v4075
    %v4472 = vunpack.c.l.b16 %v4076
    %v4473 = vunpack.c.h.b16 %v4076
    %v4474 = vunpack.c.l.b16 %v4077
    %v4475 = vunpack.c.h.b16 %v4077
    %v4476 = vunpack.c.l.b16 %v4078
    %v4477 = vunpack.c.h.b16 %v4078
    %v4478 = vunpack.c.l.b16 %v4079
    %v4479 = vunpack.c.h.b16 %v4079
    %v4480 = vunpack.c.l.b16 %v4080
    %v4481 = vunpack.c.h.b16 %v4080
    %v4482 = vunpack.c.l.b16 %v4081
    %v4483 = vunpack.c.h.b16 %v4081
    %v4484 = vunpack.c.l.b16 %v4082
    %v4485 = vunpack.c.h.b16 %v4082
    %v4486 = vunpack.c.l.b16 %v4083
    %v4487 = vunpack.c.h.b16 %v4083
    %v4488 = vunpack.c.l.b16 %v4084
    %v4489 = vunpack.c.h.b16 %v4084
    %v4490 = vunpack.c.l.b16 %v4085
    %v4491 = vunpack.c.h.b16 %v4085
    %v4492 = vunpack.c.l.b16 %v4086
    %v4493 = vunpack.c.h.b16 %v4086
    %v4494 = vpack.c.b16 %v4242, %v4238
    %v4495 = vpack.c.b16 %v4243, %v4239
    %v4496 = vpack.c.b16 %v4244, %v4240
    %v4497 = vpack.c.b16 %v4245, %v4241
    %v4498 = vpack.c.b16 %v4250, %v4246
    %v4499 = vpack.c.b16 %v4251, %v4247
    %v4500 = vpack.c.b16 %v4252, %v4248
    %v4501 = vpack.c.b16 %v4253, %v4249
    %v4502 = vpack.c.b16 %v4258, %v4254
    %v4503 = vpack.c.b16 %v4259, %v4255
    %v4504 = vpack.c.b16 %v4260, %v4256
    %v4505 = vpack.c.b16 %v4261, %v4257
    %v4506 = vpack.c.b16 %v4266, %v4262
    %v4507 = vpack.c.b16 %v4267, %v4263
    %v4508 = vpack.c.b16 %v4268, %v4264
    %v4509 = vpack.c.b16 %v4269, %v4265
    %v4510 = vpack.c.b16 %v4274, %v4270
    %v4511 = vpack.c.b16 %v4275, %v4271
    %v4512 = vpack.c.b16 %v4276, %v4272
    %v4513 = vpack.c.b16 %v4277, %v4273
    %v4514 = vpack.c.b16 %v4282, %v4278
    %v4515 = vpack.c.b16 %v4283, %v4279
    %v4516 = vpack.c.b16 %v4284, %v4280
    %v4517 = vpack.c.b16 %v4285, %v4281
    %v4518 = vpack.c.b16 %v4290, %v4286
    %v4519 = vpack.c.b16 %v4291, %v4287
    %v4520 = vpack.c.b16 %v4292, %v4288
    %v4521 = vpack.c.b16 %v4293, %v4289
    %v4522 = vpack.c.b16 %v4298, %v4294
    %v4523 = vpack.c.b16 %v4299, %v4295
    %v4524 = vpack.c.b16 %v4300, %v4296
    %v4525 = vpack.c.b16 %v4301, %v4297
    %v4526 = vpack.c.b16 %v4306, %v4302
    %v4527 = vpack.c.b16 %v4307, %v4303
    %v4528 = vpack.c.b16 %v4308, %v4304
    %v4529 = vpack.c.b16 %v4309, %v4305
    %v4530 = vpack.c.b16 %v4314, %v4310
    %v4531 = vpack.c.b16 %v4315, %v4311
    %v4532 = vpack.c.b16 %v4316, %v4312
    %v4533 = vpack.c.b16 %v4317, %v4313
    %v4534 = vpack.c.b16 %v4322, %v4318
    %v4535 = vpack.c.b16 %v4323, %v4319
    %v4536 = vpack.c.b16 %v4324, %v4320
    %v4537 = vpack.c.b16 %v4325, %v4321
    %v4538 = vpack.c.b16 %v4330, %v4326
    %v4539 = vpack.c.b16 %v4331, %v4327
    %v4540 = vpack.c.b16 %v4332, %v4328
    %v4541 = vpack.c.b16 %v4333, %v4329
    %v4542 = vpack.c.b16 %v4338, %v4334
    %v4543 = vpack.c.b16 %v4339, %v4335
    %v4544 = vpack.c.b16 %v4340, %v4336
    %v4545 = vpack.c.b16 %v4341, %v4337
    %v4546 = vpack.c.b16 %v4346, %v4342
    %v4547 = vpack.c.b16 %v4347, %v4343
    %v4548 = vpack.c.b16 %v4348, %v4344
    %v4549 = vpack.c.b16 %v4349, %v4345
    %v4550 = vpack.c.b16 %v4354, %v4350
    %v4551 = vpack.c.b16 %v4355, %v4351
    %v4552 = vpack.c.b16 %v4356, %v4352
    %v4553 = vpack.c.b16 %v4357, %v4353
    %v4554 = vpack.c.b16 %v4362, %v4358
    %v4555 = vpack.c.b16 %v4363, %v4359
    %v4556 = vpack.c.b16 %v4364, %v4360
    %v4557 = vpack.c.b16 %v4365, %v4361
    %v4558 = vpack.c.b16 %v4370, %v4366
    %v4559 = vpack.c.b16 %v4371, %v4367
    %v4560 = vpack.c.b16 %v4372, %v4368
    %v4561 = vpack.c.b16 %v4373, %v4369
    %v4562 = vpack.c.b16 %v4378, %v4374
    %v4563 = vpack.c.b16 %v4379, %v4375
    %v4564 = vpack.c.b16 %v4380, %v4376
    %v4565 = vpack.c.b16 %v4381, %v4377
    %v4566 = vpack.c.b16 %v4386, %v4382
    %v4567 = vpack.c.b16 %v4387, %v4383
    %v4568 = vpack.c.b16 %v4388, %v4384
    %v4569 = vpack.c.b16 %v4389, %v4385
    %v4570 = vpack.c.b16 %v4394, %v4390
    %v4571 = vpack.c.b16 %v4395, %v4391
    %v4572 = vpack.c.b16 %v4396, %v4392
    %v4573 = vpack.c.b16 %v4397, %v4393
    %v4574 = vpack.c.b16 %v4402, %v4398
    %v4575 = vpack.c.b16 %v4403, %v4399
    %v4576 = vpack.c.b16 %v4404, %v4400
    %v4577 = vpack.c.b16 %v4405, %v4401
    %v4578 = vpack.c.b16 %v4410, %v4406
    %v4579 = vpack.c.b16 %v4411, %v4407
    %v4580 = vpack.c.b16 %v4412, %v4408
    %v4581 = vpack.c.b16 %v4413, %v4409
    %v4582 = vpack.c.b16 %v4418, %v4414
    %v4583 = vpack.c.b16 %v4419, %v4415
    %v4584 = vpack.c.b16 %v4420, %v4416
    %v4585 = vpack.c.b16 %v4421, %v4417
    %v4586 = vpack.c.b16 %v4426, %v4422
    %v4587 = vpack.c.b16 %v4427, %v4423
    %v4588 = vpack.c.b16 %v4428, %v4424
    %v4589 = vpack.c.b16 %v4429, %v4425
    %v4590 = vpack.c.b16 %v4434, %v4430
    %v4591 = vpack.c.b16 %v4435, %v4431
    %v4592 = vpack.c.b16 %v4436, %v4432
    %v4593 = vpack.c.b16 %v4437, %v4433
    %v4594 = vpack.c.b16 %v4442, %v4438
    %v4595 = vpack.c.b16 %v4443, %v4439
    %v4596 = vpack.c.b16 %v4444, %v4440
    %v4597 = vpack.c.b16 %v4445, %v4441
    %v4598 = vpack.c.b16 %v4450, %v4446
    %v4599 = vpack.c.b16 %v4451, %v4447
    %v4600 = vpack.c.b16 %v4452, %v4448
    %v4601 = vpack.c.b16 %v4453, %v4449
    %v4602 = vpack.c.b16 %v4458, %v4454
    %v4603 = vpack.c.b16 %v4459, %v4455
    %v4604 = vpack.c.b16 %v4460, %v4456
    %v4605 = vpack.c.b16 %v4461, %v4457
    %v4606 = vpack.c.b16 %v4466, %v4462
    %v4607 = vpack.c.b16 %v4467, %v4463
    %v4608 = vpack.c.b16 %v4468, %v4464
    %v4609 = vpack.c.b16 %v4469, %v4465
    %v4610 = vpack.c.b16 %v4474, %v4470
    %v4611 = vpack.c.b16 %v4475, %v4471
    %v4612 = vpack.c.b16 %v4476, %v4472
    %v4613 = vpack.c.b16 %v4477, %v4473
    %v4614 = vpack.c.b16 %v4482, %v4478
    %v4615 = vpack.c.b16 %v4483, %v4479
    %v4616 = vpack.c.b16 %v4484, %v4480
    %v4617 = vpack.c.b16 %v4485, %v4481
    %v4618 = vpack.c.b16 %v4490, %v4486
    %v4619 = vpack.c.b16 %v4491, %v4487
    %v4620 = vpack.c.b16 %v4492, %v4488
    %v4621 = vpack.c.b16 %v4493, %v4489
    %4750 = vmatprep.subr.bf16.mxu0 %v4523
    %4751 = vmatpush1.bf16.msra.mxu0 %v4522
    %4752 = vmatprep.subr.bf16.mxu0 %v4519
    %4753 = vmatpush1.bf16.msra.mxu0 %v4518
    %4754 = vmatprep.subr.bf16.mxu0 %v4515
    %4755 = vmatpush1.bf16.msra.mxu0 %v4514
    %4756 = vmatprep.subr.bf16.mxu0 %v4511
    %4757 = vmatpush1.bf16.msra.mxu0 %v4510
    %4758 = vmatprep.subr.bf16.mxu0 %v4507
    %4759 = vmatpush1.bf16.msra.mxu0 %v4506
    %4760 = vmatprep.subr.bf16.mxu0 %v4503
    %4761 = vmatpush1.bf16.msra.mxu0 %v4502
    %4762 = vmatprep.subr.bf16.mxu0 %v4499
    %4763 = vmatpush1.bf16.msra.mxu0 %v4498
    %4764 = vmatprep.subr.bf16.mxu0 %v4495
    %4765 = vmatpush1.bf16.msra.mxu0 %v4494
    %4766 = vmatprep.subr.bf16.mxu0 %v4555
    %4767 = vmatpush2.bf16.msra.mxu0 %v4554
    %4768 = vmatprep.subr.bf16.mxu0 %v4551
    %4769 = vmatpush2.bf16.msra.mxu0 %v4550
    %4770 = vmatprep.subr.bf16.mxu0 %v4547
    %4771 = vmatpush2.bf16.msra.mxu0 %v4546
    %4772 = vmatprep.subr.bf16.mxu0 %v4543
    %4773 = vmatpush2.bf16.msra.mxu0 %v4542
    %4774 = vmatprep.subr.bf16.mxu0 %v4539
    %4775 = vmatpush2.bf16.msra.mxu0 %v4538
    %4776 = vmatprep.subr.bf16.mxu0 %v4535
    %4777 = vmatpush2.bf16.msra.mxu0 %v4534
    %4778 = vmatprep.subr.bf16.mxu0 %v4531
    %4779 = vmatpush2.bf16.msra.mxu0 %v4530
    %4780 = vmatprep.subr.bf16.mxu0 %v4527
    %4781 = vmatpush2.bf16.msra.mxu0 %v4526
    %4782 = vmatprep.mubr.bf16.mxu0 %v3956
    %4783 = vmatmul.mubr.bf16.gmra.mxu0 %v3955
    %v4784 = vpop.f32.mrf.mxu0
    %v4785 = vadd.f32 %v4093, %v4784
    %v4786 = vpop.f32.mrf.mxu0
    %v4787 = vadd.f32 %v4097, %v4786
    %v4788 = vpop.f32.mrf.mxu0
    %v4789 = vadd.f32 %v4093, %v4788
    %v4790 = vpop.f32.mrf.mxu0
    %v4791 = vadd.f32 %v4097, %v4790
    %4792 = vdwg.mxu0
    %4793 = vmatprep.subr.bf16.mxu0 %v4587
    %4794 = vmatpush1.bf16.msra.mxu0 %v4586
    %4795 = vmatprep.subr.bf16.mxu0 %v4583
    %4796 = vmatpush1.bf16.msra.mxu0 %v4582
    %4797 = vmatprep.subr.bf16.mxu0 %v4579
    %4798 = vmatpush1.bf16.msra.mxu0 %v4578
    %4799 = vmatprep.subr.bf16.mxu0 %v4575
    %4800 = vmatpush1.bf16.msra.mxu0 %v4574
    %4801 = vmatprep.subr.bf16.mxu0 %v4571
    %4802 = vmatpush1.bf16.msra.mxu0 %v4570
    %4803 = vmatprep.subr.bf16.mxu0 %v4567
    %4804 = vmatpush1.bf16.msra.mxu0 %v4566
    %4805 = vmatprep.subr.bf16.mxu0 %v4563
    %4806 = vmatpush1.bf16.msra.mxu0 %v4562
    %4807 = vmatprep.subr.bf16.mxu0 %v4559
    %4808 = vmatpush1.bf16.msra.mxu0 %v4558
    %4809 = vmatprep.subr.bf16.mxu0 %v4619
    %4810 = vmatpush2.bf16.msra.mxu0 %v4618
    %4811 = vmatprep.subr.bf16.mxu0 %v4615
    %4812 = vmatpush2.bf16.msra.mxu0 %v4614
    %4813 = vmatprep.subr.bf16.mxu0 %v4611
    %4814 = vmatpush2.bf16.msra.mxu0 %v4610
    %4815 = vmatprep.subr.bf16.mxu0 %v4607
    %4816 = vmatpush2.bf16.msra.mxu0 %v4606
    %4817 = vmatprep.subr.bf16.mxu0 %v4603
    %4818 = vmatpush2.bf16.msra.mxu0 %v4602
    %4819 = vmatprep.subr.bf16.mxu0 %v4599
    %4820 = vmatpush2.bf16.msra.mxu0 %v4598
    %4821 = vmatprep.subr.bf16.mxu0 %v4595
    %4822 = vmatpush2.bf16.msra.mxu0 %v4594
    %4823 = vmatprep.subr.bf16.mxu0 %v4591
    %4824 = vmatpush2.bf16.msra.mxu0 %v4590
    %4825 = vmatprep.mubr.bf16.mxu0 %v3958
    %4826 = vmatmul.mubr.bf16.gmra.mxu0 %v3957
    %v4827 = vpop.f32.mrf.mxu0
    %v4828 = vadd.f32 %v4785, %v4827
    %v4829 = vpop.f32.mrf.mxu0
    %v4830 = vadd.f32 %v4787, %v4829
    %v4831 = vpop.f32.mrf.mxu0
    %v4832 = vadd.f32 %v4789, %v4831
    %v4833 = vpop.f32.mrf.mxu0
    %v4834 = vadd.f32 %v4791, %v4833
    %4835 = vdwg.mxu0
    %4836 = vmatprep.subr.bf16.mxu0 %v4525
    %4837 = vmatpush1.bf16.msra.mxu0 %v4524
    %4838 = vmatprep.subr.bf16.mxu0 %v4521
    %4839 = vmatpush1.bf16.msra.mxu0 %v4520
    %4840 = vmatprep.subr.bf16.mxu0 %v4517
    %4841 = vmatpush1.bf16.msra.mxu0 %v4516
    %4842 = vmatprep.subr.bf16.mxu0 %v4513
    %4843 = vmatpush1.bf16.msra.mxu0 %v4512
    %4844 = vmatprep.subr.bf16.mxu0 %v4509
    %4845 = vmatpush1.bf16.msra.mxu0 %v4508
    %4846 = vmatprep.subr.bf16.mxu0 %v4505
    %4847 = vmatpush1.bf16.msra.mxu0 %v4504
    %4848 = vmatprep.subr.bf16.mxu0 %v4501
    %4849 = vmatpush1.bf16.msra.mxu0 %v4500
    %4850 = vmatprep.subr.bf16.mxu0 %v4497
    %4851 = vmatpush1.bf16.msra.mxu0 %v4496
    %4852 = vmatprep.subr.bf16.mxu0 %v4557
    %4853 = vmatpush2.bf16.msra.mxu0 %v4556
    %4854 = vmatprep.subr.bf16.mxu0 %v4553
    %4855 = vmatpush2.bf16.msra.mxu0 %v4552
    %4856 = vmatprep.subr.bf16.mxu0 %v4549
    %4857 = vmatpush2.bf16.msra.mxu0 %v4548
    %4858 = vmatprep.subr.bf16.mxu0 %v4545
    %4859 = vmatpush2.bf16.msra.mxu0 %v4544
    %4860 = vmatprep.subr.bf16.mxu0 %v4541
    %4861 = vmatpush2.bf16.msra.mxu0 %v4540
    %4862 = vmatprep.subr.bf16.mxu0 %v4537
    %4863 = vmatpush2.bf16.msra.mxu0 %v4536
    %4864 = vmatprep.subr.bf16.mxu0 %v4533
    %4865 = vmatpush2.bf16.msra.mxu0 %v4532
    %4866 = vmatprep.subr.bf16.mxu0 %v4529
    %4867 = vmatpush2.bf16.msra.mxu0 %v4528
    %4868 = vmatprep.mubr.bf16.mxu0 %v3956
    %4869 = vmatmul.mubr.bf16.gmra.mxu0 %v3955
    %v4870 = vpop.f32.mrf.mxu0
    %v4871 = vadd.f32 %v4101, %v4870
    %v4872 = vpop.f32.mrf.mxu0
    %v4873 = vadd.f32 %v4105, %v4872
    %v4874 = vpop.f32.mrf.mxu0
    %v4875 = vadd.f32 %v4101, %v4874
    %v4876 = vpop.f32.mrf.mxu0
    %v4877 = vadd.f32 %v4105, %v4876
    %4878 = vdwg.mxu0
    %4879 = vmatprep.subr.bf16.mxu0 %v4589
    %4880 = vmatpush1.bf16.msra.mxu0 %v4588
    %4881 = vmatprep.subr.bf16.mxu0 %v4585
    %4882 = vmatpush1.bf16.msra.mxu0 %v4584
    %4883 = vmatprep.subr.bf16.mxu0 %v4581
    %4884 = vmatpush1.bf16.msra.mxu0 %v4580
    %4885 = vmatprep.subr.bf16.mxu0 %v4577
    %4886 = vmatpush1.bf16.msra.mxu0 %v4576
    %4887 = vmatprep.subr.bf16.mxu0 %v4573
    %4888 = vmatpush1.bf16.msra.mxu0 %v4572
    %4889 = vmatprep.subr.bf16.mxu0 %v4569
    %4890 = vmatpush1.bf16.msra.mxu0 %v4568
    %4891 = vmatprep.subr.bf16.mxu0 %v4565
    %4892 = vmatpush1.bf16.msra.mxu0 %v4564
    %4893 = vmatprep.subr.bf16.mxu0 %v4561
    %4894 = vmatpush1.bf16.msra.mxu0 %v4560
    %4895 = vmatprep.subr.bf16.mxu0 %v4621
    %4896 = vmatpush2.bf16.msra.mxu0 %v4620
    %4897 = vmatprep.subr.bf16.mxu0 %v4617
    %4898 = vmatpush2.bf16.msra.mxu0 %v4616
    %4899 = vmatprep.subr.bf16.mxu0 %v4613
    %4900 = vmatpush2.bf16.msra.mxu0 %v4612
    %4901 = vmatprep.subr.bf16.mxu0 %v4609
    %4902 = vmatpush2.bf16.msra.mxu0 %v4608
    %4903 = vmatprep.subr.bf16.mxu0 %v4605
    %4904 = vmatpush2.bf16.msra.mxu0 %v4604
    %4905 = vmatprep.subr.bf16.mxu0 %v4601
    %4906 = vmatpush2.bf16.msra.mxu0 %v4600
    %4907 = vmatprep.subr.bf16.mxu0 %v4597
    %4908 = vmatpush2.bf16.msra.mxu0 %v4596
    %4909 = vmatprep.subr.bf16.mxu0 %v4593
    %4910 = vmatpush2.bf16.msra.mxu0 %v4592
    %4911 = vmatprep.mubr.bf16.mxu0 %v3958
    %4912 = vmatmul.mubr.bf16.gmra.mxu0 %v3957
    %v4913 = vpop.f32.mrf.mxu0
    %v4914 = vadd.f32 %v4871, %v4913
    %v4915 = vpop.f32.mrf.mxu0
    %v4916 = vadd.f32 %v4873, %v4915
    %v4917 = vpop.f32.mrf.mxu0
    %v4918 = vadd.f32 %v4875, %v4917
    %v4919 = vpop.f32.mrf.mxu0
    %v4920 = vadd.f32 %v4877, %v4919
    %4921 = vdwg.mxu0
    %v4922 = vadd.f32 %v4828, %v4830
    %v4923 = vadd.f32 %v4922, %v4914
    %v4924 = vadd.f32 %v4923, %v4916
    %4925 = vadd.xlane.f32.xlu0 %v4924
    %v4926 = vpop.xlane.xlu0 %4925
    %v4927 = vadd.f32 %v4832, %v4834
    %v4928 = vadd.f32 %v4927, %v4918
    %v4929 = vadd.f32 %v4928, %v4920
    %4930 = vadd.xlane.f32.xlu0 %v4929
    %v4931 = vpop.xlane.xlu0 %4930
    %v4932 = vmul.f32 %v4926, %v1738
    %v4933 = vmul.f32 %v4931, %v1738
    %v4934 = vmul.f32 %v4828, %v4828
    %v4935 = vmul.f32 %v4830, %v4830
    %v4936 = vmul.f32 %v4914, %v4914
    %v4937 = vmul.f32 %v4916, %v4916
    %v4938 = vmul.f32 %v4832, %v4832
    %v4939 = vmul.f32 %v4834, %v4834
    %v4940 = vmul.f32 %v4918, %v4918
    %v4941 = vmul.f32 %v4920, %v4920
    %v4942 = vadd.f32 %v4934, %v4935
    %v4943 = vadd.f32 %v4942, %v4936
    %v4944 = vadd.f32 %v4943, %v4937
    %4945 = vadd.xlane.f32.xlu0 %v4944
    %v4946 = vpop.xlane.xlu0 %4945
    %v4947 = vadd.f32 %v4938, %v4939
    %v4948 = vadd.f32 %v4947, %v4940
    %v4949 = vadd.f32 %v4948, %v4941
    %4950 = vadd.xlane.f32.xlu0 %v4949
    %v4951 = vpop.xlane.xlu0 %4950
    %v4952 = vmul.f32 %v4946, %v1738
    %v4953 = vmul.f32 %v4951, %v1738
    %v4954 = vmul.f32 %v4932, %v4932
    %v4955 = vmul.f32 %v4933, %v4933
    %v4956 = vsub.f32 %v4952, %v4954
    %v4957 = vsub.f32 %v4953, %v4955
    %v4958 = vadd.f32 %v4956, 1e-05
    %v4959 = vadd.f32 %v4957, 1e-05
    %v4960 = vrsqrt.pop %v4958
    %v4961 = vrsqrt.pop %v4959
    %v4962 = vsub.f32 %v4828, %v4932
    %v4963 = vsub.f32 %v4830, %v4932
    %v4964 = vsub.f32 %v4914, %v4932
    %v4965 = vsub.f32 %v4916, %v4932
    %v4966 = vsub.f32 %v4832, %v4933
    %v4967 = vsub.f32 %v4834, %v4933
    %v4968 = vsub.f32 %v4918, %v4933
    %v4969 = vsub.f32 %v4920, %v4933
    %v4970 = vmul.f32 %v4962, %v4960
    %v4971 = vmul.f32 %v4963, %v4960
    %v4972 = vmul.f32 %v4964, %v4960
    %v4973 = vmul.f32 %v4965, %v4960
    %v4974 = vmul.f32 %v4966, %v4961
    %v4975 = vmul.f32 %v4967, %v4961
    %v4976 = vmul.f32 %v4968, %v4961
    %v4977 = vmul.f32 %v4969, %v4961
    %s4978 = scalar_lea.vmem %s2, 34
    %v4979 = vld [vmem:[%s4978] ss:$8 sm:$0xf]
    %v4981 = vlaneseq
    %v4982 = vshrl.u32 %v4981, 7
    %v4983 = vsub.s32 0, %v4982
    %v4984 = vrot.slane %v4979, %v4983
    %v4985 = vlaneseq
    %v4986 = vshrl.u32 %v4985, 7
    %v4987 = vsub.s32 1, %v4986
    %v4988 = vrot.slane %v4979, %v4987
    %v4989 = vlaneseq
    %v4990 = vshrl.u32 %v4989, 7
    %v4991 = vsub.s32 2, %v4990
    %v4992 = vrot.slane %v4979, %v4991
    %v4993 = vlaneseq
    %v4994 = vshrl.u32 %v4993, 7
    %v4995 = vsub.s32 3, %v4994
    %v4996 = vrot.slane %v4979, %v4995
    %v5001 = vmul.f32 %v4970, %v4984
    %v5002 = vmul.f32 %v4971, %v4988
    %v5003 = vmul.f32 %v4972, %v4992
    %v5004 = vmul.f32 %v4973, %v4996
    %v5005 = vmul.f32 %v4974, %v4984
    %v5006 = vmul.f32 %v4975, %v4988
    %v5007 = vmul.f32 %v4976, %v4992
    %v5008 = vmul.f32 %v4977, %v4996
    %s5009 = scalar_lea.vmem %s2, 35
    %v5010 = vld [vmem:[%s5009] ss:$8 sm:$0xf]
    %v5012 = vlaneseq
    %v5013 = vshrl.u32 %v5012, 7
    %v5014 = vsub.s32 0, %v5013
    %v5015 = vrot.slane %v5010, %v5014
    %v5016 = vlaneseq
    %v5017 = vshrl.u32 %v5016, 7
    %v5018 = vsub.s32 1, %v5017
    %v5019 = vrot.slane %v5010, %v5018
    %v5020 = vlaneseq
    %v5021 = vshrl.u32 %v5020, 7
    %v5022 = vsub.s32 2, %v5021
    %v5023 = vrot.slane %v5010, %v5022
    %v5024 = vlaneseq
    %v5025 = vshrl.u32 %v5024, 7
    %v5026 = vsub.s32 3, %v5025
    %v5027 = vrot.slane %v5010, %v5026
    %v5032 = vadd.f32 %v5001, %v5015
    %v5033 = vadd.f32 %v5002, %v5019
    %v5034 = vadd.f32 %v5003, %v5023
    %v5035 = vadd.f32 %v5004, %v5027
    %v5036 = vadd.f32 %v5005, %v5015
    %v5037 = vadd.f32 %v5006, %v5019
    %v5038 = vadd.f32 %v5007, %v5023
    %v5039 = vadd.f32 %v5008, %v5027
    %v5040 = vmul.f32 %v5032, 0.5
    %v5041 = vmul.f32 %v5033, 0.5
    %v5042 = vmul.f32 %v5034, 0.5
    %v5043 = vmul.f32 %v5035, 0.5
    %v5044 = vmul.f32 %v5036, 0.5
    %v5045 = vmul.f32 %v5037, 0.5
    %v5046 = vmul.f32 %v5038, 0.5
    %v5047 = vmul.f32 %v5039, 0.5
    %v5048 = vtanh.pop %v5040
    %v5049 = vtanh.pop %v5041
    %v5050 = vtanh.pop %v5042
    %v5051 = vtanh.pop %v5043
    %v5052 = vtanh.pop %v5044
    %v5053 = vtanh.pop %v5045
    %v5054 = vtanh.pop %v5046
    %v5055 = vtanh.pop %v5047
    %v5056 = vmul.f32 %v5048, 0.5
    %v5057 = vmul.f32 %v5049, 0.5
    %v5058 = vmul.f32 %v5050, 0.5
    %v5059 = vmul.f32 %v5051, 0.5
    %v5060 = vmul.f32 %v5052, 0.5
    %v5061 = vmul.f32 %v5053, 0.5
    %v5062 = vmul.f32 %v5054, 0.5
    %v5063 = vmul.f32 %v5055, 0.5
    %v5064 = vadd.f32 %v5056, 0.5
    %v5065 = vadd.f32 %v5057, 0.5
    %v5066 = vadd.f32 %v5058, 0.5
    %v5067 = vadd.f32 %v5059, 0.5
    %v5068 = vadd.f32 %v5060, 0.5
    %v5069 = vadd.f32 %v5061, 0.5
    %v5070 = vadd.f32 %v5062, 0.5
    %v5071 = vadd.f32 %v5063, 0.5
    %v5072 = vmul.f32 %v5032, %v5064
    %v5073 = vmul.f32 %v5033, %v5065
    %v5074 = vmul.f32 %v5034, %v5066
    %v5075 = vmul.f32 %v5035, %v5067
    %v5076 = vmul.f32 %v5036, %v5068
    %v5077 = vmul.f32 %v5037, %v5069
    %v5078 = vmul.f32 %v5038, %v5070
    %v5079 = vmul.f32 %v5039, %v5071
    %v5080 = vpack.c.bf16 %v5076, %v5072
    %v5081 = vpack.c.bf16 %v5077, %v5073
    %v5082 = vpack.c.bf16 %v5078, %v5074
    %v5083 = vpack.c.bf16 %v5079, %v5075
    %v5084 = vld [vmem:[#allocation15] sm:$0xff]
    %v5085 = vld [vmem:[#allocation15 + $0x8] sm:$0xff]
    %v5086 = vld [vmem:[#allocation15 + $0x10] sm:$0xff]
    %v5087 = vld [vmem:[#allocation15 + $0x18] sm:$0xff]
    %v5088 = vld [vmem:[#allocation15 + $0x20] sm:$0xff]
    %v5089 = vld [vmem:[#allocation15 + $0x28] sm:$0xff]
    %v5090 = vld [vmem:[#allocation15 + $0x30] sm:$0xff]
    %v5091 = vld [vmem:[#allocation15 + $0x38] sm:$0xff]
    %v5092 = vld [vmem:[#allocation15 + $0x40] sm:$0xff]
    %v5093 = vld [vmem:[#allocation15 + $0x48] sm:$0xff]
    %v5094 = vld [vmem:[#allocation15 + $0x50] sm:$0xff]
    %v5095 = vld [vmem:[#allocation15 + $0x58] sm:$0xff]
    %v5096 = vld [vmem:[#allocation15 + $0x60] sm:$0xff]
    %v5097 = vld [vmem:[#allocation15 + $0x68] sm:$0xff]
    %v5098 = vld [vmem:[#allocation15 + $0x70] sm:$0xff]
    %v5099 = vld [vmem:[#allocation15 + $0x78] sm:$0xff]
    %v5100 = vld [vmem:[#allocation15 + $0x80] sm:$0xff]
    %v5101 = vld [vmem:[#allocation15 + $0x88] sm:$0xff]
    %v5102 = vld [vmem:[#allocation15 + $0x90] sm:$0xff]
    %v5103 = vld [vmem:[#allocation15 + $0x98] sm:$0xff]
    %v5104 = vld [vmem:[#allocation15 + $0xa0] sm:$0xff]
    %v5105 = vld [vmem:[#allocation15 + $0xa8] sm:$0xff]
    %v5106 = vld [vmem:[#allocation15 + $0xb0] sm:$0xff]
    %v5107 = vld [vmem:[#allocation15 + $0xb8] sm:$0xff]
    %v5108 = vld [vmem:[#allocation15 + $0xc0] sm:$0xff]
    %v5109 = vld [vmem:[#allocation15 + $0xc8] sm:$0xff]
    %v5110 = vld [vmem:[#allocation15 + $0xd0] sm:$0xff]
    %v5111 = vld [vmem:[#allocation15 + $0xd8] sm:$0xff]
    %v5112 = vld [vmem:[#allocation15 + $0xe0] sm:$0xff]
    %v5113 = vld [vmem:[#allocation15 + $0xe8] sm:$0xff]
    %v5114 = vld [vmem:[#allocation15 + $0xf0] sm:$0xff]
    %v5115 = vld [vmem:[#allocation15 + $0xf8] sm:$0xff]
    %v5116 = vld [vmem:[#allocation15 + $0x100] sm:$0xff]
    %v5117 = vld [vmem:[#allocation15 + $0x108] sm:$0xff]
    %v5118 = vld [vmem:[#allocation15 + $0x110] sm:$0xff]
    %v5119 = vld [vmem:[#allocation15 + $0x118] sm:$0xff]
    %v5120 = vld [vmem:[#allocation15 + $0x120] sm:$0xff]
    %v5121 = vld [vmem:[#allocation15 + $0x128] sm:$0xff]
    %v5122 = vld [vmem:[#allocation15 + $0x130] sm:$0xff]
    %v5123 = vld [vmem:[#allocation15 + $0x138] sm:$0xff]
    %v5124 = vld [vmem:[#allocation15 + $0x140] sm:$0xff]
    %v5125 = vld [vmem:[#allocation15 + $0x148] sm:$0xff]
    %v5126 = vld [vmem:[#allocation15 + $0x150] sm:$0xff]
    %v5127 = vld [vmem:[#allocation15 + $0x158] sm:$0xff]
    %v5128 = vld [vmem:[#allocation15 + $0x160] sm:$0xff]
    %v5129 = vld [vmem:[#allocation15 + $0x168] sm:$0xff]
    %v5130 = vld [vmem:[#allocation15 + $0x170] sm:$0xff]
    %v5131 = vld [vmem:[#allocation15 + $0x178] sm:$0xff]
    %v5132 = vld [vmem:[#allocation15 + $0x180] sm:$0xff]
    %v5133 = vld [vmem:[#allocation15 + $0x188] sm:$0xff]
    %v5134 = vld [vmem:[#allocation15 + $0x190] sm:$0xff]
    %v5135 = vld [vmem:[#allocation15 + $0x198] sm:$0xff]
    %v5136 = vld [vmem:[#allocation15 + $0x1a0] sm:$0xff]
    %v5137 = vld [vmem:[#allocation15 + $0x1a8] sm:$0xff]
    %v5138 = vld [vmem:[#allocation15 + $0x1b0] sm:$0xff]
    %v5139 = vld [vmem:[#allocation15 + $0x1b8] sm:$0xff]
    %v5140 = vld [vmem:[#allocation15 + $0x1c0] sm:$0xff]
    %v5141 = vld [vmem:[#allocation15 + $0x1c8] sm:$0xff]
    %v5142 = vld [vmem:[#allocation15 + $0x1d0] sm:$0xff]
    %v5143 = vld [vmem:[#allocation15 + $0x1d8] sm:$0xff]
    %v5144 = vld [vmem:[#allocation15 + $0x1e0] sm:$0xff]
    %v5145 = vld [vmem:[#allocation15 + $0x1e8] sm:$0xff]
    %v5146 = vld [vmem:[#allocation15 + $0x1f0] sm:$0xff]
    %v5147 = vld [vmem:[#allocation15 + $0x1f8] sm:$0xff]
    %v5148 = vld [vmem:[#allocation15 + $0x200] sm:$0xff]
    %v5149 = vld [vmem:[#allocation15 + $0x208] sm:$0xff]
    %v5150 = vld [vmem:[#allocation15 + $0x210] sm:$0xff]
    %v5151 = vld [vmem:[#allocation15 + $0x218] sm:$0xff]
    %v5152 = vld [vmem:[#allocation15 + $0x220] sm:$0xff]
    %v5153 = vld [vmem:[#allocation15 + $0x228] sm:$0xff]
    %v5154 = vld [vmem:[#allocation15 + $0x230] sm:$0xff]
    %v5155 = vld [vmem:[#allocation15 + $0x238] sm:$0xff]
    %v5156 = vld [vmem:[#allocation15 + $0x240] sm:$0xff]
    %v5157 = vld [vmem:[#allocation15 + $0x248] sm:$0xff]
    %v5158 = vld [vmem:[#allocation15 + $0x250] sm:$0xff]
    %v5159 = vld [vmem:[#allocation15 + $0x258] sm:$0xff]
    %v5160 = vld [vmem:[#allocation15 + $0x260] sm:$0xff]
    %v5161 = vld [vmem:[#allocation15 + $0x268] sm:$0xff]
    %v5162 = vld [vmem:[#allocation15 + $0x270] sm:$0xff]
    %v5163 = vld [vmem:[#allocation15 + $0x278] sm:$0xff]
    %v5164 = vld [vmem:[#allocation15 + $0x280] sm:$0xff]
    %v5165 = vld [vmem:[#allocation15 + $0x288] sm:$0xff]
    %v5166 = vld [vmem:[#allocation15 + $0x290] sm:$0xff]
    %v5167 = vld [vmem:[#allocation15 + $0x298] sm:$0xff]
    %v5168 = vld [vmem:[#allocation15 + $0x2a0] sm:$0xff]
    %v5169 = vld [vmem:[#allocation15 + $0x2a8] sm:$0xff]
    %v5170 = vld [vmem:[#allocation15 + $0x2b0] sm:$0xff]
    %v5171 = vld [vmem:[#allocation15 + $0x2b8] sm:$0xff]
    %v5172 = vld [vmem:[#allocation15 + $0x2c0] sm:$0xff]
    %v5173 = vld [vmem:[#allocation15 + $0x2c8] sm:$0xff]
    %v5174 = vld [vmem:[#allocation15 + $0x2d0] sm:$0xff]
    %v5175 = vld [vmem:[#allocation15 + $0x2d8] sm:$0xff]
    %v5176 = vld [vmem:[#allocation15 + $0x2e0] sm:$0xff]
    %v5177 = vld [vmem:[#allocation15 + $0x2e8] sm:$0xff]
    %v5178 = vld [vmem:[#allocation15 + $0x2f0] sm:$0xff]
    %v5179 = vld [vmem:[#allocation15 + $0x2f8] sm:$0xff]
    %v5180 = vld [vmem:[#allocation15 + $0x300] sm:$0xff]
    %v5181 = vld [vmem:[#allocation15 + $0x308] sm:$0xff]
    %v5182 = vld [vmem:[#allocation15 + $0x310] sm:$0xff]
    %v5183 = vld [vmem:[#allocation15 + $0x318] sm:$0xff]
    %v5184 = vld [vmem:[#allocation15 + $0x320] sm:$0xff]
    %v5185 = vld [vmem:[#allocation15 + $0x328] sm:$0xff]
    %v5186 = vld [vmem:[#allocation15 + $0x330] sm:$0xff]
    %v5187 = vld [vmem:[#allocation15 + $0x338] sm:$0xff]
    %v5188 = vld [vmem:[#allocation15 + $0x340] sm:$0xff]
    %v5189 = vld [vmem:[#allocation15 + $0x348] sm:$0xff]
    %v5190 = vld [vmem:[#allocation15 + $0x350] sm:$0xff]
    %v5191 = vld [vmem:[#allocation15 + $0x358] sm:$0xff]
    %v5192 = vld [vmem:[#allocation15 + $0x360] sm:$0xff]
    %v5193 = vld [vmem:[#allocation15 + $0x368] sm:$0xff]
    %v5194 = vld [vmem:[#allocation15 + $0x370] sm:$0xff]
    %v5195 = vld [vmem:[#allocation15 + $0x378] sm:$0xff]
    %v5196 = vld [vmem:[#allocation15 + $0x380] sm:$0xff]
    %v5197 = vld [vmem:[#allocation15 + $0x388] sm:$0xff]
    %v5198 = vld [vmem:[#allocation15 + $0x390] sm:$0xff]
    %v5199 = vld [vmem:[#allocation15 + $0x398] sm:$0xff]
    %v5200 = vld [vmem:[#allocation15 + $0x3a0] sm:$0xff]
    %v5201 = vld [vmem:[#allocation15 + $0x3a8] sm:$0xff]
    %v5202 = vld [vmem:[#allocation15 + $0x3b0] sm:$0xff]
    %v5203 = vld [vmem:[#allocation15 + $0x3b8] sm:$0xff]
    %v5204 = vld [vmem:[#allocation15 + $0x3c0] sm:$0xff]
    %v5205 = vld [vmem:[#allocation15 + $0x3c8] sm:$0xff]
    %v5206 = vld [vmem:[#allocation15 + $0x3d0] sm:$0xff]
    %v5207 = vld [vmem:[#allocation15 + $0x3d8] sm:$0xff]
    %v5208 = vld [vmem:[#allocation15 + $0x3e0] sm:$0xff]
    %v5209 = vld [vmem:[#allocation15 + $0x3e8] sm:$0xff]
    %v5210 = vld [vmem:[#allocation15 + $0x3f0] sm:$0xff]
    %v5211 = vld [vmem:[#allocation15 + $0x3f8] sm:$0xff]
    %v5340 = vunpack.c.l.b16 %v5084
    %v5341 = vunpack.c.h.b16 %v5084
    %v5342 = vunpack.c.l.b16 %v5085
    %v5343 = vunpack.c.h.b16 %v5085
    %v5344 = vunpack.c.l.b16 %v5086
    %v5345 = vunpack.c.h.b16 %v5086
    %v5346 = vunpack.c.l.b16 %v5087
    %v5347 = vunpack.c.h.b16 %v5087
    %v5348 = vunpack.c.l.b16 %v5088
    %v5349 = vunpack.c.h.b16 %v5088
    %v5350 = vunpack.c.l.b16 %v5089
    %v5351 = vunpack.c.h.b16 %v5089
    %v5352 = vunpack.c.l.b16 %v5090
    %v5353 = vunpack.c.h.b16 %v5090
    %v5354 = vunpack.c.l.b16 %v5091
    %v5355 = vunpack.c.h.b16 %v5091
    %v5356 = vunpack.c.l.b16 %v5092
    %v5357 = vunpack.c.h.b16 %v5092
    %v5358 = vunpack.c.l.b16 %v5093
    %v5359 = vunpack.c.h.b16 %v5093
    %v5360 = vunpack.c.l.b16 %v5094
    %v5361 = vunpack.c.h.b16 %v5094
    %v5362 = vunpack.c.l.b16 %v5095
    %v5363 = vunpack.c.h.b16 %v5095
    %v5364 = vunpack.c.l.b16 %v5096
    %v5365 = vunpack.c.h.b16 %v5096
    %v5366 = vunpack.c.l.b16 %v5097
    %v5367 = vunpack.c.h.b16 %v5097
    %v5368 = vunpack.c.l.b16 %v5098
    %v5369 = vunpack.c.h.b16 %v5098
    %v5370 = vunpack.c.l.b16 %v5099
    %v5371 = vunpack.c.h.b16 %v5099
    %v5372 = vunpack.c.l.b16 %v5100
    %v5373 = vunpack.c.h.b16 %v5100
    %v5374 = vunpack.c.l.b16 %v5101
    %v5375 = vunpack.c.h.b16 %v5101
    %v5376 = vunpack.c.l.b16 %v5102
    %v5377 = vunpack.c.h.b16 %v5102
    %v5378 = vunpack.c.l.b16 %v5103
    %v5379 = vunpack.c.h.b16 %v5103
    %v5380 = vunpack.c.l.b16 %v5104
    %v5381 = vunpack.c.h.b16 %v5104
    %v5382 = vunpack.c.l.b16 %v5105
    %v5383 = vunpack.c.h.b16 %v5105
    %v5384 = vunpack.c.l.b16 %v5106
    %v5385 = vunpack.c.h.b16 %v5106
    %v5386 = vunpack.c.l.b16 %v5107
    %v5387 = vunpack.c.h.b16 %v5107
    %v5388 = vunpack.c.l.b16 %v5108
    %v5389 = vunpack.c.h.b16 %v5108
    %v5390 = vunpack.c.l.b16 %v5109
    %v5391 = vunpack.c.h.b16 %v5109
    %v5392 = vunpack.c.l.b16 %v5110
    %v5393 = vunpack.c.h.b16 %v5110
    %v5394 = vunpack.c.l.b16 %v5111
    %v5395 = vunpack.c.h.b16 %v5111
    %v5396 = vunpack.c.l.b16 %v5112
    %v5397 = vunpack.c.h.b16 %v5112
    %v5398 = vunpack.c.l.b16 %v5113
    %v5399 = vunpack.c.h.b16 %v5113
    %v5400 = vunpack.c.l.b16 %v5114
    %v5401 = vunpack.c.h.b16 %v5114
    %v5402 = vunpack.c.l.b16 %v5115
    %v5403 = vunpack.c.h.b16 %v5115
    %v5404 = vunpack.c.l.b16 %v5116
    %v5405 = vunpack.c.h.b16 %v5116
    %v5406 = vunpack.c.l.b16 %v5117
    %v5407 = vunpack.c.h.b16 %v5117
    %v5408 = vunpack.c.l.b16 %v5118
    %v5409 = vunpack.c.h.b16 %v5118
    %v5410 = vunpack.c.l.b16 %v5119
    %v5411 = vunpack.c.h.b16 %v5119
    %v5412 = vunpack.c.l.b16 %v5120
    %v5413 = vunpack.c.h.b16 %v5120
    %v5414 = vunpack.c.l.b16 %v5121
    %v5415 = vunpack.c.h.b16 %v5121
    %v5416 = vunpack.c.l.b16 %v5122
    %v5417 = vunpack.c.h.b16 %v5122
    %v5418 = vunpack.c.l.b16 %v5123
    %v5419 = vunpack.c.h.b16 %v5123
    %v5420 = vunpack.c.l.b16 %v5124
    %v5421 = vunpack.c.h.b16 %v5124
    %v5422 = vunpack.c.l.b16 %v5125
    %v5423 = vunpack.c.h.b16 %v5125
    %v5424 = vunpack.c.l.b16 %v5126
    %v5425 = vunpack.c.h.b16 %v5126
    %v5426 = vunpack.c.l.b16 %v5127
    %v5427 = vunpack.c.h.b16 %v5127
    %v5428 = vunpack.c.l.b16 %v5128
    %v5429 = vunpack.c.h.b16 %v5128
    %v5430 = vunpack.c.l.b16 %v5129
    %v5431 = vunpack.c.h.b16 %v5129
    %v5432 = vunpack.c.l.b16 %v5130
    %v5433 = vunpack.c.h.b16 %v5130
    %v5434 = vunpack.c.l.b16 %v5131
    %v5435 = vunpack.c.h.b16 %v5131
    %v5436 = vunpack.c.l.b16 %v5132
    %v5437 = vunpack.c.h.b16 %v5132
    %v5438 = vunpack.c.l.b16 %v5133
    %v5439 = vunpack.c.h.b16 %v5133
    %v5440 = vunpack.c.l.b16 %v5134
    %v5441 = vunpack.c.h.b16 %v5134
    %v5442 = vunpack.c.l.b16 %v5135
    %v5443 = vunpack.c.h.b16 %v5135
    %v5444 = vunpack.c.l.b16 %v5136
    %v5445 = vunpack.c.h.b16 %v5136
    %v5446 = vunpack.c.l.b16 %v5137
    %v5447 = vunpack.c.h.b16 %v5137
    %v5448 = vunpack.c.l.b16 %v5138
    %v5449 = vunpack.c.h.b16 %v5138
    %v5450 = vunpack.c.l.b16 %v5139
    %v5451 = vunpack.c.h.b16 %v5139
    %v5452 = vunpack.c.l.b16 %v5140
    %v5453 = vunpack.c.h.b16 %v5140
    %v5454 = vunpack.c.l.b16 %v5141
    %v5455 = vunpack.c.h.b16 %v5141
    %v5456 = vunpack.c.l.b16 %v5142
    %v5457 = vunpack.c.h.b16 %v5142
    %v5458 = vunpack.c.l.b16 %v5143
    %v5459 = vunpack.c.h.b16 %v5143
    %v5460 = vunpack.c.l.b16 %v5144
    %v5461 = vunpack.c.h.b16 %v5144
    %v5462 = vunpack.c.l.b16 %v5145
    %v5463 = vunpack.c.h.b16 %v5145
    %v5464 = vunpack.c.l.b16 %v5146
    %v5465 = vunpack.c.h.b16 %v5146
    %v5466 = vunpack.c.l.b16 %v5147
    %v5467 = vunpack.c.h.b16 %v5147
    %v5468 = vunpack.c.l.b16 %v5148
    %v5469 = vunpack.c.h.b16 %v5148
    %v5470 = vunpack.c.l.b16 %v5149
    %v5471 = vunpack.c.h.b16 %v5149
    %v5472 = vunpack.c.l.b16 %v5150
    %v5473 = vunpack.c.h.b16 %v5150
    %v5474 = vunpack.c.l.b16 %v5151
    %v5475 = vunpack.c.h.b16 %v5151
    %v5476 = vunpack.c.l.b16 %v5152
    %v5477 = vunpack.c.h.b16 %v5152
    %v5478 = vunpack.c.l.b16 %v5153
    %v5479 = vunpack.c.h.b16 %v5153
    %v5480 = vunpack.c.l.b16 %v5154
    %v5481 = vunpack.c.h.b16 %v5154
    %v5482 = vunpack.c.l.b16 %v5155
    %v5483 = vunpack.c.h.b16 %v5155
    %v5484 = vunpack.c.l.b16 %v5156
    %v5485 = vunpack.c.h.b16 %v5156
    %v5486 = vunpack.c.l.b16 %v5157
    %v5487 = vunpack.c.h.b16 %v5157
    %v5488 = vunpack.c.l.b16 %v5158
    %v5489 = vunpack.c.h.b16 %v5158
    %v5490 = vunpack.c.l.b16 %v5159
    %v5491 = vunpack.c.h.b16 %v5159
    %v5492 = vunpack.c.l.b16 %v5160
    %v5493 = vunpack.c.h.b16 %v5160
    %v5494 = vunpack.c.l.b16 %v5161
    %v5495 = vunpack.c.h.b16 %v5161
    %v5496 = vunpack.c.l.b16 %v5162
    %v5497 = vunpack.c.h.b16 %v5162
    %v5498 = vunpack.c.l.b16 %v5163
    %v5499 = vunpack.c.h.b16 %v5163
    %v5500 = vunpack.c.l.b16 %v5164
    %v5501 = vunpack.c.h.b16 %v5164
    %v5502 = vunpack.c.l.b16 %v5165
    %v5503 = vunpack.c.h.b16 %v5165
    %v5504 = vunpack.c.l.b16 %v5166
    %v5505 = vunpack.c.h.b16 %v5166
    %v5506 = vunpack.c.l.b16 %v5167
    %v5507 = vunpack.c.h.b16 %v5167
    %v5508 = vunpack.c.l.b16 %v5168
    %v5509 = vunpack.c.h.b16 %v5168
    %v5510 = vunpack.c.l.b16 %v5169
    %v5511 = vunpack.c.h.b16 %v5169
    %v5512 = vunpack.c.l.b16 %v5170
    %v5513 = vunpack.c.h.b16 %v5170
    %v5514 = vunpack.c.l.b16 %v5171
    %v5515 = vunpack.c.h.b16 %v5171
    %v5516 = vunpack.c.l.b16 %v5172
    %v5517 = vunpack.c.h.b16 %v5172
    %v5518 = vunpack.c.l.b16 %v5173
    %v5519 = vunpack.c.h.b16 %v5173
    %v5520 = vunpack.c.l.b16 %v5174
    %v5521 = vunpack.c.h.b16 %v5174
    %v5522 = vunpack.c.l.b16 %v5175
    %v5523 = vunpack.c.h.b16 %v5175
    %v5524 = vunpack.c.l.b16 %v5176
    %v5525 = vunpack.c.h.b16 %v5176
    %v5526 = vunpack.c.l.b16 %v5177
    %v5527 = vunpack.c.h.b16 %v5177
    %v5528 = vunpack.c.l.b16 %v5178
    %v5529 = vunpack.c.h.b16 %v5178
    %v5530 = vunpack.c.l.b16 %v5179
    %v5531 = vunpack.c.h.b16 %v5179
    %v5532 = vunpack.c.l.b16 %v5180
    %v5533 = vunpack.c.h.b16 %v5180
    %v5534 = vunpack.c.l.b16 %v5181
    %v5535 = vunpack.c.h.b16 %v5181
    %v5536 = vunpack.c.l.b16 %v5182
    %v5537 = vunpack.c.h.b16 %v5182
    %v5538 = vunpack.c.l.b16 %v5183
    %v5539 = vunpack.c.h.b16 %v5183
    %v5540 = vunpack.c.l.b16 %v5184
    %v5541 = vunpack.c.h.b16 %v5184
    %v5542 = vunpack.c.l.b16 %v5185
    %v5543 = vunpack.c.h.b16 %v5185
    %v5544 = vunpack.c.l.b16 %v5186
    %v5545 = vunpack.c.h.b16 %v5186
    %v5546 = vunpack.c.l.b16 %v5187
    %v5547 = vunpack.c.h.b16 %v5187
    %v5548 = vunpack.c.l.b16 %v5188
    %v5549 = vunpack.c.h.b16 %v5188
    %v5550 = vunpack.c.l.b16 %v5189
    %v5551 = vunpack.c.h.b16 %v5189
    %v5552 = vunpack.c.l.b16 %v5190
    %v5553 = vunpack.c.h.b16 %v5190
    %v5554 = vunpack.c.l.b16 %v5191
    %v5555 = vunpack.c.h.b16 %v5191
    %v5556 = vunpack.c.l.b16 %v5192
    %v5557 = vunpack.c.h.b16 %v5192
    %v5558 = vunpack.c.l.b16 %v5193
    %v5559 = vunpack.c.h.b16 %v5193
    %v5560 = vunpack.c.l.b16 %v5194
    %v5561 = vunpack.c.h.b16 %v5194
    %v5562 = vunpack.c.l.b16 %v5195
    %v5563 = vunpack.c.h.b16 %v5195
    %v5564 = vunpack.c.l.b16 %v5196
    %v5565 = vunpack.c.h.b16 %v5196
    %v5566 = vunpack.c.l.b16 %v5197
    %v5567 = vunpack.c.h.b16 %v5197
    %v5568 = vunpack.c.l.b16 %v5198
    %v5569 = vunpack.c.h.b16 %v5198
    %v5570 = vunpack.c.l.b16 %v5199
    %v5571 = vunpack.c.h.b16 %v5199
    %v5572 = vunpack.c.l.b16 %v5200
    %v5573 = vunpack.c.h.b16 %v5200
    %v5574 = vunpack.c.l.b16 %v5201
    %v5575 = vunpack.c.h.b16 %v5201
    %v5576 = vunpack.c.l.b16 %v5202
    %v5577 = vunpack.c.h.b16 %v5202
    %v5578 = vunpack.c.l.b16 %v5203
    %v5579 = vunpack.c.h.b16 %v5203
    %v5580 = vunpack.c.l.b16 %v5204
    %v5581 = vunpack.c.h.b16 %v5204
    %v5582 = vunpack.c.l.b16 %v5205
    %v5583 = vunpack.c.h.b16 %v5205
    %v5584 = vunpack.c.l.b16 %v5206
    %v5585 = vunpack.c.h.b16 %v5206
    %v5586 = vunpack.c.l.b16 %v5207
    %v5587 = vunpack.c.h.b16 %v5207
    %v5588 = vunpack.c.l.b16 %v5208
    %v5589 = vunpack.c.h.b16 %v5208
    %v5590 = vunpack.c.l.b16 %v5209
    %v5591 = vunpack.c.h.b16 %v5209
    %v5592 = vunpack.c.l.b16 %v5210
    %v5593 = vunpack.c.h.b16 %v5210
    %v5594 = vunpack.c.l.b16 %v5211
    %v5595 = vunpack.c.h.b16 %v5211
    %v5596 = vpack.c.b16 %v5344, %v5340
    %v5597 = vpack.c.b16 %v5345, %v5341
    %v5598 = vpack.c.b16 %v5346, %v5342
    %v5599 = vpack.c.b16 %v5347, %v5343
    %v5600 = vpack.c.b16 %v5352, %v5348
    %v5601 = vpack.c.b16 %v5353, %v5349
    %v5602 = vpack.c.b16 %v5354, %v5350
    %v5603 = vpack.c.b16 %v5355, %v5351
    %v5604 = vpack.c.b16 %v5360, %v5356
    %v5605 = vpack.c.b16 %v5361, %v5357
    %v5606 = vpack.c.b16 %v5362, %v5358
    %v5607 = vpack.c.b16 %v5363, %v5359
    %v5608 = vpack.c.b16 %v5368, %v5364
    %v5609 = vpack.c.b16 %v5369, %v5365
    %v5610 = vpack.c.b16 %v5370, %v5366
    %v5611 = vpack.c.b16 %v5371, %v5367
    %v5612 = vpack.c.b16 %v5376, %v5372
    %v5613 = vpack.c.b16 %v5377, %v5373
    %v5614 = vpack.c.b16 %v5378, %v5374
    %v5615 = vpack.c.b16 %v5379, %v5375
    %v5616 = vpack.c.b16 %v5384, %v5380
    %v5617 = vpack.c.b16 %v5385, %v5381
    %v5618 = vpack.c.b16 %v5386, %v5382
    %v5619 = vpack.c.b16 %v5387, %v5383
    %v5620 = vpack.c.b16 %v5392, %v5388
    %v5621 = vpack.c.b16 %v5393, %v5389
    %v5622 = vpack.c.b16 %v5394, %v5390
    %v5623 = vpack.c.b16 %v5395, %v5391
    %v5624 = vpack.c.b16 %v5400, %v5396
    %v5625 = vpack.c.b16 %v5401, %v5397
    %v5626 = vpack.c.b16 %v5402, %v5398
    %v5627 = vpack.c.b16 %v5403, %v5399
    %v5628 = vpack.c.b16 %v5408, %v5404
    %v5629 = vpack.c.b16 %v5409, %v5405
    %v5630 = vpack.c.b16 %v5410, %v5406
    %v5631 = vpack.c.b16 %v5411, %v5407
    %v5632 = vpack.c.b16 %v5416, %v5412
    %v5633 = vpack.c.b16 %v5417, %v5413
    %v5634 = vpack.c.b16 %v5418, %v5414
    %v5635 = vpack.c.b16 %v5419, %v5415
    %v5636 = vpack.c.b16 %v5424, %v5420
    %v5637 = vpack.c.b16 %v5425, %v5421
    %v5638 = vpack.c.b16 %v5426, %v5422
    %v5639 = vpack.c.b16 %v5427, %v5423
    %v5640 = vpack.c.b16 %v5432, %v5428
    %v5641 = vpack.c.b16 %v5433, %v5429
    %v5642 = vpack.c.b16 %v5434, %v5430
    %v5643 = vpack.c.b16 %v5435, %v5431
    %v5644 = vpack.c.b16 %v5440, %v5436
    %v5645 = vpack.c.b16 %v5441, %v5437
    %v5646 = vpack.c.b16 %v5442, %v5438
    %v5647 = vpack.c.b16 %v5443, %v5439
    %v5648 = vpack.c.b16 %v5448, %v5444
    %v5649 = vpack.c.b16 %v5449, %v5445
    %v5650 = vpack.c.b16 %v5450, %v5446
    %v5651 = vpack.c.b16 %v5451, %v5447
    %v5652 = vpack.c.b16 %v5456, %v5452
    %v5653 = vpack.c.b16 %v5457, %v5453
    %v5654 = vpack.c.b16 %v5458, %v5454
    %v5655 = vpack.c.b16 %v5459, %v5455
    %v5656 = vpack.c.b16 %v5464, %v5460
    %v5657 = vpack.c.b16 %v5465, %v5461
    %v5658 = vpack.c.b16 %v5466, %v5462
    %v5659 = vpack.c.b16 %v5467, %v5463
    %v5660 = vpack.c.b16 %v5472, %v5468
    %v5661 = vpack.c.b16 %v5473, %v5469
    %v5662 = vpack.c.b16 %v5474, %v5470
    %v5663 = vpack.c.b16 %v5475, %v5471
    %v5664 = vpack.c.b16 %v5480, %v5476
    %v5665 = vpack.c.b16 %v5481, %v5477
    %v5666 = vpack.c.b16 %v5482, %v5478
    %v5667 = vpack.c.b16 %v5483, %v5479
    %v5668 = vpack.c.b16 %v5488, %v5484
    %v5669 = vpack.c.b16 %v5489, %v5485
    %v5670 = vpack.c.b16 %v5490, %v5486
    %v5671 = vpack.c.b16 %v5491, %v5487
    %v5672 = vpack.c.b16 %v5496, %v5492
    %v5673 = vpack.c.b16 %v5497, %v5493
    %v5674 = vpack.c.b16 %v5498, %v5494
    %v5675 = vpack.c.b16 %v5499, %v5495
    %v5676 = vpack.c.b16 %v5504, %v5500
    %v5677 = vpack.c.b16 %v5505, %v5501
    %v5678 = vpack.c.b16 %v5506, %v5502
    %v5679 = vpack.c.b16 %v5507, %v5503
    %v5680 = vpack.c.b16 %v5512, %v5508
    %v5681 = vpack.c.b16 %v5513, %v5509
    %v5682 = vpack.c.b16 %v5514, %v5510
    %v5683 = vpack.c.b16 %v5515, %v5511
    %v5684 = vpack.c.b16 %v5520, %v5516
    %v5685 = vpack.c.b16 %v5521, %v5517
    %v5686 = vpack.c.b16 %v5522, %v5518
    %v5687 = vpack.c.b16 %v5523, %v5519
    %v5688 = vpack.c.b16 %v5528, %v5524
    %v5689 = vpack.c.b16 %v5529, %v5525
    %v5690 = vpack.c.b16 %v5530, %v5526
    %v5691 = vpack.c.b16 %v5531, %v5527
    %v5692 = vpack.c.b16 %v5536, %v5532
    %v5693 = vpack.c.b16 %v5537, %v5533
    %v5694 = vpack.c.b16 %v5538, %v5534
    %v5695 = vpack.c.b16 %v5539, %v5535
    %v5696 = vpack.c.b16 %v5544, %v5540
    %v5697 = vpack.c.b16 %v5545, %v5541
    %v5698 = vpack.c.b16 %v5546, %v5542
    %v5699 = vpack.c.b16 %v5547, %v5543
    %v5700 = vpack.c.b16 %v5552, %v5548
    %v5701 = vpack.c.b16 %v5553, %v5549
    %v5702 = vpack.c.b16 %v5554, %v5550
    %v5703 = vpack.c.b16 %v5555, %v5551
    %v5704 = vpack.c.b16 %v5560, %v5556
    %v5705 = vpack.c.b16 %v5561, %v5557
    %v5706 = vpack.c.b16 %v5562, %v5558
    %v5707 = vpack.c.b16 %v5563, %v5559
    %v5708 = vpack.c.b16 %v5568, %v5564
    %v5709 = vpack.c.b16 %v5569, %v5565
    %v5710 = vpack.c.b16 %v5570, %v5566
    %v5711 = vpack.c.b16 %v5571, %v5567
    %v5712 = vpack.c.b16 %v5576, %v5572
    %v5713 = vpack.c.b16 %v5577, %v5573
    %v5714 = vpack.c.b16 %v5578, %v5574
    %v5715 = vpack.c.b16 %v5579, %v5575
    %v5716 = vpack.c.b16 %v5584, %v5580
    %v5717 = vpack.c.b16 %v5585, %v5581
    %v5718 = vpack.c.b16 %v5586, %v5582
    %v5719 = vpack.c.b16 %v5587, %v5583
    %v5720 = vpack.c.b16 %v5592, %v5588
    %v5721 = vpack.c.b16 %v5593, %v5589
    %v5722 = vpack.c.b16 %v5594, %v5590
    %v5723 = vpack.c.b16 %v5595, %v5591
    %5852 = vmatprep.subr.bf16.mxu0 %v5625
    %5853 = vmatpush1.bf16.msra.mxu0 %v5624
    %5854 = vmatprep.subr.bf16.mxu0 %v5621
    %5855 = vmatpush1.bf16.msra.mxu0 %v5620
    %5856 = vmatprep.subr.bf16.mxu0 %v5617
    %5857 = vmatpush1.bf16.msra.mxu0 %v5616
    %5858 = vmatprep.subr.bf16.mxu0 %v5613
    %5859 = vmatpush1.bf16.msra.mxu0 %v5612
    %5860 = vmatprep.subr.bf16.mxu0 %v5609
    %5861 = vmatpush1.bf16.msra.mxu0 %v5608
    %5862 = vmatprep.subr.bf16.mxu0 %v5605
    %5863 = vmatpush1.bf16.msra.mxu0 %v5604
    %5864 = vmatprep.subr.bf16.mxu0 %v5601
    %5865 = vmatpush1.bf16.msra.mxu0 %v5600
    %5866 = vmatprep.subr.bf16.mxu0 %v5597
    %5867 = vmatpush1.bf16.msra.mxu0 %v5596
    %5868 = vmatprep.subr.bf16.mxu0 %v5657
    %5869 = vmatpush2.bf16.msra.mxu0 %v5656
    %5870 = vmatprep.subr.bf16.mxu0 %v5653
    %5871 = vmatpush2.bf16.msra.mxu0 %v5652
    %5872 = vmatprep.subr.bf16.mxu0 %v5649
    %5873 = vmatpush2.bf16.msra.mxu0 %v5648
    %5874 = vmatprep.subr.bf16.mxu0 %v5645
    %5875 = vmatpush2.bf16.msra.mxu0 %v5644
    %5876 = vmatprep.subr.bf16.mxu0 %v5641
    %5877 = vmatpush2.bf16.msra.mxu0 %v5640
    %5878 = vmatprep.subr.bf16.mxu0 %v5637
    %5879 = vmatpush2.bf16.msra.mxu0 %v5636
    %5880 = vmatprep.subr.bf16.mxu0 %v5633
    %5881 = vmatpush2.bf16.msra.mxu0 %v5632
    %5882 = vmatprep.subr.bf16.mxu0 %v5629
    %5883 = vmatpush2.bf16.msra.mxu0 %v5628
    %5884 = vmatprep.mubr.bf16.mxu0 %v5081
    %5885 = vmatmul.mubr.bf16.gmra.mxu0 %v5080
    %v5886 = vpop.f32.mrf.mxu0
    %v5887 = vadd.f32 0.0, %v5886
    %v5888 = vpop.f32.mrf.mxu0
    %v5889 = vadd.f32 0.0, %v5888
    %v5890 = vpop.f32.mrf.mxu0
    %v5891 = vadd.f32 0.0, %v5890
    %v5892 = vpop.f32.mrf.mxu0
    %v5893 = vadd.f32 0.0, %v5892
    %5894 = vdwg.mxu0
    %5895 = vmatprep.subr.bf16.mxu0 %v5689
    %5896 = vmatpush1.bf16.msra.mxu0 %v5688
    %5897 = vmatprep.subr.bf16.mxu0 %v5685
    %5898 = vmatpush1.bf16.msra.mxu0 %v5684
    %5899 = vmatprep.subr.bf16.mxu0 %v5681
    %5900 = vmatpush1.bf16.msra.mxu0 %v5680
    %5901 = vmatprep.subr.bf16.mxu0 %v5677
    %5902 = vmatpush1.bf16.msra.mxu0 %v5676
    %5903 = vmatprep.subr.bf16.mxu0 %v5673
    %5904 = vmatpush1.bf16.msra.mxu0 %v5672
    %5905 = vmatprep.subr.bf16.mxu0 %v5669
    %5906 = vmatpush1.bf16.msra.mxu0 %v5668
    %5907 = vmatprep.subr.bf16.mxu0 %v5665
    %5908 = vmatpush1.bf16.msra.mxu0 %v5664
    %5909 = vmatprep.subr.bf16.mxu0 %v5661
    %5910 = vmatpush1.bf16.msra.mxu0 %v5660
    %5911 = vmatprep.subr.bf16.mxu0 %v5721
    %5912 = vmatpush2.bf16.msra.mxu0 %v5720
    %5913 = vmatprep.subr.bf16.mxu0 %v5717
    %5914 = vmatpush2.bf16.msra.mxu0 %v5716
    %5915 = vmatprep.subr.bf16.mxu0 %v5713
    %5916 = vmatpush2.bf16.msra.mxu0 %v5712
    %5917 = vmatprep.subr.bf16.mxu0 %v5709
    %5918 = vmatpush2.bf16.msra.mxu0 %v5708
    %5919 = vmatprep.subr.bf16.mxu0 %v5705
    %5920 = vmatpush2.bf16.msra.mxu0 %v5704
    %5921 = vmatprep.subr.bf16.mxu0 %v5701
    %5922 = vmatpush2.bf16.msra.mxu0 %v5700
    %5923 = vmatprep.subr.bf16.mxu0 %v5697
    %5924 = vmatpush2.bf16.msra.mxu0 %v5696
    %5925 = vmatprep.subr.bf16.mxu0 %v5693
    %5926 = vmatpush2.bf16.msra.mxu0 %v5692
    %5927 = vmatprep.mubr.bf16.mxu0 %v5083
    %5928 = vmatmul.mubr.bf16.gmra.mxu0 %v5082
    %v5929 = vpop.f32.mrf.mxu0
    %v5930 = vadd.f32 %v5887, %v5929
    %v5931 = vpop.f32.mrf.mxu0
    %v5932 = vadd.f32 %v5889, %v5931
    %v5933 = vpop.f32.mrf.mxu0
    %v5934 = vadd.f32 %v5891, %v5933
    %v5935 = vpop.f32.mrf.mxu0
    %v5936 = vadd.f32 %v5893, %v5935
    %5937 = vdwg.mxu0
    %5938 = vmatprep.subr.bf16.mxu0 %v5627
    %5939 = vmatpush1.bf16.msra.mxu0 %v5626
    %5940 = vmatprep.subr.bf16.mxu0 %v5623
    %5941 = vmatpush1.bf16.msra.mxu0 %v5622
    %5942 = vmatprep.subr.bf16.mxu0 %v5619
    %5943 = vmatpush1.bf16.msra.mxu0 %v5618
    %5944 = vmatprep.subr.bf16.mxu0 %v5615
    %5945 = vmatpush1.bf16.msra.mxu0 %v5614
    %5946 = vmatprep.subr.bf16.mxu0 %v5611
    %5947 = vmatpush1.bf16.msra.mxu0 %v5610
    %5948 = vmatprep.subr.bf16.mxu0 %v5607
    %5949 = vmatpush1.bf16.msra.mxu0 %v5606
    %5950 = vmatprep.subr.bf16.mxu0 %v5603
    %5951 = vmatpush1.bf16.msra.mxu0 %v5602
    %5952 = vmatprep.subr.bf16.mxu0 %v5599
    %5953 = vmatpush1.bf16.msra.mxu0 %v5598
    %5954 = vmatprep.subr.bf16.mxu0 %v5659
    %5955 = vmatpush2.bf16.msra.mxu0 %v5658
    %5956 = vmatprep.subr.bf16.mxu0 %v5655
    %5957 = vmatpush2.bf16.msra.mxu0 %v5654
    %5958 = vmatprep.subr.bf16.mxu0 %v5651
    %5959 = vmatpush2.bf16.msra.mxu0 %v5650
    %5960 = vmatprep.subr.bf16.mxu0 %v5647
    %5961 = vmatpush2.bf16.msra.mxu0 %v5646
    %5962 = vmatprep.subr.bf16.mxu0 %v5643
    %5963 = vmatpush2.bf16.msra.mxu0 %v5642
    %5964 = vmatprep.subr.bf16.mxu0 %v5639
    %5965 = vmatpush2.bf16.msra.mxu0 %v5638
    %5966 = vmatprep.subr.bf16.mxu0 %v5635
    %5967 = vmatpush2.bf16.msra.mxu0 %v5634
    %5968 = vmatprep.subr.bf16.mxu0 %v5631
    %5969 = vmatpush2.bf16.msra.mxu0 %v5630
    %5970 = vmatprep.mubr.bf16.mxu0 %v5081
    %5971 = vmatmul.mubr.bf16.gmra.mxu0 %v5080
    %v5972 = vpop.f32.mrf.mxu0
    %v5973 = vadd.f32 0.0, %v5972
    %v5974 = vpop.f32.mrf.mxu0
    %v5975 = vadd.f32 0.0, %v5974
    %v5976 = vpop.f32.mrf.mxu0
    %v5977 = vadd.f32 0.0, %v5976
    %v5978 = vpop.f32.mrf.mxu0
    %v5979 = vadd.f32 0.0, %v5978
    %5980 = vdwg.mxu0
    %5981 = vmatprep.subr.bf16.mxu0 %v5691
    %5982 = vmatpush1.bf16.msra.mxu0 %v5690
    %5983 = vmatprep.subr.bf16.mxu0 %v5687
    %5984 = vmatpush1.bf16.msra.mxu0 %v5686
    %5985 = vmatprep.subr.bf16.mxu0 %v5683
    %5986 = vmatpush1.bf16.msra.mxu0 %v5682
    %5987 = vmatprep.subr.bf16.mxu0 %v5679
    %5988 = vmatpush1.bf16.msra.mxu0 %v5678
    %5989 = vmatprep.subr.bf16.mxu0 %v5675
    %5990 = vmatpush1.bf16.msra.mxu0 %v5674
    %5991 = vmatprep.subr.bf16.mxu0 %v5671
    %5992 = vmatpush1.bf16.msra.mxu0 %v5670
    %5993 = vmatprep.subr.bf16.mxu0 %v5667
    %5994 = vmatpush1.bf16.msra.mxu0 %v5666
    %5995 = vmatprep.subr.bf16.mxu0 %v5663
    %5996 = vmatpush1.bf16.msra.mxu0 %v5662
    %5997 = vmatprep.subr.bf16.mxu0 %v5723
    %5998 = vmatpush2.bf16.msra.mxu0 %v5722
    %5999 = vmatprep.subr.bf16.mxu0 %v5719
    %6000 = vmatpush2.bf16.msra.mxu0 %v5718
    %6001 = vmatprep.subr.bf16.mxu0 %v5715
    %6002 = vmatpush2.bf16.msra.mxu0 %v5714
    %6003 = vmatprep.subr.bf16.mxu0 %v5711
    %6004 = vmatpush2.bf16.msra.mxu0 %v5710
    %6005 = vmatprep.subr.bf16.mxu0 %v5707
    %6006 = vmatpush2.bf16.msra.mxu0 %v5706
    %6007 = vmatprep.subr.bf16.mxu0 %v5703
    %6008 = vmatpush2.bf16.msra.mxu0 %v5702
    %6009 = vmatprep.subr.bf16.mxu0 %v5699
    %6010 = vmatpush2.bf16.msra.mxu0 %v5698
    %6011 = vmatprep.subr.bf16.mxu0 %v5695
    %6012 = vmatpush2.bf16.msra.mxu0 %v5694
    %6013 = vmatprep.mubr.bf16.mxu0 %v5083
    %6014 = vmatmul.mubr.bf16.gmra.mxu0 %v5082
    %v6015 = vpop.f32.mrf.mxu0
    %v6016 = vadd.f32 %v5973, %v6015
    %v6017 = vpop.f32.mrf.mxu0
    %v6018 = vadd.f32 %v5975, %v6017
    %v6019 = vpop.f32.mrf.mxu0
    %v6020 = vadd.f32 %v5977, %v6019
    %v6021 = vpop.f32.mrf.mxu0
    %v6022 = vadd.f32 %v5979, %v6021
    %6023 = vdwg.mxu0
    %v6024 = vadd.f32 %v3947, %v5930
    %v6025 = vadd.f32 %v3948, %v5932
    %v6026 = vadd.f32 %v3949, %v6016
    %v6027 = vadd.f32 %v3950, %v6018
    %v6028 = vadd.f32 %v3951, %v5934
    %v6029 = vadd.f32 %v3952, %v5936
    %v6030 = vadd.f32 %v3953, %v6020
    %v6031 = vadd.f32 %v3954, %v6022
    %s6032 = scalar_lea.vmem %s2, 36
    %v6033 = vld [vmem:[%s6032] ss:$8 sm:$0xf]
    %v6035 = vlaneseq
    %v6036 = vshrl.u32 %v6035, 7
    %v6037 = vsub.s32 0, %v6036
    %v6038 = vrot.slane %v6033, %v6037
    %v6039 = vlaneseq
    %v6040 = vshrl.u32 %v6039, 7
    %v6041 = vsub.s32 1, %v6040
    %v6042 = vrot.slane %v6033, %v6041
    %v6043 = vlaneseq
    %v6044 = vshrl.u32 %v6043, 7
    %v6045 = vsub.s32 2, %v6044
    %v6046 = vrot.slane %v6033, %v6045
    %v6047 = vlaneseq
    %v6048 = vshrl.u32 %v6047, 7
    %v6049 = vsub.s32 3, %v6048
    %v6050 = vrot.slane %v6033, %v6049
    %v6055 = vadd.f32 %v6024, %v6038
    %v6056 = vadd.f32 %v6025, %v6042
    %v6057 = vadd.f32 %v6026, %v6046
    %v6058 = vadd.f32 %v6027, %v6050
    %v6059 = vadd.f32 %v6028, %v6038
    %v6060 = vadd.f32 %v6029, %v6042
    %v6061 = vadd.f32 %v6030, %v6046
    %v6062 = vadd.f32 %v6031, %v6050
    %v6063 = vpack.c.bf16 %v6059, %v6055
    %v6064 = vpack.c.bf16 %v6060, %v6056
    %v6065 = vpack.c.bf16 %v6061, %v6057
    %v6066 = vpack.c.bf16 %v6062, %v6058
    %v6067 = vld [vmem:[#allocation16] sm:$0xf]
    %v6068 = vld [vmem:[#allocation16 + $0x4] sm:$0xf]
    %v6069 = vld [vmem:[#allocation16 + $0x8] sm:$0xf]
    %v6070 = vld [vmem:[#allocation16 + $0xc] sm:$0xf]
    %v6071 = vld [vmem:[#allocation16 + $0x10] sm:$0xf]
    %v6072 = vld [vmem:[#allocation16 + $0x14] sm:$0xf]
    %v6073 = vld [vmem:[#allocation16 + $0x18] sm:$0xf]
    %v6074 = vld [vmem:[#allocation16 + $0x1c] sm:$0xf]
    %v6075 = vld [vmem:[#allocation16 + $0x20] sm:$0xf]
    %v6076 = vld [vmem:[#allocation16 + $0x24] sm:$0xf]
    %v6077 = vld [vmem:[#allocation16 + $0x28] sm:$0xf]
    %v6078 = vld [vmem:[#allocation16 + $0x2c] sm:$0xf]
    %v6079 = vld [vmem:[#allocation16 + $0x30] sm:$0xf]
    %v6080 = vld [vmem:[#allocation16 + $0x34] sm:$0xf]
    %v6081 = vld [vmem:[#allocation16 + $0x38] sm:$0xf]
    %v6082 = vld [vmem:[#allocation16 + $0x3c] sm:$0xf]
    %v6083 = vld [vmem:[#allocation16 + $0x40] sm:$0xf]
    %v6084 = vld [vmem:[#allocation16 + $0x44] sm:$0xf]
    %v6085 = vld [vmem:[#allocation16 + $0x48] sm:$0xf]
    %v6086 = vld [vmem:[#allocation16 + $0x4c] sm:$0xf]
    %v6087 = vld [vmem:[#allocation16 + $0x50] sm:$0xf]
    %v6088 = vld [vmem:[#allocation16 + $0x54] sm:$0xf]
    %v6089 = vld [vmem:[#allocation16 + $0x58] sm:$0xf]
    %v6090 = vld [vmem:[#allocation16 + $0x5c] sm:$0xf]
    %v6091 = vld [vmem:[#allocation16 + $0x60] sm:$0xf]
    %v6092 = vld [vmem:[#allocation16 + $0x64] sm:$0xf]
    %v6093 = vld [vmem:[#allocation16 + $0x68] sm:$0xf]
    %v6094 = vld [vmem:[#allocation16 + $0x6c] sm:$0xf]
    %v6095 = vld [vmem:[#allocation16 + $0x70] sm:$0xf]
    %v6096 = vld [vmem:[#allocation16 + $0x74] sm:$0xf]
    %v6097 = vld [vmem:[#allocation16 + $0x78] sm:$0xf]
    %v6098 = vld [vmem:[#allocation16 + $0x7c] sm:$0xf]
    %v6099 = vld [vmem:[#allocation16 + $0x80] sm:$0xf]
    %v6100 = vld [vmem:[#allocation16 + $0x84] sm:$0xf]
    %v6101 = vld [vmem:[#allocation16 + $0x88] sm:$0xf]
    %v6102 = vld [vmem:[#allocation16 + $0x8c] sm:$0xf]
    %v6103 = vld [vmem:[#allocation16 + $0x90] sm:$0xf]
    %v6104 = vld [vmem:[#allocation16 + $0x94] sm:$0xf]
    %v6105 = vld [vmem:[#allocation16 + $0x98] sm:$0xf]
    %v6106 = vld [vmem:[#allocation16 + $0x9c] sm:$0xf]
    %v6107 = vld [vmem:[#allocation16 + $0xa0] sm:$0xf]
    %v6108 = vld [vmem:[#allocation16 + $0xa4] sm:$0xf]
    %v6109 = vld [vmem:[#allocation16 + $0xa8] sm:$0xf]
    %v6110 = vld [vmem:[#allocation16 + $0xac] sm:$0xf]
    %v6111 = vld [vmem:[#allocation16 + $0xb0] sm:$0xf]
    %v6112 = vld [vmem:[#allocation16 + $0xb4] sm:$0xf]
    %v6113 = vld [vmem:[#allocation16 + $0xb8] sm:$0xf]
    %v6114 = vld [vmem:[#allocation16 + $0xbc] sm:$0xf]
    %v6115 = vld [vmem:[#allocation16 + $0xc0] sm:$0xf]
    %v6116 = vld [vmem:[#allocation16 + $0xc4] sm:$0xf]
    %v6117 = vld [vmem:[#allocation16 + $0xc8] sm:$0xf]
    %v6118 = vld [vmem:[#allocation16 + $0xcc] sm:$0xf]
    %v6119 = vld [vmem:[#allocation16 + $0xd0] sm:$0xf]
    %v6120 = vld [vmem:[#allocation16 + $0xd4] sm:$0xf]
    %v6121 = vld [vmem:[#allocation16 + $0xd8] sm:$0xf]
    %v6122 = vld [vmem:[#allocation16 + $0xdc] sm:$0xf]
    %v6123 = vld [vmem:[#allocation16 + $0xe0] sm:$0xf]
    %v6124 = vld [vmem:[#allocation16 + $0xe4] sm:$0xf]
    %v6125 = vld [vmem:[#allocation16 + $0xe8] sm:$0xf]
    %v6126 = vld [vmem:[#allocation16 + $0xec] sm:$0xf]
    %v6127 = vld [vmem:[#allocation16 + $0xf0] sm:$0xf]
    %v6128 = vld [vmem:[#allocation16 + $0xf4] sm:$0xf]
    %v6129 = vld [vmem:[#allocation16 + $0xf8] sm:$0xf]
    %v6130 = vld [vmem:[#allocation16 + $0xfc] sm:$0xf]
    %v6131 = vld [vmem:[%s2 + $0x25] ss:$0 sm:$0xff]
    %v6196 = vunpack.c.l.b16 %v6067
    %v6197 = vunpack.c.l.b16 %v6068
    %v6198 = vunpack.c.l.b16 %v6069
    %v6199 = vunpack.c.l.b16 %v6070
    %v6200 = vunpack.c.l.b16 %v6071
    %v6201 = vunpack.c.l.b16 %v6072
    %v6202 = vunpack.c.l.b16 %v6073
    %v6203 = vunpack.c.l.b16 %v6074
    %v6204 = vunpack.c.l.b16 %v6075
    %v6205 = vunpack.c.l.b16 %v6076
    %v6206 = vunpack.c.l.b16 %v6077
    %v6207 = vunpack.c.l.b16 %v6078
    %v6208 = vunpack.c.l.b16 %v6079
    %v6209 = vunpack.c.l.b16 %v6080
    %v6210 = vunpack.c.l.b16 %v6081
    %v6211 = vunpack.c.l.b16 %v6082
    %v6212 = vunpack.c.l.b16 %v6083
    %v6213 = vunpack.c.l.b16 %v6084
    %v6214 = vunpack.c.l.b16 %v6085
    %v6215 = vunpack.c.l.b16 %v6086
    %v6216 = vunpack.c.l.b16 %v6087
    %v6217 = vunpack.c.l.b16 %v6088
    %v6218 = vunpack.c.l.b16 %v6089
    %v6219 = vunpack.c.l.b16 %v6090
    %v6220 = vunpack.c.l.b16 %v6091
    %v6221 = vunpack.c.l.b16 %v6092
    %v6222 = vunpack.c.l.b16 %v6093
    %v6223 = vunpack.c.l.b16 %v6094
    %v6224 = vunpack.c.l.b16 %v6095
    %v6225 = vunpack.c.l.b16 %v6096
    %v6226 = vunpack.c.l.b16 %v6097
    %v6227 = vunpack.c.l.b16 %v6098
    %v6228 = vunpack.c.l.b16 %v6099
    %v6229 = vunpack.c.l.b16 %v6100
    %v6230 = vunpack.c.l.b16 %v6101
    %v6231 = vunpack.c.l.b16 %v6102
    %v6232 = vunpack.c.l.b16 %v6103
    %v6233 = vunpack.c.l.b16 %v6104
    %v6234 = vunpack.c.l.b16 %v6105
    %v6235 = vunpack.c.l.b16 %v6106
    %v6236 = vunpack.c.l.b16 %v6107
    %v6237 = vunpack.c.l.b16 %v6108
    %v6238 = vunpack.c.l.b16 %v6109
    %v6239 = vunpack.c.l.b16 %v6110
    %v6240 = vunpack.c.l.b16 %v6111
    %v6241 = vunpack.c.l.b16 %v6112
    %v6242 = vunpack.c.l.b16 %v6113
    %v6243 = vunpack.c.l.b16 %v6114
    %v6244 = vunpack.c.l.b16 %v6115
    %v6245 = vunpack.c.l.b16 %v6116
    %v6246 = vunpack.c.l.b16 %v6117
    %v6247 = vunpack.c.l.b16 %v6118
    %v6248 = vunpack.c.l.b16 %v6119
    %v6249 = vunpack.c.l.b16 %v6120
    %v6250 = vunpack.c.l.b16 %v6121
    %v6251 = vunpack.c.l.b16 %v6122
    %v6252 = vunpack.c.l.b16 %v6123
    %v6253 = vunpack.c.l.b16 %v6124
    %v6254 = vunpack.c.l.b16 %v6125
    %v6255 = vunpack.c.l.b16 %v6126
    %v6256 = vunpack.c.l.b16 %v6127
    %v6257 = vunpack.c.l.b16 %v6128
    %v6258 = vunpack.c.l.b16 %v6129
    %v6259 = vunpack.c.l.b16 %v6130
    %v6260 = vpack.c.b16 %v6197, %v6196
    %v6261 = vpack.c.b16 %v6199, %v6198
    %v6262 = vpack.c.b16 %v6201, %v6200
    %v6263 = vpack.c.b16 %v6203, %v6202
    %v6264 = vpack.c.b16 %v6205, %v6204
    %v6265 = vpack.c.b16 %v6207, %v6206
    %v6266 = vpack.c.b16 %v6209, %v6208
    %v6267 = vpack.c.b16 %v6211, %v6210
    %v6268 = vpack.c.b16 %v6213, %v6212
    %v6269 = vpack.c.b16 %v6215, %v6214
    %v6270 = vpack.c.b16 %v6217, %v6216
    %v6271 = vpack.c.b16 %v6219, %v6218
    %v6272 = vpack.c.b16 %v6221, %v6220
    %v6273 = vpack.c.b16 %v6223, %v6222
    %v6274 = vpack.c.b16 %v6225, %v6224
    %v6275 = vpack.c.b16 %v6227, %v6226
    %v6276 = vpack.c.b16 %v6229, %v6228
    %v6277 = vpack.c.b16 %v6231, %v6230
    %v6278 = vpack.c.b16 %v6233, %v6232
    %v6279 = vpack.c.b16 %v6235, %v6234
    %v6280 = vpack.c.b16 %v6237, %v6236
    %v6281 = vpack.c.b16 %v6239, %v6238
    %v6282 = vpack.c.b16 %v6241, %v6240
    %v6283 = vpack.c.b16 %v6243, %v6242
    %v6284 = vpack.c.b16 %v6245, %v6244
    %v6285 = vpack.c.b16 %v6247, %v6246
    %v6286 = vpack.c.b16 %v6249, %v6248
    %v6287 = vpack.c.b16 %v6251, %v6250
    %v6288 = vpack.c.b16 %v6253, %v6252
    %v6289 = vpack.c.b16 %v6255, %v6254
    %v6290 = vpack.c.b16 %v6257, %v6256
    %v6291 = vpack.c.b16 %v6259, %v6258
    %6324 = vmatprep.subr.bf16.mxu0 0
    %6325 = vmatpush1.bf16.msra.mxu0 %v6267
    %6326 = vmatprep.subr.bf16.mxu0 0
    %6327 = vmatpush1.bf16.msra.mxu0 %v6266
    %6328 = vmatprep.subr.bf16.mxu0 0
    %6329 = vmatpush1.bf16.msra.mxu0 %v6265
    %6330 = vmatprep.subr.bf16.mxu0 0
    %6331 = vmatpush1.bf16.msra.mxu0 %v6264
    %6332 = vmatprep.subr.bf16.mxu0 0
    %6333 = vmatpush1.bf16.msra.mxu0 %v6263
    %6334 = vmatprep.subr.bf16.mxu0 0
    %6335 = vmatpush1.bf16.msra.mxu0 %v6262
    %6336 = vmatprep.subr.bf16.mxu0 0
    %6337 = vmatpush1.bf16.msra.mxu0 %v6261
    %6338 = vmatprep.subr.bf16.mxu0 0
    %6339 = vmatpush1.bf16.msra.mxu0 %v6260
    %6340 = vmatprep.subr.bf16.mxu0 0
    %6341 = vmatpush2.bf16.msra.mxu0 %v6275
    %6342 = vmatprep.subr.bf16.mxu0 0
    %6343 = vmatpush2.bf16.msra.mxu0 %v6274
    %6344 = vmatprep.subr.bf16.mxu0 0
    %6345 = vmatpush2.bf16.msra.mxu0 %v6273
    %6346 = vmatprep.subr.bf16.mxu0 0
    %6347 = vmatpush2.bf16.msra.mxu0 %v6272
    %6348 = vmatprep.subr.bf16.mxu0 0
    %6349 = vmatpush2.bf16.msra.mxu0 %v6271
    %6350 = vmatprep.subr.bf16.mxu0 0
    %6351 = vmatpush2.bf16.msra.mxu0 %v6270
    %6352 = vmatprep.subr.bf16.mxu0 0
    %6353 = vmatpush2.bf16.msra.mxu0 %v6269
    %6354 = vmatprep.subr.bf16.mxu0 0
    %6355 = vmatpush2.bf16.msra.mxu0 %v6268
    %6356 = vmatprep.mubr.bf16.mxu0 %v6064
    %6357 = vmatmul.mubr.bf16.gmra.mxu0 %v6063
    %v6358 = vpop.f32.mrf.mxu0
    %v6359 = vadd.f32 %v6131, %v6358
    %v6360 = vpop.f32.mrf.mxu0
    %v6361 = vpop.f32.mrf.mxu0
    %v6362 = vadd.f32 %v6131, %v6361
    %v6363 = vpop.f32.mrf.mxu0
    %6364 = vdwg.mxu0
    %6365 = vmatprep.subr.bf16.mxu0 0
    %6366 = vmatpush1.bf16.msra.mxu0 %v6283
    %6367 = vmatprep.subr.bf16.mxu0 0
    %6368 = vmatpush1.bf16.msra.mxu0 %v6282
    %6369 = vmatprep.subr.bf16.mxu0 0
    %6370 = vmatpush1.bf16.msra.mxu0 %v6281
    %6371 = vmatprep.subr.bf16.mxu0 0
    %6372 = vmatpush1.bf16.msra.mxu0 %v6280
    %6373 = vmatprep.subr.bf16.mxu0 0
    %6374 = vmatpush1.bf16.msra.mxu0 %v6279
    %6375 = vmatprep.subr.bf16.mxu0 0
    %6376 = vmatpush1.bf16.msra.mxu0 %v6278
    %6377 = vmatprep.subr.bf16.mxu0 0
    %6378 = vmatpush1.bf16.msra.mxu0 %v6277
    %6379 = vmatprep.subr.bf16.mxu0 0
    %6380 = vmatpush1.bf16.msra.mxu0 %v6276
    %6381 = vmatprep.subr.bf16.mxu0 0
    %6382 = vmatpush2.bf16.msra.mxu0 %v6291
    %6383 = vmatprep.subr.bf16.mxu0 0
    %6384 = vmatpush2.bf16.msra.mxu0 %v6290
    %6385 = vmatprep.subr.bf16.mxu0 0
    %6386 = vmatpush2.bf16.msra.mxu0 %v6289
    %6387 = vmatprep.subr.bf16.mxu0 0
    %6388 = vmatpush2.bf16.msra.mxu0 %v6288
    %6389 = vmatprep.subr.bf16.mxu0 0
    %6390 = vmatpush2.bf16.msra.mxu0 %v6287
    %6391 = vmatprep.subr.bf16.mxu0 0
    %6392 = vmatpush2.bf16.msra.mxu0 %v6286
    %6393 = vmatprep.subr.bf16.mxu0 0
    %6394 = vmatpush2.bf16.msra.mxu0 %v6285
    %6395 = vmatprep.subr.bf16.mxu0 0
    %6396 = vmatpush2.bf16.msra.mxu0 %v6284
    %6397 = vmatprep.mubr.bf16.mxu0 %v6066
    %6398 = vmatmul.mubr.bf16.gmra.mxu0 %v6065
    %v6399 = vpop.f32.mrf.mxu0
    %v6400 = vadd.f32 %v6359, %v6399
    %v6401 = vpop.f32.mrf.mxu0
    %v6402 = vpop.f32.mrf.mxu0
    %v6403 = vadd.f32 %v6362, %v6402
    %v6404 = vpop.f32.mrf.mxu0
    %6405 = vdwg.mxu0
    %6406 = vst [vmem:[%s13] sm:$0xff] %v6400
    %6407 = vst [vmem:[%s13 + $0x8] sm:$0xff] %v6403
    // Predicated region
    $region94: #{_ddpm_forward_impl.1} parent=1 // pred_check
      _
    $region95: #{_ddpm_forward_impl.1} parent=1 // pred_check_branch
      %6409 = sbr.rel (0) target = $region97
    $region96: #{_ddpm_forward_impl.1} parent=1 // pred_region
      _
    $region97: #{_ddpm_forward_impl.1} parent=1 // pred_fallthru
      _
    // Predicated region
    $region98: #{_ddpm_forward_impl.1} parent=1 // pred_check
      _
    $region99: #{_ddpm_forward_impl.1} parent=1 // pred_check_branch
      %6411 = sbr.rel (0) target = $region101
    $region100: #{_ddpm_forward_impl.1} parent=1 // pred_region
      _
    $region101: #{_ddpm_forward_impl.1} parent=1 // pred_fallthru
      _
    %6412 = vsyncpa [#allocation3], 1
    %6413 = vsyncpa [#allocation5], 1
    %6414 = vsyncpa [#allocation8], 1
    %6415 = vsyncpa [#allocation11], 1
    %6416 = vsyncpa [#allocation14], 1
    %6417 = vsyncpa [#allocation17], 1

</llo_original>
